<compile_context>
chip_gen: v7x
topology: tpu7x:2x2x1
jax: 0.10.0
libtpu: 0.0.40
codegen_flags: <defaults>
</compile_context>

<pallas_src>
import functools

import jax
import jax.numpy as jnp
from jax.experimental import pallas as pl
from jax.experimental.pallas import tpu as pltpu


# ----------------------------------------------------------------------------
# Fused kernel builder: embedding + L layers x ND directions, all in one launch.
# All loops are statically unrolled (T, L, ND are tiny), so every ref index is static.
# ----------------------------------------------------------------------------
def _build_fused_kernel(T, B, V, H, L, ND):
    f32 = jnp.float32

    def kernel(*refs):
        ids_ref = refs[0]                    # (T, B, 1) int32 token ids, time-major
        win_refs = refs[1:1 + L]             # l=0: (ND, V, 4H) (embedding-fused); l>0: (ND, ND*H, 4H)
        whh_ref = refs[1 + L]                # (L, ND, H, 4H)
        b_ref = refs[2 + L]                  # (L, ND, 1, 4H)   combined b_ih + b_hh
        h0_ref = refs[3 + L]                 # (L*ND, B, H)     PyTorch layout: layer*ND + dir
        c0_ref = refs[4 + L]                 # (L*ND, B, H)
        out_ref = refs[5 + L]                # (T, B, ND*H)
        hseq = refs[6 + L]                   # VMEM scratch (L, ND, T, B, H)

        # one-hot comparison iota, built once and reused by every layer-0 step
        iota = jax.lax.broadcasted_iota(jnp.int32, (B, V), 1)

        for l in range(L):
            for d in range(ND):
                w_in = win_refs[l][d]                               # (Din_l, 4H)
                w_hh = whh_ref[l, d]                                # (H, 4H)
                bias = jnp.broadcast_to(b_ref[l, d], (B, 4 * H))    # hoisted broadcast

                # ---- hoisted input projection (independent of h -> not in serial chain) ----
                gx = []
                for t in range(T):
                    if l == 0:
                        # one-hot(ids) @ (table @ W_ih^T): padding_idx=0 row is zero,
                        # OOV ids give an all-zero row (zero embedding).
                        x_t = (ids_ref[t] == iota).astype(f32)      # (B, V)
                    else:
                        x_t = jnp.concatenate(
                            [hseq[l - 1, dd, t] for dd in range(ND)], axis=-1)  # (B, ND*H)
                    gx.append(jnp.dot(x_t, w_in, preferred_element_type=f32) + bias)

                # ---- serial LSTM recurrence over time (fully unrolled) ----
                h = h0_ref[l * ND + d]                              # (B, H)
                c = c0_ref[l * ND + d]                              # (B, H)
                time_order = range(T) if d == 0 else range(T - 1, -1, -1)
                for t in time_order:
                    gates = gx[t] + jnp.dot(h, w_hh, preferred_element_type=f32)  # (B, 4H)
                    sg = jax.nn.sigmoid(gates)                      # full-vreg EUP op
                    th = jnp.tanh(gates)                            # full-vreg EUP op
                    i_g = sg[:, 0 * H:1 * H]
                    f_g = sg[:, 1 * H:2 * H]
                    g_g = th[:, 2 * H:3 * H]
                    o_g = sg[:, 3 * H:4 * H]
                    c = f_g * c + i_g * g_g
                    h = o_g * jnp.tanh(c)
                    hseq[l, d, t] = h          # VMEM scratch, aligned to original time index

        # ---- single writeback of the last layer's outputs: (T, B, ND*H) ----
        out_ref[...] = jnp.concatenate([hseq[L - 1, dd] for dd in range(ND)], axis=-1)

    return kernel


# ----------------------------------------------------------------------------
# Parameter init (deterministic, matching PyTorch module shapes)
# ----------------------------------------------------------------------------
def init_params(key, vocab_size, input_dim, hidden_size, num_layer, bidirection=True):
    num_dirs = 2 if bidirection else 1
    k_embed, k_lstm = jax.random.split(key)

    # nn.Embedding: N(0,1), padding_idx=0 row zeroed
    table = jax.random.normal(k_embed, (vocab_size, input_dim), jnp.float32)
    table = table.at[0].set(0.0)

    bound = 1.0 / jnp.sqrt(hidden_size)
    lstm = {}
    keys = jax.random.split(k_lstm, num_layer * num_dirs * 4)
    ki = 0
    for l in range(num_layer):
        in_dim = input_dim if l == 0 else num_dirs * hidden_size
        for d in range(num_dirs):
            w_ih_t = jax.random.uniform(keys[ki + 0], (in_dim, 4 * hidden_size),
                                        jnp.float32, -bound, bound)
            w_hh_t = jax.random.uniform(keys[ki + 1], (hidden_size, 4 * hidden_size),
                                        jnp.float32, -bound, bound)
            b_ih = jax.random.uniform(keys[ki + 2], (4 * hidden_size,),
                                      jnp.float32, -bound, bound)
            b_hh = jax.random.uniform(keys[ki + 3], (4 * hidden_size,),
                                      jnp.float32, -bound, bound)
            lstm[(l, d)] = (w_ih_t, w_hh_t, (b_ih + b_hh).reshape(1, 4 * hidden_size))
            ki += 4
    return {"embedding": table, "lstm": lstm}


# ----------------------------------------------------------------------------
# Forward pass (mirrors EmbedCharLayer.forward) — one fused pallas_call
# ----------------------------------------------------------------------------
def embed_char_forward(params, x_ids, h0, c0, *, max_length_seq_char,
                       hidden_size, num_layer, bidirection=True):
    ND = 2 if bidirection else 1
    T = max_length_seq_char
    H = hidden_size
    total = x_ids.size
    B = total // T                                    # total_size // max_length_seq_char
    table = params["embedding"]
    V = table.shape[0]

    # time-major token ids (T, B, 1); matches torch's reshape(-1, T) row grouping
    ids_tm = x_ids.reshape(B, T).T.reshape(T, B, 1).astype(jnp.int32)

    # fold the embedding table into layer-0's input projection: (ND, V, 4H)
    win = [jnp.stack([table @ params["lstm"][(0, d)][0] for d in range(ND)])]
    for l in range(1, num_layer):
        win.append(jnp.stack([params["lstm"][(l, d)][0] for d in range(ND)]))
    whh = jnp.stack([jnp.stack([params["lstm"][(l, d)][1] for d in range(ND)])
                     for l in range(num_layer)])                       # (L, ND, H, 4H)
    bias = jnp.stack([jnp.stack([params["lstm"][(l, d)][2] for d in range(ND)])
                      for l in range(num_layer)])                      # (L, ND, 1, 4H)

    kernel = _build_fused_kernel(T=T, B=B, V=V, H=H, L=num_layer, ND=ND)
    out_tm = pl.pallas_call(
        kernel,
        out_shape=jax.ShapeDtypeStruct((T, B, ND * H), jnp.float32),
        scratch_shapes=[pltpu.VMEM((num_layer, ND, T, B, H), jnp.float32)],
    )(ids_tm, *win, whh, bias, h0, c0)

    # back to batch-first (B, T, ND*H) to match nn.LSTM(batch_first=True)
    return jnp.transpose(out_tm, (1, 0, 2))


# ----------------------------------------------------------------------------
if __name__ == "__main__":
    vocab_size = 20
    max_length_seq_char = 8
    input_dim = 16
    hidden_size = 32
    num_layer = 2
    bidirection = True
    num_dirs = 2 if bidirection else 1

    key = jax.random.PRNGKey(0)
    k_x, k_p, k_h, k_c = jax.random.split(key, 4)

    # x: (batch=2, num_words=3, chars_per_word=8) integer token ids
    x_ids = jax.random.randint(k_x, (2, 3, max_length_seq_char), 0, vocab_size,
                               dtype=jnp.int32)

    params = init_params(k_p, vocab_size, input_dim, hidden_size, num_layer,
                         bidirection=bidirection)

    batch_total = x_ids.size // max_length_seq_char        # 6
    # init_lstm_state: torch.rand -> deterministic uniform [0,1)
    h0 = jax.random.uniform(k_h, (num_dirs * num_layer, batch_total, hidden_size),
                            jnp.float32)
    c0 = jax.random.uniform(k_c, (num_dirs * num_layer, batch_total, hidden_size),
                            jnp.float32)

    fwd = functools.partial(embed_char_forward,
                            max_length_seq_char=max_length_seq_char,
                            hidden_size=hidden_size, num_layer=num_layer,
                            bidirection=bidirection)

    out = jax.jit(fwd)(params, x_ids, h0, c0)
    out = jax.block_until_ready(out)

    expected_shape = (batch_total, max_length_seq_char, num_dirs * hidden_size)
    assert out.shape == expected_shape, (out.shape, expected_shape)
    assert out.dtype == jnp.float32
    assert bool(jnp.all(jnp.isfinite(out)))
    print("KERNEL_OK")
</pallas_src>

<mosaic_0001>
module attributes {stable_mosaic.version = 11 : i64} {
  func.func @kernel(%arg0: memref<8x6x1xi32, #tpu.memory_space<vmem>>, %arg1: memref<2x20x128xf32, #tpu.memory_space<vmem>>, %arg2: memref<2x64x128xf32, #tpu.memory_space<vmem>>, %arg3: memref<2x2x32x128xf32, #tpu.memory_space<vmem>>, %arg4: memref<2x2x1x128xf32, #tpu.memory_space<vmem>>, %arg5: memref<4x6x32xf32, #tpu.memory_space<vmem>>, %arg6: memref<4x6x32xf32, #tpu.memory_space<vmem>>, %arg7: memref<8x6x64xf32, #tpu.memory_space<vmem>>, %arg8: memref<2x2x8x6x32xf32, #tpu.memory_space<vmem>>) attributes {dimension_semantics = [], scalar_prefetch = 0 : i64, scratch_operands = 1 : i64, tpu.core_type = #tpu.core_type<tc>} {
    %0 = tpu.iota {dimensions = array<i32: 1>} : vector<6x20xi32>
    %c0 = arith.constant 0 : index
    %c0_0 = arith.constant 0 : index
    %c0_1 = arith.constant 0 : index
    %1 = vector.load %arg1[%c0, %c0_0, %c0_1] : memref<2x20x128xf32, #tpu.memory_space<vmem>>, vector<1x20x128xf32>
    %2 = vector.shape_cast %1 : vector<1x20x128xf32> to vector<20x128xf32>
    %c0_2 = arith.constant 0 : index
    %c0_3 = arith.constant 0 : index
    %c0_4 = arith.constant 0 : index
    %c0_5 = arith.constant 0 : index
    %3 = vector.load %arg3[%c0_2, %c0_3, %c0_4, %c0_5] : memref<2x2x32x128xf32, #tpu.memory_space<vmem>>, vector<1x1x32x128xf32>
    %4 = vector.shape_cast %3 : vector<1x1x32x128xf32> to vector<32x128xf32>
    %c0_6 = arith.constant 0 : index
    %c0_7 = arith.constant 0 : index
    %c0_8 = arith.constant 0 : index
    %c0_9 = arith.constant 0 : index
    %5 = vector.load %arg4[%c0_6, %c0_7, %c0_8, %c0_9] : memref<2x2x1x128xf32, #tpu.memory_space<vmem>>, vector<1x1x1x128xf32>
    %6 = vector.shape_cast %5 : vector<1x1x1x128xf32> to vector<1x128xf32>
    %7 = vector.shape_cast %6 : vector<1x128xf32> to vector<1x128xf32>
    %8 = vector.broadcast %7 : vector<1x128xf32> to vector<6x128xf32>
    %c0_10 = arith.constant 0 : index
    %c0_11 = arith.constant 0 : index
    %c0_12 = arith.constant 0 : index
    %9 = vector.load %arg0[%c0_10, %c0_11, %c0_12] : memref<8x6x1xi32, #tpu.memory_space<vmem>>, vector<1x6x1xi32>
    %10 = vector.shape_cast %9 : vector<1x6x1xi32> to vector<6x1xi32>
    %11 = vector.broadcast %10 : vector<6x1xi32> to vector<6x20xi32>
    %12 = arith.cmpi eq, %11, %0 : vector<6x20xi32>
    %13 = arith.extui %12 : vector<6x20xi1> to vector<6x20xi32>
    %14 = arith.sitofp %13 : vector<6x20xi32> to vector<6x20xf32>
    %cst = arith.constant dense<0.000000e+00> : vector<6x128xf32>
    %15 = tpu.matmul %14, %2, %cst {dimension_numbers = #tpu.dot_dimension_numbers<[1], [0], [0], [1], [0, 0, 1, 1], [], []>} : vector<6x20xf32>, vector<20x128xf32>, vector<6x128xf32> -> vector<6x128xf32>
    %16 = arith.addf %15, %8 : vector<6x128xf32>
    %c1 = arith.constant 1 : index
    %c0_13 = arith.constant 0 : index
    %c0_14 = arith.constant 0 : index
    %17 = vector.load %arg0[%c1, %c0_13, %c0_14] : memref<8x6x1xi32, #tpu.memory_space<vmem>>, vector<1x6x1xi32>
    %18 = vector.shape_cast %17 : vector<1x6x1xi32> to vector<6x1xi32>
    %19 = vector.broadcast %18 : vector<6x1xi32> to vector<6x20xi32>
    %20 = arith.cmpi eq, %19, %0 : vector<6x20xi32>
    %21 = arith.extui %20 : vector<6x20xi1> to vector<6x20xi32>
    %22 = arith.sitofp %21 : vector<6x20xi32> to vector<6x20xf32>
    %cst_15 = arith.constant dense<0.000000e+00> : vector<6x128xf32>
    %23 = tpu.matmul %22, %2, %cst_15 {dimension_numbers = #tpu.dot_dimension_numbers<[1], [0], [0], [1], [0, 0, 1, 1], [], []>} : vector<6x20xf32>, vector<20x128xf32>, vector<6x128xf32> -> vector<6x128xf32>
    %24 = arith.addf %23, %8 : vector<6x128xf32>
    %c2 = arith.constant 2 : index
    %c0_16 = arith.constant 0 : index
    %c0_17 = arith.constant 0 : index
    %25 = vector.load %arg0[%c2, %c0_16, %c0_17] : memref<8x6x1xi32, #tpu.memory_space<vmem>>, vector<1x6x1xi32>
    %26 = vector.shape_cast %25 : vector<1x6x1xi32> to vector<6x1xi32>
    %27 = vector.broadcast %26 : vector<6x1xi32> to vector<6x20xi32>
    %28 = arith.cmpi eq, %27, %0 : vector<6x20xi32>
    %29 = arith.extui %28 : vector<6x20xi1> to vector<6x20xi32>
    %30 = arith.sitofp %29 : vector<6x20xi32> to vector<6x20xf32>
    %cst_18 = arith.constant dense<0.000000e+00> : vector<6x128xf32>
    %31 = tpu.matmul %30, %2, %cst_18 {dimension_numbers = #tpu.dot_dimension_numbers<[1], [0], [0], [1], [0, 0, 1, 1], [], []>} : vector<6x20xf32>, vector<20x128xf32>, vector<6x128xf32> -> vector<6x128xf32>
    %32 = arith.addf %31, %8 : vector<6x128xf32>
    %c3 = arith.constant 3 : index
    %c0_19 = arith.constant 0 : index
    %c0_20 = arith.constant 0 : index
    %33 = vector.load %arg0[%c3, %c0_19, %c0_20] : memref<8x6x1xi32, #tpu.memory_space<vmem>>, vector<1x6x1xi32>
    %34 = vector.shape_cast %33 : vector<1x6x1xi32> to vector<6x1xi32>
    %35 = vector.broadcast %34 : vector<6x1xi32> to vector<6x20xi32>
    %36 = arith.cmpi eq, %35, %0 : vector<6x20xi32>
    %37 = arith.extui %36 : vector<6x20xi1> to vector<6x20xi32>
    %38 = arith.sitofp %37 : vector<6x20xi32> to vector<6x20xf32>
    %cst_21 = arith.constant dense<0.000000e+00> : vector<6x128xf32>
    %39 = tpu.matmul %38, %2, %cst_21 {dimension_numbers = #tpu.dot_dimension_numbers<[1], [0], [0], [1], [0, 0, 1, 1], [], []>} : vector<6x20xf32>, vector<20x128xf32>, vector<6x128xf32> -> vector<6x128xf32>
    %40 = arith.addf %39, %8 : vector<6x128xf32>
    %c4 = arith.constant 4 : index
    %c0_22 = arith.constant 0 : index
    %c0_23 = arith.constant 0 : index
    %41 = vector.load %arg0[%c4, %c0_22, %c0_23] : memref<8x6x1xi32, #tpu.memory_space<vmem>>, vector<1x6x1xi32>
    %42 = vector.shape_cast %41 : vector<1x6x1xi32> to vector<6x1xi32>
    %43 = vector.broadcast %42 : vector<6x1xi32> to vector<6x20xi32>
    %44 = arith.cmpi eq, %43, %0 : vector<6x20xi32>
    %45 = arith.extui %44 : vector<6x20xi1> to vector<6x20xi32>
    %46 = arith.sitofp %45 : vector<6x20xi32> to vector<6x20xf32>
    %cst_24 = arith.constant dense<0.000000e+00> : vector<6x128xf32>
    %47 = tpu.matmul %46, %2, %cst_24 {dimension_numbers = #tpu.dot_dimension_numbers<[1], [0], [0], [1], [0, 0, 1, 1], [], []>} : vector<6x20xf32>, vector<20x128xf32>, vector<6x128xf32> -> vector<6x128xf32>
    %48 = arith.addf %47, %8 : vector<6x128xf32>
    %c5 = arith.constant 5 : index
    %c0_25 = arith.constant 0 : index
    %c0_26 = arith.constant 0 : index
    %49 = vector.load %arg0[%c5, %c0_25, %c0_26] : memref<8x6x1xi32, #tpu.memory_space<vmem>>, vector<1x6x1xi32>
    %50 = vector.shape_cast %49 : vector<1x6x1xi32> to vector<6x1xi32>
    %51 = vector.broadcast %50 : vector<6x1xi32> to vector<6x20xi32>
    %52 = arith.cmpi eq, %51, %0 : vector<6x20xi32>
    %53 = arith.extui %52 : vector<6x20xi1> to vector<6x20xi32>
    %54 = arith.sitofp %53 : vector<6x20xi32> to vector<6x20xf32>
    %cst_27 = arith.constant dense<0.000000e+00> : vector<6x128xf32>
    %55 = tpu.matmul %54, %2, %cst_27 {dimension_numbers = #tpu.dot_dimension_numbers<[1], [0], [0], [1], [0, 0, 1, 1], [], []>} : vector<6x20xf32>, vector<20x128xf32>, vector<6x128xf32> -> vector<6x128xf32>
    %56 = arith.addf %55, %8 : vector<6x128xf32>
    %c6 = arith.constant 6 : index
    %c0_28 = arith.constant 0 : index
    %c0_29 = arith.constant 0 : index
    %57 = vector.load %arg0[%c6, %c0_28, %c0_29] : memref<8x6x1xi32, #tpu.memory_space<vmem>>, vector<1x6x1xi32>
    %58 = vector.shape_cast %57 : vector<1x6x1xi32> to vector<6x1xi32>
    %59 = vector.broadcast %58 : vector<6x1xi32> to vector<6x20xi32>
    %60 = arith.cmpi eq, %59, %0 : vector<6x20xi32>
    %61 = arith.extui %60 : vector<6x20xi1> to vector<6x20xi32>
    %62 = arith.sitofp %61 : vector<6x20xi32> to vector<6x20xf32>
    %cst_30 = arith.constant dense<0.000000e+00> : vector<6x128xf32>
    %63 = tpu.matmul %62, %2, %cst_30 {dimension_numbers = #tpu.dot_dimension_numbers<[1], [0], [0], [1], [0, 0, 1, 1], [], []>} : vector<6x20xf32>, vector<20x128xf32>, vector<6x128xf32> -> vector<6x128xf32>
    %64 = arith.addf %63, %8 : vector<6x128xf32>
    %c7 = arith.constant 7 : index
    %c0_31 = arith.constant 0 : index
    %c0_32 = arith.constant 0 : index
    %65 = vector.load %arg0[%c7, %c0_31, %c0_32] : memref<8x6x1xi32, #tpu.memory_space<vmem>>, vector<1x6x1xi32>
    %66 = vector.shape_cast %65 : vector<1x6x1xi32> to vector<6x1xi32>
    %67 = vector.broadcast %66 : vector<6x1xi32> to vector<6x20xi32>
    %68 = arith.cmpi eq, %67, %0 : vector<6x20xi32>
    %69 = arith.extui %68 : vector<6x20xi1> to vector<6x20xi32>
    %70 = arith.sitofp %69 : vector<6x20xi32> to vector<6x20xf32>
    %cst_33 = arith.constant dense<0.000000e+00> : vector<6x128xf32>
    %71 = tpu.matmul %70, %2, %cst_33 {dimension_numbers = #tpu.dot_dimension_numbers<[1], [0], [0], [1], [0, 0, 1, 1], [], []>} : vector<6x20xf32>, vector<20x128xf32>, vector<6x128xf32> -> vector<6x128xf32>
    %72 = arith.addf %71, %8 : vector<6x128xf32>
    %c0_34 = arith.constant 0 : index
    %c0_35 = arith.constant 0 : index
    %c0_36 = arith.constant 0 : index
    %73 = vector.load %arg5[%c0_34, %c0_35, %c0_36] : memref<4x6x32xf32, #tpu.memory_space<vmem>>, vector<1x6x32xf32>
    %74 = vector.shape_cast %73 : vector<1x6x32xf32> to vector<6x32xf32>
    %c0_37 = arith.constant 0 : index
    %c0_38 = arith.constant 0 : index
    %c0_39 = arith.constant 0 : index
    %75 = vector.load %arg6[%c0_37, %c0_38, %c0_39] : memref<4x6x32xf32, #tpu.memory_space<vmem>>, vector<1x6x32xf32>
    %76 = vector.shape_cast %75 : vector<1x6x32xf32> to vector<6x32xf32>
    %cst_40 = arith.constant dense<0.000000e+00> : vector<6x128xf32>
    %77 = tpu.matmul %74, %4, %cst_40 {dimension_numbers = #tpu.dot_dimension_numbers<[1], [0], [0], [1], [0, 0, 1, 1], [], []>} : vector<6x32xf32>, vector<32x128xf32>, vector<6x128xf32> -> vector<6x128xf32>
    %78 = arith.addf %16, %77 : vector<6x128xf32>
    %79 = arith.negf %78 : vector<6x128xf32>
    %80 = math.exp %79 : vector<6x128xf32>
    %cst_41 = arith.constant 1.000000e+00 : f32
    %81 = vector.broadcast %cst_41 : f32 to vector<6x128xf32>
    %82 = arith.addf %81, %80 : vector<6x128xf32>
    %83 = arith.divf %81, %82 : vector<6x128xf32>
    %84 = math.tanh %78 : vector<6x128xf32>
    %85 = vector.extract_strided_slice %83 {offsets = [0, 0], sizes = [6, 32], strides = [1, 1]} : vector<6x128xf32> to vector<6x32xf32>
    %86 = vector.extract_strided_slice %83 {offsets = [0, 32], sizes = [6, 32], strides = [1, 1]} : vector<6x128xf32> to vector<6x32xf32>
    %87 = vector.extract_strided_slice %84 {offsets = [0, 64], sizes = [6, 32], strides = [1, 1]} : vector<6x128xf32> to vector<6x32xf32>
    %88 = vector.extract_strided_slice %83 {offsets = [0, 96], sizes = [6, 32], strides = [1, 1]} : vector<6x128xf32> to vector<6x32xf32>
    %89 = arith.mulf %86, %76 : vector<6x32xf32>
    %90 = arith.mulf %85, %87 : vector<6x32xf32>
    %91 = arith.addf %89, %90 : vector<6x32xf32>
    %92 = math.tanh %91 : vector<6x32xf32>
    %93 = arith.mulf %88, %92 : vector<6x32xf32>
    %c0_42 = arith.constant 0 : index
    %c0_43 = arith.constant 0 : index
    %c0_44 = arith.constant 0 : index
    %c0_45 = arith.constant 0 : index
    %c0_46 = arith.constant 0 : index
    %94 = vector.load %arg8[%c0_42, %c0_43, %c0_44, %c0_45, %c0_46] : memref<2x2x8x6x32xf32, #tpu.memory_space<vmem>>, vector<1x1x1x6x32xf32>
    %95 = vector.shape_cast %94 : vector<1x1x1x6x32xf32> to vector<6x32xf32>
    %96 = vector.shape_cast %93 : vector<6x32xf32> to vector<1x1x1x6x32xf32>
    tpu.vector_store %arg8[%c0_42, %c0_43, %c0_44, %c0_45, %c0_46], %96 {strides = array<i32>} : memref<2x2x8x6x32xf32, #tpu.memory_space<vmem>>, vector<1x1x1x6x32xf32>,
    %cst_47 = arith.constant dense<0.000000e+00> : vector<6x128xf32>
    %97 = tpu.matmul %93, %4, %cst_47 {dimension_numbers = #tpu.dot_dimension_numbers<[1], [0], [0], [1], [0, 0, 1, 1], [], []>} : vector<6x32xf32>, vector<32x128xf32>, vector<6x128xf32> -> vector<6x128xf32>
    %98 = arith.addf %24, %97 : vector<6x128xf32>
    %99 = arith.negf %98 : vector<6x128xf32>
    %100 = math.exp %99 : vector<6x128xf32>
    %cst_48 = arith.constant 1.000000e+00 : f32
    %101 = vector.broadcast %cst_48 : f32 to vector<6x128xf32>
    %102 = arith.addf %101, %100 : vector<6x128xf32>
    %103 = arith.divf %101, %102 : vector<6x128xf32>
    %104 = math.tanh %98 : vector<6x128xf32>
    %105 = vector.extract_strided_slice %103 {offsets = [0, 0], sizes = [6, 32], strides = [1, 1]} : vector<6x128xf32> to vector<6x32xf32>
    %106 = vector.extract_strided_slice %103 {offsets = [0, 32], sizes = [6, 32], strides = [1, 1]} : vector<6x128xf32> to vector<6x32xf32>
    %107 = vector.extract_strided_slice %104 {offsets = [0, 64], sizes = [6, 32], strides = [1, 1]} : vector<6x128xf32> to vector<6x32xf32>
    %108 = vector.extract_strided_slice %103 {offsets = [0, 96], sizes = [6, 32], strides = [1, 1]} : vector<6x128xf32> to vector<6x32xf32>
    %109 = arith.mulf %106, %91 : vector<6x32xf32>
    %110 = arith.mulf %105, %107 : vector<6x32xf32>
    %111 = arith.addf %109, %110 : vector<6x32xf32>
    %112 = math.tanh %111 : vector<6x32xf32>
    %113 = arith.mulf %108, %112 : vector<6x32xf32>
    %c0_49 = arith.constant 0 : index
    %c0_50 = arith.constant 0 : index
    %c1_51 = arith.constant 1 : index
    %c0_52 = arith.constant 0 : index
    %c0_53 = arith.constant 0 : index
    %114 = vector.load %arg8[%c0_49, %c0_50, %c1_51, %c0_52, %c0_53] : memref<2x2x8x6x32xf32, #tpu.memory_space<vmem>>, vector<1x1x1x6x32xf32>
    %115 = vector.shape_cast %114 : vector<1x1x1x6x32xf32> to vector<6x32xf32>
    %116 = vector.shape_cast %113 : vector<6x32xf32> to vector<1x1x1x6x32xf32>
    tpu.vector_store %arg8[%c0_49, %c0_50, %c1_51, %c0_52, %c0_53], %116 {strides = array<i32>} : memref<2x2x8x6x32xf32, #tpu.memory_space<vmem>>, vector<1x1x1x6x32xf32>,
    %cst_54 = arith.constant dense<0.000000e+00> : vector<6x128xf32>
    %117 = tpu.matmul %113, %4, %cst_54 {dimension_numbers = #tpu.dot_dimension_numbers<[1], [0], [0], [1], [0, 0, 1, 1], [], []>} : vector<6x32xf32>, vector<32x128xf32>, vector<6x128xf32> -> vector<6x128xf32>
    %118 = arith.addf %32, %117 : vector<6x128xf32>
    %119 = arith.negf %118 : vector<6x128xf32>
    %120 = math.exp %119 : vector<6x128xf32>
    %cst_55 = arith.constant 1.000000e+00 : f32
    %121 = vector.broadcast %cst_55 : f32 to vector<6x128xf32>
    %122 = arith.addf %121, %120 : vector<6x128xf32>
    %123 = arith.divf %121, %122 : vector<6x128xf32>
    %124 = math.tanh %118 : vector<6x128xf32>
    %125 = vector.extract_strided_slice %123 {offsets = [0, 0], sizes = [6, 32], strides = [1, 1]} : vector<6x128xf32> to vector<6x32xf32>
    %126 = vector.extract_strided_slice %123 {offsets = [0, 32], sizes = [6, 32], strides = [1, 1]} : vector<6x128xf32> to vector<6x32xf32>
    %127 = vector.extract_strided_slice %124 {offsets = [0, 64], sizes = [6, 32], strides = [1, 1]} : vector<6x128xf32> to vector<6x32xf32>
    %128 = vector.extract_strided_slice %123 {offsets = [0, 96], sizes = [6, 32], strides = [1, 1]} : vector<6x128xf32> to vector<6x32xf32>
    %129 = arith.mulf %126, %111 : vector<6x32xf32>
    %130 = arith.mulf %125, %127 : vector<6x32xf32>
    %131 = arith.addf %129, %130 : vector<6x32xf32>
    %132 = math.tanh %131 : vector<6x32xf32>
    %133 = arith.mulf %128, %132 : vector<6x32xf32>
    %c0_56 = arith.constant 0 : index
    %c0_57 = arith.constant 0 : index
    %c2_58 = arith.constant 2 : index
    %c0_59 = arith.constant 0 : index
    %c0_60 = arith.constant 0 : index
    %134 = vector.load %arg8[%c0_56, %c0_57, %c2_58, %c0_59, %c0_60] : memref<2x2x8x6x32xf32, #tpu.memory_space<vmem>>, vector<1x1x1x6x32xf32>
    %135 = vector.shape_cast %134 : vector<1x1x1x6x32xf32> to vector<6x32xf32>
    %136 = vector.shape_cast %133 : vector<6x32xf32> to vector<1x1x1x6x32xf32>
    tpu.vector_store %arg8[%c0_56, %c0_57, %c2_58, %c0_59, %c0_60], %136 {strides = array<i32>} : memref<2x2x8x6x32xf32, #tpu.memory_space<vmem>>, vector<1x1x1x6x32xf32>,
    %cst_61 = arith.constant dense<0.000000e+00> : vector<6x128xf32>
    %137 = tpu.matmul %133, %4, %cst_61 {dimension_numbers = #tpu.dot_dimension_numbers<[1], [0], [0], [1], [0, 0, 1, 1], [], []>} : vector<6x32xf32>, vector<32x128xf32>, vector<6x128xf32> -> vector<6x128xf32>
    %138 = arith.addf %40, %137 : vector<6x128xf32>
    %139 = arith.negf %138 : vector<6x128xf32>
    %140 = math.exp %139 : vector<6x128xf32>
    %cst_62 = arith.constant 1.000000e+00 : f32
    %141 = vector.broadcast %cst_62 : f32 to vector<6x128xf32>
    %142 = arith.addf %141, %140 : vector<6x128xf32>
    %143 = arith.divf %141, %142 : vector<6x128xf32>
    %144 = math.tanh %138 : vector<6x128xf32>
    %145 = vector.extract_strided_slice %143 {offsets = [0, 0], sizes = [6, 32], strides = [1, 1]} : vector<6x128xf32> to vector<6x32xf32>
    %146 = vector.extract_strided_slice %143 {offsets = [0, 32], sizes = [6, 32], strides = [1, 1]} : vector<6x128xf32> to vector<6x32xf32>
    %147 = vector.extract_strided_slice %144 {offsets = [0, 64], sizes = [6, 32], strides = [1, 1]} : vector<6x128xf32> to vector<6x32xf32>
    %148 = vector.extract_strided_slice %143 {offsets = [0, 96], sizes = [6, 32], strides = [1, 1]} : vector<6x128xf32> to vector<6x32xf32>
    %149 = arith.mulf %146, %131 : vector<6x32xf32>
    %150 = arith.mulf %145, %147 : vector<6x32xf32>
    %151 = arith.addf %149, %150 : vector<6x32xf32>
    %152 = math.tanh %151 : vector<6x32xf32>
    %153 = arith.mulf %148, %152 : vector<6x32xf32>
    %c0_63 = arith.constant 0 : index
    %c0_64 = arith.constant 0 : index
    %c3_65 = arith.constant 3 : index
    %c0_66 = arith.constant 0 : index
    %c0_67 = arith.constant 0 : index
    %154 = vector.load %arg8[%c0_63, %c0_64, %c3_65, %c0_66, %c0_67] : memref<2x2x8x6x32xf32, #tpu.memory_space<vmem>>, vector<1x1x1x6x32xf32>
    %155 = vector.shape_cast %154 : vector<1x1x1x6x32xf32> to vector<6x32xf32>
    %156 = vector.shape_cast %153 : vector<6x32xf32> to vector<1x1x1x6x32xf32>
    tpu.vector_store %arg8[%c0_63, %c0_64, %c3_65, %c0_66, %c0_67], %156 {strides = array<i32>} : memref<2x2x8x6x32xf32, #tpu.memory_space<vmem>>, vector<1x1x1x6x32xf32>,
    %cst_68 = arith.constant dense<0.000000e+00> : vector<6x128xf32>
    %157 = tpu.matmul %153, %4, %cst_68 {dimension_numbers = #tpu.dot_dimension_numbers<[1], [0], [0], [1], [0, 0, 1, 1], [], []>} : vector<6x32xf32>, vector<32x128xf32>, vector<6x128xf32> -> vector<6x128xf32>
    %158 = arith.addf %48, %157 : vector<6x128xf32>
    %159 = arith.negf %158 : vector<6x128xf32>
    %160 = math.exp %159 : vector<6x128xf32>
    %cst_69 = arith.constant 1.000000e+00 : f32
    %161 = vector.broadcast %cst_69 : f32 to vector<6x128xf32>
    %162 = arith.addf %161, %160 : vector<6x128xf32>
    %163 = arith.divf %161, %162 : vector<6x128xf32>
    %164 = math.tanh %158 : vector<6x128xf32>
    %165 = vector.extract_strided_slice %163 {offsets = [0, 0], sizes = [6, 32], strides = [1, 1]} : vector<6x128xf32> to vector<6x32xf32>
    %166 = vector.extract_strided_slice %163 {offsets = [0, 32], sizes = [6, 32], strides = [1, 1]} : vector<6x128xf32> to vector<6x32xf32>
    %167 = vector.extract_strided_slice %164 {offsets = [0, 64], sizes = [6, 32], strides = [1, 1]} : vector<6x128xf32> to vector<6x32xf32>
    %168 = vector.extract_strided_slice %163 {offsets = [0, 96], sizes = [6, 32], strides = [1, 1]} : vector<6x128xf32> to vector<6x32xf32>
    %169 = arith.mulf %166, %151 : vector<6x32xf32>
    %170 = arith.mulf %165, %167 : vector<6x32xf32>
    %171 = arith.addf %169, %170 : vector<6x32xf32>
    %172 = math.tanh %171 : vector<6x32xf32>
    %173 = arith.mulf %168, %172 : vector<6x32xf32>
    %c0_70 = arith.constant 0 : index
    %c0_71 = arith.constant 0 : index
    %c4_72 = arith.constant 4 : index
    %c0_73 = arith.constant 0 : index
    %c0_74 = arith.constant 0 : index
    %174 = vector.load %arg8[%c0_70, %c0_71, %c4_72, %c0_73, %c0_74] : memref<2x2x8x6x32xf32, #tpu.memory_space<vmem>>, vector<1x1x1x6x32xf32>
    %175 = vector.shape_cast %174 : vector<1x1x1x6x32xf32> to vector<6x32xf32>
    %176 = vector.shape_cast %173 : vector<6x32xf32> to vector<1x1x1x6x32xf32>
    tpu.vector_store %arg8[%c0_70, %c0_71, %c4_72, %c0_73, %c0_74], %176 {strides = array<i32>} : memref<2x2x8x6x32xf32, #tpu.memory_space<vmem>>, vector<1x1x1x6x32xf32>,
    %cst_75 = arith.constant dense<0.000000e+00> : vector<6x128xf32>
    %177 = tpu.matmul %173, %4, %cst_75 {dimension_numbers = #tpu.dot_dimension_numbers<[1], [0], [0], [1], [0, 0, 1, 1], [], []>} : vector<6x32xf32>, vector<32x128xf32>, vector<6x128xf32> -> vector<6x128xf32>
    %178 = arith.addf %56, %177 : vector<6x128xf32>
    %179 = arith.negf %178 : vector<6x128xf32>
    %180 = math.exp %179 : vector<6x128xf32>
    %cst_76 = arith.constant 1.000000e+00 : f32
    %181 = vector.broadcast %cst_76 : f32 to vector<6x128xf32>
    %182 = arith.addf %181, %180 : vector<6x128xf32>
    %183 = arith.divf %181, %182 : vector<6x128xf32>
    %184 = math.tanh %178 : vector<6x128xf32>
    %185 = vector.extract_strided_slice %183 {offsets = [0, 0], sizes = [6, 32], strides = [1, 1]} : vector<6x128xf32> to vector<6x32xf32>
    %186 = vector.extract_strided_slice %183 {offsets = [0, 32], sizes = [6, 32], strides = [1, 1]} : vector<6x128xf32> to vector<6x32xf32>
    %187 = vector.extract_strided_slice %184 {offsets = [0, 64], sizes = [6, 32], strides = [1, 1]} : vector<6x128xf32> to vector<6x32xf32>
    %188 = vector.extract_strided_slice %183 {offsets = [0, 96], sizes = [6, 32], strides = [1, 1]} : vector<6x128xf32> to vector<6x32xf32>
    %189 = arith.mulf %186, %171 : vector<6x32xf32>
    %190 = arith.mulf %185, %187 : vector<6x32xf32>
    %191 = arith.addf %189, %190 : vector<6x32xf32>
    %192 = math.tanh %191 : vector<6x32xf32>
    %193 = arith.mulf %188, %192 : vector<6x32xf32>
    %c0_77 = arith.constant 0 : index
    %c0_78 = arith.constant 0 : index
    %c5_79 = arith.constant 5 : index
    %c0_80 = arith.constant 0 : index
    %c0_81 = arith.constant 0 : index
    %194 = vector.load %arg8[%c0_77, %c0_78, %c5_79, %c0_80, %c0_81] : memref<2x2x8x6x32xf32, #tpu.memory_space<vmem>>, vector<1x1x1x6x32xf32>
    %195 = vector.shape_cast %194 : vector<1x1x1x6x32xf32> to vector<6x32xf32>
    %196 = vector.shape_cast %193 : vector<6x32xf32> to vector<1x1x1x6x32xf32>
    tpu.vector_store %arg8[%c0_77, %c0_78, %c5_79, %c0_80, %c0_81], %196 {strides = array<i32>} : memref<2x2x8x6x32xf32, #tpu.memory_space<vmem>>, vector<1x1x1x6x32xf32>,
    %cst_82 = arith.constant dense<0.000000e+00> : vector<6x128xf32>
    %197 = tpu.matmul %193, %4, %cst_82 {dimension_numbers = #tpu.dot_dimension_numbers<[1], [0], [0], [1], [0, 0, 1, 1], [], []>} : vector<6x32xf32>, vector<32x128xf32>, vector<6x128xf32> -> vector<6x128xf32>
    %198 = arith.addf %64, %197 : vector<6x128xf32>
    %199 = arith.negf %198 : vector<6x128xf32>
    %200 = math.exp %199 : vector<6x128xf32>
    %cst_83 = arith.constant 1.000000e+00 : f32
    %201 = vector.broadcast %cst_83 : f32 to vector<6x128xf32>
    %202 = arith.addf %201, %200 : vector<6x128xf32>
    %203 = arith.divf %201, %202 : vector<6x128xf32>
    %204 = math.tanh %198 : vector<6x128xf32>
    %205 = vector.extract_strided_slice %203 {offsets = [0, 0], sizes = [6, 32], strides = [1, 1]} : vector<6x128xf32> to vector<6x32xf32>
    %206 = vector.extract_strided_slice %203 {offsets = [0, 32], sizes = [6, 32], strides = [1, 1]} : vector<6x128xf32> to vector<6x32xf32>
    %207 = vector.extract_strided_slice %204 {offsets = [0, 64], sizes = [6, 32], strides = [1, 1]} : vector<6x128xf32> to vector<6x32xf32>
    %208 = vector.extract_strided_slice %203 {offsets = [0, 96], sizes = [6, 32], strides = [1, 1]} : vector<6x128xf32> to vector<6x32xf32>
    %209 = arith.mulf %206, %191 : vector<6x32xf32>
    %210 = arith.mulf %205, %207 : vector<6x32xf32>
    %211 = arith.addf %209, %210 : vector<6x32xf32>
    %212 = math.tanh %211 : vector<6x32xf32>
    %213 = arith.mulf %208, %212 : vector<6x32xf32>
    %c0_84 = arith.constant 0 : index
    %c0_85 = arith.constant 0 : index
    %c6_86 = arith.constant 6 : index
    %c0_87 = arith.constant 0 : index
    %c0_88 = arith.constant 0 : index
    %214 = vector.load %arg8[%c0_84, %c0_85, %c6_86, %c0_87, %c0_88] : memref<2x2x8x6x32xf32, #tpu.memory_space<vmem>>, vector<1x1x1x6x32xf32>
    %215 = vector.shape_cast %214 : vector<1x1x1x6x32xf32> to vector<6x32xf32>
    %216 = vector.shape_cast %213 : vector<6x32xf32> to vector<1x1x1x6x32xf32>
    tpu.vector_store %arg8[%c0_84, %c0_85, %c6_86, %c0_87, %c0_88], %216 {strides = array<i32>} : memref<2x2x8x6x32xf32, #tpu.memory_space<vmem>>, vector<1x1x1x6x32xf32>,
    %cst_89 = arith.constant dense<0.000000e+00> : vector<6x128xf32>
    %217 = tpu.matmul %213, %4, %cst_89 {dimension_numbers = #tpu.dot_dimension_numbers<[1], [0], [0], [1], [0, 0, 1, 1], [], []>} : vector<6x32xf32>, vector<32x128xf32>, vector<6x128xf32> -> vector<6x128xf32>
    %218 = arith.addf %72, %217 : vector<6x128xf32>
    %219 = arith.negf %218 : vector<6x128xf32>
    %220 = math.exp %219 : vector<6x128xf32>
    %cst_90 = arith.constant 1.000000e+00 : f32
    %221 = vector.broadcast %cst_90 : f32 to vector<6x128xf32>
    %222 = arith.addf %221, %220 : vector<6x128xf32>
    %223 = arith.divf %221, %222 : vector<6x128xf32>
    %224 = math.tanh %218 : vector<6x128xf32>
    %225 = vector.extract_strided_slice %223 {offsets = [0, 0], sizes = [6, 32], strides = [1, 1]} : vector<6x128xf32> to vector<6x32xf32>
    %226 = vector.extract_strided_slice %223 {offsets = [0, 32], sizes = [6, 32], strides = [1, 1]} : vector<6x128xf32> to vector<6x32xf32>
    %227 = vector.extract_strided_slice %224 {offsets = [0, 64], sizes = [6, 32], strides = [1, 1]} : vector<6x128xf32> to vector<6x32xf32>
    %228 = vector.extract_strided_slice %223 {offsets = [0, 96], sizes = [6, 32], strides = [1, 1]} : vector<6x128xf32> to vector<6x32xf32>
    %229 = arith.mulf %226, %211 : vector<6x32xf32>
    %230 = arith.mulf %225, %227 : vector<6x32xf32>
    %231 = arith.addf %229, %230 : vector<6x32xf32>
    %232 = math.tanh %231 : vector<6x32xf32>
    %233 = arith.mulf %228, %232 : vector<6x32xf32>
    %c0_91 = arith.constant 0 : index
    %c0_92 = arith.constant 0 : index
    %c7_93 = arith.constant 7 : index
    %c0_94 = arith.constant 0 : index
    %c0_95 = arith.constant 0 : index
    %234 = vector.load %arg8[%c0_91, %c0_92, %c7_93, %c0_94, %c0_95] : memref<2x2x8x6x32xf32, #tpu.memory_space<vmem>>, vector<1x1x1x6x32xf32>
    %235 = vector.shape_cast %234 : vector<1x1x1x6x32xf32> to vector<6x32xf32>
    %236 = vector.shape_cast %233 : vector<6x32xf32> to vector<1x1x1x6x32xf32>
    tpu.vector_store %arg8[%c0_91, %c0_92, %c7_93, %c0_94, %c0_95], %236 {strides = array<i32>} : memref<2x2x8x6x32xf32, #tpu.memory_space<vmem>>, vector<1x1x1x6x32xf32>,
    %c1_96 = arith.constant 1 : index
    %c0_97 = arith.constant 0 : index
    %c0_98 = arith.constant 0 : index
    %237 = vector.load %arg1[%c1_96, %c0_97, %c0_98] : memref<2x20x128xf32, #tpu.memory_space<vmem>>, vector<1x20x128xf32>
    %238 = vector.shape_cast %237 : vector<1x20x128xf32> to vector<20x128xf32>
    %c0_99 = arith.constant 0 : index
    %c1_100 = arith.constant 1 : index
    %c0_101 = arith.constant 0 : index
    %c0_102 = arith.constant 0 : index
    %239 = vector.load %arg3[%c0_99, %c1_100, %c0_101, %c0_102] : memref<2x2x32x128xf32, #tpu.memory_space<vmem>>, vector<1x1x32x128xf32>
    %240 = vector.shape_cast %239 : vector<1x1x32x128xf32> to vector<32x128xf32>
    %c0_103 = arith.constant 0 : index
    %c1_104 = arith.constant 1 : index
    %c0_105 = arith.constant 0 : index
    %c0_106 = arith.constant 0 : index
    %241 = vector.load %arg4[%c0_103, %c1_104, %c0_105, %c0_106] : memref<2x2x1x128xf32, #tpu.memory_space<vmem>>, vector<1x1x1x128xf32>
    %242 = vector.shape_cast %241 : vector<1x1x1x128xf32> to vector<1x128xf32>
    %243 = vector.shape_cast %242 : vector<1x128xf32> to vector<1x128xf32>
    %244 = vector.broadcast %243 : vector<1x128xf32> to vector<6x128xf32>
    %c0_107 = arith.constant 0 : index
    %c0_108 = arith.constant 0 : index
    %c0_109 = arith.constant 0 : index
    %245 = vector.load %arg0[%c0_107, %c0_108, %c0_109] : memref<8x6x1xi32, #tpu.memory_space<vmem>>, vector<1x6x1xi32>
    %246 = vector.shape_cast %245 : vector<1x6x1xi32> to vector<6x1xi32>
    %247 = vector.broadcast %246 : vector<6x1xi32> to vector<6x20xi32>
    %248 = arith.cmpi eq, %247, %0 : vector<6x20xi32>
    %249 = arith.extui %248 : vector<6x20xi1> to vector<6x20xi32>
    %250 = arith.sitofp %249 : vector<6x20xi32> to vector<6x20xf32>
    %cst_110 = arith.constant dense<0.000000e+00> : vector<6x128xf32>
    %251 = tpu.matmul %250, %238, %cst_110 {dimension_numbers = #tpu.dot_dimension_numbers<[1], [0], [0], [1], [0, 0, 1, 1], [], []>} : vector<6x20xf32>, vector<20x128xf32>, vector<6x128xf32> -> vector<6x128xf32>
    %252 = arith.addf %251, %244 : vector<6x128xf32>
    %c1_111 = arith.constant 1 : index
    %c0_112 = arith.constant 0 : index
    %c0_113 = arith.constant 0 : index
    %253 = vector.load %arg0[%c1_111, %c0_112, %c0_113] : memref<8x6x1xi32, #tpu.memory_space<vmem>>, vector<1x6x1xi32>
    %254 = vector.shape_cast %253 : vector<1x6x1xi32> to vector<6x1xi32>
    %255 = vector.broadcast %254 : vector<6x1xi32> to vector<6x20xi32>
    %256 = arith.cmpi eq, %255, %0 : vector<6x20xi32>
    %257 = arith.extui %256 : vector<6x20xi1> to vector<6x20xi32>
    %258 = arith.sitofp %257 : vector<6x20xi32> to vector<6x20xf32>
    %cst_114 = arith.constant dense<0.000000e+00> : vector<6x128xf32>
    %259 = tpu.matmul %258, %238, %cst_114 {dimension_numbers = #tpu.dot_dimension_numbers<[1], [0], [0], [1], [0, 0, 1, 1], [], []>} : vector<6x20xf32>, vector<20x128xf32>, vector<6x128xf32> -> vector<6x128xf32>
    %260 = arith.addf %259, %244 : vector<6x128xf32>
    %c2_115 = arith.constant 2 : index
    %c0_116 = arith.constant 0 : index
    %c0_117 = arith.constant 0 : index
    %261 = vector.load %arg0[%c2_115, %c0_116, %c0_117] : memref<8x6x1xi32, #tpu.memory_space<vmem>>, vector<1x6x1xi32>
    %262 = vector.shape_cast %261 : vector<1x6x1xi32> to vector<6x1xi32>
    %263 = vector.broadcast %262 : vector<6x1xi32> to vector<6x20xi32>
    %264 = arith.cmpi eq, %263, %0 : vector<6x20xi32>
    %265 = arith.extui %264 : vector<6x20xi1> to vector<6x20xi32>
    %266 = arith.sitofp %265 : vector<6x20xi32> to vector<6x20xf32>
    %cst_118 = arith.constant dense<0.000000e+00> : vector<6x128xf32>
    %267 = tpu.matmul %266, %238, %cst_118 {dimension_numbers = #tpu.dot_dimension_numbers<[1], [0], [0], [1], [0, 0, 1, 1], [], []>} : vector<6x20xf32>, vector<20x128xf32>, vector<6x128xf32> -> vector<6x128xf32>
    %268 = arith.addf %267, %244 : vector<6x128xf32>
    %c3_119 = arith.constant 3 : index
    %c0_120 = arith.constant 0 : index
    %c0_121 = arith.constant 0 : index
    %269 = vector.load %arg0[%c3_119, %c0_120, %c0_121] : memref<8x6x1xi32, #tpu.memory_space<vmem>>, vector<1x6x1xi32>
    %270 = vector.shape_cast %269 : vector<1x6x1xi32> to vector<6x1xi32>
    %271 = vector.broadcast %270 : vector<6x1xi32> to vector<6x20xi32>
    %272 = arith.cmpi eq, %271, %0 : vector<6x20xi32>
    %273 = arith.extui %272 : vector<6x20xi1> to vector<6x20xi32>
    %274 = arith.sitofp %273 : vector<6x20xi32> to vector<6x20xf32>
    %cst_122 = arith.constant dense<0.000000e+00> : vector<6x128xf32>
    %275 = tpu.matmul %274, %238, %cst_122 {dimension_numbers = #tpu.dot_dimension_numbers<[1], [0], [0], [1], [0, 0, 1, 1], [], []>} : vector<6x20xf32>, vector<20x128xf32>, vector<6x128xf32> -> vector<6x128xf32>
    %276 = arith.addf %275, %244 : vector<6x128xf32>
    %c4_123 = arith.constant 4 : index
    %c0_124 = arith.constant 0 : index
    %c0_125 = arith.constant 0 : index
    %277 = vector.load %arg0[%c4_123, %c0_124, %c0_125] : memref<8x6x1xi32, #tpu.memory_space<vmem>>, vector<1x6x1xi32>
    %278 = vector.shape_cast %277 : vector<1x6x1xi32> to vector<6x1xi32>
    %279 = vector.broadcast %278 : vector<6x1xi32> to vector<6x20xi32>
    %280 = arith.cmpi eq, %279, %0 : vector<6x20xi32>
    %281 = arith.extui %280 : vector<6x20xi1> to vector<6x20xi32>
    %282 = arith.sitofp %281 : vector<6x20xi32> to vector<6x20xf32>
    %cst_126 = arith.constant dense<0.000000e+00> : vector<6x128xf32>
    %283 = tpu.matmul %282, %238, %cst_126 {dimension_numbers = #tpu.dot_dimension_numbers<[1], [0], [0], [1], [0, 0, 1, 1], [], []>} : vector<6x20xf32>, vector<20x128xf32>, vector<6x128xf32> -> vector<6x128xf32>
    %284 = arith.addf %283, %244 : vector<6x128xf32>
    %c5_127 = arith.constant 5 : index
    %c0_128 = arith.constant 0 : index
    %c0_129 = arith.constant 0 : index
    %285 = vector.load %arg0[%c5_127, %c0_128, %c0_129] : memref<8x6x1xi32, #tpu.memory_space<vmem>>, vector<1x6x1xi32>
    %286 = vector.shape_cast %285 : vector<1x6x1xi32> to vector<6x1xi32>
    %287 = vector.broadcast %286 : vector<6x1xi32> to vector<6x20xi32>
    %288 = arith.cmpi eq, %287, %0 : vector<6x20xi32>
    %289 = arith.extui %288 : vector<6x20xi1> to vector<6x20xi32>
    %290 = arith.sitofp %289 : vector<6x20xi32> to vector<6x20xf32>
    %cst_130 = arith.constant dense<0.000000e+00> : vector<6x128xf32>
    %291 = tpu.matmul %290, %238, %cst_130 {dimension_numbers = #tpu.dot_dimension_numbers<[1], [0], [0], [1], [0, 0, 1, 1], [], []>} : vector<6x20xf32>, vector<20x128xf32>, vector<6x128xf32> -> vector<6x128xf32>
    %292 = arith.addf %291, %244 : vector<6x128xf32>
    %c6_131 = arith.constant 6 : index
    %c0_132 = arith.constant 0 : index
    %c0_133 = arith.constant 0 : index
    %293 = vector.load %arg0[%c6_131, %c0_132, %c0_133] : memref<8x6x1xi32, #tpu.memory_space<vmem>>, vector<1x6x1xi32>
    %294 = vector.shape_cast %293 : vector<1x6x1xi32> to vector<6x1xi32>
    %295 = vector.broadcast %294 : vector<6x1xi32> to vector<6x20xi32>
    %296 = arith.cmpi eq, %295, %0 : vector<6x20xi32>
    %297 = arith.extui %296 : vector<6x20xi1> to vector<6x20xi32>
    %298 = arith.sitofp %297 : vector<6x20xi32> to vector<6x20xf32>
    %cst_134 = arith.constant dense<0.000000e+00> : vector<6x128xf32>
    %299 = tpu.matmul %298, %238, %cst_134 {dimension_numbers = #tpu.dot_dimension_numbers<[1], [0], [0], [1], [0, 0, 1, 1], [], []>} : vector<6x20xf32>, vector<20x128xf32>, vector<6x128xf32> -> vector<6x128xf32>
    %300 = arith.addf %299, %244 : vector<6x128xf32>
    %c7_135 = arith.constant 7 : index
    %c0_136 = arith.constant 0 : index
    %c0_137 = arith.constant 0 : index
    %301 = vector.load %arg0[%c7_135, %c0_136, %c0_137] : memref<8x6x1xi32, #tpu.memory_space<vmem>>, vector<1x6x1xi32>
    %302 = vector.shape_cast %301 : vector<1x6x1xi32> to vector<6x1xi32>
    %303 = vector.broadcast %302 : vector<6x1xi32> to vector<6x20xi32>
    %304 = arith.cmpi eq, %303, %0 : vector<6x20xi32>
    %305 = arith.extui %304 : vector<6x20xi1> to vector<6x20xi32>
    %306 = arith.sitofp %305 : vector<6x20xi32> to vector<6x20xf32>
    %cst_138 = arith.constant dense<0.000000e+00> : vector<6x128xf32>
    %307 = tpu.matmul %306, %238, %cst_138 {dimension_numbers = #tpu.dot_dimension_numbers<[1], [0], [0], [1], [0, 0, 1, 1], [], []>} : vector<6x20xf32>, vector<20x128xf32>, vector<6x128xf32> -> vector<6x128xf32>
    %308 = arith.addf %307, %244 : vector<6x128xf32>
    %c1_139 = arith.constant 1 : index
    %c0_140 = arith.constant 0 : index
    %c0_141 = arith.constant 0 : index
    %309 = vector.load %arg5[%c1_139, %c0_140, %c0_141] : memref<4x6x32xf32, #tpu.memory_space<vmem>>, vector<1x6x32xf32>
    %310 = vector.shape_cast %309 : vector<1x6x32xf32> to vector<6x32xf32>
    %c1_142 = arith.constant 1 : index
    %c0_143 = arith.constant 0 : index
    %c0_144 = arith.constant 0 : index
    %311 = vector.load %arg6[%c1_142, %c0_143, %c0_144] : memref<4x6x32xf32, #tpu.memory_space<vmem>>, vector<1x6x32xf32>
    %312 = vector.shape_cast %311 : vector<1x6x32xf32> to vector<6x32xf32>
    %cst_145 = arith.constant dense<0.000000e+00> : vector<6x128xf32>
    %313 = tpu.matmul %310, %240, %cst_145 {dimension_numbers = #tpu.dot_dimension_numbers<[1], [0], [0], [1], [0, 0, 1, 1], [], []>} : vector<6x32xf32>, vector<32x128xf32>, vector<6x128xf32> -> vector<6x128xf32>
    %314 = arith.addf %308, %313 : vector<6x128xf32>
    %315 = arith.negf %314 : vector<6x128xf32>
    %316 = math.exp %315 : vector<6x128xf32>
    %cst_146 = arith.constant 1.000000e+00 : f32
    %317 = vector.broadcast %cst_146 : f32 to vector<6x128xf32>
    %318 = arith.addf %317, %316 : vector<6x128xf32>
    %319 = arith.divf %317, %318 : vector<6x128xf32>
    %320 = math.tanh %314 : vector<6x128xf32>
    %321 = vector.extract_strided_slice %319 {offsets = [0, 0], sizes = [6, 32], strides = [1, 1]} : vector<6x128xf32> to vector<6x32xf32>
    %322 = vector.extract_strided_slice %319 {offsets = [0, 32], sizes = [6, 32], strides = [1, 1]} : vector<6x128xf32> to vector<6x32xf32>
    %323 = vector.extract_strided_slice %320 {offsets = [0, 64], sizes = [6, 32], strides = [1, 1]} : vector<6x128xf32> to vector<6x32xf32>
    %324 = vector.extract_strided_slice %319 {offsets = [0, 96], sizes = [6, 32], strides = [1, 1]} : vector<6x128xf32> to vector<6x32xf32>
    %325 = arith.mulf %322, %312 : vector<6x32xf32>
    %326 = arith.mulf %321, %323 : vector<6x32xf32>
    %327 = arith.addf %325, %326 : vector<6x32xf32>
    %328 = math.tanh %327 : vector<6x32xf32>
    %329 = arith.mulf %324, %328 : vector<6x32xf32>
    %c0_147 = arith.constant 0 : index
    %c1_148 = arith.constant 1 : index
    %c7_149 = arith.constant 7 : index
    %c0_150 = arith.constant 0 : index
    %c0_151 = arith.constant 0 : index
    %330 = vector.load %arg8[%c0_147, %c1_148, %c7_149, %c0_150, %c0_151] : memref<2x2x8x6x32xf32, #tpu.memory_space<vmem>>, vector<1x1x1x6x32xf32>
    %331 = vector.shape_cast %330 : vector<1x1x1x6x32xf32> to vector<6x32xf32>
    %332 = vector.shape_cast %329 : vector<6x32xf32> to vector<1x1x1x6x32xf32>
    tpu.vector_store %arg8[%c0_147, %c1_148, %c7_149, %c0_150, %c0_151], %332 {strides = array<i32>} : memref<2x2x8x6x32xf32, #tpu.memory_space<vmem>>, vector<1x1x1x6x32xf32>,
    %cst_152 = arith.constant dense<0.000000e+00> : vector<6x128xf32>
    %333 = tpu.matmul %329, %240, %cst_152 {dimension_numbers = #tpu.dot_dimension_numbers<[1], [0], [0], [1], [0, 0, 1, 1], [], []>} : vector<6x32xf32>, vector<32x128xf32>, vector<6x128xf32> -> vector<6x128xf32>
    %334 = arith.addf %300, %333 : vector<6x128xf32>
    %335 = arith.negf %334 : vector<6x128xf32>
    %336 = math.exp %335 : vector<6x128xf32>
    %cst_153 = arith.constant 1.000000e+00 : f32
    %337 = vector.broadcast %cst_153 : f32 to vector<6x128xf32>
    %338 = arith.addf %337, %336 : vector<6x128xf32>
    %339 = arith.divf %337, %338 : vector<6x128xf32>
    %340 = math.tanh %334 : vector<6x128xf32>
    %341 = vector.extract_strided_slice %339 {offsets = [0, 0], sizes = [6, 32], strides = [1, 1]} : vector<6x128xf32> to vector<6x32xf32>
    %342 = vector.extract_strided_slice %339 {offsets = [0, 32], sizes = [6, 32], strides = [1, 1]} : vector<6x128xf32> to vector<6x32xf32>
    %343 = vector.extract_strided_slice %340 {offsets = [0, 64], sizes = [6, 32], strides = [1, 1]} : vector<6x128xf32> to vector<6x32xf32>
    %344 = vector.extract_strided_slice %339 {offsets = [0, 96], sizes = [6, 32], strides = [1, 1]} : vector<6x128xf32> to vector<6x32xf32>
    %345 = arith.mulf %342, %327 : vector<6x32xf32>
    %346 = arith.mulf %341, %343 : vector<6x32xf32>
    %347 = arith.addf %345, %346 : vector<6x32xf32>
    %348 = math.tanh %347 : vector<6x32xf32>
    %349 = arith.mulf %344, %348 : vector<6x32xf32>
    %c0_154 = arith.constant 0 : index
    %c1_155 = arith.constant 1 : index
    %c6_156 = arith.constant 6 : index
    %c0_157 = arith.constant 0 : index
    %c0_158 = arith.constant 0 : index
    %350 = vector.load %arg8[%c0_154, %c1_155, %c6_156, %c0_157, %c0_158] : memref<2x2x8x6x32xf32, #tpu.memory_space<vmem>>, vector<1x1x1x6x32xf32>
    %351 = vector.shape_cast %350 : vector<1x1x1x6x32xf32> to vector<6x32xf32>
    %352 = vector.shape_cast %349 : vector<6x32xf32> to vector<1x1x1x6x32xf32>
    tpu.vector_store %arg8[%c0_154, %c1_155, %c6_156, %c0_157, %c0_158], %352 {strides = array<i32>} : memref<2x2x8x6x32xf32, #tpu.memory_space<vmem>>, vector<1x1x1x6x32xf32>,
    %cst_159 = arith.constant dense<0.000000e+00> : vector<6x128xf32>
    %353 = tpu.matmul %349, %240, %cst_159 {dimension_numbers = #tpu.dot_dimension_numbers<[1], [0], [0], [1], [0, 0, 1, 1], [], []>} : vector<6x32xf32>, vector<32x128xf32>, vector<6x128xf32> -> vector<6x128xf32>
    %354 = arith.addf %292, %353 : vector<6x128xf32>
    %355 = arith.negf %354 : vector<6x128xf32>
    %356 = math.exp %355 : vector<6x128xf32>
    %cst_160 = arith.constant 1.000000e+00 : f32
    %357 = vector.broadcast %cst_160 : f32 to vector<6x128xf32>
    %358 = arith.addf %357, %356 : vector<6x128xf32>
    %359 = arith.divf %357, %358 : vector<6x128xf32>
    %360 = math.tanh %354 : vector<6x128xf32>
    %361 = vector.extract_strided_slice %359 {offsets = [0, 0], sizes = [6, 32], strides = [1, 1]} : vector<6x128xf32> to vector<6x32xf32>
    %362 = vector.extract_strided_slice %359 {offsets = [0, 32], sizes = [6, 32], strides = [1, 1]} : vector<6x128xf32> to vector<6x32xf32>
    %363 = vector.extract_strided_slice %360 {offsets = [0, 64], sizes = [6, 32], strides = [1, 1]} : vector<6x128xf32> to vector<6x32xf32>
    %364 = vector.extract_strided_slice %359 {offsets = [0, 96], sizes = [6, 32], strides = [1, 1]} : vector<6x128xf32> to vector<6x32xf32>
    %365 = arith.mulf %362, %347 : vector<6x32xf32>
    %366 = arith.mulf %361, %363 : vector<6x32xf32>
    %367 = arith.addf %365, %366 : vector<6x32xf32>
    %368 = math.tanh %367 : vector<6x32xf32>
    %369 = arith.mulf %364, %368 : vector<6x32xf32>
    %c0_161 = arith.constant 0 : index
    %c1_162 = arith.constant 1 : index
    %c5_163 = arith.constant 5 : index
    %c0_164 = arith.constant 0 : index
    %c0_165 = arith.constant 0 : index
    %370 = vector.load %arg8[%c0_161, %c1_162, %c5_163, %c0_164, %c0_165] : memref<2x2x8x6x32xf32, #tpu.memory_space<vmem>>, vector<1x1x1x6x32xf32>
    %371 = vector.shape_cast %370 : vector<1x1x1x6x32xf32> to vector<6x32xf32>
    %372 = vector.shape_cast %369 : vector<6x32xf32> to vector<1x1x1x6x32xf32>
    tpu.vector_store %arg8[%c0_161, %c1_162, %c5_163, %c0_164, %c0_165], %372 {strides = array<i32>} : memref<2x2x8x6x32xf32, #tpu.memory_space<vmem>>, vector<1x1x1x6x32xf32>,
    %cst_166 = arith.constant dense<0.000000e+00> : vector<6x128xf32>
    %373 = tpu.matmul %369, %240, %cst_166 {dimension_numbers = #tpu.dot_dimension_numbers<[1], [0], [0], [1], [0, 0, 1, 1], [], []>} : vector<6x32xf32>, vector<32x128xf32>, vector<6x128xf32> -> vector<6x128xf32>
    %374 = arith.addf %284, %373 : vector<6x128xf32>
    %375 = arith.negf %374 : vector<6x128xf32>
    %376 = math.exp %375 : vector<6x128xf32>
    %cst_167 = arith.constant 1.000000e+00 : f32
    %377 = vector.broadcast %cst_167 : f32 to vector<6x128xf32>
    %378 = arith.addf %377, %376 : vector<6x128xf32>
    %379 = arith.divf %377, %378 : vector<6x128xf32>
    %380 = math.tanh %374 : vector<6x128xf32>
    %381 = vector.extract_strided_slice %379 {offsets = [0, 0], sizes = [6, 32], strides = [1, 1]} : vector<6x128xf32> to vector<6x32xf32>
    %382 = vector.extract_strided_slice %379 {offsets = [0, 32], sizes = [6, 32], strides = [1, 1]} : vector<6x128xf32> to vector<6x32xf32>
    %383 = vector.extract_strided_slice %380 {offsets = [0, 64], sizes = [6, 32], strides = [1, 1]} : vector<6x128xf32> to vector<6x32xf32>
    %384 = vector.extract_strided_slice %379 {offsets = [0, 96], sizes = [6, 32], strides = [1, 1]} : vector<6x128xf32> to vector<6x32xf32>
    %385 = arith.mulf %382, %367 : vector<6x32xf32>
    %386 = arith.mulf %381, %383 : vector<6x32xf32>
    %387 = arith.addf %385, %386 : vector<6x32xf32>
    %388 = math.tanh %387 : vector<6x32xf32>
    %389 = arith.mulf %384, %388 : vector<6x32xf32>
    %c0_168 = arith.constant 0 : index
    %c1_169 = arith.constant 1 : index
    %c4_170 = arith.constant 4 : index
    %c0_171 = arith.constant 0 : index
    %c0_172 = arith.constant 0 : index
    %390 = vector.load %arg8[%c0_168, %c1_169, %c4_170, %c0_171, %c0_172] : memref<2x2x8x6x32xf32, #tpu.memory_space<vmem>>, vector<1x1x1x6x32xf32>
    %391 = vector.shape_cast %390 : vector<1x1x1x6x32xf32> to vector<6x32xf32>
    %392 = vector.shape_cast %389 : vector<6x32xf32> to vector<1x1x1x6x32xf32>
    tpu.vector_store %arg8[%c0_168, %c1_169, %c4_170, %c0_171, %c0_172], %392 {strides = array<i32>} : memref<2x2x8x6x32xf32, #tpu.memory_space<vmem>>, vector<1x1x1x6x32xf32>,
    %cst_173 = arith.constant dense<0.000000e+00> : vector<6x128xf32>
    %393 = tpu.matmul %389, %240, %cst_173 {dimension_numbers = #tpu.dot_dimension_numbers<[1], [0], [0], [1], [0, 0, 1, 1], [], []>} : vector<6x32xf32>, vector<32x128xf32>, vector<6x128xf32> -> vector<6x128xf32>
    %394 = arith.addf %276, %393 : vector<6x128xf32>
    %395 = arith.negf %394 : vector<6x128xf32>
    %396 = math.exp %395 : vector<6x128xf32>
    %cst_174 = arith.constant 1.000000e+00 : f32
    %397 = vector.broadcast %cst_174 : f32 to vector<6x128xf32>
    %398 = arith.addf %397, %396 : vector<6x128xf32>
    %399 = arith.divf %397, %398 : vector<6x128xf32>
    %400 = math.tanh %394 : vector<6x128xf32>
    %401 = vector.extract_strided_slice %399 {offsets = [0, 0], sizes = [6, 32], strides = [1, 1]} : vector<6x128xf32> to vector<6x32xf32>
    %402 = vector.extract_strided_slice %399 {offsets = [0, 32], sizes = [6, 32], strides = [1, 1]} : vector<6x128xf32> to vector<6x32xf32>
    %403 = vector.extract_strided_slice %400 {offsets = [0, 64], sizes = [6, 32], strides = [1, 1]} : vector<6x128xf32> to vector<6x32xf32>
    %404 = vector.extract_strided_slice %399 {offsets = [0, 96], sizes = [6, 32], strides = [1, 1]} : vector<6x128xf32> to vector<6x32xf32>
    %405 = arith.mulf %402, %387 : vector<6x32xf32>
    %406 = arith.mulf %401, %403 : vector<6x32xf32>
    %407 = arith.addf %405, %406 : vector<6x32xf32>
    %408 = math.tanh %407 : vector<6x32xf32>
    %409 = arith.mulf %404, %408 : vector<6x32xf32>
    %c0_175 = arith.constant 0 : index
    %c1_176 = arith.constant 1 : index
    %c3_177 = arith.constant 3 : index
    %c0_178 = arith.constant 0 : index
    %c0_179 = arith.constant 0 : index
    %410 = vector.load %arg8[%c0_175, %c1_176, %c3_177, %c0_178, %c0_179] : memref<2x2x8x6x32xf32, #tpu.memory_space<vmem>>, vector<1x1x1x6x32xf32>
    %411 = vector.shape_cast %410 : vector<1x1x1x6x32xf32> to vector<6x32xf32>
    %412 = vector.shape_cast %409 : vector<6x32xf32> to vector<1x1x1x6x32xf32>
    tpu.vector_store %arg8[%c0_175, %c1_176, %c3_177, %c0_178, %c0_179], %412 {strides = array<i32>} : memref<2x2x8x6x32xf32, #tpu.memory_space<vmem>>, vector<1x1x1x6x32xf32>,
    %cst_180 = arith.constant dense<0.000000e+00> : vector<6x128xf32>
    %413 = tpu.matmul %409, %240, %cst_180 {dimension_numbers = #tpu.dot_dimension_numbers<[1], [0], [0], [1], [0, 0, 1, 1], [], []>} : vector<6x32xf32>, vector<32x128xf32>, vector<6x128xf32> -> vector<6x128xf32>
    %414 = arith.addf %268, %413 : vector<6x128xf32>
    %415 = arith.negf %414 : vector<6x128xf32>
    %416 = math.exp %415 : vector<6x128xf32>
    %cst_181 = arith.constant 1.000000e+00 : f32
    %417 = vector.broadcast %cst_181 : f32 to vector<6x128xf32>
    %418 = arith.addf %417, %416 : vector<6x128xf32>
    %419 = arith.divf %417, %418 : vector<6x128xf32>
    %420 = math.tanh %414 : vector<6x128xf32>
    %421 = vector.extract_strided_slice %419 {offsets = [0, 0], sizes = [6, 32], strides = [1, 1]} : vector<6x128xf32> to vector<6x32xf32>
    %422 = vector.extract_strided_slice %419 {offsets = [0, 32], sizes = [6, 32], strides = [1, 1]} : vector<6x128xf32> to vector<6x32xf32>
    %423 = vector.extract_strided_slice %420 {offsets = [0, 64], sizes = [6, 32], strides = [1, 1]} : vector<6x128xf32> to vector<6x32xf32>
    %424 = vector.extract_strided_slice %419 {offsets = [0, 96], sizes = [6, 32], strides = [1, 1]} : vector<6x128xf32> to vector<6x32xf32>
    %425 = arith.mulf %422, %407 : vector<6x32xf32>
    %426 = arith.mulf %421, %423 : vector<6x32xf32>
    %427 = arith.addf %425, %426 : vector<6x32xf32>
    %428 = math.tanh %427 : vector<6x32xf32>
    %429 = arith.mulf %424, %428 : vector<6x32xf32>
    %c0_182 = arith.constant 0 : index
    %c1_183 = arith.constant 1 : index
    %c2_184 = arith.constant 2 : index
    %c0_185 = arith.constant 0 : index
    %c0_186 = arith.constant 0 : index
    %430 = vector.load %arg8[%c0_182, %c1_183, %c2_184, %c0_185, %c0_186] : memref<2x2x8x6x32xf32, #tpu.memory_space<vmem>>, vector<1x1x1x6x32xf32>
    %431 = vector.shape_cast %430 : vector<1x1x1x6x32xf32> to vector<6x32xf32>
    %432 = vector.shape_cast %429 : vector<6x32xf32> to vector<1x1x1x6x32xf32>
    tpu.vector_store %arg8[%c0_182, %c1_183, %c2_184, %c0_185, %c0_186], %432 {strides = array<i32>} : memref<2x2x8x6x32xf32, #tpu.memory_space<vmem>>, vector<1x1x1x6x32xf32>,
    %cst_187 = arith.constant dense<0.000000e+00> : vector<6x128xf32>
    %433 = tpu.matmul %429, %240, %cst_187 {dimension_numbers = #tpu.dot_dimension_numbers<[1], [0], [0], [1], [0, 0, 1, 1], [], []>} : vector<6x32xf32>, vector<32x128xf32>, vector<6x128xf32> -> vector<6x128xf32>
    %434 = arith.addf %260, %433 : vector<6x128xf32>
    %435 = arith.negf %434 : vector<6x128xf32>
    %436 = math.exp %435 : vector<6x128xf32>
    %cst_188 = arith.constant 1.000000e+00 : f32
    %437 = vector.broadcast %cst_188 : f32 to vector<6x128xf32>
    %438 = arith.addf %437, %436 : vector<6x128xf32>
    %439 = arith.divf %437, %438 : vector<6x128xf32>
    %440 = math.tanh %434 : vector<6x128xf32>
    %441 = vector.extract_strided_slice %439 {offsets = [0, 0], sizes = [6, 32], strides = [1, 1]} : vector<6x128xf32> to vector<6x32xf32>
    %442 = vector.extract_strided_slice %439 {offsets = [0, 32], sizes = [6, 32], strides = [1, 1]} : vector<6x128xf32> to vector<6x32xf32>
    %443 = vector.extract_strided_slice %440 {offsets = [0, 64], sizes = [6, 32], strides = [1, 1]} : vector<6x128xf32> to vector<6x32xf32>
    %444 = vector.extract_strided_slice %439 {offsets = [0, 96], sizes = [6, 32], strides = [1, 1]} : vector<6x128xf32> to vector<6x32xf32>
    %445 = arith.mulf %442, %427 : vector<6x32xf32>
    %446 = arith.mulf %441, %443 : vector<6x32xf32>
    %447 = arith.addf %445, %446 : vector<6x32xf32>
    %448 = math.tanh %447 : vector<6x32xf32>
    %449 = arith.mulf %444, %448 : vector<6x32xf32>
    %c0_189 = arith.constant 0 : index
    %c1_190 = arith.constant 1 : index
    %c1_191 = arith.constant 1 : index
    %c0_192 = arith.constant 0 : index
    %c0_193 = arith.constant 0 : index
    %450 = vector.load %arg8[%c0_189, %c1_190, %c1_191, %c0_192, %c0_193] : memref<2x2x8x6x32xf32, #tpu.memory_space<vmem>>, vector<1x1x1x6x32xf32>
    %451 = vector.shape_cast %450 : vector<1x1x1x6x32xf32> to vector<6x32xf32>
    %452 = vector.shape_cast %449 : vector<6x32xf32> to vector<1x1x1x6x32xf32>
    tpu.vector_store %arg8[%c0_189, %c1_190, %c1_191, %c0_192, %c0_193], %452 {strides = array<i32>} : memref<2x2x8x6x32xf32, #tpu.memory_space<vmem>>, vector<1x1x1x6x32xf32>,
    %cst_194 = arith.constant dense<0.000000e+00> : vector<6x128xf32>
    %453 = tpu.matmul %449, %240, %cst_194 {dimension_numbers = #tpu.dot_dimension_numbers<[1], [0], [0], [1], [0, 0, 1, 1], [], []>} : vector<6x32xf32>, vector<32x128xf32>, vector<6x128xf32> -> vector<6x128xf32>
    %454 = arith.addf %252, %453 : vector<6x128xf32>
    %455 = arith.negf %454 : vector<6x128xf32>
    %456 = math.exp %455 : vector<6x128xf32>
    %cst_195 = arith.constant 1.000000e+00 : f32
    %457 = vector.broadcast %cst_195 : f32 to vector<6x128xf32>
    %458 = arith.addf %457, %456 : vector<6x128xf32>
    %459 = arith.divf %457, %458 : vector<6x128xf32>
    %460 = math.tanh %454 : vector<6x128xf32>
    %461 = vector.extract_strided_slice %459 {offsets = [0, 0], sizes = [6, 32], strides = [1, 1]} : vector<6x128xf32> to vector<6x32xf32>
    %462 = vector.extract_strided_slice %459 {offsets = [0, 32], sizes = [6, 32], strides = [1, 1]} : vector<6x128xf32> to vector<6x32xf32>
    %463 = vector.extract_strided_slice %460 {offsets = [0, 64], sizes = [6, 32], strides = [1, 1]} : vector<6x128xf32> to vector<6x32xf32>
    %464 = vector.extract_strided_slice %459 {offsets = [0, 96], sizes = [6, 32], strides = [1, 1]} : vector<6x128xf32> to vector<6x32xf32>
    %465 = arith.mulf %462, %447 : vector<6x32xf32>
    %466 = arith.mulf %461, %463 : vector<6x32xf32>
    %467 = arith.addf %465, %466 : vector<6x32xf32>
    %468 = math.tanh %467 : vector<6x32xf32>
    %469 = arith.mulf %464, %468 : vector<6x32xf32>
    %c0_196 = arith.constant 0 : index
    %c1_197 = arith.constant 1 : index
    %c0_198 = arith.constant 0 : index
    %c0_199 = arith.constant 0 : index
    %c0_200 = arith.constant 0 : index
    %470 = vector.load %arg8[%c0_196, %c1_197, %c0_198, %c0_199, %c0_200] : memref<2x2x8x6x32xf32, #tpu.memory_space<vmem>>, vector<1x1x1x6x32xf32>
    %471 = vector.shape_cast %470 : vector<1x1x1x6x32xf32> to vector<6x32xf32>
    %472 = vector.shape_cast %469 : vector<6x32xf32> to vector<1x1x1x6x32xf32>
    tpu.vector_store %arg8[%c0_196, %c1_197, %c0_198, %c0_199, %c0_200], %472 {strides = array<i32>} : memref<2x2x8x6x32xf32, #tpu.memory_space<vmem>>, vector<1x1x1x6x32xf32>,
    %c0_201 = arith.constant 0 : index
    %c0_202 = arith.constant 0 : index
    %c0_203 = arith.constant 0 : index
    %473 = vector.load %arg2[%c0_201, %c0_202, %c0_203] : memref<2x64x128xf32, #tpu.memory_space<vmem>>, vector<1x64x128xf32>
    %474 = vector.shape_cast %473 : vector<1x64x128xf32> to vector<64x128xf32>
    %c1_204 = arith.constant 1 : index
    %c0_205 = arith.constant 0 : index
    %c0_206 = arith.constant 0 : index
    %c0_207 = arith.constant 0 : index
    %475 = vector.load %arg3[%c1_204, %c0_205, %c0_206, %c0_207] : memref<2x2x32x128xf32, #tpu.memory_space<vmem>>, vector<1x1x32x128xf32>
    %476 = vector.shape_cast %475 : vector<1x1x32x128xf32> to vector<32x128xf32>
    %c1_208 = arith.constant 1 : index
    %c0_209 = arith.constant 0 : index
    %c0_210 = arith.constant 0 : index
    %c0_211 = arith.constant 0 : index
    %477 = vector.load %arg4[%c1_208, %c0_209, %c0_210, %c0_211] : memref<2x2x1x128xf32, #tpu.memory_space<vmem>>, vector<1x1x1x128xf32>
    %478 = vector.shape_cast %477 : vector<1x1x1x128xf32> to vector<1x128xf32>
    %479 = vector.shape_cast %478 : vector<1x128xf32> to vector<1x128xf32>
    %480 = vector.broadcast %479 : vector<1x128xf32> to vector<6x128xf32>
    %c0_212 = arith.constant 0 : index
    %c0_213 = arith.constant 0 : index
    %c0_214 = arith.constant 0 : index
    %c0_215 = arith.constant 0 : index
    %c0_216 = arith.constant 0 : index
    %481 = vector.load %arg8[%c0_212, %c0_213, %c0_214, %c0_215, %c0_216] : memref<2x2x8x6x32xf32, #tpu.memory_space<vmem>>, vector<1x1x1x6x32xf32>
    %482 = vector.shape_cast %481 : vector<1x1x1x6x32xf32> to vector<6x32xf32>
    %c0_217 = arith.constant 0 : index
    %c1_218 = arith.constant 1 : index
    %c0_219 = arith.constant 0 : index
    %c0_220 = arith.constant 0 : index
    %c0_221 = arith.constant 0 : index
    %483 = vector.load %arg8[%c0_217, %c1_218, %c0_219, %c0_220, %c0_221] : memref<2x2x8x6x32xf32, #tpu.memory_space<vmem>>, vector<1x1x1x6x32xf32>
    %484 = vector.shape_cast %483 : vector<1x1x1x6x32xf32> to vector<6x32xf32>
    %485 = tpu.concatenate %482, %484 in 1 : vector<6x32xf32>, vector<6x32xf32> -> vector<6x64xf32>
    %cst_222 = arith.constant dense<0.000000e+00> : vector<6x128xf32>
    %486 = tpu.matmul %485, %474, %cst_222 {dimension_numbers = #tpu.dot_dimension_numbers<[1], [0], [0], [1], [0, 0, 1, 1], [], []>} : vector<6x64xf32>, vector<64x128xf32>, vector<6x128xf32> -> vector<6x128xf32>
    %487 = arith.addf %486, %480 : vector<6x128xf32>
    %c0_223 = arith.constant 0 : index
    %c0_224 = arith.constant 0 : index
    %c1_225 = arith.constant 1 : index
    %c0_226 = arith.constant 0 : index
    %c0_227 = arith.constant 0 : index
    %488 = vector.load %arg8[%c0_223, %c0_224, %c1_225, %c0_226, %c0_227] : memref<2x2x8x6x32xf32, #tpu.memory_space<vmem>>, vector<1x1x1x6x32xf32>
    %489 = vector.shape_cast %488 : vector<1x1x1x6x32xf32> to vector<6x32xf32>
    %c0_228 = arith.constant 0 : index
    %c1_229 = arith.constant 1 : index
    %c1_230 = arith.constant 1 : index
    %c0_231 = arith.constant 0 : index
    %c0_232 = arith.constant 0 : index
    %490 = vector.load %arg8[%c0_228, %c1_229, %c1_230, %c0_231, %c0_232] : memref<2x2x8x6x32xf32, #tpu.memory_space<vmem>>, vector<1x1x1x6x32xf32>
    %491 = vector.shape_cast %490 : vector<1x1x1x6x32xf32> to vector<6x32xf32>
    %492 = tpu.concatenate %489, %491 in 1 : vector<6x32xf32>, vector<6x32xf32> -> vector<6x64xf32>
    %cst_233 = arith.constant dense<0.000000e+00> : vector<6x128xf32>
    %493 = tpu.matmul %492, %474, %cst_233 {dimension_numbers = #tpu.dot_dimension_numbers<[1], [0], [0], [1], [0, 0, 1, 1], [], []>} : vector<6x64xf32>, vector<64x128xf32>, vector<6x128xf32> -> vector<6x128xf32>
    %494 = arith.addf %493, %480 : vector<6x128xf32>
    %c0_234 = arith.constant 0 : index
    %c0_235 = arith.constant 0 : index
    %c2_236 = arith.constant 2 : index
    %c0_237 = arith.constant 0 : index
    %c0_238 = arith.constant 0 : index
    %495 = vector.load %arg8[%c0_234, %c0_235, %c2_236, %c0_237, %c0_238] : memref<2x2x8x6x32xf32, #tpu.memory_space<vmem>>, vector<1x1x1x6x32xf32>
    %496 = vector.shape_cast %495 : vector<1x1x1x6x32xf32> to vector<6x32xf32>
    %c0_239 = arith.constant 0 : index
    %c1_240 = arith.constant 1 : index
    %c2_241 = arith.constant 2 : index
    %c0_242 = arith.constant 0 : index
    %c0_243 = arith.constant 0 : index
    %497 = vector.load %arg8[%c0_239, %c1_240, %c2_241, %c0_242, %c0_243] : memref<2x2x8x6x32xf32, #tpu.memory_space<vmem>>, vector<1x1x1x6x32xf32>
    %498 = vector.shape_cast %497 : vector<1x1x1x6x32xf32> to vector<6x32xf32>
    %499 = tpu.concatenate %496, %498 in 1 : vector<6x32xf32>, vector<6x32xf32> -> vector<6x64xf32>
    %cst_244 = arith.constant dense<0.000000e+00> : vector<6x128xf32>
    %500 = tpu.matmul %499, %474, %cst_244 {dimension_numbers = #tpu.dot_dimension_numbers<[1], [0], [0], [1], [0, 0, 1, 1], [], []>} : vector<6x64xf32>, vector<64x128xf32>, vector<6x128xf32> -> vector<6x128xf32>
    %501 = arith.addf %500, %480 : vector<6x128xf32>
    %c0_245 = arith.constant 0 : index
    %c0_246 = arith.constant 0 : index
    %c3_247 = arith.constant 3 : index
    %c0_248 = arith.constant 0 : index
    %c0_249 = arith.constant 0 : index
    %502 = vector.load %arg8[%c0_245, %c0_246, %c3_247, %c0_248, %c0_249] : memref<2x2x8x6x32xf32, #tpu.memory_space<vmem>>, vector<1x1x1x6x32xf32>
    %503 = vector.shape_cast %502 : vector<1x1x1x6x32xf32> to vector<6x32xf32>
    %c0_250 = arith.constant 0 : index
    %c1_251 = arith.constant 1 : index
    %c3_252 = arith.constant 3 : index
    %c0_253 = arith.constant 0 : index
    %c0_254 = arith.constant 0 : index
    %504 = vector.load %arg8[%c0_250, %c1_251, %c3_252, %c0_253, %c0_254] : memref<2x2x8x6x32xf32, #tpu.memory_space<vmem>>, vector<1x1x1x6x32xf32>
    %505 = vector.shape_cast %504 : vector<1x1x1x6x32xf32> to vector<6x32xf32>
    %506 = tpu.concatenate %503, %505 in 1 : vector<6x32xf32>, vector<6x32xf32> -> vector<6x64xf32>
    %cst_255 = arith.constant dense<0.000000e+00> : vector<6x128xf32>
    %507 = tpu.matmul %506, %474, %cst_255 {dimension_numbers = #tpu.dot_dimension_numbers<[1], [0], [0], [1], [0, 0, 1, 1], [], []>} : vector<6x64xf32>, vector<64x128xf32>, vector<6x128xf32> -> vector<6x128xf32>
    %508 = arith.addf %507, %480 : vector<6x128xf32>
    %c0_256 = arith.constant 0 : index
    %c0_257 = arith.constant 0 : index
    %c4_258 = arith.constant 4 : index
    %c0_259 = arith.constant 0 : index
    %c0_260 = arith.constant 0 : index
    %509 = vector.load %arg8[%c0_256, %c0_257, %c4_258, %c0_259, %c0_260] : memref<2x2x8x6x32xf32, #tpu.memory_space<vmem>>, vector<1x1x1x6x32xf32>
    %510 = vector.shape_cast %509 : vector<1x1x1x6x32xf32> to vector<6x32xf32>
    %c0_261 = arith.constant 0 : index
    %c1_262 = arith.constant 1 : index
    %c4_263 = arith.constant 4 : index
    %c0_264 = arith.constant 0 : index
    %c0_265 = arith.constant 0 : index
    %511 = vector.load %arg8[%c0_261, %c1_262, %c4_263, %c0_264, %c0_265] : memref<2x2x8x6x32xf32, #tpu.memory_space<vmem>>, vector<1x1x1x6x32xf32>
    %512 = vector.shape_cast %511 : vector<1x1x1x6x32xf32> to vector<6x32xf32>
    %513 = tpu.concatenate %510, %512 in 1 : vector<6x32xf32>, vector<6x32xf32> -> vector<6x64xf32>
    %cst_266 = arith.constant dense<0.000000e+00> : vector<6x128xf32>
    %514 = tpu.matmul %513, %474, %cst_266 {dimension_numbers = #tpu.dot_dimension_numbers<[1], [0], [0], [1], [0, 0, 1, 1], [], []>} : vector<6x64xf32>, vector<64x128xf32>, vector<6x128xf32> -> vector<6x128xf32>
    %515 = arith.addf %514, %480 : vector<6x128xf32>
    %c0_267 = arith.constant 0 : index
    %c0_268 = arith.constant 0 : index
    %c5_269 = arith.constant 5 : index
    %c0_270 = arith.constant 0 : index
    %c0_271 = arith.constant 0 : index
    %516 = vector.load %arg8[%c0_267, %c0_268, %c5_269, %c0_270, %c0_271] : memref<2x2x8x6x32xf32, #tpu.memory_space<vmem>>, vector<1x1x1x6x32xf32>
    %517 = vector.shape_cast %516 : vector<1x1x1x6x32xf32> to vector<6x32xf32>
    %c0_272 = arith.constant 0 : index
    %c1_273 = arith.constant 1 : index
    %c5_274 = arith.constant 5 : index
    %c0_275 = arith.constant 0 : index
    %c0_276 = arith.constant 0 : index
    %518 = vector.load %arg8[%c0_272, %c1_273, %c5_274, %c0_275, %c0_276] : memref<2x2x8x6x32xf32, #tpu.memory_space<vmem>>, vector<1x1x1x6x32xf32>
    %519 = vector.shape_cast %518 : vector<1x1x1x6x32xf32> to vector<6x32xf32>
    %520 = tpu.concatenate %517, %519 in 1 : vector<6x32xf32>, vector<6x32xf32> -> vector<6x64xf32>
    %cst_277 = arith.constant dense<0.000000e+00> : vector<6x128xf32>
    %521 = tpu.matmul %520, %474, %cst_277 {dimension_numbers = #tpu.dot_dimension_numbers<[1], [0], [0], [1], [0, 0, 1, 1], [], []>} : vector<6x64xf32>, vector<64x128xf32>, vector<6x128xf32> -> vector<6x128xf32>
    %522 = arith.addf %521, %480 : vector<6x128xf32>
    %c0_278 = arith.constant 0 : index
    %c0_279 = arith.constant 0 : index
    %c6_280 = arith.constant 6 : index
    %c0_281 = arith.constant 0 : index
    %c0_282 = arith.constant 0 : index
    %523 = vector.load %arg8[%c0_278, %c0_279, %c6_280, %c0_281, %c0_282] : memref<2x2x8x6x32xf32, #tpu.memory_space<vmem>>, vector<1x1x1x6x32xf32>
    %524 = vector.shape_cast %523 : vector<1x1x1x6x32xf32> to vector<6x32xf32>
    %c0_283 = arith.constant 0 : index
    %c1_284 = arith.constant 1 : index
    %c6_285 = arith.constant 6 : index
    %c0_286 = arith.constant 0 : index
    %c0_287 = arith.constant 0 : index
    %525 = vector.load %arg8[%c0_283, %c1_284, %c6_285, %c0_286, %c0_287] : memref<2x2x8x6x32xf32, #tpu.memory_space<vmem>>, vector<1x1x1x6x32xf32>
    %526 = vector.shape_cast %525 : vector<1x1x1x6x32xf32> to vector<6x32xf32>
    %527 = tpu.concatenate %524, %526 in 1 : vector<6x32xf32>, vector<6x32xf32> -> vector<6x64xf32>
    %cst_288 = arith.constant dense<0.000000e+00> : vector<6x128xf32>
    %528 = tpu.matmul %527, %474, %cst_288 {dimension_numbers = #tpu.dot_dimension_numbers<[1], [0], [0], [1], [0, 0, 1, 1], [], []>} : vector<6x64xf32>, vector<64x128xf32>, vector<6x128xf32> -> vector<6x128xf32>
    %529 = arith.addf %528, %480 : vector<6x128xf32>
    %c0_289 = arith.constant 0 : index
    %c0_290 = arith.constant 0 : index
    %c7_291 = arith.constant 7 : index
    %c0_292 = arith.constant 0 : index
    %c0_293 = arith.constant 0 : index
    %530 = vector.load %arg8[%c0_289, %c0_290, %c7_291, %c0_292, %c0_293] : memref<2x2x8x6x32xf32, #tpu.memory_space<vmem>>, vector<1x1x1x6x32xf32>
    %531 = vector.shape_cast %530 : vector<1x1x1x6x32xf32> to vector<6x32xf32>
    %c0_294 = arith.constant 0 : index
    %c1_295 = arith.constant 1 : index
    %c7_296 = arith.constant 7 : index
    %c0_297 = arith.constant 0 : index
    %c0_298 = arith.constant 0 : index
    %532 = vector.load %arg8[%c0_294, %c1_295, %c7_296, %c0_297, %c0_298] : memref<2x2x8x6x32xf32, #tpu.memory_space<vmem>>, vector<1x1x1x6x32xf32>
    %533 = vector.shape_cast %532 : vector<1x1x1x6x32xf32> to vector<6x32xf32>
    %534 = tpu.concatenate %531, %533 in 1 : vector<6x32xf32>, vector<6x32xf32> -> vector<6x64xf32>
    %cst_299 = arith.constant dense<0.000000e+00> : vector<6x128xf32>
    %535 = tpu.matmul %534, %474, %cst_299 {dimension_numbers = #tpu.dot_dimension_numbers<[1], [0], [0], [1], [0, 0, 1, 1], [], []>} : vector<6x64xf32>, vector<64x128xf32>, vector<6x128xf32> -> vector<6x128xf32>
    %536 = arith.addf %535, %480 : vector<6x128xf32>
    %c2_300 = arith.constant 2 : index
    %c0_301 = arith.constant 0 : index
    %c0_302 = arith.constant 0 : index
    %537 = vector.load %arg5[%c2_300, %c0_301, %c0_302] : memref<4x6x32xf32, #tpu.memory_space<vmem>>, vector<1x6x32xf32>
    %538 = vector.shape_cast %537 : vector<1x6x32xf32> to vector<6x32xf32>
    %c2_303 = arith.constant 2 : index
    %c0_304 = arith.constant 0 : index
    %c0_305 = arith.constant 0 : index
    %539 = vector.load %arg6[%c2_303, %c0_304, %c0_305] : memref<4x6x32xf32, #tpu.memory_space<vmem>>, vector<1x6x32xf32>
    %540 = vector.shape_cast %539 : vector<1x6x32xf32> to vector<6x32xf32>
    %cst_306 = arith.constant dense<0.000000e+00> : vector<6x128xf32>
    %541 = tpu.matmul %538, %476, %cst_306 {dimension_numbers = #tpu.dot_dimension_numbers<[1], [0], [0], [1], [0, 0, 1, 1], [], []>} : vector<6x32xf32>, vector<32x128xf32>, vector<6x128xf32> -> vector<6x128xf32>
    %542 = arith.addf %487, %541 : vector<6x128xf32>
    %543 = arith.negf %542 : vector<6x128xf32>
    %544 = math.exp %543 : vector<6x128xf32>
    %cst_307 = arith.constant 1.000000e+00 : f32
    %545 = vector.broadcast %cst_307 : f32 to vector<6x128xf32>
    %546 = arith.addf %545, %544 : vector<6x128xf32>
    %547 = arith.divf %545, %546 : vector<6x128xf32>
    %548 = math.tanh %542 : vector<6x128xf32>
    %549 = vector.extract_strided_slice %547 {offsets = [0, 0], sizes = [6, 32], strides = [1, 1]} : vector<6x128xf32> to vector<6x32xf32>
    %550 = vector.extract_strided_slice %547 {offsets = [0, 32], sizes = [6, 32], strides = [1, 1]} : vector<6x128xf32> to vector<6x32xf32>
    %551 = vector.extract_strided_slice %548 {offsets = [0, 64], sizes = [6, 32], strides = [1, 1]} : vector<6x128xf32> to vector<6x32xf32>
    %552 = vector.extract_strided_slice %547 {offsets = [0, 96], sizes = [6, 32], strides = [1, 1]} : vector<6x128xf32> to vector<6x32xf32>
    %553 = arith.mulf %550, %540 : vector<6x32xf32>
    %554 = arith.mulf %549, %551 : vector<6x32xf32>
    %555 = arith.addf %553, %554 : vector<6x32xf32>
    %556 = math.tanh %555 : vector<6x32xf32>
    %557 = arith.mulf %552, %556 : vector<6x32xf32>
    %c1_308 = arith.constant 1 : index
    %c0_309 = arith.constant 0 : index
    %c0_310 = arith.constant 0 : index
    %c0_311 = arith.constant 0 : index
    %c0_312 = arith.constant 0 : index
    %558 = vector.load %arg8[%c1_308, %c0_309, %c0_310, %c0_311, %c0_312] : memref<2x2x8x6x32xf32, #tpu.memory_space<vmem>>, vector<1x1x1x6x32xf32>
    %559 = vector.shape_cast %558 : vector<1x1x1x6x32xf32> to vector<6x32xf32>
    %560 = vector.shape_cast %557 : vector<6x32xf32> to vector<1x1x1x6x32xf32>
    tpu.vector_store %arg8[%c1_308, %c0_309, %c0_310, %c0_311, %c0_312], %560 {strides = array<i32>} : memref<2x2x8x6x32xf32, #tpu.memory_space<vmem>>, vector<1x1x1x6x32xf32>,
    %cst_313 = arith.constant dense<0.000000e+00> : vector<6x128xf32>
    %561 = tpu.matmul %557, %476, %cst_313 {dimension_numbers = #tpu.dot_dimension_numbers<[1], [0], [0], [1], [0, 0, 1, 1], [], []>} : vector<6x32xf32>, vector<32x128xf32>, vector<6x128xf32> -> vector<6x128xf32>
    %562 = arith.addf %494, %561 : vector<6x128xf32>
    %563 = arith.negf %562 : vector<6x128xf32>
    %564 = math.exp %563 : vector<6x128xf32>
    %cst_314 = arith.constant 1.000000e+00 : f32
    %565 = vector.broadcast %cst_314 : f32 to vector<6x128xf32>
    %566 = arith.addf %565, %564 : vector<6x128xf32>
    %567 = arith.divf %565, %566 : vector<6x128xf32>
    %568 = math.tanh %562 : vector<6x128xf32>
    %569 = vector.extract_strided_slice %567 {offsets = [0, 0], sizes = [6, 32], strides = [1, 1]} : vector<6x128xf32> to vector<6x32xf32>
    %570 = vector.extract_strided_slice %567 {offsets = [0, 32], sizes = [6, 32], strides = [1, 1]} : vector<6x128xf32> to vector<6x32xf32>
    %571 = vector.extract_strided_slice %568 {offsets = [0, 64], sizes = [6, 32], strides = [1, 1]} : vector<6x128xf32> to vector<6x32xf32>
    %572 = vector.extract_strided_slice %567 {offsets = [0, 96], sizes = [6, 32], strides = [1, 1]} : vector<6x128xf32> to vector<6x32xf32>
    %573 = arith.mulf %570, %555 : vector<6x32xf32>
    %574 = arith.mulf %569, %571 : vector<6x32xf32>
    %575 = arith.addf %573, %574 : vector<6x32xf32>
    %576 = math.tanh %575 : vector<6x32xf32>
    %577 = arith.mulf %572, %576 : vector<6x32xf32>
    %c1_315 = arith.constant 1 : index
    %c0_316 = arith.constant 0 : index
    %c1_317 = arith.constant 1 : index
    %c0_318 = arith.constant 0 : index
    %c0_319 = arith.constant 0 : index
    %578 = vector.load %arg8[%c1_315, %c0_316, %c1_317, %c0_318, %c0_319] : memref<2x2x8x6x32xf32, #tpu.memory_space<vmem>>, vector<1x1x1x6x32xf32>
    %579 = vector.shape_cast %578 : vector<1x1x1x6x32xf32> to vector<6x32xf32>
    %580 = vector.shape_cast %577 : vector<6x32xf32> to vector<1x1x1x6x32xf32>
    tpu.vector_store %arg8[%c1_315, %c0_316, %c1_317, %c0_318, %c0_319], %580 {strides = array<i32>} : memref<2x2x8x6x32xf32, #tpu.memory_space<vmem>>, vector<1x1x1x6x32xf32>,
    %cst_320 = arith.constant dense<0.000000e+00> : vector<6x128xf32>
    %581 = tpu.matmul %577, %476, %cst_320 {dimension_numbers = #tpu.dot_dimension_numbers<[1], [0], [0], [1], [0, 0, 1, 1], [], []>} : vector<6x32xf32>, vector<32x128xf32>, vector<6x128xf32> -> vector<6x128xf32>
    %582 = arith.addf %501, %581 : vector<6x128xf32>
    %583 = arith.negf %582 : vector<6x128xf32>
    %584 = math.exp %583 : vector<6x128xf32>
    %cst_321 = arith.constant 1.000000e+00 : f32
    %585 = vector.broadcast %cst_321 : f32 to vector<6x128xf32>
    %586 = arith.addf %585, %584 : vector<6x128xf32>
    %587 = arith.divf %585, %586 : vector<6x128xf32>
    %588 = math.tanh %582 : vector<6x128xf32>
    %589 = vector.extract_strided_slice %587 {offsets = [0, 0], sizes = [6, 32], strides = [1, 1]} : vector<6x128xf32> to vector<6x32xf32>
    %590 = vector.extract_strided_slice %587 {offsets = [0, 32], sizes = [6, 32], strides = [1, 1]} : vector<6x128xf32> to vector<6x32xf32>
    %591 = vector.extract_strided_slice %588 {offsets = [0, 64], sizes = [6, 32], strides = [1, 1]} : vector<6x128xf32> to vector<6x32xf32>
    %592 = vector.extract_strided_slice %587 {offsets = [0, 96], sizes = [6, 32], strides = [1, 1]} : vector<6x128xf32> to vector<6x32xf32>
    %593 = arith.mulf %590, %575 : vector<6x32xf32>
    %594 = arith.mulf %589, %591 : vector<6x32xf32>
    %595 = arith.addf %593, %594 : vector<6x32xf32>
    %596 = math.tanh %595 : vector<6x32xf32>
    %597 = arith.mulf %592, %596 : vector<6x32xf32>
    %c1_322 = arith.constant 1 : index
    %c0_323 = arith.constant 0 : index
    %c2_324 = arith.constant 2 : index
    %c0_325 = arith.constant 0 : index
    %c0_326 = arith.constant 0 : index
    %598 = vector.load %arg8[%c1_322, %c0_323, %c2_324, %c0_325, %c0_326] : memref<2x2x8x6x32xf32, #tpu.memory_space<vmem>>, vector<1x1x1x6x32xf32>
    %599 = vector.shape_cast %598 : vector<1x1x1x6x32xf32> to vector<6x32xf32>
    %600 = vector.shape_cast %597 : vector<6x32xf32> to vector<1x1x1x6x32xf32>
    tpu.vector_store %arg8[%c1_322, %c0_323, %c2_324, %c0_325, %c0_326], %600 {strides = array<i32>} : memref<2x2x8x6x32xf32, #tpu.memory_space<vmem>>, vector<1x1x1x6x32xf32>,
    %cst_327 = arith.constant dense<0.000000e+00> : vector<6x128xf32>
    %601 = tpu.matmul %597, %476, %cst_327 {dimension_numbers = #tpu.dot_dimension_numbers<[1], [0], [0], [1], [0, 0, 1, 1], [], []>} : vector<6x32xf32>, vector<32x128xf32>, vector<6x128xf32> -> vector<6x128xf32>
    %602 = arith.addf %508, %601 : vector<6x128xf32>
    %603 = arith.negf %602 : vector<6x128xf32>
    %604 = math.exp %603 : vector<6x128xf32>
    %cst_328 = arith.constant 1.000000e+00 : f32
    %605 = vector.broadcast %cst_328 : f32 to vector<6x128xf32>
    %606 = arith.addf %605, %604 : vector<6x128xf32>
    %607 = arith.divf %605, %606 : vector<6x128xf32>
    %608 = math.tanh %602 : vector<6x128xf32>
    %609 = vector.extract_strided_slice %607 {offsets = [0, 0], sizes = [6, 32], strides = [1, 1]} : vector<6x128xf32> to vector<6x32xf32>
    %610 = vector.extract_strided_slice %607 {offsets = [0, 32], sizes = [6, 32], strides = [1, 1]} : vector<6x128xf32> to vector<6x32xf32>
    %611 = vector.extract_strided_slice %608 {offsets = [0, 64], sizes = [6, 32], strides = [1, 1]} : vector<6x128xf32> to vector<6x32xf32>
    %612 = vector.extract_strided_slice %607 {offsets = [0, 96], sizes = [6, 32], strides = [1, 1]} : vector<6x128xf32> to vector<6x32xf32>
    %613 = arith.mulf %610, %595 : vector<6x32xf32>
    %614 = arith.mulf %609, %611 : vector<6x32xf32>
    %615 = arith.addf %613, %614 : vector<6x32xf32>
    %616 = math.tanh %615 : vector<6x32xf32>
    %617 = arith.mulf %612, %616 : vector<6x32xf32>
    %c1_329 = arith.constant 1 : index
    %c0_330 = arith.constant 0 : index
    %c3_331 = arith.constant 3 : index
    %c0_332 = arith.constant 0 : index
    %c0_333 = arith.constant 0 : index
    %618 = vector.load %arg8[%c1_329, %c0_330, %c3_331, %c0_332, %c0_333] : memref<2x2x8x6x32xf32, #tpu.memory_space<vmem>>, vector<1x1x1x6x32xf32>
    %619 = vector.shape_cast %618 : vector<1x1x1x6x32xf32> to vector<6x32xf32>
    %620 = vector.shape_cast %617 : vector<6x32xf32> to vector<1x1x1x6x32xf32>
    tpu.vector_store %arg8[%c1_329, %c0_330, %c3_331, %c0_332, %c0_333], %620 {strides = array<i32>} : memref<2x2x8x6x32xf32, #tpu.memory_space<vmem>>, vector<1x1x1x6x32xf32>,
    %cst_334 = arith.constant dense<0.000000e+00> : vector<6x128xf32>
    %621 = tpu.matmul %617, %476, %cst_334 {dimension_numbers = #tpu.dot_dimension_numbers<[1], [0], [0], [1], [0, 0, 1, 1], [], []>} : vector<6x32xf32>, vector<32x128xf32>, vector<6x128xf32> -> vector<6x128xf32>
    %622 = arith.addf %515, %621 : vector<6x128xf32>
    %623 = arith.negf %622 : vector<6x128xf32>
    %624 = math.exp %623 : vector<6x128xf32>
    %cst_335 = arith.constant 1.000000e+00 : f32
    %625 = vector.broadcast %cst_335 : f32 to vector<6x128xf32>
    %626 = arith.addf %625, %624 : vector<6x128xf32>
    %627 = arith.divf %625, %626 : vector<6x128xf32>
    %628 = math.tanh %622 : vector<6x128xf32>
    %629 = vector.extract_strided_slice %627 {offsets = [0, 0], sizes = [6, 32], strides = [1, 1]} : vector<6x128xf32> to vector<6x32xf32>
    %630 = vector.extract_strided_slice %627 {offsets = [0, 32], sizes = [6, 32], strides = [1, 1]} : vector<6x128xf32> to vector<6x32xf32>
    %631 = vector.extract_strided_slice %628 {offsets = [0, 64], sizes = [6, 32], strides = [1, 1]} : vector<6x128xf32> to vector<6x32xf32>
    %632 = vector.extract_strided_slice %627 {offsets = [0, 96], sizes = [6, 32], strides = [1, 1]} : vector<6x128xf32> to vector<6x32xf32>
    %633 = arith.mulf %630, %615 : vector<6x32xf32>
    %634 = arith.mulf %629, %631 : vector<6x32xf32>
    %635 = arith.addf %633, %634 : vector<6x32xf32>
    %636 = math.tanh %635 : vector<6x32xf32>
    %637 = arith.mulf %632, %636 : vector<6x32xf32>
    %c1_336 = arith.constant 1 : index
    %c0_337 = arith.constant 0 : index
    %c4_338 = arith.constant 4 : index
    %c0_339 = arith.constant 0 : index
    %c0_340 = arith.constant 0 : index
    %638 = vector.load %arg8[%c1_336, %c0_337, %c4_338, %c0_339, %c0_340] : memref<2x2x8x6x32xf32, #tpu.memory_space<vmem>>, vector<1x1x1x6x32xf32>
    %639 = vector.shape_cast %638 : vector<1x1x1x6x32xf32> to vector<6x32xf32>
    %640 = vector.shape_cast %637 : vector<6x32xf32> to vector<1x1x1x6x32xf32>
    tpu.vector_store %arg8[%c1_336, %c0_337, %c4_338, %c0_339, %c0_340], %640 {strides = array<i32>} : memref<2x2x8x6x32xf32, #tpu.memory_space<vmem>>, vector<1x1x1x6x32xf32>,
    %cst_341 = arith.constant dense<0.000000e+00> : vector<6x128xf32>
    %641 = tpu.matmul %637, %476, %cst_341 {dimension_numbers = #tpu.dot_dimension_numbers<[1], [0], [0], [1], [0, 0, 1, 1], [], []>} : vector<6x32xf32>, vector<32x128xf32>, vector<6x128xf32> -> vector<6x128xf32>
    %642 = arith.addf %522, %641 : vector<6x128xf32>
    %643 = arith.negf %642 : vector<6x128xf32>
    %644 = math.exp %643 : vector<6x128xf32>
    %cst_342 = arith.constant 1.000000e+00 : f32
    %645 = vector.broadcast %cst_342 : f32 to vector<6x128xf32>
    %646 = arith.addf %645, %644 : vector<6x128xf32>
    %647 = arith.divf %645, %646 : vector<6x128xf32>
    %648 = math.tanh %642 : vector<6x128xf32>
    %649 = vector.extract_strided_slice %647 {offsets = [0, 0], sizes = [6, 32], strides = [1, 1]} : vector<6x128xf32> to vector<6x32xf32>
    %650 = vector.extract_strided_slice %647 {offsets = [0, 32], sizes = [6, 32], strides = [1, 1]} : vector<6x128xf32> to vector<6x32xf32>
    %651 = vector.extract_strided_slice %648 {offsets = [0, 64], sizes = [6, 32], strides = [1, 1]} : vector<6x128xf32> to vector<6x32xf32>
    %652 = vector.extract_strided_slice %647 {offsets = [0, 96], sizes = [6, 32], strides = [1, 1]} : vector<6x128xf32> to vector<6x32xf32>
    %653 = arith.mulf %650, %635 : vector<6x32xf32>
    %654 = arith.mulf %649, %651 : vector<6x32xf32>
    %655 = arith.addf %653, %654 : vector<6x32xf32>
    %656 = math.tanh %655 : vector<6x32xf32>
    %657 = arith.mulf %652, %656 : vector<6x32xf32>
    %c1_343 = arith.constant 1 : index
    %c0_344 = arith.constant 0 : index
    %c5_345 = arith.constant 5 : index
    %c0_346 = arith.constant 0 : index
    %c0_347 = arith.constant 0 : index
    %658 = vector.load %arg8[%c1_343, %c0_344, %c5_345, %c0_346, %c0_347] : memref<2x2x8x6x32xf32, #tpu.memory_space<vmem>>, vector<1x1x1x6x32xf32>
    %659 = vector.shape_cast %658 : vector<1x1x1x6x32xf32> to vector<6x32xf32>
    %660 = vector.shape_cast %657 : vector<6x32xf32> to vector<1x1x1x6x32xf32>
    tpu.vector_store %arg8[%c1_343, %c0_344, %c5_345, %c0_346, %c0_347], %660 {strides = array<i32>} : memref<2x2x8x6x32xf32, #tpu.memory_space<vmem>>, vector<1x1x1x6x32xf32>,
    %cst_348 = arith.constant dense<0.000000e+00> : vector<6x128xf32>
    %661 = tpu.matmul %657, %476, %cst_348 {dimension_numbers = #tpu.dot_dimension_numbers<[1], [0], [0], [1], [0, 0, 1, 1], [], []>} : vector<6x32xf32>, vector<32x128xf32>, vector<6x128xf32> -> vector<6x128xf32>
    %662 = arith.addf %529, %661 : vector<6x128xf32>
    %663 = arith.negf %662 : vector<6x128xf32>
    %664 = math.exp %663 : vector<6x128xf32>
    %cst_349 = arith.constant 1.000000e+00 : f32
    %665 = vector.broadcast %cst_349 : f32 to vector<6x128xf32>
    %666 = arith.addf %665, %664 : vector<6x128xf32>
    %667 = arith.divf %665, %666 : vector<6x128xf32>
    %668 = math.tanh %662 : vector<6x128xf32>
    %669 = vector.extract_strided_slice %667 {offsets = [0, 0], sizes = [6, 32], strides = [1, 1]} : vector<6x128xf32> to vector<6x32xf32>
    %670 = vector.extract_strided_slice %667 {offsets = [0, 32], sizes = [6, 32], strides = [1, 1]} : vector<6x128xf32> to vector<6x32xf32>
    %671 = vector.extract_strided_slice %668 {offsets = [0, 64], sizes = [6, 32], strides = [1, 1]} : vector<6x128xf32> to vector<6x32xf32>
    %672 = vector.extract_strided_slice %667 {offsets = [0, 96], sizes = [6, 32], strides = [1, 1]} : vector<6x128xf32> to vector<6x32xf32>
    %673 = arith.mulf %670, %655 : vector<6x32xf32>
    %674 = arith.mulf %669, %671 : vector<6x32xf32>
    %675 = arith.addf %673, %674 : vector<6x32xf32>
    %676 = math.tanh %675 : vector<6x32xf32>
    %677 = arith.mulf %672, %676 : vector<6x32xf32>
    %c1_350 = arith.constant 1 : index
    %c0_351 = arith.constant 0 : index
    %c6_352 = arith.constant 6 : index
    %c0_353 = arith.constant 0 : index
    %c0_354 = arith.constant 0 : index
    %678 = vector.load %arg8[%c1_350, %c0_351, %c6_352, %c0_353, %c0_354] : memref<2x2x8x6x32xf32, #tpu.memory_space<vmem>>, vector<1x1x1x6x32xf32>
    %679 = vector.shape_cast %678 : vector<1x1x1x6x32xf32> to vector<6x32xf32>
    %680 = vector.shape_cast %677 : vector<6x32xf32> to vector<1x1x1x6x32xf32>
    tpu.vector_store %arg8[%c1_350, %c0_351, %c6_352, %c0_353, %c0_354], %680 {strides = array<i32>} : memref<2x2x8x6x32xf32, #tpu.memory_space<vmem>>, vector<1x1x1x6x32xf32>,
    %cst_355 = arith.constant dense<0.000000e+00> : vector<6x128xf32>
    %681 = tpu.matmul %677, %476, %cst_355 {dimension_numbers = #tpu.dot_dimension_numbers<[1], [0], [0], [1], [0, 0, 1, 1], [], []>} : vector<6x32xf32>, vector<32x128xf32>, vector<6x128xf32> -> vector<6x128xf32>
    %682 = arith.addf %536, %681 : vector<6x128xf32>
    %683 = arith.negf %682 : vector<6x128xf32>
    %684 = math.exp %683 : vector<6x128xf32>
    %cst_356 = arith.constant 1.000000e+00 : f32
    %685 = vector.broadcast %cst_356 : f32 to vector<6x128xf32>
    %686 = arith.addf %685, %684 : vector<6x128xf32>
    %687 = arith.divf %685, %686 : vector<6x128xf32>
    %688 = math.tanh %682 : vector<6x128xf32>
    %689 = vector.extract_strided_slice %687 {offsets = [0, 0], sizes = [6, 32], strides = [1, 1]} : vector<6x128xf32> to vector<6x32xf32>
    %690 = vector.extract_strided_slice %687 {offsets = [0, 32], sizes = [6, 32], strides = [1, 1]} : vector<6x128xf32> to vector<6x32xf32>
    %691 = vector.extract_strided_slice %688 {offsets = [0, 64], sizes = [6, 32], strides = [1, 1]} : vector<6x128xf32> to vector<6x32xf32>
    %692 = vector.extract_strided_slice %687 {offsets = [0, 96], sizes = [6, 32], strides = [1, 1]} : vector<6x128xf32> to vector<6x32xf32>
    %693 = arith.mulf %690, %675 : vector<6x32xf32>
    %694 = arith.mulf %689, %691 : vector<6x32xf32>
    %695 = arith.addf %693, %694 : vector<6x32xf32>
    %696 = math.tanh %695 : vector<6x32xf32>
    %697 = arith.mulf %692, %696 : vector<6x32xf32>
    %c1_357 = arith.constant 1 : index
    %c0_358 = arith.constant 0 : index
    %c7_359 = arith.constant 7 : index
    %c0_360 = arith.constant 0 : index
    %c0_361 = arith.constant 0 : index
    %698 = vector.load %arg8[%c1_357, %c0_358, %c7_359, %c0_360, %c0_361] : memref<2x2x8x6x32xf32, #tpu.memory_space<vmem>>, vector<1x1x1x6x32xf32>
    %699 = vector.shape_cast %698 : vector<1x1x1x6x32xf32> to vector<6x32xf32>
    %700 = vector.shape_cast %697 : vector<6x32xf32> to vector<1x1x1x6x32xf32>
    tpu.vector_store %arg8[%c1_357, %c0_358, %c7_359, %c0_360, %c0_361], %700 {strides = array<i32>} : memref<2x2x8x6x32xf32, #tpu.memory_space<vmem>>, vector<1x1x1x6x32xf32>,
    %c1_362 = arith.constant 1 : index
    %c0_363 = arith.constant 0 : index
    %c0_364 = arith.constant 0 : index
    %701 = vector.load %arg2[%c1_362, %c0_363, %c0_364] : memref<2x64x128xf32, #tpu.memory_space<vmem>>, vector<1x64x128xf32>
    %702 = vector.shape_cast %701 : vector<1x64x128xf32> to vector<64x128xf32>
    %c1_365 = arith.constant 1 : index
    %c1_366 = arith.constant 1 : index
    %c0_367 = arith.constant 0 : index
    %c0_368 = arith.constant 0 : index
    %703 = vector.load %arg3[%c1_365, %c1_366, %c0_367, %c0_368] : memref<2x2x32x128xf32, #tpu.memory_space<vmem>>, vector<1x1x32x128xf32>
    %704 = vector.shape_cast %703 : vector<1x1x32x128xf32> to vector<32x128xf32>
    %c1_369 = arith.constant 1 : index
    %c1_370 = arith.constant 1 : index
    %c0_371 = arith.constant 0 : index
    %c0_372 = arith.constant 0 : index
    %705 = vector.load %arg4[%c1_369, %c1_370, %c0_371, %c0_372] : memref<2x2x1x128xf32, #tpu.memory_space<vmem>>, vector<1x1x1x128xf32>
    %706 = vector.shape_cast %705 : vector<1x1x1x128xf32> to vector<1x128xf32>
    %707 = vector.shape_cast %706 : vector<1x128xf32> to vector<1x128xf32>
    %708 = vector.broadcast %707 : vector<1x128xf32> to vector<6x128xf32>
    %c0_373 = arith.constant 0 : index
    %c0_374 = arith.constant 0 : index
    %c0_375 = arith.constant 0 : index
    %c0_376 = arith.constant 0 : index
    %c0_377 = arith.constant 0 : index
    %709 = vector.load %arg8[%c0_373, %c0_374, %c0_375, %c0_376, %c0_377] : memref<2x2x8x6x32xf32, #tpu.memory_space<vmem>>, vector<1x1x1x6x32xf32>
    %710 = vector.shape_cast %709 : vector<1x1x1x6x32xf32> to vector<6x32xf32>
    %c0_378 = arith.constant 0 : index
    %c1_379 = arith.constant 1 : index
    %c0_380 = arith.constant 0 : index
    %c0_381 = arith.constant 0 : index
    %c0_382 = arith.constant 0 : index
    %711 = vector.load %arg8[%c0_378, %c1_379, %c0_380, %c0_381, %c0_382] : memref<2x2x8x6x32xf32, #tpu.memory_space<vmem>>, vector<1x1x1x6x32xf32>
    %712 = vector.shape_cast %711 : vector<1x1x1x6x32xf32> to vector<6x32xf32>
    %713 = tpu.concatenate %710, %712 in 1 : vector<6x32xf32>, vector<6x32xf32> -> vector<6x64xf32>
    %cst_383 = arith.constant dense<0.000000e+00> : vector<6x128xf32>
    %714 = tpu.matmul %713, %702, %cst_383 {dimension_numbers = #tpu.dot_dimension_numbers<[1], [0], [0], [1], [0, 0, 1, 1], [], []>} : vector<6x64xf32>, vector<64x128xf32>, vector<6x128xf32> -> vector<6x128xf32>
    %715 = arith.addf %714, %708 : vector<6x128xf32>
    %c0_384 = arith.constant 0 : index
    %c0_385 = arith.constant 0 : index
    %c1_386 = arith.constant 1 : index
    %c0_387 = arith.constant 0 : index
    %c0_388 = arith.constant 0 : index
    %716 = vector.load %arg8[%c0_384, %c0_385, %c1_386, %c0_387, %c0_388] : memref<2x2x8x6x32xf32, #tpu.memory_space<vmem>>, vector<1x1x1x6x32xf32>
    %717 = vector.shape_cast %716 : vector<1x1x1x6x32xf32> to vector<6x32xf32>
    %c0_389 = arith.constant 0 : index
    %c1_390 = arith.constant 1 : index
    %c1_391 = arith.constant 1 : index
    %c0_392 = arith.constant 0 : index
    %c0_393 = arith.constant 0 : index
    %718 = vector.load %arg8[%c0_389, %c1_390, %c1_391, %c0_392, %c0_393] : memref<2x2x8x6x32xf32, #tpu.memory_space<vmem>>, vector<1x1x1x6x32xf32>
    %719 = vector.shape_cast %718 : vector<1x1x1x6x32xf32> to vector<6x32xf32>
    %720 = tpu.concatenate %717, %719 in 1 : vector<6x32xf32>, vector<6x32xf32> -> vector<6x64xf32>
    %cst_394 = arith.constant dense<0.000000e+00> : vector<6x128xf32>
    %721 = tpu.matmul %720, %702, %cst_394 {dimension_numbers = #tpu.dot_dimension_numbers<[1], [0], [0], [1], [0, 0, 1, 1], [], []>} : vector<6x64xf32>, vector<64x128xf32>, vector<6x128xf32> -> vector<6x128xf32>
    %722 = arith.addf %721, %708 : vector<6x128xf32>
    %c0_395 = arith.constant 0 : index
    %c0_396 = arith.constant 0 : index
    %c2_397 = arith.constant 2 : index
    %c0_398 = arith.constant 0 : index
    %c0_399 = arith.constant 0 : index
    %723 = vector.load %arg8[%c0_395, %c0_396, %c2_397, %c0_398, %c0_399] : memref<2x2x8x6x32xf32, #tpu.memory_space<vmem>>, vector<1x1x1x6x32xf32>
    %724 = vector.shape_cast %723 : vector<1x1x1x6x32xf32> to vector<6x32xf32>
    %c0_400 = arith.constant 0 : index
    %c1_401 = arith.constant 1 : index
    %c2_402 = arith.constant 2 : index
    %c0_403 = arith.constant 0 : index
    %c0_404 = arith.constant 0 : index
    %725 = vector.load %arg8[%c0_400, %c1_401, %c2_402, %c0_403, %c0_404] : memref<2x2x8x6x32xf32, #tpu.memory_space<vmem>>, vector<1x1x1x6x32xf32>
    %726 = vector.shape_cast %725 : vector<1x1x1x6x32xf32> to vector<6x32xf32>
    %727 = tpu.concatenate %724, %726 in 1 : vector<6x32xf32>, vector<6x32xf32> -> vector<6x64xf32>
    %cst_405 = arith.constant dense<0.000000e+00> : vector<6x128xf32>
    %728 = tpu.matmul %727, %702, %cst_405 {dimension_numbers = #tpu.dot_dimension_numbers<[1], [0], [0], [1], [0, 0, 1, 1], [], []>} : vector<6x64xf32>, vector<64x128xf32>, vector<6x128xf32> -> vector<6x128xf32>
    %729 = arith.addf %728, %708 : vector<6x128xf32>
    %c0_406 = arith.constant 0 : index
    %c0_407 = arith.constant 0 : index
    %c3_408 = arith.constant 3 : index
    %c0_409 = arith.constant 0 : index
    %c0_410 = arith.constant 0 : index
    %730 = vector.load %arg8[%c0_406, %c0_407, %c3_408, %c0_409, %c0_410] : memref<2x2x8x6x32xf32, #tpu.memory_space<vmem>>, vector<1x1x1x6x32xf32>
    %731 = vector.shape_cast %730 : vector<1x1x1x6x32xf32> to vector<6x32xf32>
    %c0_411 = arith.constant 0 : index
    %c1_412 = arith.constant 1 : index
    %c3_413 = arith.constant 3 : index
    %c0_414 = arith.constant 0 : index
    %c0_415 = arith.constant 0 : index
    %732 = vector.load %arg8[%c0_411, %c1_412, %c3_413, %c0_414, %c0_415] : memref<2x2x8x6x32xf32, #tpu.memory_space<vmem>>, vector<1x1x1x6x32xf32>
    %733 = vector.shape_cast %732 : vector<1x1x1x6x32xf32> to vector<6x32xf32>
    %734 = tpu.concatenate %731, %733 in 1 : vector<6x32xf32>, vector<6x32xf32> -> vector<6x64xf32>
    %cst_416 = arith.constant dense<0.000000e+00> : vector<6x128xf32>
    %735 = tpu.matmul %734, %702, %cst_416 {dimension_numbers = #tpu.dot_dimension_numbers<[1], [0], [0], [1], [0, 0, 1, 1], [], []>} : vector<6x64xf32>, vector<64x128xf32>, vector<6x128xf32> -> vector<6x128xf32>
    %736 = arith.addf %735, %708 : vector<6x128xf32>
    %c0_417 = arith.constant 0 : index
    %c0_418 = arith.constant 0 : index
    %c4_419 = arith.constant 4 : index
    %c0_420 = arith.constant 0 : index
    %c0_421 = arith.constant 0 : index
    %737 = vector.load %arg8[%c0_417, %c0_418, %c4_419, %c0_420, %c0_421] : memref<2x2x8x6x32xf32, #tpu.memory_space<vmem>>, vector<1x1x1x6x32xf32>
    %738 = vector.shape_cast %737 : vector<1x1x1x6x32xf32> to vector<6x32xf32>
    %c0_422 = arith.constant 0 : index
    %c1_423 = arith.constant 1 : index
    %c4_424 = arith.constant 4 : index
    %c0_425 = arith.constant 0 : index
    %c0_426 = arith.constant 0 : index
    %739 = vector.load %arg8[%c0_422, %c1_423, %c4_424, %c0_425, %c0_426] : memref<2x2x8x6x32xf32, #tpu.memory_space<vmem>>, vector<1x1x1x6x32xf32>
    %740 = vector.shape_cast %739 : vector<1x1x1x6x32xf32> to vector<6x32xf32>
    %741 = tpu.concatenate %738, %740 in 1 : vector<6x32xf32>, vector<6x32xf32> -> vector<6x64xf32>
    %cst_427 = arith.constant dense<0.000000e+00> : vector<6x128xf32>
    %742 = tpu.matmul %741, %702, %cst_427 {dimension_numbers = #tpu.dot_dimension_numbers<[1], [0], [0], [1], [0, 0, 1, 1], [], []>} : vector<6x64xf32>, vector<64x128xf32>, vector<6x128xf32> -> vector<6x128xf32>
    %743 = arith.addf %742, %708 : vector<6x128xf32>
    %c0_428 = arith.constant 0 : index
    %c0_429 = arith.constant 0 : index
    %c5_430 = arith.constant 5 : index
    %c0_431 = arith.constant 0 : index
    %c0_432 = arith.constant 0 : index
    %744 = vector.load %arg8[%c0_428, %c0_429, %c5_430, %c0_431, %c0_432] : memref<2x2x8x6x32xf32, #tpu.memory_space<vmem>>, vector<1x1x1x6x32xf32>
    %745 = vector.shape_cast %744 : vector<1x1x1x6x32xf32> to vector<6x32xf32>
    %c0_433 = arith.constant 0 : index
    %c1_434 = arith.constant 1 : index
    %c5_435 = arith.constant 5 : index
    %c0_436 = arith.constant 0 : index
    %c0_437 = arith.constant 0 : index
    %746 = vector.load %arg8[%c0_433, %c1_434, %c5_435, %c0_436, %c0_437] : memref<2x2x8x6x32xf32, #tpu.memory_space<vmem>>, vector<1x1x1x6x32xf32>
    %747 = vector.shape_cast %746 : vector<1x1x1x6x32xf32> to vector<6x32xf32>
    %748 = tpu.concatenate %745, %747 in 1 : vector<6x32xf32>, vector<6x32xf32> -> vector<6x64xf32>
    %cst_438 = arith.constant dense<0.000000e+00> : vector<6x128xf32>
    %749 = tpu.matmul %748, %702, %cst_438 {dimension_numbers = #tpu.dot_dimension_numbers<[1], [0], [0], [1], [0, 0, 1, 1], [], []>} : vector<6x64xf32>, vector<64x128xf32>, vector<6x128xf32> -> vector<6x128xf32>
    %750 = arith.addf %749, %708 : vector<6x128xf32>
    %c0_439 = arith.constant 0 : index
    %c0_440 = arith.constant 0 : index
    %c6_441 = arith.constant 6 : index
    %c0_442 = arith.constant 0 : index
    %c0_443 = arith.constant 0 : index
    %751 = vector.load %arg8[%c0_439, %c0_440, %c6_441, %c0_442, %c0_443] : memref<2x2x8x6x32xf32, #tpu.memory_space<vmem>>, vector<1x1x1x6x32xf32>
    %752 = vector.shape_cast %751 : vector<1x1x1x6x32xf32> to vector<6x32xf32>
    %c0_444 = arith.constant 0 : index
    %c1_445 = arith.constant 1 : index
    %c6_446 = arith.constant 6 : index
    %c0_447 = arith.constant 0 : index
    %c0_448 = arith.constant 0 : index
    %753 = vector.load %arg8[%c0_444, %c1_445, %c6_446, %c0_447, %c0_448] : memref<2x2x8x6x32xf32, #tpu.memory_space<vmem>>, vector<1x1x1x6x32xf32>
    %754 = vector.shape_cast %753 : vector<1x1x1x6x32xf32> to vector<6x32xf32>
    %755 = tpu.concatenate %752, %754 in 1 : vector<6x32xf32>, vector<6x32xf32> -> vector<6x64xf32>
    %cst_449 = arith.constant dense<0.000000e+00> : vector<6x128xf32>
    %756 = tpu.matmul %755, %702, %cst_449 {dimension_numbers = #tpu.dot_dimension_numbers<[1], [0], [0], [1], [0, 0, 1, 1], [], []>} : vector<6x64xf32>, vector<64x128xf32>, vector<6x128xf32> -> vector<6x128xf32>
    %757 = arith.addf %756, %708 : vector<6x128xf32>
    %c0_450 = arith.constant 0 : index
    %c0_451 = arith.constant 0 : index
    %c7_452 = arith.constant 7 : index
    %c0_453 = arith.constant 0 : index
    %c0_454 = arith.constant 0 : index
    %758 = vector.load %arg8[%c0_450, %c0_451, %c7_452, %c0_453, %c0_454] : memref<2x2x8x6x32xf32, #tpu.memory_space<vmem>>, vector<1x1x1x6x32xf32>
    %759 = vector.shape_cast %758 : vector<1x1x1x6x32xf32> to vector<6x32xf32>
    %c0_455 = arith.constant 0 : index
    %c1_456 = arith.constant 1 : index
    %c7_457 = arith.constant 7 : index
    %c0_458 = arith.constant 0 : index
    %c0_459 = arith.constant 0 : index
    %760 = vector.load %arg8[%c0_455, %c1_456, %c7_457, %c0_458, %c0_459] : memref<2x2x8x6x32xf32, #tpu.memory_space<vmem>>, vector<1x1x1x6x32xf32>
    %761 = vector.shape_cast %760 : vector<1x1x1x6x32xf32> to vector<6x32xf32>
    %762 = tpu.concatenate %759, %761 in 1 : vector<6x32xf32>, vector<6x32xf32> -> vector<6x64xf32>
    %cst_460 = arith.constant dense<0.000000e+00> : vector<6x128xf32>
    %763 = tpu.matmul %762, %702, %cst_460 {dimension_numbers = #tpu.dot_dimension_numbers<[1], [0], [0], [1], [0, 0, 1, 1], [], []>} : vector<6x64xf32>, vector<64x128xf32>, vector<6x128xf32> -> vector<6x128xf32>
    %764 = arith.addf %763, %708 : vector<6x128xf32>
    %c3_461 = arith.constant 3 : index
    %c0_462 = arith.constant 0 : index
    %c0_463 = arith.constant 0 : index
    %765 = vector.load %arg5[%c3_461, %c0_462, %c0_463] : memref<4x6x32xf32, #tpu.memory_space<vmem>>, vector<1x6x32xf32>
    %766 = vector.shape_cast %765 : vector<1x6x32xf32> to vector<6x32xf32>
    %c3_464 = arith.constant 3 : index
    %c0_465 = arith.constant 0 : index
    %c0_466 = arith.constant 0 : index
    %767 = vector.load %arg6[%c3_464, %c0_465, %c0_466] : memref<4x6x32xf32, #tpu.memory_space<vmem>>, vector<1x6x32xf32>
    %768 = vector.shape_cast %767 : vector<1x6x32xf32> to vector<6x32xf32>
    %cst_467 = arith.constant dense<0.000000e+00> : vector<6x128xf32>
    %769 = tpu.matmul %766, %704, %cst_467 {dimension_numbers = #tpu.dot_dimension_numbers<[1], [0], [0], [1], [0, 0, 1, 1], [], []>} : vector<6x32xf32>, vector<32x128xf32>, vector<6x128xf32> -> vector<6x128xf32>
    %770 = arith.addf %764, %769 : vector<6x128xf32>
    %771 = arith.negf %770 : vector<6x128xf32>
    %772 = math.exp %771 : vector<6x128xf32>
    %cst_468 = arith.constant 1.000000e+00 : f32
    %773 = vector.broadcast %cst_468 : f32 to vector<6x128xf32>
    %774 = arith.addf %773, %772 : vector<6x128xf32>
    %775 = arith.divf %773, %774 : vector<6x128xf32>
    %776 = math.tanh %770 : vector<6x128xf32>
    %777 = vector.extract_strided_slice %775 {offsets = [0, 0], sizes = [6, 32], strides = [1, 1]} : vector<6x128xf32> to vector<6x32xf32>
    %778 = vector.extract_strided_slice %775 {offsets = [0, 32], sizes = [6, 32], strides = [1, 1]} : vector<6x128xf32> to vector<6x32xf32>
    %779 = vector.extract_strided_slice %776 {offsets = [0, 64], sizes = [6, 32], strides = [1, 1]} : vector<6x128xf32> to vector<6x32xf32>
    %780 = vector.extract_strided_slice %775 {offsets = [0, 96], sizes = [6, 32], strides = [1, 1]} : vector<6x128xf32> to vector<6x32xf32>
    %781 = arith.mulf %778, %768 : vector<6x32xf32>
    %782 = arith.mulf %777, %779 : vector<6x32xf32>
    %783 = arith.addf %781, %782 : vector<6x32xf32>
    %784 = math.tanh %783 : vector<6x32xf32>
    %785 = arith.mulf %780, %784 : vector<6x32xf32>
    %c1_469 = arith.constant 1 : index
    %c1_470 = arith.constant 1 : index
    %c7_471 = arith.constant 7 : index
    %c0_472 = arith.constant 0 : index
    %c0_473 = arith.constant 0 : index
    %786 = vector.load %arg8[%c1_469, %c1_470, %c7_471, %c0_472, %c0_473] : memref<2x2x8x6x32xf32, #tpu.memory_space<vmem>>, vector<1x1x1x6x32xf32>
    %787 = vector.shape_cast %786 : vector<1x1x1x6x32xf32> to vector<6x32xf32>
    %788 = vector.shape_cast %785 : vector<6x32xf32> to vector<1x1x1x6x32xf32>
    tpu.vector_store %arg8[%c1_469, %c1_470, %c7_471, %c0_472, %c0_473], %788 {strides = array<i32>} : memref<2x2x8x6x32xf32, #tpu.memory_space<vmem>>, vector<1x1x1x6x32xf32>,
    %cst_474 = arith.constant dense<0.000000e+00> : vector<6x128xf32>
    %789 = tpu.matmul %785, %704, %cst_474 {dimension_numbers = #tpu.dot_dimension_numbers<[1], [0], [0], [1], [0, 0, 1, 1], [], []>} : vector<6x32xf32>, vector<32x128xf32>, vector<6x128xf32> -> vector<6x128xf32>
    %790 = arith.addf %757, %789 : vector<6x128xf32>
    %791 = arith.negf %790 : vector<6x128xf32>
    %792 = math.exp %791 : vector<6x128xf32>
    %cst_475 = arith.constant 1.000000e+00 : f32
    %793 = vector.broadcast %cst_475 : f32 to vector<6x128xf32>
    %794 = arith.addf %793, %792 : vector<6x128xf32>
    %795 = arith.divf %793, %794 : vector<6x128xf32>
    %796 = math.tanh %790 : vector<6x128xf32>
    %797 = vector.extract_strided_slice %795 {offsets = [0, 0], sizes = [6, 32], strides = [1, 1]} : vector<6x128xf32> to vector<6x32xf32>
    %798 = vector.extract_strided_slice %795 {offsets = [0, 32], sizes = [6, 32], strides = [1, 1]} : vector<6x128xf32> to vector<6x32xf32>
    %799 = vector.extract_strided_slice %796 {offsets = [0, 64], sizes = [6, 32], strides = [1, 1]} : vector<6x128xf32> to vector<6x32xf32>
    %800 = vector.extract_strided_slice %795 {offsets = [0, 96], sizes = [6, 32], strides = [1, 1]} : vector<6x128xf32> to vector<6x32xf32>
    %801 = arith.mulf %798, %783 : vector<6x32xf32>
    %802 = arith.mulf %797, %799 : vector<6x32xf32>
    %803 = arith.addf %801, %802 : vector<6x32xf32>
    %804 = math.tanh %803 : vector<6x32xf32>
    %805 = arith.mulf %800, %804 : vector<6x32xf32>
    %c1_476 = arith.constant 1 : index
    %c1_477 = arith.constant 1 : index
    %c6_478 = arith.constant 6 : index
    %c0_479 = arith.constant 0 : index
    %c0_480 = arith.constant 0 : index
    %806 = vector.load %arg8[%c1_476, %c1_477, %c6_478, %c0_479, %c0_480] : memref<2x2x8x6x32xf32, #tpu.memory_space<vmem>>, vector<1x1x1x6x32xf32>
    %807 = vector.shape_cast %806 : vector<1x1x1x6x32xf32> to vector<6x32xf32>
    %808 = vector.shape_cast %805 : vector<6x32xf32> to vector<1x1x1x6x32xf32>
    tpu.vector_store %arg8[%c1_476, %c1_477, %c6_478, %c0_479, %c0_480], %808 {strides = array<i32>} : memref<2x2x8x6x32xf32, #tpu.memory_space<vmem>>, vector<1x1x1x6x32xf32>,
    %cst_481 = arith.constant dense<0.000000e+00> : vector<6x128xf32>
    %809 = tpu.matmul %805, %704, %cst_481 {dimension_numbers = #tpu.dot_dimension_numbers<[1], [0], [0], [1], [0, 0, 1, 1], [], []>} : vector<6x32xf32>, vector<32x128xf32>, vector<6x128xf32> -> vector<6x128xf32>
    %810 = arith.addf %750, %809 : vector<6x128xf32>
    %811 = arith.negf %810 : vector<6x128xf32>
    %812 = math.exp %811 : vector<6x128xf32>
    %cst_482 = arith.constant 1.000000e+00 : f32
    %813 = vector.broadcast %cst_482 : f32 to vector<6x128xf32>
    %814 = arith.addf %813, %812 : vector<6x128xf32>
    %815 = arith.divf %813, %814 : vector<6x128xf32>
    %816 = math.tanh %810 : vector<6x128xf32>
    %817 = vector.extract_strided_slice %815 {offsets = [0, 0], sizes = [6, 32], strides = [1, 1]} : vector<6x128xf32> to vector<6x32xf32>
    %818 = vector.extract_strided_slice %815 {offsets = [0, 32], sizes = [6, 32], strides = [1, 1]} : vector<6x128xf32> to vector<6x32xf32>
    %819 = vector.extract_strided_slice %816 {offsets = [0, 64], sizes = [6, 32], strides = [1, 1]} : vector<6x128xf32> to vector<6x32xf32>
    %820 = vector.extract_strided_slice %815 {offsets = [0, 96], sizes = [6, 32], strides = [1, 1]} : vector<6x128xf32> to vector<6x32xf32>
    %821 = arith.mulf %818, %803 : vector<6x32xf32>
    %822 = arith.mulf %817, %819 : vector<6x32xf32>
    %823 = arith.addf %821, %822 : vector<6x32xf32>
    %824 = math.tanh %823 : vector<6x32xf32>
    %825 = arith.mulf %820, %824 : vector<6x32xf32>
    %c1_483 = arith.constant 1 : index
    %c1_484 = arith.constant 1 : index
    %c5_485 = arith.constant 5 : index
    %c0_486 = arith.constant 0 : index
    %c0_487 = arith.constant 0 : index
    %826 = vector.load %arg8[%c1_483, %c1_484, %c5_485, %c0_486, %c0_487] : memref<2x2x8x6x32xf32, #tpu.memory_space<vmem>>, vector<1x1x1x6x32xf32>
    %827 = vector.shape_cast %826 : vector<1x1x1x6x32xf32> to vector<6x32xf32>
    %828 = vector.shape_cast %825 : vector<6x32xf32> to vector<1x1x1x6x32xf32>
    tpu.vector_store %arg8[%c1_483, %c1_484, %c5_485, %c0_486, %c0_487], %828 {strides = array<i32>} : memref<2x2x8x6x32xf32, #tpu.memory_space<vmem>>, vector<1x1x1x6x32xf32>,
    %cst_488 = arith.constant dense<0.000000e+00> : vector<6x128xf32>
    %829 = tpu.matmul %825, %704, %cst_488 {dimension_numbers = #tpu.dot_dimension_numbers<[1], [0], [0], [1], [0, 0, 1, 1], [], []>} : vector<6x32xf32>, vector<32x128xf32>, vector<6x128xf32> -> vector<6x128xf32>
    %830 = arith.addf %743, %829 : vector<6x128xf32>
    %831 = arith.negf %830 : vector<6x128xf32>
    %832 = math.exp %831 : vector<6x128xf32>
    %cst_489 = arith.constant 1.000000e+00 : f32
    %833 = vector.broadcast %cst_489 : f32 to vector<6x128xf32>
    %834 = arith.addf %833, %832 : vector<6x128xf32>
    %835 = arith.divf %833, %834 : vector<6x128xf32>
    %836 = math.tanh %830 : vector<6x128xf32>
    %837 = vector.extract_strided_slice %835 {offsets = [0, 0], sizes = [6, 32], strides = [1, 1]} : vector<6x128xf32> to vector<6x32xf32>
    %838 = vector.extract_strided_slice %835 {offsets = [0, 32], sizes = [6, 32], strides = [1, 1]} : vector<6x128xf32> to vector<6x32xf32>
    %839 = vector.extract_strided_slice %836 {offsets = [0, 64], sizes = [6, 32], strides = [1, 1]} : vector<6x128xf32> to vector<6x32xf32>
    %840 = vector.extract_strided_slice %835 {offsets = [0, 96], sizes = [6, 32], strides = [1, 1]} : vector<6x128xf32> to vector<6x32xf32>
    %841 = arith.mulf %838, %823 : vector<6x32xf32>
    %842 = arith.mulf %837, %839 : vector<6x32xf32>
    %843 = arith.addf %841, %842 : vector<6x32xf32>
    %844 = math.tanh %843 : vector<6x32xf32>
    %845 = arith.mulf %840, %844 : vector<6x32xf32>
    %c1_490 = arith.constant 1 : index
    %c1_491 = arith.constant 1 : index
    %c4_492 = arith.constant 4 : index
    %c0_493 = arith.constant 0 : index
    %c0_494 = arith.constant 0 : index
    %846 = vector.load %arg8[%c1_490, %c1_491, %c4_492, %c0_493, %c0_494] : memref<2x2x8x6x32xf32, #tpu.memory_space<vmem>>, vector<1x1x1x6x32xf32>
    %847 = vector.shape_cast %846 : vector<1x1x1x6x32xf32> to vector<6x32xf32>
    %848 = vector.shape_cast %845 : vector<6x32xf32> to vector<1x1x1x6x32xf32>
    tpu.vector_store %arg8[%c1_490, %c1_491, %c4_492, %c0_493, %c0_494], %848 {strides = array<i32>} : memref<2x2x8x6x32xf32, #tpu.memory_space<vmem>>, vector<1x1x1x6x32xf32>,
    %cst_495 = arith.constant dense<0.000000e+00> : vector<6x128xf32>
    %849 = tpu.matmul %845, %704, %cst_495 {dimension_numbers = #tpu.dot_dimension_numbers<[1], [0], [0], [1], [0, 0, 1, 1], [], []>} : vector<6x32xf32>, vector<32x128xf32>, vector<6x128xf32> -> vector<6x128xf32>
    %850 = arith.addf %736, %849 : vector<6x128xf32>
    %851 = arith.negf %850 : vector<6x128xf32>
    %852 = math.exp %851 : vector<6x128xf32>
    %cst_496 = arith.constant 1.000000e+00 : f32
    %853 = vector.broadcast %cst_496 : f32 to vector<6x128xf32>
    %854 = arith.addf %853, %852 : vector<6x128xf32>
    %855 = arith.divf %853, %854 : vector<6x128xf32>
    %856 = math.tanh %850 : vector<6x128xf32>
    %857 = vector.extract_strided_slice %855 {offsets = [0, 0], sizes = [6, 32], strides = [1, 1]} : vector<6x128xf32> to vector<6x32xf32>
    %858 = vector.extract_strided_slice %855 {offsets = [0, 32], sizes = [6, 32], strides = [1, 1]} : vector<6x128xf32> to vector<6x32xf32>
    %859 = vector.extract_strided_slice %856 {offsets = [0, 64], sizes = [6, 32], strides = [1, 1]} : vector<6x128xf32> to vector<6x32xf32>
    %860 = vector.extract_strided_slice %855 {offsets = [0, 96], sizes = [6, 32], strides = [1, 1]} : vector<6x128xf32> to vector<6x32xf32>
    %861 = arith.mulf %858, %843 : vector<6x32xf32>
    %862 = arith.mulf %857, %859 : vector<6x32xf32>
    %863 = arith.addf %861, %862 : vector<6x32xf32>
    %864 = math.tanh %863 : vector<6x32xf32>
    %865 = arith.mulf %860, %864 : vector<6x32xf32>
    %c1_497 = arith.constant 1 : index
    %c1_498 = arith.constant 1 : index
    %c3_499 = arith.constant 3 : index
    %c0_500 = arith.constant 0 : index
    %c0_501 = arith.constant 0 : index
    %866 = vector.load %arg8[%c1_497, %c1_498, %c3_499, %c0_500, %c0_501] : memref<2x2x8x6x32xf32, #tpu.memory_space<vmem>>, vector<1x1x1x6x32xf32>
    %867 = vector.shape_cast %866 : vector<1x1x1x6x32xf32> to vector<6x32xf32>
    %868 = vector.shape_cast %865 : vector<6x32xf32> to vector<1x1x1x6x32xf32>
    tpu.vector_store %arg8[%c1_497, %c1_498, %c3_499, %c0_500, %c0_501], %868 {strides = array<i32>} : memref<2x2x8x6x32xf32, #tpu.memory_space<vmem>>, vector<1x1x1x6x32xf32>,
    %cst_502 = arith.constant dense<0.000000e+00> : vector<6x128xf32>
    %869 = tpu.matmul %865, %704, %cst_502 {dimension_numbers = #tpu.dot_dimension_numbers<[1], [0], [0], [1], [0, 0, 1, 1], [], []>} : vector<6x32xf32>, vector<32x128xf32>, vector<6x128xf32> -> vector<6x128xf32>
    %870 = arith.addf %729, %869 : vector<6x128xf32>
    %871 = arith.negf %870 : vector<6x128xf32>
    %872 = math.exp %871 : vector<6x128xf32>
    %cst_503 = arith.constant 1.000000e+00 : f32
    %873 = vector.broadcast %cst_503 : f32 to vector<6x128xf32>
    %874 = arith.addf %873, %872 : vector<6x128xf32>
    %875 = arith.divf %873, %874 : vector<6x128xf32>
    %876 = math.tanh %870 : vector<6x128xf32>
    %877 = vector.extract_strided_slice %875 {offsets = [0, 0], sizes = [6, 32], strides = [1, 1]} : vector<6x128xf32> to vector<6x32xf32>
    %878 = vector.extract_strided_slice %875 {offsets = [0, 32], sizes = [6, 32], strides = [1, 1]} : vector<6x128xf32> to vector<6x32xf32>
    %879 = vector.extract_strided_slice %876 {offsets = [0, 64], sizes = [6, 32], strides = [1, 1]} : vector<6x128xf32> to vector<6x32xf32>
    %880 = vector.extract_strided_slice %875 {offsets = [0, 96], sizes = [6, 32], strides = [1, 1]} : vector<6x128xf32> to vector<6x32xf32>
    %881 = arith.mulf %878, %863 : vector<6x32xf32>
    %882 = arith.mulf %877, %879 : vector<6x32xf32>
    %883 = arith.addf %881, %882 : vector<6x32xf32>
    %884 = math.tanh %883 : vector<6x32xf32>
    %885 = arith.mulf %880, %884 : vector<6x32xf32>
    %c1_504 = arith.constant 1 : index
    %c1_505 = arith.constant 1 : index
    %c2_506 = arith.constant 2 : index
    %c0_507 = arith.constant 0 : index
    %c0_508 = arith.constant 0 : index
    %886 = vector.load %arg8[%c1_504, %c1_505, %c2_506, %c0_507, %c0_508] : memref<2x2x8x6x32xf32, #tpu.memory_space<vmem>>, vector<1x1x1x6x32xf32>
    %887 = vector.shape_cast %886 : vector<1x1x1x6x32xf32> to vector<6x32xf32>
    %888 = vector.shape_cast %885 : vector<6x32xf32> to vector<1x1x1x6x32xf32>
    tpu.vector_store %arg8[%c1_504, %c1_505, %c2_506, %c0_507, %c0_508], %888 {strides = array<i32>} : memref<2x2x8x6x32xf32, #tpu.memory_space<vmem>>, vector<1x1x1x6x32xf32>,
    %cst_509 = arith.constant dense<0.000000e+00> : vector<6x128xf32>
    %889 = tpu.matmul %885, %704, %cst_509 {dimension_numbers = #tpu.dot_dimension_numbers<[1], [0], [0], [1], [0, 0, 1, 1], [], []>} : vector<6x32xf32>, vector<32x128xf32>, vector<6x128xf32> -> vector<6x128xf32>
    %890 = arith.addf %722, %889 : vector<6x128xf32>
    %891 = arith.negf %890 : vector<6x128xf32>
    %892 = math.exp %891 : vector<6x128xf32>
    %cst_510 = arith.constant 1.000000e+00 : f32
    %893 = vector.broadcast %cst_510 : f32 to vector<6x128xf32>
    %894 = arith.addf %893, %892 : vector<6x128xf32>
    %895 = arith.divf %893, %894 : vector<6x128xf32>
    %896 = math.tanh %890 : vector<6x128xf32>
    %897 = vector.extract_strided_slice %895 {offsets = [0, 0], sizes = [6, 32], strides = [1, 1]} : vector<6x128xf32> to vector<6x32xf32>
    %898 = vector.extract_strided_slice %895 {offsets = [0, 32], sizes = [6, 32], strides = [1, 1]} : vector<6x128xf32> to vector<6x32xf32>
    %899 = vector.extract_strided_slice %896 {offsets = [0, 64], sizes = [6, 32], strides = [1, 1]} : vector<6x128xf32> to vector<6x32xf32>
    %900 = vector.extract_strided_slice %895 {offsets = [0, 96], sizes = [6, 32], strides = [1, 1]} : vector<6x128xf32> to vector<6x32xf32>
    %901 = arith.mulf %898, %883 : vector<6x32xf32>
    %902 = arith.mulf %897, %899 : vector<6x32xf32>
    %903 = arith.addf %901, %902 : vector<6x32xf32>
    %904 = math.tanh %903 : vector<6x32xf32>
    %905 = arith.mulf %900, %904 : vector<6x32xf32>
    %c1_511 = arith.constant 1 : index
    %c1_512 = arith.constant 1 : index
    %c1_513 = arith.constant 1 : index
    %c0_514 = arith.constant 0 : index
    %c0_515 = arith.constant 0 : index
    %906 = vector.load %arg8[%c1_511, %c1_512, %c1_513, %c0_514, %c0_515] : memref<2x2x8x6x32xf32, #tpu.memory_space<vmem>>, vector<1x1x1x6x32xf32>
    %907 = vector.shape_cast %906 : vector<1x1x1x6x32xf32> to vector<6x32xf32>
    %908 = vector.shape_cast %905 : vector<6x32xf32> to vector<1x1x1x6x32xf32>
    tpu.vector_store %arg8[%c1_511, %c1_512, %c1_513, %c0_514, %c0_515], %908 {strides = array<i32>} : memref<2x2x8x6x32xf32, #tpu.memory_space<vmem>>, vector<1x1x1x6x32xf32>,
    %cst_516 = arith.constant dense<0.000000e+00> : vector<6x128xf32>
    %909 = tpu.matmul %905, %704, %cst_516 {dimension_numbers = #tpu.dot_dimension_numbers<[1], [0], [0], [1], [0, 0, 1, 1], [], []>} : vector<6x32xf32>, vector<32x128xf32>, vector<6x128xf32> -> vector<6x128xf32>
    %910 = arith.addf %715, %909 : vector<6x128xf32>
    %911 = arith.negf %910 : vector<6x128xf32>
    %912 = math.exp %911 : vector<6x128xf32>
    %cst_517 = arith.constant 1.000000e+00 : f32
    %913 = vector.broadcast %cst_517 : f32 to vector<6x128xf32>
    %914 = arith.addf %913, %912 : vector<6x128xf32>
    %915 = arith.divf %913, %914 : vector<6x128xf32>
    %916 = math.tanh %910 : vector<6x128xf32>
    %917 = vector.extract_strided_slice %915 {offsets = [0, 0], sizes = [6, 32], strides = [1, 1]} : vector<6x128xf32> to vector<6x32xf32>
    %918 = vector.extract_strided_slice %915 {offsets = [0, 32], sizes = [6, 32], strides = [1, 1]} : vector<6x128xf32> to vector<6x32xf32>
    %919 = vector.extract_strided_slice %916 {offsets = [0, 64], sizes = [6, 32], strides = [1, 1]} : vector<6x128xf32> to vector<6x32xf32>
    %920 = vector.extract_strided_slice %915 {offsets = [0, 96], sizes = [6, 32], strides = [1, 1]} : vector<6x128xf32> to vector<6x32xf32>
    %921 = arith.mulf %918, %903 : vector<6x32xf32>
    %922 = arith.mulf %917, %919 : vector<6x32xf32>
    %923 = arith.addf %921, %922 : vector<6x32xf32>
    %924 = math.tanh %923 : vector<6x32xf32>
    %925 = arith.mulf %920, %924 : vector<6x32xf32>
    %c1_518 = arith.constant 1 : index
    %c1_519 = arith.constant 1 : index
    %c0_520 = arith.constant 0 : index
    %c0_521 = arith.constant 0 : index
    %c0_522 = arith.constant 0 : index
    %926 = vector.load %arg8[%c1_518, %c1_519, %c0_520, %c0_521, %c0_522] : memref<2x2x8x6x32xf32, #tpu.memory_space<vmem>>, vector<1x1x1x6x32xf32>
    %927 = vector.shape_cast %926 : vector<1x1x1x6x32xf32> to vector<6x32xf32>
    %928 = vector.shape_cast %925 : vector<6x32xf32> to vector<1x1x1x6x32xf32>
    tpu.vector_store %arg8[%c1_518, %c1_519, %c0_520, %c0_521, %c0_522], %928 {strides = array<i32>} : memref<2x2x8x6x32xf32, #tpu.memory_space<vmem>>, vector<1x1x1x6x32xf32>,
    %c1_523 = arith.constant 1 : index
    %c0_524 = arith.constant 0 : index
    %c0_525 = arith.constant 0 : index
    %c0_526 = arith.constant 0 : index
    %c0_527 = arith.constant 0 : index
    %929 = vector.load %arg8[%c1_523, %c0_524, %c0_525, %c0_526, %c0_527] : memref<2x2x8x6x32xf32, #tpu.memory_space<vmem>>, vector<1x1x8x6x32xf32>
    %930 = vector.shape_cast %929 : vector<1x1x8x6x32xf32> to vector<8x6x32xf32>
    %c1_528 = arith.constant 1 : index
    %c1_529 = arith.constant 1 : index
    %c0_530 = arith.constant 0 : index
    %c0_531 = arith.constant 0 : index
    %c0_532 = arith.constant 0 : index
    %931 = vector.load %arg8[%c1_528, %c1_529, %c0_530, %c0_531, %c0_532] : memref<2x2x8x6x32xf32, #tpu.memory_space<vmem>>, vector<1x1x8x6x32xf32>
    %932 = vector.shape_cast %931 : vector<1x1x8x6x32xf32> to vector<8x6x32xf32>
    %933 = tpu.concatenate %930, %932 in 2 : vector<8x6x32xf32>, vector<8x6x32xf32> -> vector<8x6x64xf32>
    %c0_533 = arith.constant 0 : index
    %c0_534 = arith.constant 0 : index
    %c0_535 = arith.constant 0 : index
    %934 = vector.load %arg7[%c0_533, %c0_534, %c0_535] : memref<8x6x64xf32, #tpu.memory_space<vmem>>, vector<8x6x64xf32>
    tpu.vector_store %arg7[%c0_533, %c0_534, %c0_535], %933 {strides = array<i32>} : memref<8x6x64xf32, #tpu.memory_space<vmem>>, vector<8x6x64xf32>,
    return
  }
}

</mosaic_0001>

<llo_original>
// kernel: embed_char_forward.1
$region0: #{embed_char_forward.1}
  #allocation0 [shape = 'u32[]', space=smem, size = 0x4, offset = 0x4, fixed_abs, tag = 'smem constant byte address 0x4 - core index']
  #allocation1 [shape = 'u32[144,128]{1,0:T(1,128)}', space=vmem, size = 0x12000, scoped, tag = 'internal scratch']
  #allocation2 [shape = 'f32[2,2,8,6,32]{4,3,2,1,0:T(8,128)}', space=vmem, size = 0x20000, scoped, tag = 'scratch operand']
  %s0 = inlined_call_operand.vmem [shape: s32[8,6,1], index: 0, kind: input, shape index: {}]
  %s1 = inlined_call_operand.vmem [shape: f32[2,20,128], index: 1, kind: input, shape index: {}]
  %s2 = inlined_call_operand.vmem [shape: f32[2,64,128], index: 2, kind: input, shape index: {}]
  %s3 = inlined_call_operand.vmem [shape: f32[2,2,32,128], index: 3, kind: input, shape index: {}]
  %s4 = inlined_call_operand.vmem [shape: f32[2,2,1,128], index: 4, kind: input, shape index: {}]
  %s5 = inlined_call_operand.vmem [shape: f32[4,6,32], index: 5, kind: input, shape index: {}]
  %s6 = inlined_call_operand.vmem [shape: f32[4,6,32], index: 6, kind: input, shape index: {}]
  %s7 = inlined_call_operand.vmem [shape: f32[8,6,64], index: 7, kind: output, shape index: {}]
  %s8 = sld [smem:[#allocation0]]
  $region38: #{embed_char_forward.1} parent=0
    _
  %s10 = ssub.s32 1, %s8
  %s11 = scalar_select 0, %s10, %s8
  // Predicated region
  $region2: #{embed_char_forward.1} parent=0 // pred_check
    _
  $region3: #{embed_char_forward.1} parent=0 // pred_check_branch
    %13 = sbr.rel (0) target = $region5
  $region4: #{embed_char_forward.1} parent=0 // pred_region
    _
  $region5: #{embed_char_forward.1} parent=0 // pred_fallthru
    _
  // Predicated region
  $region6: #{embed_char_forward.1} parent=0 // pred_check
    _
  $region7: #{embed_char_forward.1} parent=0 // pred_check_branch
    %15 = sbr.rel (0) target = $region9
  $region8: #{embed_char_forward.1} parent=0 // pred_region
    _
  $region9: #{embed_char_forward.1} parent=0 // pred_fallthru
    _
  // Predicated region
  $region10: #{embed_char_forward.1} parent=0 // pred_check
    _
  $region11: #{embed_char_forward.1} parent=0 // pred_check_branch
    %17 = sbr.rel (0) target = $region13
  $region12: #{embed_char_forward.1} parent=0 // pred_region
    _
  $region13: #{embed_char_forward.1} parent=0 // pred_fallthru
    _
  // Predicated region
  $region14: #{embed_char_forward.1} parent=0 // pred_check
    _
  $region15: #{embed_char_forward.1} parent=0 // pred_check_branch
    %19 = sbr.rel (0) target = $region17
  $region16: #{embed_char_forward.1} parent=0 // pred_region
    _
  $region17: #{embed_char_forward.1} parent=0 // pred_fallthru
    _
  // Predicated region
  $region18: #{embed_char_forward.1} parent=0 // pred_check
    _
  $region19: #{embed_char_forward.1} parent=0 // pred_check_branch
    %21 = sbr.rel (0) target = $region21
  $region20: #{embed_char_forward.1} parent=0 // pred_region
    _
  $region21: #{embed_char_forward.1} parent=0 // pred_fallthru
    _
  // Predicated region
  $region22: #{embed_char_forward.1} parent=0 // pred_check
    _
  $region23: #{embed_char_forward.1} parent=0 // pred_check_branch
    %23 = sbr.rel (0) target = $region25
  $region24: #{embed_char_forward.1} parent=0 // pred_region
    _
  $region25: #{embed_char_forward.1} parent=0 // pred_fallthru
    _
  // Predicated region
  $region26: #{embed_char_forward.1} parent=0 // pred_check
    _
  $region27: #{embed_char_forward.1} parent=0 // pred_check_branch
    %25 = sbr.rel (0) target = $region29
  $region28: #{embed_char_forward.1} parent=0 // pred_region
    _
  $region29: #{embed_char_forward.1} parent=0 // pred_fallthru
    _
  %v26 = vlaneseq
  %v27 = vand.u32 %v26, 127
  %v28 = vld [vmem:[%s1] sm:$0xff]
  %v29 = vld [vmem:[%s1 + $0x8] sm:$0xff]
  %v30 = vld [vmem:[%s1 + $0x10] sm:$0xf]
  %v31 = vld [vmem:[%s3] sm:$0xff]
  %v32 = vld [vmem:[%s3 + $0x8] sm:$0xff]
  %v33 = vld [vmem:[%s3 + $0x10] sm:$0xff]
  %v34 = vld [vmem:[%s3 + $0x18] sm:$0xff]
  %v35 = vld [vmem:[%s4] sm:$0x1]
  %v37 = vlaneseq
  %v38 = vshrl.u32 %v37, 7
  %v39 = vsub.s32 0, %v38
  %v40 = vrot.slane %v35, %v39
  %v42 = vld [vmem:[%s0] sm:$0x3f]
  %43 = vset.pattern.permute.xlu0 0
  %44 = vperm.xlu0 %43, %v42
  %v45 = vpop.permute.xlu0 %44
  %vm46 = vcmp.eq.s32.totalorder %v45, %v27
  %v47 = vsel %vm46, 1, 0
  %v48 = vcvt.s32.f32 %v47
  %vm49 = vcmask 162816
  %v51 = vsel %vm49, %v48, 0
  %vm53 = vcmask 1043456
  %v55 = vsel %vm53, %v30, 0
  %57 = vmatprep.subr.mxu0 0.0
  %58 = vmatpush1.msra.mxu0 %v28
  %59 = vmatprep.subr.mxu0 0.0
  %60 = vmatpush1.msra.mxu0 %v29
  %61 = vmatprep.subr.mxu0 0.0
  %62 = vmatpush1.msra.mxu0 %v55
  %63 = vmatprep.subr.mxu0 0.0
  %64 = vmatpush1.msra.mxu0 0.0
  %65 = vmatprep.subr.mxu0 0.0
  %66 = vmatpush1.msra.mxu0 0.0
  %67 = vmatprep.subr.mxu0 0.0
  %68 = vmatpush1.msra.mxu0 0.0
  %69 = vmatprep.subr.mxu0 0.0
  %70 = vmatpush1.msra.mxu0 0.0
  %71 = vmatprep.subr.mxu0 0.0
  %72 = vmatpush1.msra.mxu0 0.0
  %73 = vmatprep.subr.mxu0 0.0
  %74 = vmatpush1.msra.mxu0 0.0
  %75 = vmatprep.subr.mxu0 0.0
  %76 = vmatpush1.msra.mxu0 0.0
  %77 = vmatprep.subr.mxu0 0.0
  %78 = vmatpush1.msra.mxu0 0.0
  %79 = vmatprep.subr.mxu0 0.0
  %80 = vmatpush1.msra.mxu0 0.0
  %81 = vmatprep.subr.mxu0 0.0
  %82 = vmatpush1.msra.mxu0 0.0
  %83 = vmatprep.subr.mxu0 0.0
  %84 = vmatpush1.msra.mxu0 0.0
  %85 = vmatprep.subr.mxu0 0.0
  %86 = vmatpush1.msra.mxu0 0.0
  %87 = vmatprep.subr.mxu0 0.0
  %88 = vmatpush1.msra.mxu0 0.0
  %89 = vmatprep.subr.mxu0 0.0
  %90 = vmatpush1.msra.mxu0 0.0
  %91 = vmatprep.subr.mxu0 0.0
  %92 = vmatpush1.msra.mxu0 0.0
  %93 = vmatprep.subr.mxu0 0.0
  %94 = vmatpush1.msra.mxu0 0.0
  %95 = vmatprep.subr.mxu0 0.0
  %96 = vmatpush1.msra.mxu0 0.0
  %97 = vmatprep.subr.mxu0 0.0
  %98 = vmatpush1.msra.mxu0 0.0
  %99 = vmatprep.subr.mxu0 0.0
  %100 = vmatpush1.msra.mxu0 0.0
  %101 = vmatprep.subr.mxu0 0.0
  %102 = vmatpush1.msra.mxu0 0.0
  %103 = vmatprep.subr.mxu0 0.0
  %104 = vmatpush1.msra.mxu0 0.0
  %105 = vmatprep.subr.mxu0 0.0
  %106 = vmatpush1.msra.mxu0 0.0
  %107 = vmatprep.subr.mxu0 0.0
  %108 = vmatpush1.msra.mxu0 0.0
  %109 = vmatprep.subr.mxu0 0.0
  %110 = vmatpush1.msra.mxu0 0.0
  %111 = vmatprep.subr.mxu0 0.0
  %112 = vmatpush1.msra.mxu0 0.0
  %113 = vmatprep.subr.mxu0 0.0
  %114 = vmatpush1.msra.mxu0 0.0
  %115 = vmatprep.subr.mxu0 0.0
  %116 = vmatpush1.msra.mxu0 0.0
  %117 = vmatprep.subr.mxu0 0.0
  %118 = vmatpush1.msra.mxu0 0.0
  %119 = vmatprep.subr.mxu0 0.0
  %120 = vmatpush1.msra.mxu0 0.0
  %121 = vmatprep.mubr.f32.mxu0 0.0
  %122 = vmatmul.mubr.f32.gmra.mrb[0].mxu0 %v51
  %v123 = vpop.f32.mrb[0].mxu0
  %v124 = vadd.f32 %v40, %v123
  %v125 = vpop.f32.mrb[0].mxu0
  %126 = vdwg.mxu0
  %s127 = scalar_lea.vmem %s0, 8
  %v128 = vld [vmem:[%s127] sm:$0x3f]
  %129 = vset.pattern.permute.xlu0 0
  %130 = vperm.xlu0 %129, %v128
  %v131 = vpop.permute.xlu0 %130
  %vm132 = vcmp.eq.s32.totalorder %v131, %v27
  %v133 = vsel %vm132, 1, 0
  %v134 = vcvt.s32.f32 %v133
  %v136 = vsel %vm49, %v134, 0
  %138 = vmatprep.subr.mxu0 0.0
  %139 = vmatpush1.msra.mxu0 %v28
  %140 = vmatprep.subr.mxu0 0.0
  %141 = vmatpush1.msra.mxu0 %v29
  %142 = vmatprep.subr.mxu0 0.0
  %143 = vmatpush1.msra.mxu0 %v55
  %144 = vmatprep.subr.mxu0 0.0
  %145 = vmatpush1.msra.mxu0 0.0
  %146 = vmatprep.subr.mxu0 0.0
  %147 = vmatpush1.msra.mxu0 0.0
  %148 = vmatprep.subr.mxu0 0.0
  %149 = vmatpush1.msra.mxu0 0.0
  %150 = vmatprep.subr.mxu0 0.0
  %151 = vmatpush1.msra.mxu0 0.0
  %152 = vmatprep.subr.mxu0 0.0
  %153 = vmatpush1.msra.mxu0 0.0
  %154 = vmatprep.subr.mxu0 0.0
  %155 = vmatpush1.msra.mxu0 0.0
  %156 = vmatprep.subr.mxu0 0.0
  %157 = vmatpush1.msra.mxu0 0.0
  %158 = vmatprep.subr.mxu0 0.0
  %159 = vmatpush1.msra.mxu0 0.0
  %160 = vmatprep.subr.mxu0 0.0
  %161 = vmatpush1.msra.mxu0 0.0
  %162 = vmatprep.subr.mxu0 0.0
  %163 = vmatpush1.msra.mxu0 0.0
  %164 = vmatprep.subr.mxu0 0.0
  %165 = vmatpush1.msra.mxu0 0.0
  %166 = vmatprep.subr.mxu0 0.0
  %167 = vmatpush1.msra.mxu0 0.0
  %168 = vmatprep.subr.mxu0 0.0
  %169 = vmatpush1.msra.mxu0 0.0
  %170 = vmatprep.subr.mxu0 0.0
  %171 = vmatpush1.msra.mxu0 0.0
  %172 = vmatprep.subr.mxu0 0.0
  %173 = vmatpush1.msra.mxu0 0.0
  %174 = vmatprep.subr.mxu0 0.0
  %175 = vmatpush1.msra.mxu0 0.0
  %176 = vmatprep.subr.mxu0 0.0
  %177 = vmatpush1.msra.mxu0 0.0
  %178 = vmatprep.subr.mxu0 0.0
  %179 = vmatpush1.msra.mxu0 0.0
  %180 = vmatprep.subr.mxu0 0.0
  %181 = vmatpush1.msra.mxu0 0.0
  %182 = vmatprep.subr.mxu0 0.0
  %183 = vmatpush1.msra.mxu0 0.0
  %184 = vmatprep.subr.mxu0 0.0
  %185 = vmatpush1.msra.mxu0 0.0
  %186 = vmatprep.subr.mxu0 0.0
  %187 = vmatpush1.msra.mxu0 0.0
  %188 = vmatprep.subr.mxu0 0.0
  %189 = vmatpush1.msra.mxu0 0.0
  %190 = vmatprep.subr.mxu0 0.0
  %191 = vmatpush1.msra.mxu0 0.0
  %192 = vmatprep.subr.mxu0 0.0
  %193 = vmatpush1.msra.mxu0 0.0
  %194 = vmatprep.subr.mxu0 0.0
  %195 = vmatpush1.msra.mxu0 0.0
  %196 = vmatprep.subr.mxu0 0.0
  %197 = vmatpush1.msra.mxu0 0.0
  %198 = vmatprep.subr.mxu0 0.0
  %199 = vmatpush1.msra.mxu0 0.0
  %200 = vmatprep.subr.mxu0 0.0
  %201 = vmatpush1.msra.mxu0 0.0
  %202 = vmatprep.mubr.f32.mxu0 0.0
  %203 = vmatmul.mubr.f32.gmra.mrb[0].mxu0 %v136
  %v204 = vpop.f32.mrb[0].mxu0
  %v205 = vadd.f32 %v40, %v204
  %v206 = vpop.f32.mrb[0].mxu0
  %207 = vdwg.mxu0
  %s208 = scalar_lea.vmem %s0, 16
  %v209 = vld [vmem:[%s208] sm:$0x3f]
  %210 = vset.pattern.permute.xlu0 0
  %211 = vperm.xlu0 %210, %v209
  %v212 = vpop.permute.xlu0 %211
  %vm213 = vcmp.eq.s32.totalorder %v212, %v27
  %v214 = vsel %vm213, 1, 0
  %v215 = vcvt.s32.f32 %v214
  %v217 = vsel %vm49, %v215, 0
  %219 = vmatprep.subr.mxu0 0.0
  %220 = vmatpush1.msra.mxu0 %v28
  %221 = vmatprep.subr.mxu0 0.0
  %222 = vmatpush1.msra.mxu0 %v29
  %223 = vmatprep.subr.mxu0 0.0
  %224 = vmatpush1.msra.mxu0 %v55
  %225 = vmatprep.subr.mxu0 0.0
  %226 = vmatpush1.msra.mxu0 0.0
  %227 = vmatprep.subr.mxu0 0.0
  %228 = vmatpush1.msra.mxu0 0.0
  %229 = vmatprep.subr.mxu0 0.0
  %230 = vmatpush1.msra.mxu0 0.0
  %231 = vmatprep.subr.mxu0 0.0
  %232 = vmatpush1.msra.mxu0 0.0
  %233 = vmatprep.subr.mxu0 0.0
  %234 = vmatpush1.msra.mxu0 0.0
  %235 = vmatprep.subr.mxu0 0.0
  %236 = vmatpush1.msra.mxu0 0.0
  %237 = vmatprep.subr.mxu0 0.0
  %238 = vmatpush1.msra.mxu0 0.0
  %239 = vmatprep.subr.mxu0 0.0
  %240 = vmatpush1.msra.mxu0 0.0
  %241 = vmatprep.subr.mxu0 0.0
  %242 = vmatpush1.msra.mxu0 0.0
  %243 = vmatprep.subr.mxu0 0.0
  %244 = vmatpush1.msra.mxu0 0.0
  %245 = vmatprep.subr.mxu0 0.0
  %246 = vmatpush1.msra.mxu0 0.0
  %247 = vmatprep.subr.mxu0 0.0
  %248 = vmatpush1.msra.mxu0 0.0
  %249 = vmatprep.subr.mxu0 0.0
  %250 = vmatpush1.msra.mxu0 0.0
  %251 = vmatprep.subr.mxu0 0.0
  %252 = vmatpush1.msra.mxu0 0.0
  %253 = vmatprep.subr.mxu0 0.0
  %254 = vmatpush1.msra.mxu0 0.0
  %255 = vmatprep.subr.mxu0 0.0
  %256 = vmatpush1.msra.mxu0 0.0
  %257 = vmatprep.subr.mxu0 0.0
  %258 = vmatpush1.msra.mxu0 0.0
  %259 = vmatprep.subr.mxu0 0.0
  %260 = vmatpush1.msra.mxu0 0.0
  %261 = vmatprep.subr.mxu0 0.0
  %262 = vmatpush1.msra.mxu0 0.0
  %263 = vmatprep.subr.mxu0 0.0
  %264 = vmatpush1.msra.mxu0 0.0
  %265 = vmatprep.subr.mxu0 0.0
  %266 = vmatpush1.msra.mxu0 0.0
  %267 = vmatprep.subr.mxu0 0.0
  %268 = vmatpush1.msra.mxu0 0.0
  %269 = vmatprep.subr.mxu0 0.0
  %270 = vmatpush1.msra.mxu0 0.0
  %271 = vmatprep.subr.mxu0 0.0
  %272 = vmatpush1.msra.mxu0 0.0
  %273 = vmatprep.subr.mxu0 0.0
  %274 = vmatpush1.msra.mxu0 0.0
  %275 = vmatprep.subr.mxu0 0.0
  %276 = vmatpush1.msra.mxu0 0.0
  %277 = vmatprep.subr.mxu0 0.0
  %278 = vmatpush1.msra.mxu0 0.0
  %279 = vmatprep.subr.mxu0 0.0
  %280 = vmatpush1.msra.mxu0 0.0
  %281 = vmatprep.subr.mxu0 0.0
  %282 = vmatpush1.msra.mxu0 0.0
  %283 = vmatprep.mubr.f32.mxu0 0.0
  %284 = vmatmul.mubr.f32.gmra.mrb[0].mxu0 %v217
  %v285 = vpop.f32.mrb[0].mxu0
  %v286 = vadd.f32 %v40, %v285
  %v287 = vpop.f32.mrb[0].mxu0
  %288 = vdwg.mxu0
  %s289 = scalar_lea.vmem %s0, 24
  %v290 = vld [vmem:[%s289] sm:$0x3f]
  %291 = vset.pattern.permute.xlu0 0
  %292 = vperm.xlu0 %291, %v290
  %v293 = vpop.permute.xlu0 %292
  %vm294 = vcmp.eq.s32.totalorder %v293, %v27
  %v295 = vsel %vm294, 1, 0
  %v296 = vcvt.s32.f32 %v295
  %v298 = vsel %vm49, %v296, 0
  %300 = vmatprep.subr.mxu0 0.0
  %301 = vmatpush1.msra.mxu0 %v28
  %302 = vmatprep.subr.mxu0 0.0
  %303 = vmatpush1.msra.mxu0 %v29
  %304 = vmatprep.subr.mxu0 0.0
  %305 = vmatpush1.msra.mxu0 %v55
  %306 = vmatprep.subr.mxu0 0.0
  %307 = vmatpush1.msra.mxu0 0.0
  %308 = vmatprep.subr.mxu0 0.0
  %309 = vmatpush1.msra.mxu0 0.0
  %310 = vmatprep.subr.mxu0 0.0
  %311 = vmatpush1.msra.mxu0 0.0
  %312 = vmatprep.subr.mxu0 0.0
  %313 = vmatpush1.msra.mxu0 0.0
  %314 = vmatprep.subr.mxu0 0.0
  %315 = vmatpush1.msra.mxu0 0.0
  %316 = vmatprep.subr.mxu0 0.0
  %317 = vmatpush1.msra.mxu0 0.0
  %318 = vmatprep.subr.mxu0 0.0
  %319 = vmatpush1.msra.mxu0 0.0
  %320 = vmatprep.subr.mxu0 0.0
  %321 = vmatpush1.msra.mxu0 0.0
  %322 = vmatprep.subr.mxu0 0.0
  %323 = vmatpush1.msra.mxu0 0.0
  %324 = vmatprep.subr.mxu0 0.0
  %325 = vmatpush1.msra.mxu0 0.0
  %326 = vmatprep.subr.mxu0 0.0
  %327 = vmatpush1.msra.mxu0 0.0
  %328 = vmatprep.subr.mxu0 0.0
  %329 = vmatpush1.msra.mxu0 0.0
  %330 = vmatprep.subr.mxu0 0.0
  %331 = vmatpush1.msra.mxu0 0.0
  %332 = vmatprep.subr.mxu0 0.0
  %333 = vmatpush1.msra.mxu0 0.0
  %334 = vmatprep.subr.mxu0 0.0
  %335 = vmatpush1.msra.mxu0 0.0
  %336 = vmatprep.subr.mxu0 0.0
  %337 = vmatpush1.msra.mxu0 0.0
  %338 = vmatprep.subr.mxu0 0.0
  %339 = vmatpush1.msra.mxu0 0.0
  %340 = vmatprep.subr.mxu0 0.0
  %341 = vmatpush1.msra.mxu0 0.0
  %342 = vmatprep.subr.mxu0 0.0
  %343 = vmatpush1.msra.mxu0 0.0
  %344 = vmatprep.subr.mxu0 0.0
  %345 = vmatpush1.msra.mxu0 0.0
  %346 = vmatprep.subr.mxu0 0.0
  %347 = vmatpush1.msra.mxu0 0.0
  %348 = vmatprep.subr.mxu0 0.0
  %349 = vmatpush1.msra.mxu0 0.0
  %350 = vmatprep.subr.mxu0 0.0
  %351 = vmatpush1.msra.mxu0 0.0
  %352 = vmatprep.subr.mxu0 0.0
  %353 = vmatpush1.msra.mxu0 0.0
  %354 = vmatprep.subr.mxu0 0.0
  %355 = vmatpush1.msra.mxu0 0.0
  %356 = vmatprep.subr.mxu0 0.0
  %357 = vmatpush1.msra.mxu0 0.0
  %358 = vmatprep.subr.mxu0 0.0
  %359 = vmatpush1.msra.mxu0 0.0
  %360 = vmatprep.subr.mxu0 0.0
  %361 = vmatpush1.msra.mxu0 0.0
  %362 = vmatprep.subr.mxu0 0.0
  %363 = vmatpush1.msra.mxu0 0.0
  %364 = vmatprep.mubr.f32.mxu0 0.0
  %365 = vmatmul.mubr.f32.gmra.mrb[0].mxu0 %v298
  %v366 = vpop.f32.mrb[0].mxu0
  %v367 = vadd.f32 %v40, %v366
  %v368 = vpop.f32.mrb[0].mxu0
  %369 = vdwg.mxu0
  %s370 = scalar_lea.vmem %s0, 32
  %v371 = vld [vmem:[%s370] sm:$0x3f]
  %372 = vset.pattern.permute.xlu0 0
  %373 = vperm.xlu0 %372, %v371
  %v374 = vpop.permute.xlu0 %373
  %vm375 = vcmp.eq.s32.totalorder %v374, %v27
  %v376 = vsel %vm375, 1, 0
  %v377 = vcvt.s32.f32 %v376
  %v379 = vsel %vm49, %v377, 0
  %381 = vmatprep.subr.mxu0 0.0
  %382 = vmatpush1.msra.mxu0 %v28
  %383 = vmatprep.subr.mxu0 0.0
  %384 = vmatpush1.msra.mxu0 %v29
  %385 = vmatprep.subr.mxu0 0.0
  %386 = vmatpush1.msra.mxu0 %v55
  %387 = vmatprep.subr.mxu0 0.0
  %388 = vmatpush1.msra.mxu0 0.0
  %389 = vmatprep.subr.mxu0 0.0
  %390 = vmatpush1.msra.mxu0 0.0
  %391 = vmatprep.subr.mxu0 0.0
  %392 = vmatpush1.msra.mxu0 0.0
  %393 = vmatprep.subr.mxu0 0.0
  %394 = vmatpush1.msra.mxu0 0.0
  %395 = vmatprep.subr.mxu0 0.0
  %396 = vmatpush1.msra.mxu0 0.0
  %397 = vmatprep.subr.mxu0 0.0
  %398 = vmatpush1.msra.mxu0 0.0
  %399 = vmatprep.subr.mxu0 0.0
  %400 = vmatpush1.msra.mxu0 0.0
  %401 = vmatprep.subr.mxu0 0.0
  %402 = vmatpush1.msra.mxu0 0.0
  %403 = vmatprep.subr.mxu0 0.0
  %404 = vmatpush1.msra.mxu0 0.0
  %405 = vmatprep.subr.mxu0 0.0
  %406 = vmatpush1.msra.mxu0 0.0
  %407 = vmatprep.subr.mxu0 0.0
  %408 = vmatpush1.msra.mxu0 0.0
  %409 = vmatprep.subr.mxu0 0.0
  %410 = vmatpush1.msra.mxu0 0.0
  %411 = vmatprep.subr.mxu0 0.0
  %412 = vmatpush1.msra.mxu0 0.0
  %413 = vmatprep.subr.mxu0 0.0
  %414 = vmatpush1.msra.mxu0 0.0
  %415 = vmatprep.subr.mxu0 0.0
  %416 = vmatpush1.msra.mxu0 0.0
  %417 = vmatprep.subr.mxu0 0.0
  %418 = vmatpush1.msra.mxu0 0.0
  %419 = vmatprep.subr.mxu0 0.0
  %420 = vmatpush1.msra.mxu0 0.0
  %421 = vmatprep.subr.mxu0 0.0
  %422 = vmatpush1.msra.mxu0 0.0
  %423 = vmatprep.subr.mxu0 0.0
  %424 = vmatpush1.msra.mxu0 0.0
  %425 = vmatprep.subr.mxu0 0.0
  %426 = vmatpush1.msra.mxu0 0.0
  %427 = vmatprep.subr.mxu0 0.0
  %428 = vmatpush1.msra.mxu0 0.0
  %429 = vmatprep.subr.mxu0 0.0
  %430 = vmatpush1.msra.mxu0 0.0
  %431 = vmatprep.subr.mxu0 0.0
  %432 = vmatpush1.msra.mxu0 0.0
  %433 = vmatprep.subr.mxu0 0.0
  %434 = vmatpush1.msra.mxu0 0.0
  %435 = vmatprep.subr.mxu0 0.0
  %436 = vmatpush1.msra.mxu0 0.0
  %437 = vmatprep.subr.mxu0 0.0
  %438 = vmatpush1.msra.mxu0 0.0
  %439 = vmatprep.subr.mxu0 0.0
  %440 = vmatpush1.msra.mxu0 0.0
  %441 = vmatprep.subr.mxu0 0.0
  %442 = vmatpush1.msra.mxu0 0.0
  %443 = vmatprep.subr.mxu0 0.0
  %444 = vmatpush1.msra.mxu0 0.0
  %445 = vmatprep.mubr.f32.mxu0 0.0
  %446 = vmatmul.mubr.f32.gmra.mrb[0].mxu0 %v379
  %v447 = vpop.f32.mrb[0].mxu0
  %v448 = vadd.f32 %v40, %v447
  %v449 = vpop.f32.mrb[0].mxu0
  %450 = vdwg.mxu0
  %s451 = scalar_lea.vmem %s0, 40
  %v452 = vld [vmem:[%s451] sm:$0x3f]
  %453 = vset.pattern.permute.xlu0 0
  %454 = vperm.xlu0 %453, %v452
  %v455 = vpop.permute.xlu0 %454
  %vm456 = vcmp.eq.s32.totalorder %v455, %v27
  %v457 = vsel %vm456, 1, 0
  %v458 = vcvt.s32.f32 %v457
  %v460 = vsel %vm49, %v458, 0
  %462 = vmatprep.subr.mxu0 0.0
  %463 = vmatpush1.msra.mxu0 %v28
  %464 = vmatprep.subr.mxu0 0.0
  %465 = vmatpush1.msra.mxu0 %v29
  %466 = vmatprep.subr.mxu0 0.0
  %467 = vmatpush1.msra.mxu0 %v55
  %468 = vmatprep.subr.mxu0 0.0
  %469 = vmatpush1.msra.mxu0 0.0
  %470 = vmatprep.subr.mxu0 0.0
  %471 = vmatpush1.msra.mxu0 0.0
  %472 = vmatprep.subr.mxu0 0.0
  %473 = vmatpush1.msra.mxu0 0.0
  %474 = vmatprep.subr.mxu0 0.0
  %475 = vmatpush1.msra.mxu0 0.0
  %476 = vmatprep.subr.mxu0 0.0
  %477 = vmatpush1.msra.mxu0 0.0
  %478 = vmatprep.subr.mxu0 0.0
  %479 = vmatpush1.msra.mxu0 0.0
  %480 = vmatprep.subr.mxu0 0.0
  %481 = vmatpush1.msra.mxu0 0.0
  %482 = vmatprep.subr.mxu0 0.0
  %483 = vmatpush1.msra.mxu0 0.0
  %484 = vmatprep.subr.mxu0 0.0
  %485 = vmatpush1.msra.mxu0 0.0
  %486 = vmatprep.subr.mxu0 0.0
  %487 = vmatpush1.msra.mxu0 0.0
  %488 = vmatprep.subr.mxu0 0.0
  %489 = vmatpush1.msra.mxu0 0.0
  %490 = vmatprep.subr.mxu0 0.0
  %491 = vmatpush1.msra.mxu0 0.0
  %492 = vmatprep.subr.mxu0 0.0
  %493 = vmatpush1.msra.mxu0 0.0
  %494 = vmatprep.subr.mxu0 0.0
  %495 = vmatpush1.msra.mxu0 0.0
  %496 = vmatprep.subr.mxu0 0.0
  %497 = vmatpush1.msra.mxu0 0.0
  %498 = vmatprep.subr.mxu0 0.0
  %499 = vmatpush1.msra.mxu0 0.0
  %500 = vmatprep.subr.mxu0 0.0
  %501 = vmatpush1.msra.mxu0 0.0
  %502 = vmatprep.subr.mxu0 0.0
  %503 = vmatpush1.msra.mxu0 0.0
  %504 = vmatprep.subr.mxu0 0.0
  %505 = vmatpush1.msra.mxu0 0.0
  %506 = vmatprep.subr.mxu0 0.0
  %507 = vmatpush1.msra.mxu0 0.0
  %508 = vmatprep.subr.mxu0 0.0
  %509 = vmatpush1.msra.mxu0 0.0
  %510 = vmatprep.subr.mxu0 0.0
  %511 = vmatpush1.msra.mxu0 0.0
  %512 = vmatprep.subr.mxu0 0.0
  %513 = vmatpush1.msra.mxu0 0.0
  %514 = vmatprep.subr.mxu0 0.0
  %515 = vmatpush1.msra.mxu0 0.0
  %516 = vmatprep.subr.mxu0 0.0
  %517 = vmatpush1.msra.mxu0 0.0
  %518 = vmatprep.subr.mxu0 0.0
  %519 = vmatpush1.msra.mxu0 0.0
  %520 = vmatprep.subr.mxu0 0.0
  %521 = vmatpush1.msra.mxu0 0.0
  %522 = vmatprep.subr.mxu0 0.0
  %523 = vmatpush1.msra.mxu0 0.0
  %524 = vmatprep.subr.mxu0 0.0
  %525 = vmatpush1.msra.mxu0 0.0
  %526 = vmatprep.mubr.f32.mxu0 0.0
  %527 = vmatmul.mubr.f32.gmra.mrb[0].mxu0 %v460
  %v528 = vpop.f32.mrb[0].mxu0
  %v529 = vadd.f32 %v40, %v528
  %v530 = vpop.f32.mrb[0].mxu0
  %531 = vdwg.mxu0
  %s532 = scalar_lea.vmem %s0, 48
  %v533 = vld [vmem:[%s532] sm:$0x3f]
  %534 = vset.pattern.permute.xlu0 0
  %535 = vperm.xlu0 %534, %v533
  %v536 = vpop.permute.xlu0 %535
  %vm537 = vcmp.eq.s32.totalorder %v536, %v27
  %v538 = vsel %vm537, 1, 0
  %v539 = vcvt.s32.f32 %v538
  %v541 = vsel %vm49, %v539, 0
  %543 = vmatprep.subr.mxu0 0.0
  %544 = vmatpush1.msra.mxu0 %v28
  %545 = vmatprep.subr.mxu0 0.0
  %546 = vmatpush1.msra.mxu0 %v29
  %547 = vmatprep.subr.mxu0 0.0
  %548 = vmatpush1.msra.mxu0 %v55
  %549 = vmatprep.subr.mxu0 0.0
  %550 = vmatpush1.msra.mxu0 0.0
  %551 = vmatprep.subr.mxu0 0.0
  %552 = vmatpush1.msra.mxu0 0.0
  %553 = vmatprep.subr.mxu0 0.0
  %554 = vmatpush1.msra.mxu0 0.0
  %555 = vmatprep.subr.mxu0 0.0
  %556 = vmatpush1.msra.mxu0 0.0
  %557 = vmatprep.subr.mxu0 0.0
  %558 = vmatpush1.msra.mxu0 0.0
  %559 = vmatprep.subr.mxu0 0.0
  %560 = vmatpush1.msra.mxu0 0.0
  %561 = vmatprep.subr.mxu0 0.0
  %562 = vmatpush1.msra.mxu0 0.0
  %563 = vmatprep.subr.mxu0 0.0
  %564 = vmatpush1.msra.mxu0 0.0
  %565 = vmatprep.subr.mxu0 0.0
  %566 = vmatpush1.msra.mxu0 0.0
  %567 = vmatprep.subr.mxu0 0.0
  %568 = vmatpush1.msra.mxu0 0.0
  %569 = vmatprep.subr.mxu0 0.0
  %570 = vmatpush1.msra.mxu0 0.0
  %571 = vmatprep.subr.mxu0 0.0
  %572 = vmatpush1.msra.mxu0 0.0
  %573 = vmatprep.subr.mxu0 0.0
  %574 = vmatpush1.msra.mxu0 0.0
  %575 = vmatprep.subr.mxu0 0.0
  %576 = vmatpush1.msra.mxu0 0.0
  %577 = vmatprep.subr.mxu0 0.0
  %578 = vmatpush1.msra.mxu0 0.0
  %579 = vmatprep.subr.mxu0 0.0
  %580 = vmatpush1.msra.mxu0 0.0
  %581 = vmatprep.subr.mxu0 0.0
  %582 = vmatpush1.msra.mxu0 0.0
  %583 = vmatprep.subr.mxu0 0.0
  %584 = vmatpush1.msra.mxu0 0.0
  %585 = vmatprep.subr.mxu0 0.0
  %586 = vmatpush1.msra.mxu0 0.0
  %587 = vmatprep.subr.mxu0 0.0
  %588 = vmatpush1.msra.mxu0 0.0
  %589 = vmatprep.subr.mxu0 0.0
  %590 = vmatpush1.msra.mxu0 0.0
  %591 = vmatprep.subr.mxu0 0.0
  %592 = vmatpush1.msra.mxu0 0.0
  %593 = vmatprep.subr.mxu0 0.0
  %594 = vmatpush1.msra.mxu0 0.0
  %595 = vmatprep.subr.mxu0 0.0
  %596 = vmatpush1.msra.mxu0 0.0
  %597 = vmatprep.subr.mxu0 0.0
  %598 = vmatpush1.msra.mxu0 0.0
  %599 = vmatprep.subr.mxu0 0.0
  %600 = vmatpush1.msra.mxu0 0.0
  %601 = vmatprep.subr.mxu0 0.0
  %602 = vmatpush1.msra.mxu0 0.0
  %603 = vmatprep.subr.mxu0 0.0
  %604 = vmatpush1.msra.mxu0 0.0
  %605 = vmatprep.subr.mxu0 0.0
  %606 = vmatpush1.msra.mxu0 0.0
  %607 = vmatprep.mubr.f32.mxu0 0.0
  %608 = vmatmul.mubr.f32.gmra.mrb[0].mxu0 %v541
  %v609 = vpop.f32.mrb[0].mxu0
  %v610 = vadd.f32 %v40, %v609
  %v611 = vpop.f32.mrb[0].mxu0
  %612 = vdwg.mxu0
  %s613 = scalar_lea.vmem %s0, 56
  %v614 = vld [vmem:[%s613] sm:$0x3f]
  %615 = vset.pattern.permute.xlu0 0
  %616 = vperm.xlu0 %615, %v614
  %v617 = vpop.permute.xlu0 %616
  %vm618 = vcmp.eq.s32.totalorder %v617, %v27
  %v619 = vsel %vm618, 1, 0
  %v620 = vcvt.s32.f32 %v619
  %v622 = vsel %vm49, %v620, 0
  %624 = vmatprep.subr.mxu0 0.0
  %625 = vmatpush1.msra.mxu0 %v28
  %626 = vmatprep.subr.mxu0 0.0
  %627 = vmatpush1.msra.mxu0 %v29
  %628 = vmatprep.subr.mxu0 0.0
  %629 = vmatpush1.msra.mxu0 %v55
  %630 = vmatprep.subr.mxu0 0.0
  %631 = vmatpush1.msra.mxu0 0.0
  %632 = vmatprep.subr.mxu0 0.0
  %633 = vmatpush1.msra.mxu0 0.0
  %634 = vmatprep.subr.mxu0 0.0
  %635 = vmatpush1.msra.mxu0 0.0
  %636 = vmatprep.subr.mxu0 0.0
  %637 = vmatpush1.msra.mxu0 0.0
  %638 = vmatprep.subr.mxu0 0.0
  %639 = vmatpush1.msra.mxu0 0.0
  %640 = vmatprep.subr.mxu0 0.0
  %641 = vmatpush1.msra.mxu0 0.0
  %642 = vmatprep.subr.mxu0 0.0
  %643 = vmatpush1.msra.mxu0 0.0
  %644 = vmatprep.subr.mxu0 0.0
  %645 = vmatpush1.msra.mxu0 0.0
  %646 = vmatprep.subr.mxu0 0.0
  %647 = vmatpush1.msra.mxu0 0.0
  %648 = vmatprep.subr.mxu0 0.0
  %649 = vmatpush1.msra.mxu0 0.0
  %650 = vmatprep.subr.mxu0 0.0
  %651 = vmatpush1.msra.mxu0 0.0
  %652 = vmatprep.subr.mxu0 0.0
  %653 = vmatpush1.msra.mxu0 0.0
  %654 = vmatprep.subr.mxu0 0.0
  %655 = vmatpush1.msra.mxu0 0.0
  %656 = vmatprep.subr.mxu0 0.0
  %657 = vmatpush1.msra.mxu0 0.0
  %658 = vmatprep.subr.mxu0 0.0
  %659 = vmatpush1.msra.mxu0 0.0
  %660 = vmatprep.subr.mxu0 0.0
  %661 = vmatpush1.msra.mxu0 0.0
  %662 = vmatprep.subr.mxu0 0.0
  %663 = vmatpush1.msra.mxu0 0.0
  %664 = vmatprep.subr.mxu0 0.0
  %665 = vmatpush1.msra.mxu0 0.0
  %666 = vmatprep.subr.mxu0 0.0
  %667 = vmatpush1.msra.mxu0 0.0
  %668 = vmatprep.subr.mxu0 0.0
  %669 = vmatpush1.msra.mxu0 0.0
  %670 = vmatprep.subr.mxu0 0.0
  %671 = vmatpush1.msra.mxu0 0.0
  %672 = vmatprep.subr.mxu0 0.0
  %673 = vmatpush1.msra.mxu0 0.0
  %674 = vmatprep.subr.mxu0 0.0
  %675 = vmatpush1.msra.mxu0 0.0
  %676 = vmatprep.subr.mxu0 0.0
  %677 = vmatpush1.msra.mxu0 0.0
  %678 = vmatprep.subr.mxu0 0.0
  %679 = vmatpush1.msra.mxu0 0.0
  %680 = vmatprep.subr.mxu0 0.0
  %681 = vmatpush1.msra.mxu0 0.0
  %682 = vmatprep.subr.mxu0 0.0
  %683 = vmatpush1.msra.mxu0 0.0
  %684 = vmatprep.subr.mxu0 0.0
  %685 = vmatpush1.msra.mxu0 0.0
  %686 = vmatprep.subr.mxu0 0.0
  %687 = vmatpush1.msra.mxu0 0.0
  %688 = vmatprep.mubr.f32.mxu0 0.0
  %689 = vmatmul.mubr.f32.gmra.mrb[0].mxu0 %v622
  %v690 = vpop.f32.mrb[0].mxu0
  %v691 = vadd.f32 %v40, %v690
  %v692 = vpop.f32.mrb[0].mxu0
  %693 = vdwg.mxu0
  %v694 = vld [vmem:[%s5] sm:$0x3f]
  %v695 = vld [vmem:[%s6] sm:$0x3f]
  %vm696 = vcmask 261120
  %v698 = vsel %vm696, %v694, 0
  %700 = vmatprep.subr.mxu0 0.0
  %701 = vmatpush1.msra.mxu0 %v31
  %702 = vmatprep.subr.mxu0 0.0
  %703 = vmatpush1.msra.mxu0 %v32
  %704 = vmatprep.subr.mxu0 0.0
  %705 = vmatpush1.msra.mxu0 %v33
  %706 = vmatprep.subr.mxu0 0.0
  %707 = vmatpush1.msra.mxu0 %v34
  %708 = vmatprep.subr.mxu0 0.0
  %709 = vmatpush1.msra.mxu0 0.0
  %710 = vmatprep.subr.mxu0 0.0
  %711 = vmatpush1.msra.mxu0 0.0
  %712 = vmatprep.subr.mxu0 0.0
  %713 = vmatpush1.msra.mxu0 0.0
  %714 = vmatprep.subr.mxu0 0.0
  %715 = vmatpush1.msra.mxu0 0.0
  %716 = vmatprep.subr.mxu0 0.0
  %717 = vmatpush1.msra.mxu0 0.0
  %718 = vmatprep.subr.mxu0 0.0
  %719 = vmatpush1.msra.mxu0 0.0
  %720 = vmatprep.subr.mxu0 0.0
  %721 = vmatpush1.msra.mxu0 0.0
  %722 = vmatprep.subr.mxu0 0.0
  %723 = vmatpush1.msra.mxu0 0.0
  %724 = vmatprep.subr.mxu0 0.0
  %725 = vmatpush1.msra.mxu0 0.0
  %726 = vmatprep.subr.mxu0 0.0
  %727 = vmatpush1.msra.mxu0 0.0
  %728 = vmatprep.subr.mxu0 0.0
  %729 = vmatpush1.msra.mxu0 0.0
  %730 = vmatprep.subr.mxu0 0.0
  %731 = vmatpush1.msra.mxu0 0.0
  %732 = vmatprep.subr.mxu0 0.0
  %733 = vmatpush1.msra.mxu0 0.0
  %734 = vmatprep.subr.mxu0 0.0
  %735 = vmatpush1.msra.mxu0 0.0
  %736 = vmatprep.subr.mxu0 0.0
  %737 = vmatpush1.msra.mxu0 0.0
  %738 = vmatprep.subr.mxu0 0.0
  %739 = vmatpush1.msra.mxu0 0.0
  %740 = vmatprep.subr.mxu0 0.0
  %741 = vmatpush1.msra.mxu0 0.0
  %742 = vmatprep.subr.mxu0 0.0
  %743 = vmatpush1.msra.mxu0 0.0
  %744 = vmatprep.subr.mxu0 0.0
  %745 = vmatpush1.msra.mxu0 0.0
  %746 = vmatprep.subr.mxu0 0.0
  %747 = vmatpush1.msra.mxu0 0.0
  %748 = vmatprep.subr.mxu0 0.0
  %749 = vmatpush1.msra.mxu0 0.0
  %750 = vmatprep.subr.mxu0 0.0
  %751 = vmatpush1.msra.mxu0 0.0
  %752 = vmatprep.subr.mxu0 0.0
  %753 = vmatpush1.msra.mxu0 0.0
  %754 = vmatprep.subr.mxu0 0.0
  %755 = vmatpush1.msra.mxu0 0.0
  %756 = vmatprep.subr.mxu0 0.0
  %757 = vmatpush1.msra.mxu0 0.0
  %758 = vmatprep.subr.mxu0 0.0
  %759 = vmatpush1.msra.mxu0 0.0
  %760 = vmatprep.subr.mxu0 0.0
  %761 = vmatpush1.msra.mxu0 0.0
  %762 = vmatprep.subr.mxu0 0.0
  %763 = vmatpush1.msra.mxu0 0.0
  %764 = vmatprep.mubr.f32.mxu0 0.0
  %765 = vmatmul.mubr.f32.gmra.mrb[0].mxu0 %v698
  %v766 = vpop.f32.mrb[0].mxu0
  %v767 = vadd.f32 0.0, %v766
  %v768 = vpop.f32.mrb[0].mxu0
  %769 = vdwg.mxu0
  %v770 = vadd.f32 %v124, %v767
  %v771 = vxor.u32 %v770, 2147483648
  %v772 = vmul.f32 %v771, 1.442695
  %v773 = vpow.pop %v772
  %v774 = vadd.f32 %v773, 1.0
  %v775 = vrcp.pop %v774
  %v776 = vmul.f32 1.0, %v775
  %v777 = vtanh.pop %v770
  %779 = vrot.lane.b32.xlu0 %v695, 32
  %v780 = vpop.permute.xlu0 %779
  %v782 = vmul.f32 %v776, %v780
  %784 = vrot.lane.b32.xlu0 %v777, 64
  %v785 = vpop.permute.xlu0 %784
  %v787 = vmul.f32 %v776, %v785
  %789 = vrot.lane.b32.xlu0 %v787, 32
  %v790 = vpop.permute.xlu0 %789
  %v792 = vadd.f32 %v782, %v790
  %v793 = vtanh.pop %v792
  %795 = vrot.lane.b32.xlu0 %v793, 64
  %v796 = vpop.permute.xlu0 %795
  %v798 = vmul.f32 %v776, %v796
  %800 = vrot.lane.b32.xlu0 %v798, 32
  %v801 = vpop.permute.xlu0 %800
  %vm803 = vcmask 259072
  %804 = vst.msk [vmem:[#allocation2] sm:$0x3f] %vm803, %v801
  %v805 = vsel %vm696, %v801, 0
  %807 = vmatprep.subr.mxu0 0.0
  %808 = vmatpush1.msra.mxu0 %v31
  %809 = vmatprep.subr.mxu0 0.0
  %810 = vmatpush1.msra.mxu0 %v32
  %811 = vmatprep.subr.mxu0 0.0
  %812 = vmatpush1.msra.mxu0 %v33
  %813 = vmatprep.subr.mxu0 0.0
  %814 = vmatpush1.msra.mxu0 %v34
  %815 = vmatprep.subr.mxu0 0.0
  %816 = vmatpush1.msra.mxu0 0.0
  %817 = vmatprep.subr.mxu0 0.0
  %818 = vmatpush1.msra.mxu0 0.0
  %819 = vmatprep.subr.mxu0 0.0
  %820 = vmatpush1.msra.mxu0 0.0
  %821 = vmatprep.subr.mxu0 0.0
  %822 = vmatpush1.msra.mxu0 0.0
  %823 = vmatprep.subr.mxu0 0.0
  %824 = vmatpush1.msra.mxu0 0.0
  %825 = vmatprep.subr.mxu0 0.0
  %826 = vmatpush1.msra.mxu0 0.0
  %827 = vmatprep.subr.mxu0 0.0
  %828 = vmatpush1.msra.mxu0 0.0
  %829 = vmatprep.subr.mxu0 0.0
  %830 = vmatpush1.msra.mxu0 0.0
  %831 = vmatprep.subr.mxu0 0.0
  %832 = vmatpush1.msra.mxu0 0.0
  %833 = vmatprep.subr.mxu0 0.0
  %834 = vmatpush1.msra.mxu0 0.0
  %835 = vmatprep.subr.mxu0 0.0
  %836 = vmatpush1.msra.mxu0 0.0
  %837 = vmatprep.subr.mxu0 0.0
  %838 = vmatpush1.msra.mxu0 0.0
  %839 = vmatprep.subr.mxu0 0.0
  %840 = vmatpush1.msra.mxu0 0.0
  %841 = vmatprep.subr.mxu0 0.0
  %842 = vmatpush1.msra.mxu0 0.0
  %843 = vmatprep.subr.mxu0 0.0
  %844 = vmatpush1.msra.mxu0 0.0
  %845 = vmatprep.subr.mxu0 0.0
  %846 = vmatpush1.msra.mxu0 0.0
  %847 = vmatprep.subr.mxu0 0.0
  %848 = vmatpush1.msra.mxu0 0.0
  %849 = vmatprep.subr.mxu0 0.0
  %850 = vmatpush1.msra.mxu0 0.0
  %851 = vmatprep.subr.mxu0 0.0
  %852 = vmatpush1.msra.mxu0 0.0
  %853 = vmatprep.subr.mxu0 0.0
  %854 = vmatpush1.msra.mxu0 0.0
  %855 = vmatprep.subr.mxu0 0.0
  %856 = vmatpush1.msra.mxu0 0.0
  %857 = vmatprep.subr.mxu0 0.0
  %858 = vmatpush1.msra.mxu0 0.0
  %859 = vmatprep.subr.mxu0 0.0
  %860 = vmatpush1.msra.mxu0 0.0
  %861 = vmatprep.subr.mxu0 0.0
  %862 = vmatpush1.msra.mxu0 0.0
  %863 = vmatprep.subr.mxu0 0.0
  %864 = vmatpush1.msra.mxu0 0.0
  %865 = vmatprep.subr.mxu0 0.0
  %866 = vmatpush1.msra.mxu0 0.0
  %867 = vmatprep.subr.mxu0 0.0
  %868 = vmatpush1.msra.mxu0 0.0
  %869 = vmatprep.subr.mxu0 0.0
  %870 = vmatpush1.msra.mxu0 0.0
  %871 = vmatprep.mubr.f32.mxu0 0.0
  %872 = vmatmul.mubr.f32.gmra.mrb[0].mxu0 %v805
  %v873 = vpop.f32.mrb[0].mxu0
  %v874 = vadd.f32 0.0, %v873
  %v875 = vpop.f32.mrb[0].mxu0
  %876 = vdwg.mxu0
  %v877 = vadd.f32 %v205, %v874
  %v878 = vxor.u32 %v877, 2147483648
  %v879 = vmul.f32 %v878, 1.442695
  %v880 = vpow.pop %v879
  %v881 = vadd.f32 %v880, 1.0
  %v882 = vrcp.pop %v881
  %v883 = vmul.f32 1.0, %v882
  %v884 = vtanh.pop %v877
  %v885 = vmul.f32 %v883, %v792
  %887 = vrot.lane.b32.xlu0 %v884, 64
  %v888 = vpop.permute.xlu0 %887
  %v890 = vmul.f32 %v883, %v888
  %892 = vrot.lane.b32.xlu0 %v890, 32
  %v893 = vpop.permute.xlu0 %892
  %v895 = vadd.f32 %v885, %v893
  %v896 = vtanh.pop %v895
  %898 = vrot.lane.b32.xlu0 %v896, 64
  %v899 = vpop.permute.xlu0 %898
  %v901 = vmul.f32 %v883, %v899
  %903 = vrot.lane.b32.xlu0 %v901, 32
  %v904 = vpop.permute.xlu0 %903
  %s906 = scalar_lea.vmem [#allocation2], 8
  %907 = vst.msk [vmem:[%s906] sm:$0x3f] %vm803, %v904
  %v908 = vsel %vm696, %v904, 0
  %910 = vmatprep.subr.mxu0 0.0
  %911 = vmatpush1.msra.mxu0 %v31
  %912 = vmatprep.subr.mxu0 0.0
  %913 = vmatpush1.msra.mxu0 %v32
  %914 = vmatprep.subr.mxu0 0.0
  %915 = vmatpush1.msra.mxu0 %v33
  %916 = vmatprep.subr.mxu0 0.0
  %917 = vmatpush1.msra.mxu0 %v34
  %918 = vmatprep.subr.mxu0 0.0
  %919 = vmatpush1.msra.mxu0 0.0
  %920 = vmatprep.subr.mxu0 0.0
  %921 = vmatpush1.msra.mxu0 0.0
  %922 = vmatprep.subr.mxu0 0.0
  %923 = vmatpush1.msra.mxu0 0.0
  %924 = vmatprep.subr.mxu0 0.0
  %925 = vmatpush1.msra.mxu0 0.0
  %926 = vmatprep.subr.mxu0 0.0
  %927 = vmatpush1.msra.mxu0 0.0
  %928 = vmatprep.subr.mxu0 0.0
  %929 = vmatpush1.msra.mxu0 0.0
  %930 = vmatprep.subr.mxu0 0.0
  %931 = vmatpush1.msra.mxu0 0.0
  %932 = vmatprep.subr.mxu0 0.0
  %933 = vmatpush1.msra.mxu0 0.0
  %934 = vmatprep.subr.mxu0 0.0
  %935 = vmatpush1.msra.mxu0 0.0
  %936 = vmatprep.subr.mxu0 0.0
  %937 = vmatpush1.msra.mxu0 0.0
  %938 = vmatprep.subr.mxu0 0.0
  %939 = vmatpush1.msra.mxu0 0.0
  %940 = vmatprep.subr.mxu0 0.0
  %941 = vmatpush1.msra.mxu0 0.0
  %942 = vmatprep.subr.mxu0 0.0
  %943 = vmatpush1.msra.mxu0 0.0
  %944 = vmatprep.subr.mxu0 0.0
  %945 = vmatpush1.msra.mxu0 0.0
  %946 = vmatprep.subr.mxu0 0.0
  %947 = vmatpush1.msra.mxu0 0.0
  %948 = vmatprep.subr.mxu0 0.0
  %949 = vmatpush1.msra.mxu0 0.0
  %950 = vmatprep.subr.mxu0 0.0
  %951 = vmatpush1.msra.mxu0 0.0
  %952 = vmatprep.subr.mxu0 0.0
  %953 = vmatpush1.msra.mxu0 0.0
  %954 = vmatprep.subr.mxu0 0.0
  %955 = vmatpush1.msra.mxu0 0.0
  %956 = vmatprep.subr.mxu0 0.0
  %957 = vmatpush1.msra.mxu0 0.0
  %958 = vmatprep.subr.mxu0 0.0
  %959 = vmatpush1.msra.mxu0 0.0
  %960 = vmatprep.subr.mxu0 0.0
  %961 = vmatpush1.msra.mxu0 0.0
  %962 = vmatprep.subr.mxu0 0.0
  %963 = vmatpush1.msra.mxu0 0.0
  %964 = vmatprep.subr.mxu0 0.0
  %965 = vmatpush1.msra.mxu0 0.0
  %966 = vmatprep.subr.mxu0 0.0
  %967 = vmatpush1.msra.mxu0 0.0
  %968 = vmatprep.subr.mxu0 0.0
  %969 = vmatpush1.msra.mxu0 0.0
  %970 = vmatprep.subr.mxu0 0.0
  %971 = vmatpush1.msra.mxu0 0.0
  %972 = vmatprep.subr.mxu0 0.0
  %973 = vmatpush1.msra.mxu0 0.0
  %974 = vmatprep.mubr.f32.mxu0 0.0
  %975 = vmatmul.mubr.f32.gmra.mrb[0].mxu0 %v908
  %v976 = vpop.f32.mrb[0].mxu0
  %v977 = vadd.f32 0.0, %v976
  %v978 = vpop.f32.mrb[0].mxu0
  %979 = vdwg.mxu0
  %v980 = vadd.f32 %v286, %v977
  %v981 = vxor.u32 %v980, 2147483648
  %v982 = vmul.f32 %v981, 1.442695
  %v983 = vpow.pop %v982
  %v984 = vadd.f32 %v983, 1.0
  %v985 = vrcp.pop %v984
  %v986 = vmul.f32 1.0, %v985
  %v987 = vtanh.pop %v980
  %v988 = vmul.f32 %v986, %v895
  %990 = vrot.lane.b32.xlu0 %v987, 64
  %v991 = vpop.permute.xlu0 %990
  %v993 = vmul.f32 %v986, %v991
  %995 = vrot.lane.b32.xlu0 %v993, 32
  %v996 = vpop.permute.xlu0 %995
  %v998 = vadd.f32 %v988, %v996
  %v999 = vtanh.pop %v998
  %1001 = vrot.lane.b32.xlu0 %v999, 64
  %v1002 = vpop.permute.xlu0 %1001
  %v1004 = vmul.f32 %v986, %v1002
  %1006 = vrot.lane.b32.xlu0 %v1004, 32
  %v1007 = vpop.permute.xlu0 %1006
  %s1009 = scalar_lea.vmem [#allocation2], 16
  %1010 = vst.msk [vmem:[%s1009] sm:$0x3f] %vm803, %v1007
  %v1011 = vsel %vm696, %v1007, 0
  %1013 = vmatprep.subr.mxu0 0.0
  %1014 = vmatpush1.msra.mxu0 %v31
  %1015 = vmatprep.subr.mxu0 0.0
  %1016 = vmatpush1.msra.mxu0 %v32
  %1017 = vmatprep.subr.mxu0 0.0
  %1018 = vmatpush1.msra.mxu0 %v33
  %1019 = vmatprep.subr.mxu0 0.0
  %1020 = vmatpush1.msra.mxu0 %v34
  %1021 = vmatprep.subr.mxu0 0.0
  %1022 = vmatpush1.msra.mxu0 0.0
  %1023 = vmatprep.subr.mxu0 0.0
  %1024 = vmatpush1.msra.mxu0 0.0
  %1025 = vmatprep.subr.mxu0 0.0
  %1026 = vmatpush1.msra.mxu0 0.0
  %1027 = vmatprep.subr.mxu0 0.0
  %1028 = vmatpush1.msra.mxu0 0.0
  %1029 = vmatprep.subr.mxu0 0.0
  %1030 = vmatpush1.msra.mxu0 0.0
  %1031 = vmatprep.subr.mxu0 0.0
  %1032 = vmatpush1.msra.mxu0 0.0
  %1033 = vmatprep.subr.mxu0 0.0
  %1034 = vmatpush1.msra.mxu0 0.0
  %1035 = vmatprep.subr.mxu0 0.0
  %1036 = vmatpush1.msra.mxu0 0.0
  %1037 = vmatprep.subr.mxu0 0.0
  %1038 = vmatpush1.msra.mxu0 0.0
  %1039 = vmatprep.subr.mxu0 0.0
  %1040 = vmatpush1.msra.mxu0 0.0
  %1041 = vmatprep.subr.mxu0 0.0
  %1042 = vmatpush1.msra.mxu0 0.0
  %1043 = vmatprep.subr.mxu0 0.0
  %1044 = vmatpush1.msra.mxu0 0.0
  %1045 = vmatprep.subr.mxu0 0.0
  %1046 = vmatpush1.msra.mxu0 0.0
  %1047 = vmatprep.subr.mxu0 0.0
  %1048 = vmatpush1.msra.mxu0 0.0
  %1049 = vmatprep.subr.mxu0 0.0
  %1050 = vmatpush1.msra.mxu0 0.0
  %1051 = vmatprep.subr.mxu0 0.0
  %1052 = vmatpush1.msra.mxu0 0.0
  %1053 = vmatprep.subr.mxu0 0.0
  %1054 = vmatpush1.msra.mxu0 0.0
  %1055 = vmatprep.subr.mxu0 0.0
  %1056 = vmatpush1.msra.mxu0 0.0
  %1057 = vmatprep.subr.mxu0 0.0
  %1058 = vmatpush1.msra.mxu0 0.0
  %1059 = vmatprep.subr.mxu0 0.0
  %1060 = vmatpush1.msra.mxu0 0.0
  %1061 = vmatprep.subr.mxu0 0.0
  %1062 = vmatpush1.msra.mxu0 0.0
  %1063 = vmatprep.subr.mxu0 0.0
  %1064 = vmatpush1.msra.mxu0 0.0
  %1065 = vmatprep.subr.mxu0 0.0
  %1066 = vmatpush1.msra.mxu0 0.0
  %1067 = vmatprep.subr.mxu0 0.0
  %1068 = vmatpush1.msra.mxu0 0.0
  %1069 = vmatprep.subr.mxu0 0.0
  %1070 = vmatpush1.msra.mxu0 0.0
  %1071 = vmatprep.subr.mxu0 0.0
  %1072 = vmatpush1.msra.mxu0 0.0
  %1073 = vmatprep.subr.mxu0 0.0
  %1074 = vmatpush1.msra.mxu0 0.0
  %1075 = vmatprep.subr.mxu0 0.0
  %1076 = vmatpush1.msra.mxu0 0.0
  %1077 = vmatprep.mubr.f32.mxu0 0.0
  %1078 = vmatmul.mubr.f32.gmra.mrb[0].mxu0 %v1011
  %v1079 = vpop.f32.mrb[0].mxu0
  %v1080 = vadd.f32 0.0, %v1079
  %v1081 = vpop.f32.mrb[0].mxu0
  %1082 = vdwg.mxu0
  %v1083 = vadd.f32 %v367, %v1080
  %v1084 = vxor.u32 %v1083, 2147483648
  %v1085 = vmul.f32 %v1084, 1.442695
  %v1086 = vpow.pop %v1085
  %v1087 = vadd.f32 %v1086, 1.0
  %v1088 = vrcp.pop %v1087
  %v1089 = vmul.f32 1.0, %v1088
  %v1090 = vtanh.pop %v1083
  %v1091 = vmul.f32 %v1089, %v998
  %1093 = vrot.lane.b32.xlu0 %v1090, 64
  %v1094 = vpop.permute.xlu0 %1093
  %v1096 = vmul.f32 %v1089, %v1094
  %1098 = vrot.lane.b32.xlu0 %v1096, 32
  %v1099 = vpop.permute.xlu0 %1098
  %v1101 = vadd.f32 %v1091, %v1099
  %v1102 = vtanh.pop %v1101
  %1104 = vrot.lane.b32.xlu0 %v1102, 64
  %v1105 = vpop.permute.xlu0 %1104
  %v1107 = vmul.f32 %v1089, %v1105
  %1109 = vrot.lane.b32.xlu0 %v1107, 32
  %v1110 = vpop.permute.xlu0 %1109
  %s1112 = scalar_lea.vmem [#allocation2], 24
  %1113 = vst.msk [vmem:[%s1112] sm:$0x3f] %vm803, %v1110
  %v1114 = vsel %vm696, %v1110, 0
  %1116 = vmatprep.subr.mxu0 0.0
  %1117 = vmatpush1.msra.mxu0 %v31
  %1118 = vmatprep.subr.mxu0 0.0
  %1119 = vmatpush1.msra.mxu0 %v32
  %1120 = vmatprep.subr.mxu0 0.0
  %1121 = vmatpush1.msra.mxu0 %v33
  %1122 = vmatprep.subr.mxu0 0.0
  %1123 = vmatpush1.msra.mxu0 %v34
  %1124 = vmatprep.subr.mxu0 0.0
  %1125 = vmatpush1.msra.mxu0 0.0
  %1126 = vmatprep.subr.mxu0 0.0
  %1127 = vmatpush1.msra.mxu0 0.0
  %1128 = vmatprep.subr.mxu0 0.0
  %1129 = vmatpush1.msra.mxu0 0.0
  %1130 = vmatprep.subr.mxu0 0.0
  %1131 = vmatpush1.msra.mxu0 0.0
  %1132 = vmatprep.subr.mxu0 0.0
  %1133 = vmatpush1.msra.mxu0 0.0
  %1134 = vmatprep.subr.mxu0 0.0
  %1135 = vmatpush1.msra.mxu0 0.0
  %1136 = vmatprep.subr.mxu0 0.0
  %1137 = vmatpush1.msra.mxu0 0.0
  %1138 = vmatprep.subr.mxu0 0.0
  %1139 = vmatpush1.msra.mxu0 0.0
  %1140 = vmatprep.subr.mxu0 0.0
  %1141 = vmatpush1.msra.mxu0 0.0
  %1142 = vmatprep.subr.mxu0 0.0
  %1143 = vmatpush1.msra.mxu0 0.0
  %1144 = vmatprep.subr.mxu0 0.0
  %1145 = vmatpush1.msra.mxu0 0.0
  %1146 = vmatprep.subr.mxu0 0.0
  %1147 = vmatpush1.msra.mxu0 0.0
  %1148 = vmatprep.subr.mxu0 0.0
  %1149 = vmatpush1.msra.mxu0 0.0
  %1150 = vmatprep.subr.mxu0 0.0
  %1151 = vmatpush1.msra.mxu0 0.0
  %1152 = vmatprep.subr.mxu0 0.0
  %1153 = vmatpush1.msra.mxu0 0.0
  %1154 = vmatprep.subr.mxu0 0.0
  %1155 = vmatpush1.msra.mxu0 0.0
  %1156 = vmatprep.subr.mxu0 0.0
  %1157 = vmatpush1.msra.mxu0 0.0
  %1158 = vmatprep.subr.mxu0 0.0
  %1159 = vmatpush1.msra.mxu0 0.0
  %1160 = vmatprep.subr.mxu0 0.0
  %1161 = vmatpush1.msra.mxu0 0.0
  %1162 = vmatprep.subr.mxu0 0.0
  %1163 = vmatpush1.msra.mxu0 0.0
  %1164 = vmatprep.subr.mxu0 0.0
  %1165 = vmatpush1.msra.mxu0 0.0
  %1166 = vmatprep.subr.mxu0 0.0
  %1167 = vmatpush1.msra.mxu0 0.0
  %1168 = vmatprep.subr.mxu0 0.0
  %1169 = vmatpush1.msra.mxu0 0.0
  %1170 = vmatprep.subr.mxu0 0.0
  %1171 = vmatpush1.msra.mxu0 0.0
  %1172 = vmatprep.subr.mxu0 0.0
  %1173 = vmatpush1.msra.mxu0 0.0
  %1174 = vmatprep.subr.mxu0 0.0
  %1175 = vmatpush1.msra.mxu0 0.0
  %1176 = vmatprep.subr.mxu0 0.0
  %1177 = vmatpush1.msra.mxu0 0.0
  %1178 = vmatprep.subr.mxu0 0.0
  %1179 = vmatpush1.msra.mxu0 0.0
  %1180 = vmatprep.mubr.f32.mxu0 0.0
  %1181 = vmatmul.mubr.f32.gmra.mrb[0].mxu0 %v1114
  %v1182 = vpop.f32.mrb[0].mxu0
  %v1183 = vadd.f32 0.0, %v1182
  %v1184 = vpop.f32.mrb[0].mxu0
  %1185 = vdwg.mxu0
  %v1186 = vadd.f32 %v448, %v1183
  %v1187 = vxor.u32 %v1186, 2147483648
  %v1188 = vmul.f32 %v1187, 1.442695
  %v1189 = vpow.pop %v1188
  %v1190 = vadd.f32 %v1189, 1.0
  %v1191 = vrcp.pop %v1190
  %v1192 = vmul.f32 1.0, %v1191
  %v1193 = vtanh.pop %v1186
  %v1194 = vmul.f32 %v1192, %v1101
  %1196 = vrot.lane.b32.xlu0 %v1193, 64
  %v1197 = vpop.permute.xlu0 %1196
  %v1199 = vmul.f32 %v1192, %v1197
  %1201 = vrot.lane.b32.xlu0 %v1199, 32
  %v1202 = vpop.permute.xlu0 %1201
  %v1204 = vadd.f32 %v1194, %v1202
  %v1205 = vtanh.pop %v1204
  %1207 = vrot.lane.b32.xlu0 %v1205, 64
  %v1208 = vpop.permute.xlu0 %1207
  %v1210 = vmul.f32 %v1192, %v1208
  %1212 = vrot.lane.b32.xlu0 %v1210, 32
  %v1213 = vpop.permute.xlu0 %1212
  %s1215 = scalar_lea.vmem [#allocation2], 32
  %1216 = vst.msk [vmem:[%s1215] sm:$0x3f] %vm803, %v1213
  %v1217 = vsel %vm696, %v1213, 0
  %1219 = vmatprep.subr.mxu0 0.0
  %1220 = vmatpush1.msra.mxu0 %v31
  %1221 = vmatprep.subr.mxu0 0.0
  %1222 = vmatpush1.msra.mxu0 %v32
  %1223 = vmatprep.subr.mxu0 0.0
  %1224 = vmatpush1.msra.mxu0 %v33
  %1225 = vmatprep.subr.mxu0 0.0
  %1226 = vmatpush1.msra.mxu0 %v34
  %1227 = vmatprep.subr.mxu0 0.0
  %1228 = vmatpush1.msra.mxu0 0.0
  %1229 = vmatprep.subr.mxu0 0.0
  %1230 = vmatpush1.msra.mxu0 0.0
  %1231 = vmatprep.subr.mxu0 0.0
  %1232 = vmatpush1.msra.mxu0 0.0
  %1233 = vmatprep.subr.mxu0 0.0
  %1234 = vmatpush1.msra.mxu0 0.0
  %1235 = vmatprep.subr.mxu0 0.0
  %1236 = vmatpush1.msra.mxu0 0.0
  %1237 = vmatprep.subr.mxu0 0.0
  %1238 = vmatpush1.msra.mxu0 0.0
  %1239 = vmatprep.subr.mxu0 0.0
  %1240 = vmatpush1.msra.mxu0 0.0
  %1241 = vmatprep.subr.mxu0 0.0
  %1242 = vmatpush1.msra.mxu0 0.0
  %1243 = vmatprep.subr.mxu0 0.0
  %1244 = vmatpush1.msra.mxu0 0.0
  %1245 = vmatprep.subr.mxu0 0.0
  %1246 = vmatpush1.msra.mxu0 0.0
  %1247 = vmatprep.subr.mxu0 0.0
  %1248 = vmatpush1.msra.mxu0 0.0
  %1249 = vmatprep.subr.mxu0 0.0
  %1250 = vmatpush1.msra.mxu0 0.0
  %1251 = vmatprep.subr.mxu0 0.0
  %1252 = vmatpush1.msra.mxu0 0.0
  %1253 = vmatprep.subr.mxu0 0.0
  %1254 = vmatpush1.msra.mxu0 0.0
  %1255 = vmatprep.subr.mxu0 0.0
  %1256 = vmatpush1.msra.mxu0 0.0
  %1257 = vmatprep.subr.mxu0 0.0
  %1258 = vmatpush1.msra.mxu0 0.0
  %1259 = vmatprep.subr.mxu0 0.0
  %1260 = vmatpush1.msra.mxu0 0.0
  %1261 = vmatprep.subr.mxu0 0.0
  %1262 = vmatpush1.msra.mxu0 0.0
  %1263 = vmatprep.subr.mxu0 0.0
  %1264 = vmatpush1.msra.mxu0 0.0
  %1265 = vmatprep.subr.mxu0 0.0
  %1266 = vmatpush1.msra.mxu0 0.0
  %1267 = vmatprep.subr.mxu0 0.0
  %1268 = vmatpush1.msra.mxu0 0.0
  %1269 = vmatprep.subr.mxu0 0.0
  %1270 = vmatpush1.msra.mxu0 0.0
  %1271 = vmatprep.subr.mxu0 0.0
  %1272 = vmatpush1.msra.mxu0 0.0
  %1273 = vmatprep.subr.mxu0 0.0
  %1274 = vmatpush1.msra.mxu0 0.0
  %1275 = vmatprep.subr.mxu0 0.0
  %1276 = vmatpush1.msra.mxu0 0.0
  %1277 = vmatprep.subr.mxu0 0.0
  %1278 = vmatpush1.msra.mxu0 0.0
  %1279 = vmatprep.subr.mxu0 0.0
  %1280 = vmatpush1.msra.mxu0 0.0
  %1281 = vmatprep.subr.mxu0 0.0
  %1282 = vmatpush1.msra.mxu0 0.0
  %1283 = vmatprep.mubr.f32.mxu0 0.0
  %1284 = vmatmul.mubr.f32.gmra.mrb[0].mxu0 %v1217
  %v1285 = vpop.f32.mrb[0].mxu0
  %v1286 = vadd.f32 0.0, %v1285
  %v1287 = vpop.f32.mrb[0].mxu0
  %1288 = vdwg.mxu0
  %v1289 = vadd.f32 %v529, %v1286
  %v1290 = vxor.u32 %v1289, 2147483648
  %v1291 = vmul.f32 %v1290, 1.442695
  %v1292 = vpow.pop %v1291
  %v1293 = vadd.f32 %v1292, 1.0
  %v1294 = vrcp.pop %v1293
  %v1295 = vmul.f32 1.0, %v1294
  %v1296 = vtanh.pop %v1289
  %v1297 = vmul.f32 %v1295, %v1204
  %1299 = vrot.lane.b32.xlu0 %v1296, 64
  %v1300 = vpop.permute.xlu0 %1299
  %v1302 = vmul.f32 %v1295, %v1300
  %1304 = vrot.lane.b32.xlu0 %v1302, 32
  %v1305 = vpop.permute.xlu0 %1304
  %v1307 = vadd.f32 %v1297, %v1305
  %v1308 = vtanh.pop %v1307
  %1310 = vrot.lane.b32.xlu0 %v1308, 64
  %v1311 = vpop.permute.xlu0 %1310
  %v1313 = vmul.f32 %v1295, %v1311
  %1315 = vrot.lane.b32.xlu0 %v1313, 32
  %v1316 = vpop.permute.xlu0 %1315
  %s1318 = scalar_lea.vmem [#allocation2], 40
  %1319 = vst.msk [vmem:[%s1318] sm:$0x3f] %vm803, %v1316
  %v1320 = vsel %vm696, %v1316, 0
  %1322 = vmatprep.subr.mxu0 0.0
  %1323 = vmatpush1.msra.mxu0 %v31
  %1324 = vmatprep.subr.mxu0 0.0
  %1325 = vmatpush1.msra.mxu0 %v32
  %1326 = vmatprep.subr.mxu0 0.0
  %1327 = vmatpush1.msra.mxu0 %v33
  %1328 = vmatprep.subr.mxu0 0.0
  %1329 = vmatpush1.msra.mxu0 %v34
  %1330 = vmatprep.subr.mxu0 0.0
  %1331 = vmatpush1.msra.mxu0 0.0
  %1332 = vmatprep.subr.mxu0 0.0
  %1333 = vmatpush1.msra.mxu0 0.0
  %1334 = vmatprep.subr.mxu0 0.0
  %1335 = vmatpush1.msra.mxu0 0.0
  %1336 = vmatprep.subr.mxu0 0.0
  %1337 = vmatpush1.msra.mxu0 0.0
  %1338 = vmatprep.subr.mxu0 0.0
  %1339 = vmatpush1.msra.mxu0 0.0
  %1340 = vmatprep.subr.mxu0 0.0
  %1341 = vmatpush1.msra.mxu0 0.0
  %1342 = vmatprep.subr.mxu0 0.0
  %1343 = vmatpush1.msra.mxu0 0.0
  %1344 = vmatprep.subr.mxu0 0.0
  %1345 = vmatpush1.msra.mxu0 0.0
  %1346 = vmatprep.subr.mxu0 0.0
  %1347 = vmatpush1.msra.mxu0 0.0
  %1348 = vmatprep.subr.mxu0 0.0
  %1349 = vmatpush1.msra.mxu0 0.0
  %1350 = vmatprep.subr.mxu0 0.0
  %1351 = vmatpush1.msra.mxu0 0.0
  %1352 = vmatprep.subr.mxu0 0.0
  %1353 = vmatpush1.msra.mxu0 0.0
  %1354 = vmatprep.subr.mxu0 0.0
  %1355 = vmatpush1.msra.mxu0 0.0
  %1356 = vmatprep.subr.mxu0 0.0
  %1357 = vmatpush1.msra.mxu0 0.0
  %1358 = vmatprep.subr.mxu0 0.0
  %1359 = vmatpush1.msra.mxu0 0.0
  %1360 = vmatprep.subr.mxu0 0.0
  %1361 = vmatpush1.msra.mxu0 0.0
  %1362 = vmatprep.subr.mxu0 0.0
  %1363 = vmatpush1.msra.mxu0 0.0
  %1364 = vmatprep.subr.mxu0 0.0
  %1365 = vmatpush1.msra.mxu0 0.0
  %1366 = vmatprep.subr.mxu0 0.0
  %1367 = vmatpush1.msra.mxu0 0.0
  %1368 = vmatprep.subr.mxu0 0.0
  %1369 = vmatpush1.msra.mxu0 0.0
  %1370 = vmatprep.subr.mxu0 0.0
  %1371 = vmatpush1.msra.mxu0 0.0
  %1372 = vmatprep.subr.mxu0 0.0
  %1373 = vmatpush1.msra.mxu0 0.0
  %1374 = vmatprep.subr.mxu0 0.0
  %1375 = vmatpush1.msra.mxu0 0.0
  %1376 = vmatprep.subr.mxu0 0.0
  %1377 = vmatpush1.msra.mxu0 0.0
  %1378 = vmatprep.subr.mxu0 0.0
  %1379 = vmatpush1.msra.mxu0 0.0
  %1380 = vmatprep.subr.mxu0 0.0
  %1381 = vmatpush1.msra.mxu0 0.0
  %1382 = vmatprep.subr.mxu0 0.0
  %1383 = vmatpush1.msra.mxu0 0.0
  %1384 = vmatprep.subr.mxu0 0.0
  %1385 = vmatpush1.msra.mxu0 0.0
  %1386 = vmatprep.mubr.f32.mxu0 0.0
  %1387 = vmatmul.mubr.f32.gmra.mrb[0].mxu0 %v1320
  %v1388 = vpop.f32.mrb[0].mxu0
  %v1389 = vadd.f32 0.0, %v1388
  %v1390 = vpop.f32.mrb[0].mxu0
  %1391 = vdwg.mxu0
  %v1392 = vadd.f32 %v610, %v1389
  %v1393 = vxor.u32 %v1392, 2147483648
  %v1394 = vmul.f32 %v1393, 1.442695
  %v1395 = vpow.pop %v1394
  %v1396 = vadd.f32 %v1395, 1.0
  %v1397 = vrcp.pop %v1396
  %v1398 = vmul.f32 1.0, %v1397
  %v1399 = vtanh.pop %v1392
  %v1400 = vmul.f32 %v1398, %v1307
  %1402 = vrot.lane.b32.xlu0 %v1399, 64
  %v1403 = vpop.permute.xlu0 %1402
  %v1405 = vmul.f32 %v1398, %v1403
  %1407 = vrot.lane.b32.xlu0 %v1405, 32
  %v1408 = vpop.permute.xlu0 %1407
  %v1410 = vadd.f32 %v1400, %v1408
  %v1411 = vtanh.pop %v1410
  %1413 = vrot.lane.b32.xlu0 %v1411, 64
  %v1414 = vpop.permute.xlu0 %1413
  %v1416 = vmul.f32 %v1398, %v1414
  %1418 = vrot.lane.b32.xlu0 %v1416, 32
  %v1419 = vpop.permute.xlu0 %1418
  %s1421 = scalar_lea.vmem [#allocation2], 48
  %1422 = vst.msk [vmem:[%s1421] sm:$0x3f] %vm803, %v1419
  %v1423 = vsel %vm696, %v1419, 0
  %1425 = vmatprep.subr.mxu0 0.0
  %1426 = vmatpush1.msra.mxu0 %v31
  %1427 = vmatprep.subr.mxu0 0.0
  %1428 = vmatpush1.msra.mxu0 %v32
  %1429 = vmatprep.subr.mxu0 0.0
  %1430 = vmatpush1.msra.mxu0 %v33
  %1431 = vmatprep.subr.mxu0 0.0
  %1432 = vmatpush1.msra.mxu0 %v34
  %1433 = vmatprep.subr.mxu0 0.0
  %1434 = vmatpush1.msra.mxu0 0.0
  %1435 = vmatprep.subr.mxu0 0.0
  %1436 = vmatpush1.msra.mxu0 0.0
  %1437 = vmatprep.subr.mxu0 0.0
  %1438 = vmatpush1.msra.mxu0 0.0
  %1439 = vmatprep.subr.mxu0 0.0
  %1440 = vmatpush1.msra.mxu0 0.0
  %1441 = vmatprep.subr.mxu0 0.0
  %1442 = vmatpush1.msra.mxu0 0.0
  %1443 = vmatprep.subr.mxu0 0.0
  %1444 = vmatpush1.msra.mxu0 0.0
  %1445 = vmatprep.subr.mxu0 0.0
  %1446 = vmatpush1.msra.mxu0 0.0
  %1447 = vmatprep.subr.mxu0 0.0
  %1448 = vmatpush1.msra.mxu0 0.0
  %1449 = vmatprep.subr.mxu0 0.0
  %1450 = vmatpush1.msra.mxu0 0.0
  %1451 = vmatprep.subr.mxu0 0.0
  %1452 = vmatpush1.msra.mxu0 0.0
  %1453 = vmatprep.subr.mxu0 0.0
  %1454 = vmatpush1.msra.mxu0 0.0
  %1455 = vmatprep.subr.mxu0 0.0
  %1456 = vmatpush1.msra.mxu0 0.0
  %1457 = vmatprep.subr.mxu0 0.0
  %1458 = vmatpush1.msra.mxu0 0.0
  %1459 = vmatprep.subr.mxu0 0.0
  %1460 = vmatpush1.msra.mxu0 0.0
  %1461 = vmatprep.subr.mxu0 0.0
  %1462 = vmatpush1.msra.mxu0 0.0
  %1463 = vmatprep.subr.mxu0 0.0
  %1464 = vmatpush1.msra.mxu0 0.0
  %1465 = vmatprep.subr.mxu0 0.0
  %1466 = vmatpush1.msra.mxu0 0.0
  %1467 = vmatprep.subr.mxu0 0.0
  %1468 = vmatpush1.msra.mxu0 0.0
  %1469 = vmatprep.subr.mxu0 0.0
  %1470 = vmatpush1.msra.mxu0 0.0
  %1471 = vmatprep.subr.mxu0 0.0
  %1472 = vmatpush1.msra.mxu0 0.0
  %1473 = vmatprep.subr.mxu0 0.0
  %1474 = vmatpush1.msra.mxu0 0.0
  %1475 = vmatprep.subr.mxu0 0.0
  %1476 = vmatpush1.msra.mxu0 0.0
  %1477 = vmatprep.subr.mxu0 0.0
  %1478 = vmatpush1.msra.mxu0 0.0
  %1479 = vmatprep.subr.mxu0 0.0
  %1480 = vmatpush1.msra.mxu0 0.0
  %1481 = vmatprep.subr.mxu0 0.0
  %1482 = vmatpush1.msra.mxu0 0.0
  %1483 = vmatprep.subr.mxu0 0.0
  %1484 = vmatpush1.msra.mxu0 0.0
  %1485 = vmatprep.subr.mxu0 0.0
  %1486 = vmatpush1.msra.mxu0 0.0
  %1487 = vmatprep.subr.mxu0 0.0
  %1488 = vmatpush1.msra.mxu0 0.0
  %1489 = vmatprep.mubr.f32.mxu0 0.0
  %1490 = vmatmul.mubr.f32.gmra.mrb[0].mxu0 %v1423
  %v1491 = vpop.f32.mrb[0].mxu0
  %v1492 = vadd.f32 0.0, %v1491
  %v1493 = vpop.f32.mrb[0].mxu0
  %1494 = vdwg.mxu0
  %v1495 = vadd.f32 %v691, %v1492
  %v1496 = vxor.u32 %v1495, 2147483648
  %v1497 = vmul.f32 %v1496, 1.442695
  %v1498 = vpow.pop %v1497
  %v1499 = vadd.f32 %v1498, 1.0
  %v1500 = vrcp.pop %v1499
  %v1501 = vmul.f32 1.0, %v1500
  %v1502 = vtanh.pop %v1495
  %v1503 = vmul.f32 %v1501, %v1410
  %1505 = vrot.lane.b32.xlu0 %v1502, 64
  %v1506 = vpop.permute.xlu0 %1505
  %v1508 = vmul.f32 %v1501, %v1506
  %1510 = vrot.lane.b32.xlu0 %v1508, 32
  %v1511 = vpop.permute.xlu0 %1510
  %v1513 = vadd.f32 %v1503, %v1511
  %v1514 = vtanh.pop %v1513
  %1516 = vrot.lane.b32.xlu0 %v1514, 64
  %v1517 = vpop.permute.xlu0 %1516
  %v1519 = vmul.f32 %v1501, %v1517
  %1521 = vrot.lane.b32.xlu0 %v1519, 32
  %v1522 = vpop.permute.xlu0 %1521
  %s1524 = scalar_lea.vmem [#allocation2], 56
  %1525 = vst.msk [vmem:[%s1524] sm:$0x3f] %vm803, %v1522
  %s1526 = scalar_lea.vmem %s1, 24
  %v1527 = vld [vmem:[%s1526] sm:$0xff]
  %v1528 = vld [vmem:[%s1526 + $0x8] sm:$0xff]
  %v1529 = vld [vmem:[%s1526 + $0x10] sm:$0xf]
  %s1530 = scalar_lea.vmem %s3, 32
  %v1531 = vld [vmem:[%s1530] sm:$0xff]
  %v1532 = vld [vmem:[%s1530 + $0x8] sm:$0xff]
  %v1533 = vld [vmem:[%s1530 + $0x10] sm:$0xff]
  %v1534 = vld [vmem:[%s1530 + $0x18] sm:$0xff]
  %s1535 = scalar_lea.vmem %s4, 1
  %v1536 = vld [vmem:[%s1535] sm:$0x1]
  %v1538 = vlaneseq
  %v1539 = vshrl.u32 %v1538, 7
  %v1540 = vsub.s32 0, %v1539
  %v1541 = vrot.slane %v1536, %v1540
  %v1543 = vld [vmem:[%s0] sm:$0x3f]
  %1544 = vset.pattern.permute.xlu0 0
  %1545 = vperm.xlu0 %1544, %v1543
  %v1546 = vpop.permute.xlu0 %1545
  %vm1547 = vcmp.eq.s32.totalorder %v1546, %v27
  %v1548 = vsel %vm1547, 1, 0
  %v1549 = vcvt.s32.f32 %v1548
  %v1551 = vsel %vm49, %v1549, 0
  %v1554 = vsel %vm53, %v1529, 0
  %1556 = vmatprep.subr.mxu0 0.0
  %1557 = vmatpush1.msra.mxu0 %v1527
  %1558 = vmatprep.subr.mxu0 0.0
  %1559 = vmatpush1.msra.mxu0 %v1528
  %1560 = vmatprep.subr.mxu0 0.0
  %1561 = vmatpush1.msra.mxu0 %v1554
  %1562 = vmatprep.subr.mxu0 0.0
  %1563 = vmatpush1.msra.mxu0 0.0
  %1564 = vmatprep.subr.mxu0 0.0
  %1565 = vmatpush1.msra.mxu0 0.0
  %1566 = vmatprep.subr.mxu0 0.0
  %1567 = vmatpush1.msra.mxu0 0.0
  %1568 = vmatprep.subr.mxu0 0.0
  %1569 = vmatpush1.msra.mxu0 0.0
  %1570 = vmatprep.subr.mxu0 0.0
  %1571 = vmatpush1.msra.mxu0 0.0
  %1572 = vmatprep.subr.mxu0 0.0
  %1573 = vmatpush1.msra.mxu0 0.0
  %1574 = vmatprep.subr.mxu0 0.0
  %1575 = vmatpush1.msra.mxu0 0.0
  %1576 = vmatprep.subr.mxu0 0.0
  %1577 = vmatpush1.msra.mxu0 0.0
  %1578 = vmatprep.subr.mxu0 0.0
  %1579 = vmatpush1.msra.mxu0 0.0
  %1580 = vmatprep.subr.mxu0 0.0
  %1581 = vmatpush1.msra.mxu0 0.0
  %1582 = vmatprep.subr.mxu0 0.0
  %1583 = vmatpush1.msra.mxu0 0.0
  %1584 = vmatprep.subr.mxu0 0.0
  %1585 = vmatpush1.msra.mxu0 0.0
  %1586 = vmatprep.subr.mxu0 0.0
  %1587 = vmatpush1.msra.mxu0 0.0
  %1588 = vmatprep.subr.mxu0 0.0
  %1589 = vmatpush1.msra.mxu0 0.0
  %1590 = vmatprep.subr.mxu0 0.0
  %1591 = vmatpush1.msra.mxu0 0.0
  %1592 = vmatprep.subr.mxu0 0.0
  %1593 = vmatpush1.msra.mxu0 0.0
  %1594 = vmatprep.subr.mxu0 0.0
  %1595 = vmatpush1.msra.mxu0 0.0
  %1596 = vmatprep.subr.mxu0 0.0
  %1597 = vmatpush1.msra.mxu0 0.0
  %1598 = vmatprep.subr.mxu0 0.0
  %1599 = vmatpush1.msra.mxu0 0.0
  %1600 = vmatprep.subr.mxu0 0.0
  %1601 = vmatpush1.msra.mxu0 0.0
  %1602 = vmatprep.subr.mxu0 0.0
  %1603 = vmatpush1.msra.mxu0 0.0
  %1604 = vmatprep.subr.mxu0 0.0
  %1605 = vmatpush1.msra.mxu0 0.0
  %1606 = vmatprep.subr.mxu0 0.0
  %1607 = vmatpush1.msra.mxu0 0.0
  %1608 = vmatprep.subr.mxu0 0.0
  %1609 = vmatpush1.msra.mxu0 0.0
  %1610 = vmatprep.subr.mxu0 0.0
  %1611 = vmatpush1.msra.mxu0 0.0
  %1612 = vmatprep.subr.mxu0 0.0
  %1613 = vmatpush1.msra.mxu0 0.0
  %1614 = vmatprep.subr.mxu0 0.0
  %1615 = vmatpush1.msra.mxu0 0.0
  %1616 = vmatprep.subr.mxu0 0.0
  %1617 = vmatpush1.msra.mxu0 0.0
  %1618 = vmatprep.subr.mxu0 0.0
  %1619 = vmatpush1.msra.mxu0 0.0
  %1620 = vmatprep.mubr.f32.mxu0 0.0
  %1621 = vmatmul.mubr.f32.gmra.mrb[0].mxu0 %v1551
  %v1622 = vpop.f32.mrb[0].mxu0
  %v1623 = vadd.f32 %v1541, %v1622
  %v1624 = vpop.f32.mrb[0].mxu0
  %1625 = vdwg.mxu0
  %v1626 = vld [vmem:[%s127] sm:$0x3f]
  %1627 = vset.pattern.permute.xlu0 0
  %1628 = vperm.xlu0 %1627, %v1626
  %v1629 = vpop.permute.xlu0 %1628
  %vm1630 = vcmp.eq.s32.totalorder %v1629, %v27
  %v1631 = vsel %vm1630, 1, 0
  %v1632 = vcvt.s32.f32 %v1631
  %v1634 = vsel %vm49, %v1632, 0
  %1636 = vmatprep.subr.mxu0 0.0
  %1637 = vmatpush1.msra.mxu0 %v1527
  %1638 = vmatprep.subr.mxu0 0.0
  %1639 = vmatpush1.msra.mxu0 %v1528
  %1640 = vmatprep.subr.mxu0 0.0
  %1641 = vmatpush1.msra.mxu0 %v1554
  %1642 = vmatprep.subr.mxu0 0.0
  %1643 = vmatpush1.msra.mxu0 0.0
  %1644 = vmatprep.subr.mxu0 0.0
  %1645 = vmatpush1.msra.mxu0 0.0
  %1646 = vmatprep.subr.mxu0 0.0
  %1647 = vmatpush1.msra.mxu0 0.0
  %1648 = vmatprep.subr.mxu0 0.0
  %1649 = vmatpush1.msra.mxu0 0.0
  %1650 = vmatprep.subr.mxu0 0.0
  %1651 = vmatpush1.msra.mxu0 0.0
  %1652 = vmatprep.subr.mxu0 0.0
  %1653 = vmatpush1.msra.mxu0 0.0
  %1654 = vmatprep.subr.mxu0 0.0
  %1655 = vmatpush1.msra.mxu0 0.0
  %1656 = vmatprep.subr.mxu0 0.0
  %1657 = vmatpush1.msra.mxu0 0.0
  %1658 = vmatprep.subr.mxu0 0.0
  %1659 = vmatpush1.msra.mxu0 0.0
  %1660 = vmatprep.subr.mxu0 0.0
  %1661 = vmatpush1.msra.mxu0 0.0
  %1662 = vmatprep.subr.mxu0 0.0
  %1663 = vmatpush1.msra.mxu0 0.0
  %1664 = vmatprep.subr.mxu0 0.0
  %1665 = vmatpush1.msra.mxu0 0.0
  %1666 = vmatprep.subr.mxu0 0.0
  %1667 = vmatpush1.msra.mxu0 0.0
  %1668 = vmatprep.subr.mxu0 0.0
  %1669 = vmatpush1.msra.mxu0 0.0
  %1670 = vmatprep.subr.mxu0 0.0
  %1671 = vmatpush1.msra.mxu0 0.0
  %1672 = vmatprep.subr.mxu0 0.0
  %1673 = vmatpush1.msra.mxu0 0.0
  %1674 = vmatprep.subr.mxu0 0.0
  %1675 = vmatpush1.msra.mxu0 0.0
  %1676 = vmatprep.subr.mxu0 0.0
  %1677 = vmatpush1.msra.mxu0 0.0
  %1678 = vmatprep.subr.mxu0 0.0
  %1679 = vmatpush1.msra.mxu0 0.0
  %1680 = vmatprep.subr.mxu0 0.0
  %1681 = vmatpush1.msra.mxu0 0.0
  %1682 = vmatprep.subr.mxu0 0.0
  %1683 = vmatpush1.msra.mxu0 0.0
  %1684 = vmatprep.subr.mxu0 0.0
  %1685 = vmatpush1.msra.mxu0 0.0
  %1686 = vmatprep.subr.mxu0 0.0
  %1687 = vmatpush1.msra.mxu0 0.0
  %1688 = vmatprep.subr.mxu0 0.0
  %1689 = vmatpush1.msra.mxu0 0.0
  %1690 = vmatprep.subr.mxu0 0.0
  %1691 = vmatpush1.msra.mxu0 0.0
  %1692 = vmatprep.subr.mxu0 0.0
  %1693 = vmatpush1.msra.mxu0 0.0
  %1694 = vmatprep.subr.mxu0 0.0
  %1695 = vmatpush1.msra.mxu0 0.0
  %1696 = vmatprep.subr.mxu0 0.0
  %1697 = vmatpush1.msra.mxu0 0.0
  %1698 = vmatprep.subr.mxu0 0.0
  %1699 = vmatpush1.msra.mxu0 0.0
  %1700 = vmatprep.mubr.f32.mxu0 0.0
  %1701 = vmatmul.mubr.f32.gmra.mrb[0].mxu0 %v1634
  %v1702 = vpop.f32.mrb[0].mxu0
  %v1703 = vadd.f32 %v1541, %v1702
  %v1704 = vpop.f32.mrb[0].mxu0
  %1705 = vdwg.mxu0
  %v1706 = vld [vmem:[%s208] sm:$0x3f]
  %1707 = vset.pattern.permute.xlu0 0
  %1708 = vperm.xlu0 %1707, %v1706
  %v1709 = vpop.permute.xlu0 %1708
  %vm1710 = vcmp.eq.s32.totalorder %v1709, %v27
  %v1711 = vsel %vm1710, 1, 0
  %v1712 = vcvt.s32.f32 %v1711
  %v1714 = vsel %vm49, %v1712, 0
  %1716 = vmatprep.subr.mxu0 0.0
  %1717 = vmatpush1.msra.mxu0 %v1527
  %1718 = vmatprep.subr.mxu0 0.0
  %1719 = vmatpush1.msra.mxu0 %v1528
  %1720 = vmatprep.subr.mxu0 0.0
  %1721 = vmatpush1.msra.mxu0 %v1554
  %1722 = vmatprep.subr.mxu0 0.0
  %1723 = vmatpush1.msra.mxu0 0.0
  %1724 = vmatprep.subr.mxu0 0.0
  %1725 = vmatpush1.msra.mxu0 0.0
  %1726 = vmatprep.subr.mxu0 0.0
  %1727 = vmatpush1.msra.mxu0 0.0
  %1728 = vmatprep.subr.mxu0 0.0
  %1729 = vmatpush1.msra.mxu0 0.0
  %1730 = vmatprep.subr.mxu0 0.0
  %1731 = vmatpush1.msra.mxu0 0.0
  %1732 = vmatprep.subr.mxu0 0.0
  %1733 = vmatpush1.msra.mxu0 0.0
  %1734 = vmatprep.subr.mxu0 0.0
  %1735 = vmatpush1.msra.mxu0 0.0
  %1736 = vmatprep.subr.mxu0 0.0
  %1737 = vmatpush1.msra.mxu0 0.0
  %1738 = vmatprep.subr.mxu0 0.0
  %1739 = vmatpush1.msra.mxu0 0.0
  %1740 = vmatprep.subr.mxu0 0.0
  %1741 = vmatpush1.msra.mxu0 0.0
  %1742 = vmatprep.subr.mxu0 0.0
  %1743 = vmatpush1.msra.mxu0 0.0
  %1744 = vmatprep.subr.mxu0 0.0
  %1745 = vmatpush1.msra.mxu0 0.0
  %1746 = vmatprep.subr.mxu0 0.0
  %1747 = vmatpush1.msra.mxu0 0.0
  %1748 = vmatprep.subr.mxu0 0.0
  %1749 = vmatpush1.msra.mxu0 0.0
  %1750 = vmatprep.subr.mxu0 0.0
  %1751 = vmatpush1.msra.mxu0 0.0
  %1752 = vmatprep.subr.mxu0 0.0
  %1753 = vmatpush1.msra.mxu0 0.0
  %1754 = vmatprep.subr.mxu0 0.0
  %1755 = vmatpush1.msra.mxu0 0.0
  %1756 = vmatprep.subr.mxu0 0.0
  %1757 = vmatpush1.msra.mxu0 0.0
  %1758 = vmatprep.subr.mxu0 0.0
  %1759 = vmatpush1.msra.mxu0 0.0
  %1760 = vmatprep.subr.mxu0 0.0
  %1761 = vmatpush1.msra.mxu0 0.0
  %1762 = vmatprep.subr.mxu0 0.0
  %1763 = vmatpush1.msra.mxu0 0.0
  %1764 = vmatprep.subr.mxu0 0.0
  %1765 = vmatpush1.msra.mxu0 0.0
  %1766 = vmatprep.subr.mxu0 0.0
  %1767 = vmatpush1.msra.mxu0 0.0
  %1768 = vmatprep.subr.mxu0 0.0
  %1769 = vmatpush1.msra.mxu0 0.0
  %1770 = vmatprep.subr.mxu0 0.0
  %1771 = vmatpush1.msra.mxu0 0.0
  %1772 = vmatprep.subr.mxu0 0.0
  %1773 = vmatpush1.msra.mxu0 0.0
  %1774 = vmatprep.subr.mxu0 0.0
  %1775 = vmatpush1.msra.mxu0 0.0
  %1776 = vmatprep.subr.mxu0 0.0
  %1777 = vmatpush1.msra.mxu0 0.0
  %1778 = vmatprep.subr.mxu0 0.0
  %1779 = vmatpush1.msra.mxu0 0.0
  %1780 = vmatprep.mubr.f32.mxu0 0.0
  %1781 = vmatmul.mubr.f32.gmra.mrb[0].mxu0 %v1714
  %v1782 = vpop.f32.mrb[0].mxu0
  %v1783 = vadd.f32 %v1541, %v1782
  %v1784 = vpop.f32.mrb[0].mxu0
  %1785 = vdwg.mxu0
  %v1786 = vld [vmem:[%s289] sm:$0x3f]
  %1787 = vset.pattern.permute.xlu0 0
  %1788 = vperm.xlu0 %1787, %v1786
  %v1789 = vpop.permute.xlu0 %1788
  %vm1790 = vcmp.eq.s32.totalorder %v1789, %v27
  %v1791 = vsel %vm1790, 1, 0
  %v1792 = vcvt.s32.f32 %v1791
  %v1794 = vsel %vm49, %v1792, 0
  %1796 = vmatprep.subr.mxu0 0.0
  %1797 = vmatpush1.msra.mxu0 %v1527
  %1798 = vmatprep.subr.mxu0 0.0
  %1799 = vmatpush1.msra.mxu0 %v1528
  %1800 = vmatprep.subr.mxu0 0.0
  %1801 = vmatpush1.msra.mxu0 %v1554
  %1802 = vmatprep.subr.mxu0 0.0
  %1803 = vmatpush1.msra.mxu0 0.0
  %1804 = vmatprep.subr.mxu0 0.0
  %1805 = vmatpush1.msra.mxu0 0.0
  %1806 = vmatprep.subr.mxu0 0.0
  %1807 = vmatpush1.msra.mxu0 0.0
  %1808 = vmatprep.subr.mxu0 0.0
  %1809 = vmatpush1.msra.mxu0 0.0
  %1810 = vmatprep.subr.mxu0 0.0
  %1811 = vmatpush1.msra.mxu0 0.0
  %1812 = vmatprep.subr.mxu0 0.0
  %1813 = vmatpush1.msra.mxu0 0.0
  %1814 = vmatprep.subr.mxu0 0.0
  %1815 = vmatpush1.msra.mxu0 0.0
  %1816 = vmatprep.subr.mxu0 0.0
  %1817 = vmatpush1.msra.mxu0 0.0
  %1818 = vmatprep.subr.mxu0 0.0
  %1819 = vmatpush1.msra.mxu0 0.0
  %1820 = vmatprep.subr.mxu0 0.0
  %1821 = vmatpush1.msra.mxu0 0.0
  %1822 = vmatprep.subr.mxu0 0.0
  %1823 = vmatpush1.msra.mxu0 0.0
  %1824 = vmatprep.subr.mxu0 0.0
  %1825 = vmatpush1.msra.mxu0 0.0
  %1826 = vmatprep.subr.mxu0 0.0
  %1827 = vmatpush1.msra.mxu0 0.0
  %1828 = vmatprep.subr.mxu0 0.0
  %1829 = vmatpush1.msra.mxu0 0.0
  %1830 = vmatprep.subr.mxu0 0.0
  %1831 = vmatpush1.msra.mxu0 0.0
  %1832 = vmatprep.subr.mxu0 0.0
  %1833 = vmatpush1.msra.mxu0 0.0
  %1834 = vmatprep.subr.mxu0 0.0
  %1835 = vmatpush1.msra.mxu0 0.0
  %1836 = vmatprep.subr.mxu0 0.0
  %1837 = vmatpush1.msra.mxu0 0.0
  %1838 = vmatprep.subr.mxu0 0.0
  %1839 = vmatpush1.msra.mxu0 0.0
  %1840 = vmatprep.subr.mxu0 0.0
  %1841 = vmatpush1.msra.mxu0 0.0
  %1842 = vmatprep.subr.mxu0 0.0
  %1843 = vmatpush1.msra.mxu0 0.0
  %1844 = vmatprep.subr.mxu0 0.0
  %1845 = vmatpush1.msra.mxu0 0.0
  %1846 = vmatprep.subr.mxu0 0.0
  %1847 = vmatpush1.msra.mxu0 0.0
  %1848 = vmatprep.subr.mxu0 0.0
  %1849 = vmatpush1.msra.mxu0 0.0
  %1850 = vmatprep.subr.mxu0 0.0
  %1851 = vmatpush1.msra.mxu0 0.0
  %1852 = vmatprep.subr.mxu0 0.0
  %1853 = vmatpush1.msra.mxu0 0.0
  %1854 = vmatprep.subr.mxu0 0.0
  %1855 = vmatpush1.msra.mxu0 0.0
  %1856 = vmatprep.subr.mxu0 0.0
  %1857 = vmatpush1.msra.mxu0 0.0
  %1858 = vmatprep.subr.mxu0 0.0
  %1859 = vmatpush1.msra.mxu0 0.0
  %1860 = vmatprep.mubr.f32.mxu0 0.0
  %1861 = vmatmul.mubr.f32.gmra.mrb[0].mxu0 %v1794
  %v1862 = vpop.f32.mrb[0].mxu0
  %v1863 = vadd.f32 %v1541, %v1862
  %v1864 = vpop.f32.mrb[0].mxu0
  %1865 = vdwg.mxu0
  %v1866 = vld [vmem:[%s370] sm:$0x3f]
  %1867 = vset.pattern.permute.xlu0 0
  %1868 = vperm.xlu0 %1867, %v1866
  %v1869 = vpop.permute.xlu0 %1868
  %vm1870 = vcmp.eq.s32.totalorder %v1869, %v27
  %v1871 = vsel %vm1870, 1, 0
  %v1872 = vcvt.s32.f32 %v1871
  %v1874 = vsel %vm49, %v1872, 0
  %1876 = vmatprep.subr.mxu0 0.0
  %1877 = vmatpush1.msra.mxu0 %v1527
  %1878 = vmatprep.subr.mxu0 0.0
  %1879 = vmatpush1.msra.mxu0 %v1528
  %1880 = vmatprep.subr.mxu0 0.0
  %1881 = vmatpush1.msra.mxu0 %v1554
  %1882 = vmatprep.subr.mxu0 0.0
  %1883 = vmatpush1.msra.mxu0 0.0
  %1884 = vmatprep.subr.mxu0 0.0
  %1885 = vmatpush1.msra.mxu0 0.0
  %1886 = vmatprep.subr.mxu0 0.0
  %1887 = vmatpush1.msra.mxu0 0.0
  %1888 = vmatprep.subr.mxu0 0.0
  %1889 = vmatpush1.msra.mxu0 0.0
  %1890 = vmatprep.subr.mxu0 0.0
  %1891 = vmatpush1.msra.mxu0 0.0
  %1892 = vmatprep.subr.mxu0 0.0
  %1893 = vmatpush1.msra.mxu0 0.0
  %1894 = vmatprep.subr.mxu0 0.0
  %1895 = vmatpush1.msra.mxu0 0.0
  %1896 = vmatprep.subr.mxu0 0.0
  %1897 = vmatpush1.msra.mxu0 0.0
  %1898 = vmatprep.subr.mxu0 0.0
  %1899 = vmatpush1.msra.mxu0 0.0
  %1900 = vmatprep.subr.mxu0 0.0
  %1901 = vmatpush1.msra.mxu0 0.0
  %1902 = vmatprep.subr.mxu0 0.0
  %1903 = vmatpush1.msra.mxu0 0.0
  %1904 = vmatprep.subr.mxu0 0.0
  %1905 = vmatpush1.msra.mxu0 0.0
  %1906 = vmatprep.subr.mxu0 0.0
  %1907 = vmatpush1.msra.mxu0 0.0
  %1908 = vmatprep.subr.mxu0 0.0
  %1909 = vmatpush1.msra.mxu0 0.0
  %1910 = vmatprep.subr.mxu0 0.0
  %1911 = vmatpush1.msra.mxu0 0.0
  %1912 = vmatprep.subr.mxu0 0.0
  %1913 = vmatpush1.msra.mxu0 0.0
  %1914 = vmatprep.subr.mxu0 0.0
  %1915 = vmatpush1.msra.mxu0 0.0
  %1916 = vmatprep.subr.mxu0 0.0
  %1917 = vmatpush1.msra.mxu0 0.0
  %1918 = vmatprep.subr.mxu0 0.0
  %1919 = vmatpush1.msra.mxu0 0.0
  %1920 = vmatprep.subr.mxu0 0.0
  %1921 = vmatpush1.msra.mxu0 0.0
  %1922 = vmatprep.subr.mxu0 0.0
  %1923 = vmatpush1.msra.mxu0 0.0
  %1924 = vmatprep.subr.mxu0 0.0
  %1925 = vmatpush1.msra.mxu0 0.0
  %1926 = vmatprep.subr.mxu0 0.0
  %1927 = vmatpush1.msra.mxu0 0.0
  %1928 = vmatprep.subr.mxu0 0.0
  %1929 = vmatpush1.msra.mxu0 0.0
  %1930 = vmatprep.subr.mxu0 0.0
  %1931 = vmatpush1.msra.mxu0 0.0
  %1932 = vmatprep.subr.mxu0 0.0
  %1933 = vmatpush1.msra.mxu0 0.0
  %1934 = vmatprep.subr.mxu0 0.0
  %1935 = vmatpush1.msra.mxu0 0.0
  %1936 = vmatprep.subr.mxu0 0.0
  %1937 = vmatpush1.msra.mxu0 0.0
  %1938 = vmatprep.subr.mxu0 0.0
  %1939 = vmatpush1.msra.mxu0 0.0
  %1940 = vmatprep.mubr.f32.mxu0 0.0
  %1941 = vmatmul.mubr.f32.gmra.mrb[0].mxu0 %v1874
  %v1942 = vpop.f32.mrb[0].mxu0
  %v1943 = vadd.f32 %v1541, %v1942
  %v1944 = vpop.f32.mrb[0].mxu0
  %1945 = vdwg.mxu0
  %v1946 = vld [vmem:[%s451] sm:$0x3f]
  %1947 = vset.pattern.permute.xlu0 0
  %1948 = vperm.xlu0 %1947, %v1946
  %v1949 = vpop.permute.xlu0 %1948
  %vm1950 = vcmp.eq.s32.totalorder %v1949, %v27
  %v1951 = vsel %vm1950, 1, 0
  %v1952 = vcvt.s32.f32 %v1951
  %v1954 = vsel %vm49, %v1952, 0
  %1956 = vmatprep.subr.mxu0 0.0
  %1957 = vmatpush1.msra.mxu0 %v1527
  %1958 = vmatprep.subr.mxu0 0.0
  %1959 = vmatpush1.msra.mxu0 %v1528
  %1960 = vmatprep.subr.mxu0 0.0
  %1961 = vmatpush1.msra.mxu0 %v1554
  %1962 = vmatprep.subr.mxu0 0.0
  %1963 = vmatpush1.msra.mxu0 0.0
  %1964 = vmatprep.subr.mxu0 0.0
  %1965 = vmatpush1.msra.mxu0 0.0
  %1966 = vmatprep.subr.mxu0 0.0
  %1967 = vmatpush1.msra.mxu0 0.0
  %1968 = vmatprep.subr.mxu0 0.0
  %1969 = vmatpush1.msra.mxu0 0.0
  %1970 = vmatprep.subr.mxu0 0.0
  %1971 = vmatpush1.msra.mxu0 0.0
  %1972 = vmatprep.subr.mxu0 0.0
  %1973 = vmatpush1.msra.mxu0 0.0
  %1974 = vmatprep.subr.mxu0 0.0
  %1975 = vmatpush1.msra.mxu0 0.0
  %1976 = vmatprep.subr.mxu0 0.0
  %1977 = vmatpush1.msra.mxu0 0.0
  %1978 = vmatprep.subr.mxu0 0.0
  %1979 = vmatpush1.msra.mxu0 0.0
  %1980 = vmatprep.subr.mxu0 0.0
  %1981 = vmatpush1.msra.mxu0 0.0
  %1982 = vmatprep.subr.mxu0 0.0
  %1983 = vmatpush1.msra.mxu0 0.0
  %1984 = vmatprep.subr.mxu0 0.0
  %1985 = vmatpush1.msra.mxu0 0.0
  %1986 = vmatprep.subr.mxu0 0.0
  %1987 = vmatpush1.msra.mxu0 0.0
  %1988 = vmatprep.subr.mxu0 0.0
  %1989 = vmatpush1.msra.mxu0 0.0
  %1990 = vmatprep.subr.mxu0 0.0
  %1991 = vmatpush1.msra.mxu0 0.0
  %1992 = vmatprep.subr.mxu0 0.0
  %1993 = vmatpush1.msra.mxu0 0.0
  %1994 = vmatprep.subr.mxu0 0.0
  %1995 = vmatpush1.msra.mxu0 0.0
  %1996 = vmatprep.subr.mxu0 0.0
  %1997 = vmatpush1.msra.mxu0 0.0
  %1998 = vmatprep.subr.mxu0 0.0
  %1999 = vmatpush1.msra.mxu0 0.0
  %2000 = vmatprep.subr.mxu0 0.0
  %2001 = vmatpush1.msra.mxu0 0.0
  %2002 = vmatprep.subr.mxu0 0.0
  %2003 = vmatpush1.msra.mxu0 0.0
  %2004 = vmatprep.subr.mxu0 0.0
  %2005 = vmatpush1.msra.mxu0 0.0
  %2006 = vmatprep.subr.mxu0 0.0
  %2007 = vmatpush1.msra.mxu0 0.0
  %2008 = vmatprep.subr.mxu0 0.0
  %2009 = vmatpush1.msra.mxu0 0.0
  %2010 = vmatprep.subr.mxu0 0.0
  %2011 = vmatpush1.msra.mxu0 0.0
  %2012 = vmatprep.subr.mxu0 0.0
  %2013 = vmatpush1.msra.mxu0 0.0
  %2014 = vmatprep.subr.mxu0 0.0
  %2015 = vmatpush1.msra.mxu0 0.0
  %2016 = vmatprep.subr.mxu0 0.0
  %2017 = vmatpush1.msra.mxu0 0.0
  %2018 = vmatprep.subr.mxu0 0.0
  %2019 = vmatpush1.msra.mxu0 0.0
  %2020 = vmatprep.mubr.f32.mxu0 0.0
  %2021 = vmatmul.mubr.f32.gmra.mrb[0].mxu0 %v1954
  %v2022 = vpop.f32.mrb[0].mxu0
  %v2023 = vadd.f32 %v1541, %v2022
  %v2024 = vpop.f32.mrb[0].mxu0
  %2025 = vdwg.mxu0
  %v2026 = vld [vmem:[%s532] sm:$0x3f]
  %2027 = vset.pattern.permute.xlu0 0
  %2028 = vperm.xlu0 %2027, %v2026
  %v2029 = vpop.permute.xlu0 %2028
  %vm2030 = vcmp.eq.s32.totalorder %v2029, %v27
  %v2031 = vsel %vm2030, 1, 0
  %v2032 = vcvt.s32.f32 %v2031
  %v2034 = vsel %vm49, %v2032, 0
  %2036 = vmatprep.subr.mxu0 0.0
  %2037 = vmatpush1.msra.mxu0 %v1527
  %2038 = vmatprep.subr.mxu0 0.0
  %2039 = vmatpush1.msra.mxu0 %v1528
  %2040 = vmatprep.subr.mxu0 0.0
  %2041 = vmatpush1.msra.mxu0 %v1554
  %2042 = vmatprep.subr.mxu0 0.0
  %2043 = vmatpush1.msra.mxu0 0.0
  %2044 = vmatprep.subr.mxu0 0.0
  %2045 = vmatpush1.msra.mxu0 0.0
  %2046 = vmatprep.subr.mxu0 0.0
  %2047 = vmatpush1.msra.mxu0 0.0
  %2048 = vmatprep.subr.mxu0 0.0
  %2049 = vmatpush1.msra.mxu0 0.0
  %2050 = vmatprep.subr.mxu0 0.0
  %2051 = vmatpush1.msra.mxu0 0.0
  %2052 = vmatprep.subr.mxu0 0.0
  %2053 = vmatpush1.msra.mxu0 0.0
  %2054 = vmatprep.subr.mxu0 0.0
  %2055 = vmatpush1.msra.mxu0 0.0
  %2056 = vmatprep.subr.mxu0 0.0
  %2057 = vmatpush1.msra.mxu0 0.0
  %2058 = vmatprep.subr.mxu0 0.0
  %2059 = vmatpush1.msra.mxu0 0.0
  %2060 = vmatprep.subr.mxu0 0.0
  %2061 = vmatpush1.msra.mxu0 0.0
  %2062 = vmatprep.subr.mxu0 0.0
  %2063 = vmatpush1.msra.mxu0 0.0
  %2064 = vmatprep.subr.mxu0 0.0
  %2065 = vmatpush1.msra.mxu0 0.0
  %2066 = vmatprep.subr.mxu0 0.0
  %2067 = vmatpush1.msra.mxu0 0.0
  %2068 = vmatprep.subr.mxu0 0.0
  %2069 = vmatpush1.msra.mxu0 0.0
  %2070 = vmatprep.subr.mxu0 0.0
  %2071 = vmatpush1.msra.mxu0 0.0
  %2072 = vmatprep.subr.mxu0 0.0
  %2073 = vmatpush1.msra.mxu0 0.0
  %2074 = vmatprep.subr.mxu0 0.0
  %2075 = vmatpush1.msra.mxu0 0.0
  %2076 = vmatprep.subr.mxu0 0.0
  %2077 = vmatpush1.msra.mxu0 0.0
  %2078 = vmatprep.subr.mxu0 0.0
  %2079 = vmatpush1.msra.mxu0 0.0
  %2080 = vmatprep.subr.mxu0 0.0
  %2081 = vmatpush1.msra.mxu0 0.0
  %2082 = vmatprep.subr.mxu0 0.0
  %2083 = vmatpush1.msra.mxu0 0.0
  %2084 = vmatprep.subr.mxu0 0.0
  %2085 = vmatpush1.msra.mxu0 0.0
  %2086 = vmatprep.subr.mxu0 0.0
  %2087 = vmatpush1.msra.mxu0 0.0
  %2088 = vmatprep.subr.mxu0 0.0
  %2089 = vmatpush1.msra.mxu0 0.0
  %2090 = vmatprep.subr.mxu0 0.0
  %2091 = vmatpush1.msra.mxu0 0.0
  %2092 = vmatprep.subr.mxu0 0.0
  %2093 = vmatpush1.msra.mxu0 0.0
  %2094 = vmatprep.subr.mxu0 0.0
  %2095 = vmatpush1.msra.mxu0 0.0
  %2096 = vmatprep.subr.mxu0 0.0
  %2097 = vmatpush1.msra.mxu0 0.0
  %2098 = vmatprep.subr.mxu0 0.0
  %2099 = vmatpush1.msra.mxu0 0.0
  %2100 = vmatprep.mubr.f32.mxu0 0.0
  %2101 = vmatmul.mubr.f32.gmra.mrb[0].mxu0 %v2034
  %v2102 = vpop.f32.mrb[0].mxu0
  %v2103 = vadd.f32 %v1541, %v2102
  %v2104 = vpop.f32.mrb[0].mxu0
  %2105 = vdwg.mxu0
  %v2106 = vld [vmem:[%s613] sm:$0x3f]
  %2107 = vset.pattern.permute.xlu0 0
  %2108 = vperm.xlu0 %2107, %v2106
  %v2109 = vpop.permute.xlu0 %2108
  %vm2110 = vcmp.eq.s32.totalorder %v2109, %v27
  %v2111 = vsel %vm2110, 1, 0
  %v2112 = vcvt.s32.f32 %v2111
  %v2114 = vsel %vm49, %v2112, 0
  %2116 = vmatprep.subr.mxu0 0.0
  %2117 = vmatpush1.msra.mxu0 %v1527
  %2118 = vmatprep.subr.mxu0 0.0
  %2119 = vmatpush1.msra.mxu0 %v1528
  %2120 = vmatprep.subr.mxu0 0.0
  %2121 = vmatpush1.msra.mxu0 %v1554
  %2122 = vmatprep.subr.mxu0 0.0
  %2123 = vmatpush1.msra.mxu0 0.0
  %2124 = vmatprep.subr.mxu0 0.0
  %2125 = vmatpush1.msra.mxu0 0.0
  %2126 = vmatprep.subr.mxu0 0.0
  %2127 = vmatpush1.msra.mxu0 0.0
  %2128 = vmatprep.subr.mxu0 0.0
  %2129 = vmatpush1.msra.mxu0 0.0
  %2130 = vmatprep.subr.mxu0 0.0
  %2131 = vmatpush1.msra.mxu0 0.0
  %2132 = vmatprep.subr.mxu0 0.0
  %2133 = vmatpush1.msra.mxu0 0.0
  %2134 = vmatprep.subr.mxu0 0.0
  %2135 = vmatpush1.msra.mxu0 0.0
  %2136 = vmatprep.subr.mxu0 0.0
  %2137 = vmatpush1.msra.mxu0 0.0
  %2138 = vmatprep.subr.mxu0 0.0
  %2139 = vmatpush1.msra.mxu0 0.0
  %2140 = vmatprep.subr.mxu0 0.0
  %2141 = vmatpush1.msra.mxu0 0.0
  %2142 = vmatprep.subr.mxu0 0.0
  %2143 = vmatpush1.msra.mxu0 0.0
  %2144 = vmatprep.subr.mxu0 0.0
  %2145 = vmatpush1.msra.mxu0 0.0
  %2146 = vmatprep.subr.mxu0 0.0
  %2147 = vmatpush1.msra.mxu0 0.0
  %2148 = vmatprep.subr.mxu0 0.0
  %2149 = vmatpush1.msra.mxu0 0.0
  %2150 = vmatprep.subr.mxu0 0.0
  %2151 = vmatpush1.msra.mxu0 0.0
  %2152 = vmatprep.subr.mxu0 0.0
  %2153 = vmatpush1.msra.mxu0 0.0
  %2154 = vmatprep.subr.mxu0 0.0
  %2155 = vmatpush1.msra.mxu0 0.0
  %2156 = vmatprep.subr.mxu0 0.0
  %2157 = vmatpush1.msra.mxu0 0.0
  %2158 = vmatprep.subr.mxu0 0.0
  %2159 = vmatpush1.msra.mxu0 0.0
  %2160 = vmatprep.subr.mxu0 0.0
  %2161 = vmatpush1.msra.mxu0 0.0
  %2162 = vmatprep.subr.mxu0 0.0
  %2163 = vmatpush1.msra.mxu0 0.0
  %2164 = vmatprep.subr.mxu0 0.0
  %2165 = vmatpush1.msra.mxu0 0.0
  %2166 = vmatprep.subr.mxu0 0.0
  %2167 = vmatpush1.msra.mxu0 0.0
  %2168 = vmatprep.subr.mxu0 0.0
  %2169 = vmatpush1.msra.mxu0 0.0
  %2170 = vmatprep.subr.mxu0 0.0
  %2171 = vmatpush1.msra.mxu0 0.0
  %2172 = vmatprep.subr.mxu0 0.0
  %2173 = vmatpush1.msra.mxu0 0.0
  %2174 = vmatprep.subr.mxu0 0.0
  %2175 = vmatpush1.msra.mxu0 0.0
  %2176 = vmatprep.subr.mxu0 0.0
  %2177 = vmatpush1.msra.mxu0 0.0
  %2178 = vmatprep.subr.mxu0 0.0
  %2179 = vmatpush1.msra.mxu0 0.0
  %2180 = vmatprep.mubr.f32.mxu0 0.0
  %2181 = vmatmul.mubr.f32.gmra.mrb[0].mxu0 %v2114
  %v2182 = vpop.f32.mrb[0].mxu0
  %v2183 = vadd.f32 %v1541, %v2182
  %v2184 = vpop.f32.mrb[0].mxu0
  %2185 = vdwg.mxu0
  %s2186 = scalar_lea.vmem %s5, 8
  %v2187 = vld [vmem:[%s2186] sm:$0x3f]
  %s2188 = scalar_lea.vmem %s6, 8
  %v2189 = vld [vmem:[%s2188] sm:$0x3f]
  %v2191 = vsel %vm696, %v2187, 0
  %2193 = vmatprep.subr.mxu0 0.0
  %2194 = vmatpush1.msra.mxu0 %v1531
  %2195 = vmatprep.subr.mxu0 0.0
  %2196 = vmatpush1.msra.mxu0 %v1532
  %2197 = vmatprep.subr.mxu0 0.0
  %2198 = vmatpush1.msra.mxu0 %v1533
  %2199 = vmatprep.subr.mxu0 0.0
  %2200 = vmatpush1.msra.mxu0 %v1534
  %2201 = vmatprep.subr.mxu0 0.0
  %2202 = vmatpush1.msra.mxu0 0.0
  %2203 = vmatprep.subr.mxu0 0.0
  %2204 = vmatpush1.msra.mxu0 0.0
  %2205 = vmatprep.subr.mxu0 0.0
  %2206 = vmatpush1.msra.mxu0 0.0
  %2207 = vmatprep.subr.mxu0 0.0
  %2208 = vmatpush1.msra.mxu0 0.0
  %2209 = vmatprep.subr.mxu0 0.0
  %2210 = vmatpush1.msra.mxu0 0.0
  %2211 = vmatprep.subr.mxu0 0.0
  %2212 = vmatpush1.msra.mxu0 0.0
  %2213 = vmatprep.subr.mxu0 0.0
  %2214 = vmatpush1.msra.mxu0 0.0
  %2215 = vmatprep.subr.mxu0 0.0
  %2216 = vmatpush1.msra.mxu0 0.0
  %2217 = vmatprep.subr.mxu0 0.0
  %2218 = vmatpush1.msra.mxu0 0.0
  %2219 = vmatprep.subr.mxu0 0.0
  %2220 = vmatpush1.msra.mxu0 0.0
  %2221 = vmatprep.subr.mxu0 0.0
  %2222 = vmatpush1.msra.mxu0 0.0
  %2223 = vmatprep.subr.mxu0 0.0
  %2224 = vmatpush1.msra.mxu0 0.0
  %2225 = vmatprep.subr.mxu0 0.0
  %2226 = vmatpush1.msra.mxu0 0.0
  %2227 = vmatprep.subr.mxu0 0.0
  %2228 = vmatpush1.msra.mxu0 0.0
  %2229 = vmatprep.subr.mxu0 0.0
  %2230 = vmatpush1.msra.mxu0 0.0
  %2231 = vmatprep.subr.mxu0 0.0
  %2232 = vmatpush1.msra.mxu0 0.0
  %2233 = vmatprep.subr.mxu0 0.0
  %2234 = vmatpush1.msra.mxu0 0.0
  %2235 = vmatprep.subr.mxu0 0.0
  %2236 = vmatpush1.msra.mxu0 0.0
  %2237 = vmatprep.subr.mxu0 0.0
  %2238 = vmatpush1.msra.mxu0 0.0
  %2239 = vmatprep.subr.mxu0 0.0
  %2240 = vmatpush1.msra.mxu0 0.0
  %2241 = vmatprep.subr.mxu0 0.0
  %2242 = vmatpush1.msra.mxu0 0.0
  %2243 = vmatprep.subr.mxu0 0.0
  %2244 = vmatpush1.msra.mxu0 0.0
  %2245 = vmatprep.subr.mxu0 0.0
  %2246 = vmatpush1.msra.mxu0 0.0
  %2247 = vmatprep.subr.mxu0 0.0
  %2248 = vmatpush1.msra.mxu0 0.0
  %2249 = vmatprep.subr.mxu0 0.0
  %2250 = vmatpush1.msra.mxu0 0.0
  %2251 = vmatprep.subr.mxu0 0.0
  %2252 = vmatpush1.msra.mxu0 0.0
  %2253 = vmatprep.subr.mxu0 0.0
  %2254 = vmatpush1.msra.mxu0 0.0
  %2255 = vmatprep.subr.mxu0 0.0
  %2256 = vmatpush1.msra.mxu0 0.0
  %2257 = vmatprep.mubr.f32.mxu0 0.0
  %2258 = vmatmul.mubr.f32.gmra.mrb[0].mxu0 %v2191
  %v2259 = vpop.f32.mrb[0].mxu0
  %v2260 = vadd.f32 0.0, %v2259
  %v2261 = vpop.f32.mrb[0].mxu0
  %2262 = vdwg.mxu0
  %v2263 = vadd.f32 %v2183, %v2260
  %v2264 = vxor.u32 %v2263, 2147483648
  %v2265 = vmul.f32 %v2264, 1.442695
  %v2266 = vpow.pop %v2265
  %v2267 = vadd.f32 %v2266, 1.0
  %v2268 = vrcp.pop %v2267
  %v2269 = vmul.f32 1.0, %v2268
  %v2270 = vtanh.pop %v2263
  %2272 = vrot.lane.b32.xlu0 %v2189, 32
  %v2273 = vpop.permute.xlu0 %2272
  %v2275 = vmul.f32 %v2269, %v2273
  %2277 = vrot.lane.b32.xlu0 %v2270, 64
  %v2278 = vpop.permute.xlu0 %2277
  %v2280 = vmul.f32 %v2269, %v2278
  %2282 = vrot.lane.b32.xlu0 %v2280, 32
  %v2283 = vpop.permute.xlu0 %2282
  %v2285 = vadd.f32 %v2275, %v2283
  %v2286 = vtanh.pop %v2285
  %2288 = vrot.lane.b32.xlu0 %v2286, 64
  %v2289 = vpop.permute.xlu0 %2288
  %v2291 = vmul.f32 %v2269, %v2289
  %2293 = vrot.lane.b32.xlu0 %v2291, 32
  %v2294 = vpop.permute.xlu0 %2293
  %s2296 = scalar_lea.vmem [#allocation2], 120
  %2297 = vst.msk [vmem:[%s2296] sm:$0x3f] %vm803, %v2294
  %v2298 = vsel %vm696, %v2294, 0
  %2300 = vmatprep.subr.mxu0 0.0
  %2301 = vmatpush1.msra.mxu0 %v1531
  %2302 = vmatprep.subr.mxu0 0.0
  %2303 = vmatpush1.msra.mxu0 %v1532
  %2304 = vmatprep.subr.mxu0 0.0
  %2305 = vmatpush1.msra.mxu0 %v1533
  %2306 = vmatprep.subr.mxu0 0.0
  %2307 = vmatpush1.msra.mxu0 %v1534
  %2308 = vmatprep.subr.mxu0 0.0
  %2309 = vmatpush1.msra.mxu0 0.0
  %2310 = vmatprep.subr.mxu0 0.0
  %2311 = vmatpush1.msra.mxu0 0.0
  %2312 = vmatprep.subr.mxu0 0.0
  %2313 = vmatpush1.msra.mxu0 0.0
  %2314 = vmatprep.subr.mxu0 0.0
  %2315 = vmatpush1.msra.mxu0 0.0
  %2316 = vmatprep.subr.mxu0 0.0
  %2317 = vmatpush1.msra.mxu0 0.0
  %2318 = vmatprep.subr.mxu0 0.0
  %2319 = vmatpush1.msra.mxu0 0.0
  %2320 = vmatprep.subr.mxu0 0.0
  %2321 = vmatpush1.msra.mxu0 0.0
  %2322 = vmatprep.subr.mxu0 0.0
  %2323 = vmatpush1.msra.mxu0 0.0
  %2324 = vmatprep.subr.mxu0 0.0
  %2325 = vmatpush1.msra.mxu0 0.0
  %2326 = vmatprep.subr.mxu0 0.0
  %2327 = vmatpush1.msra.mxu0 0.0
  %2328 = vmatprep.subr.mxu0 0.0
  %2329 = vmatpush1.msra.mxu0 0.0
  %2330 = vmatprep.subr.mxu0 0.0
  %2331 = vmatpush1.msra.mxu0 0.0
  %2332 = vmatprep.subr.mxu0 0.0
  %2333 = vmatpush1.msra.mxu0 0.0
  %2334 = vmatprep.subr.mxu0 0.0
  %2335 = vmatpush1.msra.mxu0 0.0
  %2336 = vmatprep.subr.mxu0 0.0
  %2337 = vmatpush1.msra.mxu0 0.0
  %2338 = vmatprep.subr.mxu0 0.0
  %2339 = vmatpush1.msra.mxu0 0.0
  %2340 = vmatprep.subr.mxu0 0.0
  %2341 = vmatpush1.msra.mxu0 0.0
  %2342 = vmatprep.subr.mxu0 0.0
  %2343 = vmatpush1.msra.mxu0 0.0
  %2344 = vmatprep.subr.mxu0 0.0
  %2345 = vmatpush1.msra.mxu0 0.0
  %2346 = vmatprep.subr.mxu0 0.0
  %2347 = vmatpush1.msra.mxu0 0.0
  %2348 = vmatprep.subr.mxu0 0.0
  %2349 = vmatpush1.msra.mxu0 0.0
  %2350 = vmatprep.subr.mxu0 0.0
  %2351 = vmatpush1.msra.mxu0 0.0
  %2352 = vmatprep.subr.mxu0 0.0
  %2353 = vmatpush1.msra.mxu0 0.0
  %2354 = vmatprep.subr.mxu0 0.0
  %2355 = vmatpush1.msra.mxu0 0.0
  %2356 = vmatprep.subr.mxu0 0.0
  %2357 = vmatpush1.msra.mxu0 0.0
  %2358 = vmatprep.subr.mxu0 0.0
  %2359 = vmatpush1.msra.mxu0 0.0
  %2360 = vmatprep.subr.mxu0 0.0
  %2361 = vmatpush1.msra.mxu0 0.0
  %2362 = vmatprep.subr.mxu0 0.0
  %2363 = vmatpush1.msra.mxu0 0.0
  %2364 = vmatprep.mubr.f32.mxu0 0.0
  %2365 = vmatmul.mubr.f32.gmra.mrb[0].mxu0 %v2298
  %v2366 = vpop.f32.mrb[0].mxu0
  %v2367 = vadd.f32 0.0, %v2366
  %v2368 = vpop.f32.mrb[0].mxu0
  %2369 = vdwg.mxu0
  %v2370 = vadd.f32 %v2103, %v2367
  %v2371 = vxor.u32 %v2370, 2147483648
  %v2372 = vmul.f32 %v2371, 1.442695
  %v2373 = vpow.pop %v2372
  %v2374 = vadd.f32 %v2373, 1.0
  %v2375 = vrcp.pop %v2374
  %v2376 = vmul.f32 1.0, %v2375
  %v2377 = vtanh.pop %v2370
  %v2378 = vmul.f32 %v2376, %v2285
  %2380 = vrot.lane.b32.xlu0 %v2377, 64
  %v2381 = vpop.permute.xlu0 %2380
  %v2383 = vmul.f32 %v2376, %v2381
  %2385 = vrot.lane.b32.xlu0 %v2383, 32
  %v2386 = vpop.permute.xlu0 %2385
  %v2388 = vadd.f32 %v2378, %v2386
  %v2389 = vtanh.pop %v2388
  %2391 = vrot.lane.b32.xlu0 %v2389, 64
  %v2392 = vpop.permute.xlu0 %2391
  %v2394 = vmul.f32 %v2376, %v2392
  %2396 = vrot.lane.b32.xlu0 %v2394, 32
  %v2397 = vpop.permute.xlu0 %2396
  %s2399 = scalar_lea.vmem [#allocation2], 112
  %2400 = vst.msk [vmem:[%s2399] sm:$0x3f] %vm803, %v2397
  %v2401 = vsel %vm696, %v2397, 0
  %2403 = vmatprep.subr.mxu0 0.0
  %2404 = vmatpush1.msra.mxu0 %v1531
  %2405 = vmatprep.subr.mxu0 0.0
  %2406 = vmatpush1.msra.mxu0 %v1532
  %2407 = vmatprep.subr.mxu0 0.0
  %2408 = vmatpush1.msra.mxu0 %v1533
  %2409 = vmatprep.subr.mxu0 0.0
  %2410 = vmatpush1.msra.mxu0 %v1534
  %2411 = vmatprep.subr.mxu0 0.0
  %2412 = vmatpush1.msra.mxu0 0.0
  %2413 = vmatprep.subr.mxu0 0.0
  %2414 = vmatpush1.msra.mxu0 0.0
  %2415 = vmatprep.subr.mxu0 0.0
  %2416 = vmatpush1.msra.mxu0 0.0
  %2417 = vmatprep.subr.mxu0 0.0
  %2418 = vmatpush1.msra.mxu0 0.0
  %2419 = vmatprep.subr.mxu0 0.0
  %2420 = vmatpush1.msra.mxu0 0.0
  %2421 = vmatprep.subr.mxu0 0.0
  %2422 = vmatpush1.msra.mxu0 0.0
  %2423 = vmatprep.subr.mxu0 0.0
  %2424 = vmatpush1.msra.mxu0 0.0
  %2425 = vmatprep.subr.mxu0 0.0
  %2426 = vmatpush1.msra.mxu0 0.0
  %2427 = vmatprep.subr.mxu0 0.0
  %2428 = vmatpush1.msra.mxu0 0.0
  %2429 = vmatprep.subr.mxu0 0.0
  %2430 = vmatpush1.msra.mxu0 0.0
  %2431 = vmatprep.subr.mxu0 0.0
  %2432 = vmatpush1.msra.mxu0 0.0
  %2433 = vmatprep.subr.mxu0 0.0
  %2434 = vmatpush1.msra.mxu0 0.0
  %2435 = vmatprep.subr.mxu0 0.0
  %2436 = vmatpush1.msra.mxu0 0.0
  %2437 = vmatprep.subr.mxu0 0.0
  %2438 = vmatpush1.msra.mxu0 0.0
  %2439 = vmatprep.subr.mxu0 0.0
  %2440 = vmatpush1.msra.mxu0 0.0
  %2441 = vmatprep.subr.mxu0 0.0
  %2442 = vmatpush1.msra.mxu0 0.0
  %2443 = vmatprep.subr.mxu0 0.0
  %2444 = vmatpush1.msra.mxu0 0.0
  %2445 = vmatprep.subr.mxu0 0.0
  %2446 = vmatpush1.msra.mxu0 0.0
  %2447 = vmatprep.subr.mxu0 0.0
  %2448 = vmatpush1.msra.mxu0 0.0
  %2449 = vmatprep.subr.mxu0 0.0
  %2450 = vmatpush1.msra.mxu0 0.0
  %2451 = vmatprep.subr.mxu0 0.0
  %2452 = vmatpush1.msra.mxu0 0.0
  %2453 = vmatprep.subr.mxu0 0.0
  %2454 = vmatpush1.msra.mxu0 0.0
  %2455 = vmatprep.subr.mxu0 0.0
  %2456 = vmatpush1.msra.mxu0 0.0
  %2457 = vmatprep.subr.mxu0 0.0
  %2458 = vmatpush1.msra.mxu0 0.0
  %2459 = vmatprep.subr.mxu0 0.0
  %2460 = vmatpush1.msra.mxu0 0.0
  %2461 = vmatprep.subr.mxu0 0.0
  %2462 = vmatpush1.msra.mxu0 0.0
  %2463 = vmatprep.subr.mxu0 0.0
  %2464 = vmatpush1.msra.mxu0 0.0
  %2465 = vmatprep.subr.mxu0 0.0
  %2466 = vmatpush1.msra.mxu0 0.0
  %2467 = vmatprep.mubr.f32.mxu0 0.0
  %2468 = vmatmul.mubr.f32.gmra.mrb[0].mxu0 %v2401
  %v2469 = vpop.f32.mrb[0].mxu0
  %v2470 = vadd.f32 0.0, %v2469
  %v2471 = vpop.f32.mrb[0].mxu0
  %2472 = vdwg.mxu0
  %v2473 = vadd.f32 %v2023, %v2470
  %v2474 = vxor.u32 %v2473, 2147483648
  %v2475 = vmul.f32 %v2474, 1.442695
  %v2476 = vpow.pop %v2475
  %v2477 = vadd.f32 %v2476, 1.0
  %v2478 = vrcp.pop %v2477
  %v2479 = vmul.f32 1.0, %v2478
  %v2480 = vtanh.pop %v2473
  %v2481 = vmul.f32 %v2479, %v2388
  %2483 = vrot.lane.b32.xlu0 %v2480, 64
  %v2484 = vpop.permute.xlu0 %2483
  %v2486 = vmul.f32 %v2479, %v2484
  %2488 = vrot.lane.b32.xlu0 %v2486, 32
  %v2489 = vpop.permute.xlu0 %2488
  %v2491 = vadd.f32 %v2481, %v2489
  %v2492 = vtanh.pop %v2491
  %2494 = vrot.lane.b32.xlu0 %v2492, 64
  %v2495 = vpop.permute.xlu0 %2494
  %v2497 = vmul.f32 %v2479, %v2495
  %2499 = vrot.lane.b32.xlu0 %v2497, 32
  %v2500 = vpop.permute.xlu0 %2499
  %s2502 = scalar_lea.vmem [#allocation2], 104
  %2503 = vst.msk [vmem:[%s2502] sm:$0x3f] %vm803, %v2500
  %v2504 = vsel %vm696, %v2500, 0
  %2506 = vmatprep.subr.mxu0 0.0
  %2507 = vmatpush1.msra.mxu0 %v1531
  %2508 = vmatprep.subr.mxu0 0.0
  %2509 = vmatpush1.msra.mxu0 %v1532
  %2510 = vmatprep.subr.mxu0 0.0
  %2511 = vmatpush1.msra.mxu0 %v1533
  %2512 = vmatprep.subr.mxu0 0.0
  %2513 = vmatpush1.msra.mxu0 %v1534
  %2514 = vmatprep.subr.mxu0 0.0
  %2515 = vmatpush1.msra.mxu0 0.0
  %2516 = vmatprep.subr.mxu0 0.0
  %2517 = vmatpush1.msra.mxu0 0.0
  %2518 = vmatprep.subr.mxu0 0.0
  %2519 = vmatpush1.msra.mxu0 0.0
  %2520 = vmatprep.subr.mxu0 0.0
  %2521 = vmatpush1.msra.mxu0 0.0
  %2522 = vmatprep.subr.mxu0 0.0
  %2523 = vmatpush1.msra.mxu0 0.0
  %2524 = vmatprep.subr.mxu0 0.0
  %2525 = vmatpush1.msra.mxu0 0.0
  %2526 = vmatprep.subr.mxu0 0.0
  %2527 = vmatpush1.msra.mxu0 0.0
  %2528 = vmatprep.subr.mxu0 0.0
  %2529 = vmatpush1.msra.mxu0 0.0
  %2530 = vmatprep.subr.mxu0 0.0
  %2531 = vmatpush1.msra.mxu0 0.0
  %2532 = vmatprep.subr.mxu0 0.0
  %2533 = vmatpush1.msra.mxu0 0.0
  %2534 = vmatprep.subr.mxu0 0.0
  %2535 = vmatpush1.msra.mxu0 0.0
  %2536 = vmatprep.subr.mxu0 0.0
  %2537 = vmatpush1.msra.mxu0 0.0
  %2538 = vmatprep.subr.mxu0 0.0
  %2539 = vmatpush1.msra.mxu0 0.0
  %2540 = vmatprep.subr.mxu0 0.0
  %2541 = vmatpush1.msra.mxu0 0.0
  %2542 = vmatprep.subr.mxu0 0.0
  %2543 = vmatpush1.msra.mxu0 0.0
  %2544 = vmatprep.subr.mxu0 0.0
  %2545 = vmatpush1.msra.mxu0 0.0
  %2546 = vmatprep.subr.mxu0 0.0
  %2547 = vmatpush1.msra.mxu0 0.0
  %2548 = vmatprep.subr.mxu0 0.0
  %2549 = vmatpush1.msra.mxu0 0.0
  %2550 = vmatprep.subr.mxu0 0.0
  %2551 = vmatpush1.msra.mxu0 0.0
  %2552 = vmatprep.subr.mxu0 0.0
  %2553 = vmatpush1.msra.mxu0 0.0
  %2554 = vmatprep.subr.mxu0 0.0
  %2555 = vmatpush1.msra.mxu0 0.0
  %2556 = vmatprep.subr.mxu0 0.0
  %2557 = vmatpush1.msra.mxu0 0.0
  %2558 = vmatprep.subr.mxu0 0.0
  %2559 = vmatpush1.msra.mxu0 0.0
  %2560 = vmatprep.subr.mxu0 0.0
  %2561 = vmatpush1.msra.mxu0 0.0
  %2562 = vmatprep.subr.mxu0 0.0
  %2563 = vmatpush1.msra.mxu0 0.0
  %2564 = vmatprep.subr.mxu0 0.0
  %2565 = vmatpush1.msra.mxu0 0.0
  %2566 = vmatprep.subr.mxu0 0.0
  %2567 = vmatpush1.msra.mxu0 0.0
  %2568 = vmatprep.subr.mxu0 0.0
  %2569 = vmatpush1.msra.mxu0 0.0
  %2570 = vmatprep.mubr.f32.mxu0 0.0
  %2571 = vmatmul.mubr.f32.gmra.mrb[0].mxu0 %v2504
  %v2572 = vpop.f32.mrb[0].mxu0
  %v2573 = vadd.f32 0.0, %v2572
  %v2574 = vpop.f32.mrb[0].mxu0
  %2575 = vdwg.mxu0
  %v2576 = vadd.f32 %v1943, %v2573
  %v2577 = vxor.u32 %v2576, 2147483648
  %v2578 = vmul.f32 %v2577, 1.442695
  %v2579 = vpow.pop %v2578
  %v2580 = vadd.f32 %v2579, 1.0
  %v2581 = vrcp.pop %v2580
  %v2582 = vmul.f32 1.0, %v2581
  %v2583 = vtanh.pop %v2576
  %v2584 = vmul.f32 %v2582, %v2491
  %2586 = vrot.lane.b32.xlu0 %v2583, 64
  %v2587 = vpop.permute.xlu0 %2586
  %v2589 = vmul.f32 %v2582, %v2587
  %2591 = vrot.lane.b32.xlu0 %v2589, 32
  %v2592 = vpop.permute.xlu0 %2591
  %v2594 = vadd.f32 %v2584, %v2592
  %v2595 = vtanh.pop %v2594
  %2597 = vrot.lane.b32.xlu0 %v2595, 64
  %v2598 = vpop.permute.xlu0 %2597
  %v2600 = vmul.f32 %v2582, %v2598
  %2602 = vrot.lane.b32.xlu0 %v2600, 32
  %v2603 = vpop.permute.xlu0 %2602
  %s2605 = scalar_lea.vmem [#allocation2], 96
  %2606 = vst.msk [vmem:[%s2605] sm:$0x3f] %vm803, %v2603
  %v2607 = vsel %vm696, %v2603, 0
  %2609 = vmatprep.subr.mxu0 0.0
  %2610 = vmatpush1.msra.mxu0 %v1531
  %2611 = vmatprep.subr.mxu0 0.0
  %2612 = vmatpush1.msra.mxu0 %v1532
  %2613 = vmatprep.subr.mxu0 0.0
  %2614 = vmatpush1.msra.mxu0 %v1533
  %2615 = vmatprep.subr.mxu0 0.0
  %2616 = vmatpush1.msra.mxu0 %v1534
  %2617 = vmatprep.subr.mxu0 0.0
  %2618 = vmatpush1.msra.mxu0 0.0
  %2619 = vmatprep.subr.mxu0 0.0
  %2620 = vmatpush1.msra.mxu0 0.0
  %2621 = vmatprep.subr.mxu0 0.0
  %2622 = vmatpush1.msra.mxu0 0.0
  %2623 = vmatprep.subr.mxu0 0.0
  %2624 = vmatpush1.msra.mxu0 0.0
  %2625 = vmatprep.subr.mxu0 0.0
  %2626 = vmatpush1.msra.mxu0 0.0
  %2627 = vmatprep.subr.mxu0 0.0
  %2628 = vmatpush1.msra.mxu0 0.0
  %2629 = vmatprep.subr.mxu0 0.0
  %2630 = vmatpush1.msra.mxu0 0.0
  %2631 = vmatprep.subr.mxu0 0.0
  %2632 = vmatpush1.msra.mxu0 0.0
  %2633 = vmatprep.subr.mxu0 0.0
  %2634 = vmatpush1.msra.mxu0 0.0
  %2635 = vmatprep.subr.mxu0 0.0
  %2636 = vmatpush1.msra.mxu0 0.0
  %2637 = vmatprep.subr.mxu0 0.0
  %2638 = vmatpush1.msra.mxu0 0.0
  %2639 = vmatprep.subr.mxu0 0.0
  %2640 = vmatpush1.msra.mxu0 0.0
  %2641 = vmatprep.subr.mxu0 0.0
  %2642 = vmatpush1.msra.mxu0 0.0
  %2643 = vmatprep.subr.mxu0 0.0
  %2644 = vmatpush1.msra.mxu0 0.0
  %2645 = vmatprep.subr.mxu0 0.0
  %2646 = vmatpush1.msra.mxu0 0.0
  %2647 = vmatprep.subr.mxu0 0.0
  %2648 = vmatpush1.msra.mxu0 0.0
  %2649 = vmatprep.subr.mxu0 0.0
  %2650 = vmatpush1.msra.mxu0 0.0
  %2651 = vmatprep.subr.mxu0 0.0
  %2652 = vmatpush1.msra.mxu0 0.0
  %2653 = vmatprep.subr.mxu0 0.0
  %2654 = vmatpush1.msra.mxu0 0.0
  %2655 = vmatprep.subr.mxu0 0.0
  %2656 = vmatpush1.msra.mxu0 0.0
  %2657 = vmatprep.subr.mxu0 0.0
  %2658 = vmatpush1.msra.mxu0 0.0
  %2659 = vmatprep.subr.mxu0 0.0
  %2660 = vmatpush1.msra.mxu0 0.0
  %2661 = vmatprep.subr.mxu0 0.0
  %2662 = vmatpush1.msra.mxu0 0.0
  %2663 = vmatprep.subr.mxu0 0.0
  %2664 = vmatpush1.msra.mxu0 0.0
  %2665 = vmatprep.subr.mxu0 0.0
  %2666 = vmatpush1.msra.mxu0 0.0
  %2667 = vmatprep.subr.mxu0 0.0
  %2668 = vmatpush1.msra.mxu0 0.0
  %2669 = vmatprep.subr.mxu0 0.0
  %2670 = vmatpush1.msra.mxu0 0.0
  %2671 = vmatprep.subr.mxu0 0.0
  %2672 = vmatpush1.msra.mxu0 0.0
  %2673 = vmatprep.mubr.f32.mxu0 0.0
  %2674 = vmatmul.mubr.f32.gmra.mrb[0].mxu0 %v2607
  %v2675 = vpop.f32.mrb[0].mxu0
  %v2676 = vadd.f32 0.0, %v2675
  %v2677 = vpop.f32.mrb[0].mxu0
  %2678 = vdwg.mxu0
  %v2679 = vadd.f32 %v1863, %v2676
  %v2680 = vxor.u32 %v2679, 2147483648
  %v2681 = vmul.f32 %v2680, 1.442695
  %v2682 = vpow.pop %v2681
  %v2683 = vadd.f32 %v2682, 1.0
  %v2684 = vrcp.pop %v2683
  %v2685 = vmul.f32 1.0, %v2684
  %v2686 = vtanh.pop %v2679
  %v2687 = vmul.f32 %v2685, %v2594
  %2689 = vrot.lane.b32.xlu0 %v2686, 64
  %v2690 = vpop.permute.xlu0 %2689
  %v2692 = vmul.f32 %v2685, %v2690
  %2694 = vrot.lane.b32.xlu0 %v2692, 32
  %v2695 = vpop.permute.xlu0 %2694
  %v2697 = vadd.f32 %v2687, %v2695
  %v2698 = vtanh.pop %v2697
  %2700 = vrot.lane.b32.xlu0 %v2698, 64
  %v2701 = vpop.permute.xlu0 %2700
  %v2703 = vmul.f32 %v2685, %v2701
  %2705 = vrot.lane.b32.xlu0 %v2703, 32
  %v2706 = vpop.permute.xlu0 %2705
  %s2708 = scalar_lea.vmem [#allocation2], 88
  %2709 = vst.msk [vmem:[%s2708] sm:$0x3f] %vm803, %v2706
  %v2710 = vsel %vm696, %v2706, 0
  %2712 = vmatprep.subr.mxu0 0.0
  %2713 = vmatpush1.msra.mxu0 %v1531
  %2714 = vmatprep.subr.mxu0 0.0
  %2715 = vmatpush1.msra.mxu0 %v1532
  %2716 = vmatprep.subr.mxu0 0.0
  %2717 = vmatpush1.msra.mxu0 %v1533
  %2718 = vmatprep.subr.mxu0 0.0
  %2719 = vmatpush1.msra.mxu0 %v1534
  %2720 = vmatprep.subr.mxu0 0.0
  %2721 = vmatpush1.msra.mxu0 0.0
  %2722 = vmatprep.subr.mxu0 0.0
  %2723 = vmatpush1.msra.mxu0 0.0
  %2724 = vmatprep.subr.mxu0 0.0
  %2725 = vmatpush1.msra.mxu0 0.0
  %2726 = vmatprep.subr.mxu0 0.0
  %2727 = vmatpush1.msra.mxu0 0.0
  %2728 = vmatprep.subr.mxu0 0.0
  %2729 = vmatpush1.msra.mxu0 0.0
  %2730 = vmatprep.subr.mxu0 0.0
  %2731 = vmatpush1.msra.mxu0 0.0
  %2732 = vmatprep.subr.mxu0 0.0
  %2733 = vmatpush1.msra.mxu0 0.0
  %2734 = vmatprep.subr.mxu0 0.0
  %2735 = vmatpush1.msra.mxu0 0.0
  %2736 = vmatprep.subr.mxu0 0.0
  %2737 = vmatpush1.msra.mxu0 0.0
  %2738 = vmatprep.subr.mxu0 0.0
  %2739 = vmatpush1.msra.mxu0 0.0
  %2740 = vmatprep.subr.mxu0 0.0
  %2741 = vmatpush1.msra.mxu0 0.0
  %2742 = vmatprep.subr.mxu0 0.0
  %2743 = vmatpush1.msra.mxu0 0.0
  %2744 = vmatprep.subr.mxu0 0.0
  %2745 = vmatpush1.msra.mxu0 0.0
  %2746 = vmatprep.subr.mxu0 0.0
  %2747 = vmatpush1.msra.mxu0 0.0
  %2748 = vmatprep.subr.mxu0 0.0
  %2749 = vmatpush1.msra.mxu0 0.0
  %2750 = vmatprep.subr.mxu0 0.0
  %2751 = vmatpush1.msra.mxu0 0.0
  %2752 = vmatprep.subr.mxu0 0.0
  %2753 = vmatpush1.msra.mxu0 0.0
  %2754 = vmatprep.subr.mxu0 0.0
  %2755 = vmatpush1.msra.mxu0 0.0
  %2756 = vmatprep.subr.mxu0 0.0
  %2757 = vmatpush1.msra.mxu0 0.0
  %2758 = vmatprep.subr.mxu0 0.0
  %2759 = vmatpush1.msra.mxu0 0.0
  %2760 = vmatprep.subr.mxu0 0.0
  %2761 = vmatpush1.msra.mxu0 0.0
  %2762 = vmatprep.subr.mxu0 0.0
  %2763 = vmatpush1.msra.mxu0 0.0
  %2764 = vmatprep.subr.mxu0 0.0
  %2765 = vmatpush1.msra.mxu0 0.0
  %2766 = vmatprep.subr.mxu0 0.0
  %2767 = vmatpush1.msra.mxu0 0.0
  %2768 = vmatprep.subr.mxu0 0.0
  %2769 = vmatpush1.msra.mxu0 0.0
  %2770 = vmatprep.subr.mxu0 0.0
  %2771 = vmatpush1.msra.mxu0 0.0
  %2772 = vmatprep.subr.mxu0 0.0
  %2773 = vmatpush1.msra.mxu0 0.0
  %2774 = vmatprep.subr.mxu0 0.0
  %2775 = vmatpush1.msra.mxu0 0.0
  %2776 = vmatprep.mubr.f32.mxu0 0.0
  %2777 = vmatmul.mubr.f32.gmra.mrb[0].mxu0 %v2710
  %v2778 = vpop.f32.mrb[0].mxu0
  %v2779 = vadd.f32 0.0, %v2778
  %v2780 = vpop.f32.mrb[0].mxu0
  %2781 = vdwg.mxu0
  %v2782 = vadd.f32 %v1783, %v2779
  %v2783 = vxor.u32 %v2782, 2147483648
  %v2784 = vmul.f32 %v2783, 1.442695
  %v2785 = vpow.pop %v2784
  %v2786 = vadd.f32 %v2785, 1.0
  %v2787 = vrcp.pop %v2786
  %v2788 = vmul.f32 1.0, %v2787
  %v2789 = vtanh.pop %v2782
  %v2790 = vmul.f32 %v2788, %v2697
  %2792 = vrot.lane.b32.xlu0 %v2789, 64
  %v2793 = vpop.permute.xlu0 %2792
  %v2795 = vmul.f32 %v2788, %v2793
  %2797 = vrot.lane.b32.xlu0 %v2795, 32
  %v2798 = vpop.permute.xlu0 %2797
  %v2800 = vadd.f32 %v2790, %v2798
  %v2801 = vtanh.pop %v2800
  %2803 = vrot.lane.b32.xlu0 %v2801, 64
  %v2804 = vpop.permute.xlu0 %2803
  %v2806 = vmul.f32 %v2788, %v2804
  %2808 = vrot.lane.b32.xlu0 %v2806, 32
  %v2809 = vpop.permute.xlu0 %2808
  %s2811 = scalar_lea.vmem [#allocation2], 80
  %2812 = vst.msk [vmem:[%s2811] sm:$0x3f] %vm803, %v2809
  %v2813 = vsel %vm696, %v2809, 0
  %2815 = vmatprep.subr.mxu0 0.0
  %2816 = vmatpush1.msra.mxu0 %v1531
  %2817 = vmatprep.subr.mxu0 0.0
  %2818 = vmatpush1.msra.mxu0 %v1532
  %2819 = vmatprep.subr.mxu0 0.0
  %2820 = vmatpush1.msra.mxu0 %v1533
  %2821 = vmatprep.subr.mxu0 0.0
  %2822 = vmatpush1.msra.mxu0 %v1534
  %2823 = vmatprep.subr.mxu0 0.0
  %2824 = vmatpush1.msra.mxu0 0.0
  %2825 = vmatprep.subr.mxu0 0.0
  %2826 = vmatpush1.msra.mxu0 0.0
  %2827 = vmatprep.subr.mxu0 0.0
  %2828 = vmatpush1.msra.mxu0 0.0
  %2829 = vmatprep.subr.mxu0 0.0
  %2830 = vmatpush1.msra.mxu0 0.0
  %2831 = vmatprep.subr.mxu0 0.0
  %2832 = vmatpush1.msra.mxu0 0.0
  %2833 = vmatprep.subr.mxu0 0.0
  %2834 = vmatpush1.msra.mxu0 0.0
  %2835 = vmatprep.subr.mxu0 0.0
  %2836 = vmatpush1.msra.mxu0 0.0
  %2837 = vmatprep.subr.mxu0 0.0
  %2838 = vmatpush1.msra.mxu0 0.0
  %2839 = vmatprep.subr.mxu0 0.0
  %2840 = vmatpush1.msra.mxu0 0.0
  %2841 = vmatprep.subr.mxu0 0.0
  %2842 = vmatpush1.msra.mxu0 0.0
  %2843 = vmatprep.subr.mxu0 0.0
  %2844 = vmatpush1.msra.mxu0 0.0
  %2845 = vmatprep.subr.mxu0 0.0
  %2846 = vmatpush1.msra.mxu0 0.0
  %2847 = vmatprep.subr.mxu0 0.0
  %2848 = vmatpush1.msra.mxu0 0.0
  %2849 = vmatprep.subr.mxu0 0.0
  %2850 = vmatpush1.msra.mxu0 0.0
  %2851 = vmatprep.subr.mxu0 0.0
  %2852 = vmatpush1.msra.mxu0 0.0
  %2853 = vmatprep.subr.mxu0 0.0
  %2854 = vmatpush1.msra.mxu0 0.0
  %2855 = vmatprep.subr.mxu0 0.0
  %2856 = vmatpush1.msra.mxu0 0.0
  %2857 = vmatprep.subr.mxu0 0.0
  %2858 = vmatpush1.msra.mxu0 0.0
  %2859 = vmatprep.subr.mxu0 0.0
  %2860 = vmatpush1.msra.mxu0 0.0
  %2861 = vmatprep.subr.mxu0 0.0
  %2862 = vmatpush1.msra.mxu0 0.0
  %2863 = vmatprep.subr.mxu0 0.0
  %2864 = vmatpush1.msra.mxu0 0.0
  %2865 = vmatprep.subr.mxu0 0.0
  %2866 = vmatpush1.msra.mxu0 0.0
  %2867 = vmatprep.subr.mxu0 0.0
  %2868 = vmatpush1.msra.mxu0 0.0
  %2869 = vmatprep.subr.mxu0 0.0
  %2870 = vmatpush1.msra.mxu0 0.0
  %2871 = vmatprep.subr.mxu0 0.0
  %2872 = vmatpush1.msra.mxu0 0.0
  %2873 = vmatprep.subr.mxu0 0.0
  %2874 = vmatpush1.msra.mxu0 0.0
  %2875 = vmatprep.subr.mxu0 0.0
  %2876 = vmatpush1.msra.mxu0 0.0
  %2877 = vmatprep.subr.mxu0 0.0
  %2878 = vmatpush1.msra.mxu0 0.0
  %2879 = vmatprep.mubr.f32.mxu0 0.0
  %2880 = vmatmul.mubr.f32.gmra.mrb[0].mxu0 %v2813
  %v2881 = vpop.f32.mrb[0].mxu0
  %v2882 = vadd.f32 0.0, %v2881
  %v2883 = vpop.f32.mrb[0].mxu0
  %2884 = vdwg.mxu0
  %v2885 = vadd.f32 %v1703, %v2882
  %v2886 = vxor.u32 %v2885, 2147483648
  %v2887 = vmul.f32 %v2886, 1.442695
  %v2888 = vpow.pop %v2887
  %v2889 = vadd.f32 %v2888, 1.0
  %v2890 = vrcp.pop %v2889
  %v2891 = vmul.f32 1.0, %v2890
  %v2892 = vtanh.pop %v2885
  %v2893 = vmul.f32 %v2891, %v2800
  %2895 = vrot.lane.b32.xlu0 %v2892, 64
  %v2896 = vpop.permute.xlu0 %2895
  %v2898 = vmul.f32 %v2891, %v2896
  %2900 = vrot.lane.b32.xlu0 %v2898, 32
  %v2901 = vpop.permute.xlu0 %2900
  %v2903 = vadd.f32 %v2893, %v2901
  %v2904 = vtanh.pop %v2903
  %2906 = vrot.lane.b32.xlu0 %v2904, 64
  %v2907 = vpop.permute.xlu0 %2906
  %v2909 = vmul.f32 %v2891, %v2907
  %2911 = vrot.lane.b32.xlu0 %v2909, 32
  %v2912 = vpop.permute.xlu0 %2911
  %s2914 = scalar_lea.vmem [#allocation2], 72
  %2915 = vst.msk [vmem:[%s2914] sm:$0x3f] %vm803, %v2912
  %v2916 = vsel %vm696, %v2912, 0
  %2918 = vmatprep.subr.mxu0 0.0
  %2919 = vmatpush1.msra.mxu0 %v1531
  %2920 = vmatprep.subr.mxu0 0.0
  %2921 = vmatpush1.msra.mxu0 %v1532
  %2922 = vmatprep.subr.mxu0 0.0
  %2923 = vmatpush1.msra.mxu0 %v1533
  %2924 = vmatprep.subr.mxu0 0.0
  %2925 = vmatpush1.msra.mxu0 %v1534
  %2926 = vmatprep.subr.mxu0 0.0
  %2927 = vmatpush1.msra.mxu0 0.0
  %2928 = vmatprep.subr.mxu0 0.0
  %2929 = vmatpush1.msra.mxu0 0.0
  %2930 = vmatprep.subr.mxu0 0.0
  %2931 = vmatpush1.msra.mxu0 0.0
  %2932 = vmatprep.subr.mxu0 0.0
  %2933 = vmatpush1.msra.mxu0 0.0
  %2934 = vmatprep.subr.mxu0 0.0
  %2935 = vmatpush1.msra.mxu0 0.0
  %2936 = vmatprep.subr.mxu0 0.0
  %2937 = vmatpush1.msra.mxu0 0.0
  %2938 = vmatprep.subr.mxu0 0.0
  %2939 = vmatpush1.msra.mxu0 0.0
  %2940 = vmatprep.subr.mxu0 0.0
  %2941 = vmatpush1.msra.mxu0 0.0
  %2942 = vmatprep.subr.mxu0 0.0
  %2943 = vmatpush1.msra.mxu0 0.0
  %2944 = vmatprep.subr.mxu0 0.0
  %2945 = vmatpush1.msra.mxu0 0.0
  %2946 = vmatprep.subr.mxu0 0.0
  %2947 = vmatpush1.msra.mxu0 0.0
  %2948 = vmatprep.subr.mxu0 0.0
  %2949 = vmatpush1.msra.mxu0 0.0
  %2950 = vmatprep.subr.mxu0 0.0
  %2951 = vmatpush1.msra.mxu0 0.0
  %2952 = vmatprep.subr.mxu0 0.0
  %2953 = vmatpush1.msra.mxu0 0.0
  %2954 = vmatprep.subr.mxu0 0.0
  %2955 = vmatpush1.msra.mxu0 0.0
  %2956 = vmatprep.subr.mxu0 0.0
  %2957 = vmatpush1.msra.mxu0 0.0
  %2958 = vmatprep.subr.mxu0 0.0
  %2959 = vmatpush1.msra.mxu0 0.0
  %2960 = vmatprep.subr.mxu0 0.0
  %2961 = vmatpush1.msra.mxu0 0.0
  %2962 = vmatprep.subr.mxu0 0.0
  %2963 = vmatpush1.msra.mxu0 0.0
  %2964 = vmatprep.subr.mxu0 0.0
  %2965 = vmatpush1.msra.mxu0 0.0
  %2966 = vmatprep.subr.mxu0 0.0
  %2967 = vmatpush1.msra.mxu0 0.0
  %2968 = vmatprep.subr.mxu0 0.0
  %2969 = vmatpush1.msra.mxu0 0.0
  %2970 = vmatprep.subr.mxu0 0.0
  %2971 = vmatpush1.msra.mxu0 0.0
  %2972 = vmatprep.subr.mxu0 0.0
  %2973 = vmatpush1.msra.mxu0 0.0
  %2974 = vmatprep.subr.mxu0 0.0
  %2975 = vmatpush1.msra.mxu0 0.0
  %2976 = vmatprep.subr.mxu0 0.0
  %2977 = vmatpush1.msra.mxu0 0.0
  %2978 = vmatprep.subr.mxu0 0.0
  %2979 = vmatpush1.msra.mxu0 0.0
  %2980 = vmatprep.subr.mxu0 0.0
  %2981 = vmatpush1.msra.mxu0 0.0
  %2982 = vmatprep.mubr.f32.mxu0 0.0
  %2983 = vmatmul.mubr.f32.gmra.mrb[0].mxu0 %v2916
  %v2984 = vpop.f32.mrb[0].mxu0
  %v2985 = vadd.f32 0.0, %v2984
  %v2986 = vpop.f32.mrb[0].mxu0
  %2987 = vdwg.mxu0
  %v2988 = vadd.f32 %v1623, %v2985
  %v2989 = vxor.u32 %v2988, 2147483648
  %v2990 = vmul.f32 %v2989, 1.442695
  %v2991 = vpow.pop %v2990
  %v2992 = vadd.f32 %v2991, 1.0
  %v2993 = vrcp.pop %v2992
  %v2994 = vmul.f32 1.0, %v2993
  %v2995 = vtanh.pop %v2988
  %v2996 = vmul.f32 %v2994, %v2903
  %2998 = vrot.lane.b32.xlu0 %v2995, 64
  %v2999 = vpop.permute.xlu0 %2998
  %v3001 = vmul.f32 %v2994, %v2999
  %3003 = vrot.lane.b32.xlu0 %v3001, 32
  %v3004 = vpop.permute.xlu0 %3003
  %v3006 = vadd.f32 %v2996, %v3004
  %v3007 = vtanh.pop %v3006
  %3009 = vrot.lane.b32.xlu0 %v3007, 64
  %v3010 = vpop.permute.xlu0 %3009
  %v3012 = vmul.f32 %v2994, %v3010
  %3014 = vrot.lane.b32.xlu0 %v3012, 32
  %v3015 = vpop.permute.xlu0 %3014
  %s3017 = scalar_lea.vmem [#allocation2], 64
  %3018 = vst.msk [vmem:[%s3017] sm:$0x3f] %vm803, %v3015
  %v3019 = vld [vmem:[%s2] sm:$0xff]
  %v3020 = vld [vmem:[%s2 + $0x8] sm:$0xff]
  %v3021 = vld [vmem:[%s2 + $0x10] sm:$0xff]
  %v3022 = vld [vmem:[%s2 + $0x18] sm:$0xff]
  %v3023 = vld [vmem:[%s2 + $0x20] sm:$0xff]
  %v3024 = vld [vmem:[%s2 + $0x28] sm:$0xff]
  %v3025 = vld [vmem:[%s2 + $0x30] sm:$0xff]
  %v3026 = vld [vmem:[%s2 + $0x38] sm:$0xff]
  %s3027 = scalar_lea.vmem %s3, 64
  %v3028 = vld [vmem:[%s3027] sm:$0xff]
  %v3029 = vld [vmem:[%s3027 + $0x8] sm:$0xff]
  %v3030 = vld [vmem:[%s3027 + $0x10] sm:$0xff]
  %v3031 = vld [vmem:[%s3027 + $0x18] sm:$0xff]
  %s3032 = scalar_lea.vmem %s4, 2
  %v3033 = vld [vmem:[%s3032] sm:$0x1]
  %v3035 = vlaneseq
  %v3036 = vshrl.u32 %v3035, 7
  %v3037 = vsub.s32 0, %v3036
  %v3038 = vrot.slane %v3033, %v3037
  %v3040 = vld [vmem:[#allocation2] sm:$0x3f]
  %v3041 = vld [vmem:[%s3017] sm:$0x3f]
  %3043 = vrot.lane.b32.xlu0 %v3041, 32
  %v3044 = vpop.permute.xlu0 %3043
  %v3046 = vsel %vm696, %v3040, %v3044
  %vm3047 = vcmask 523264
  %v3049 = vsel %vm3047, %v3046, 0
  %3051 = vmatprep.subr.mxu0 0.0
  %3052 = vmatpush1.msra.mxu0 %v3019
  %3053 = vmatprep.subr.mxu0 0.0
  %3054 = vmatpush1.msra.mxu0 %v3020
  %3055 = vmatprep.subr.mxu0 0.0
  %3056 = vmatpush1.msra.mxu0 %v3021
  %3057 = vmatprep.subr.mxu0 0.0
  %3058 = vmatpush1.msra.mxu0 %v3022
  %3059 = vmatprep.subr.mxu0 0.0
  %3060 = vmatpush1.msra.mxu0 %v3023
  %3061 = vmatprep.subr.mxu0 0.0
  %3062 = vmatpush1.msra.mxu0 %v3024
  %3063 = vmatprep.subr.mxu0 0.0
  %3064 = vmatpush1.msra.mxu0 %v3025
  %3065 = vmatprep.subr.mxu0 0.0
  %3066 = vmatpush1.msra.mxu0 %v3026
  %3067 = vmatprep.subr.mxu0 0.0
  %3068 = vmatpush1.msra.mxu0 0.0
  %3069 = vmatprep.subr.mxu0 0.0
  %3070 = vmatpush1.msra.mxu0 0.0
  %3071 = vmatprep.subr.mxu0 0.0
  %3072 = vmatpush1.msra.mxu0 0.0
  %3073 = vmatprep.subr.mxu0 0.0
  %3074 = vmatpush1.msra.mxu0 0.0
  %3075 = vmatprep.subr.mxu0 0.0
  %3076 = vmatpush1.msra.mxu0 0.0
  %3077 = vmatprep.subr.mxu0 0.0
  %3078 = vmatpush1.msra.mxu0 0.0
  %3079 = vmatprep.subr.mxu0 0.0
  %3080 = vmatpush1.msra.mxu0 0.0
  %3081 = vmatprep.subr.mxu0 0.0
  %3082 = vmatpush1.msra.mxu0 0.0
  %3083 = vmatprep.subr.mxu0 0.0
  %3084 = vmatpush1.msra.mxu0 0.0
  %3085 = vmatprep.subr.mxu0 0.0
  %3086 = vmatpush1.msra.mxu0 0.0
  %3087 = vmatprep.subr.mxu0 0.0
  %3088 = vmatpush1.msra.mxu0 0.0
  %3089 = vmatprep.subr.mxu0 0.0
  %3090 = vmatpush1.msra.mxu0 0.0
  %3091 = vmatprep.subr.mxu0 0.0
  %3092 = vmatpush1.msra.mxu0 0.0
  %3093 = vmatprep.subr.mxu0 0.0
  %3094 = vmatpush1.msra.mxu0 0.0
  %3095 = vmatprep.subr.mxu0 0.0
  %3096 = vmatpush1.msra.mxu0 0.0
  %3097 = vmatprep.subr.mxu0 0.0
  %3098 = vmatpush1.msra.mxu0 0.0
  %3099 = vmatprep.subr.mxu0 0.0
  %3100 = vmatpush1.msra.mxu0 0.0
  %3101 = vmatprep.subr.mxu0 0.0
  %3102 = vmatpush1.msra.mxu0 0.0
  %3103 = vmatprep.subr.mxu0 0.0
  %3104 = vmatpush1.msra.mxu0 0.0
  %3105 = vmatprep.subr.mxu0 0.0
  %3106 = vmatpush1.msra.mxu0 0.0
  %3107 = vmatprep.subr.mxu0 0.0
  %3108 = vmatpush1.msra.mxu0 0.0
  %3109 = vmatprep.subr.mxu0 0.0
  %3110 = vmatpush1.msra.mxu0 0.0
  %3111 = vmatprep.subr.mxu0 0.0
  %3112 = vmatpush1.msra.mxu0 0.0
  %3113 = vmatprep.subr.mxu0 0.0
  %3114 = vmatpush1.msra.mxu0 0.0
  %3115 = vmatprep.mubr.f32.mxu0 0.0
  %3116 = vmatmul.mubr.f32.gmra.mrb[0].mxu0 %v3049
  %v3117 = vpop.f32.mrb[0].mxu0
  %v3118 = vadd.f32 %v3038, %v3117
  %v3119 = vpop.f32.mrb[0].mxu0
  %3120 = vdwg.mxu0
  %v3121 = vld [vmem:[%s906] sm:$0x3f]
  %v3122 = vld [vmem:[%s2914] sm:$0x3f]
  %3124 = vrot.lane.b32.xlu0 %v3122, 32
  %v3125 = vpop.permute.xlu0 %3124
  %v3127 = vsel %vm696, %v3121, %v3125
  %v3129 = vsel %vm3047, %v3127, 0
  %3131 = vmatprep.subr.mxu0 0.0
  %3132 = vmatpush1.msra.mxu0 %v3019
  %3133 = vmatprep.subr.mxu0 0.0
  %3134 = vmatpush1.msra.mxu0 %v3020
  %3135 = vmatprep.subr.mxu0 0.0
  %3136 = vmatpush1.msra.mxu0 %v3021
  %3137 = vmatprep.subr.mxu0 0.0
  %3138 = vmatpush1.msra.mxu0 %v3022
  %3139 = vmatprep.subr.mxu0 0.0
  %3140 = vmatpush1.msra.mxu0 %v3023
  %3141 = vmatprep.subr.mxu0 0.0
  %3142 = vmatpush1.msra.mxu0 %v3024
  %3143 = vmatprep.subr.mxu0 0.0
  %3144 = vmatpush1.msra.mxu0 %v3025
  %3145 = vmatprep.subr.mxu0 0.0
  %3146 = vmatpush1.msra.mxu0 %v3026
  %3147 = vmatprep.subr.mxu0 0.0
  %3148 = vmatpush1.msra.mxu0 0.0
  %3149 = vmatprep.subr.mxu0 0.0
  %3150 = vmatpush1.msra.mxu0 0.0
  %3151 = vmatprep.subr.mxu0 0.0
  %3152 = vmatpush1.msra.mxu0 0.0
  %3153 = vmatprep.subr.mxu0 0.0
  %3154 = vmatpush1.msra.mxu0 0.0
  %3155 = vmatprep.subr.mxu0 0.0
  %3156 = vmatpush1.msra.mxu0 0.0
  %3157 = vmatprep.subr.mxu0 0.0
  %3158 = vmatpush1.msra.mxu0 0.0
  %3159 = vmatprep.subr.mxu0 0.0
  %3160 = vmatpush1.msra.mxu0 0.0
  %3161 = vmatprep.subr.mxu0 0.0
  %3162 = vmatpush1.msra.mxu0 0.0
  %3163 = vmatprep.subr.mxu0 0.0
  %3164 = vmatpush1.msra.mxu0 0.0
  %3165 = vmatprep.subr.mxu0 0.0
  %3166 = vmatpush1.msra.mxu0 0.0
  %3167 = vmatprep.subr.mxu0 0.0
  %3168 = vmatpush1.msra.mxu0 0.0
  %3169 = vmatprep.subr.mxu0 0.0
  %3170 = vmatpush1.msra.mxu0 0.0
  %3171 = vmatprep.subr.mxu0 0.0
  %3172 = vmatpush1.msra.mxu0 0.0
  %3173 = vmatprep.subr.mxu0 0.0
  %3174 = vmatpush1.msra.mxu0 0.0
  %3175 = vmatprep.subr.mxu0 0.0
  %3176 = vmatpush1.msra.mxu0 0.0
  %3177 = vmatprep.subr.mxu0 0.0
  %3178 = vmatpush1.msra.mxu0 0.0
  %3179 = vmatprep.subr.mxu0 0.0
  %3180 = vmatpush1.msra.mxu0 0.0
  %3181 = vmatprep.subr.mxu0 0.0
  %3182 = vmatpush1.msra.mxu0 0.0
  %3183 = vmatprep.subr.mxu0 0.0
  %3184 = vmatpush1.msra.mxu0 0.0
  %3185 = vmatprep.subr.mxu0 0.0
  %3186 = vmatpush1.msra.mxu0 0.0
  %3187 = vmatprep.subr.mxu0 0.0
  %3188 = vmatpush1.msra.mxu0 0.0
  %3189 = vmatprep.subr.mxu0 0.0
  %3190 = vmatpush1.msra.mxu0 0.0
  %3191 = vmatprep.subr.mxu0 0.0
  %3192 = vmatpush1.msra.mxu0 0.0
  %3193 = vmatprep.subr.mxu0 0.0
  %3194 = vmatpush1.msra.mxu0 0.0
  %3195 = vmatprep.mubr.f32.mxu0 0.0
  %3196 = vmatmul.mubr.f32.gmra.mrb[0].mxu0 %v3129
  %v3197 = vpop.f32.mrb[0].mxu0
  %v3198 = vadd.f32 %v3038, %v3197
  %v3199 = vpop.f32.mrb[0].mxu0
  %3200 = vdwg.mxu0
  %v3201 = vld [vmem:[%s1009] sm:$0x3f]
  %v3202 = vld [vmem:[%s2811] sm:$0x3f]
  %3204 = vrot.lane.b32.xlu0 %v3202, 32
  %v3205 = vpop.permute.xlu0 %3204
  %v3207 = vsel %vm696, %v3201, %v3205
  %v3209 = vsel %vm3047, %v3207, 0
  %3211 = vmatprep.subr.mxu0 0.0
  %3212 = vmatpush1.msra.mxu0 %v3019
  %3213 = vmatprep.subr.mxu0 0.0
  %3214 = vmatpush1.msra.mxu0 %v3020
  %3215 = vmatprep.subr.mxu0 0.0
  %3216 = vmatpush1.msra.mxu0 %v3021
  %3217 = vmatprep.subr.mxu0 0.0
  %3218 = vmatpush1.msra.mxu0 %v3022
  %3219 = vmatprep.subr.mxu0 0.0
  %3220 = vmatpush1.msra.mxu0 %v3023
  %3221 = vmatprep.subr.mxu0 0.0
  %3222 = vmatpush1.msra.mxu0 %v3024
  %3223 = vmatprep.subr.mxu0 0.0
  %3224 = vmatpush1.msra.mxu0 %v3025
  %3225 = vmatprep.subr.mxu0 0.0
  %3226 = vmatpush1.msra.mxu0 %v3026
  %3227 = vmatprep.subr.mxu0 0.0
  %3228 = vmatpush1.msra.mxu0 0.0
  %3229 = vmatprep.subr.mxu0 0.0
  %3230 = vmatpush1.msra.mxu0 0.0
  %3231 = vmatprep.subr.mxu0 0.0
  %3232 = vmatpush1.msra.mxu0 0.0
  %3233 = vmatprep.subr.mxu0 0.0
  %3234 = vmatpush1.msra.mxu0 0.0
  %3235 = vmatprep.subr.mxu0 0.0
  %3236 = vmatpush1.msra.mxu0 0.0
  %3237 = vmatprep.subr.mxu0 0.0
  %3238 = vmatpush1.msra.mxu0 0.0
  %3239 = vmatprep.subr.mxu0 0.0
  %3240 = vmatpush1.msra.mxu0 0.0
  %3241 = vmatprep.subr.mxu0 0.0
  %3242 = vmatpush1.msra.mxu0 0.0
  %3243 = vmatprep.subr.mxu0 0.0
  %3244 = vmatpush1.msra.mxu0 0.0
  %3245 = vmatprep.subr.mxu0 0.0
  %3246 = vmatpush1.msra.mxu0 0.0
  %3247 = vmatprep.subr.mxu0 0.0
  %3248 = vmatpush1.msra.mxu0 0.0
  %3249 = vmatprep.subr.mxu0 0.0
  %3250 = vmatpush1.msra.mxu0 0.0
  %3251 = vmatprep.subr.mxu0 0.0
  %3252 = vmatpush1.msra.mxu0 0.0
  %3253 = vmatprep.subr.mxu0 0.0
  %3254 = vmatpush1.msra.mxu0 0.0
  %3255 = vmatprep.subr.mxu0 0.0
  %3256 = vmatpush1.msra.mxu0 0.0
  %3257 = vmatprep.subr.mxu0 0.0
  %3258 = vmatpush1.msra.mxu0 0.0
  %3259 = vmatprep.subr.mxu0 0.0
  %3260 = vmatpush1.msra.mxu0 0.0
  %3261 = vmatprep.subr.mxu0 0.0
  %3262 = vmatpush1.msra.mxu0 0.0
  %3263 = vmatprep.subr.mxu0 0.0
  %3264 = vmatpush1.msra.mxu0 0.0
  %3265 = vmatprep.subr.mxu0 0.0
  %3266 = vmatpush1.msra.mxu0 0.0
  %3267 = vmatprep.subr.mxu0 0.0
  %3268 = vmatpush1.msra.mxu0 0.0
  %3269 = vmatprep.subr.mxu0 0.0
  %3270 = vmatpush1.msra.mxu0 0.0
  %3271 = vmatprep.subr.mxu0 0.0
  %3272 = vmatpush1.msra.mxu0 0.0
  %3273 = vmatprep.subr.mxu0 0.0
  %3274 = vmatpush1.msra.mxu0 0.0
  %3275 = vmatprep.mubr.f32.mxu0 0.0
  %3276 = vmatmul.mubr.f32.gmra.mrb[0].mxu0 %v3209
  %v3277 = vpop.f32.mrb[0].mxu0
  %v3278 = vadd.f32 %v3038, %v3277
  %v3279 = vpop.f32.mrb[0].mxu0
  %3280 = vdwg.mxu0
  %v3281 = vld [vmem:[%s1112] sm:$0x3f]
  %v3282 = vld [vmem:[%s2708] sm:$0x3f]
  %3284 = vrot.lane.b32.xlu0 %v3282, 32
  %v3285 = vpop.permute.xlu0 %3284
  %v3287 = vsel %vm696, %v3281, %v3285
  %v3289 = vsel %vm3047, %v3287, 0
  %3291 = vmatprep.subr.mxu0 0.0
  %3292 = vmatpush1.msra.mxu0 %v3019
  %3293 = vmatprep.subr.mxu0 0.0
  %3294 = vmatpush1.msra.mxu0 %v3020
  %3295 = vmatprep.subr.mxu0 0.0
  %3296 = vmatpush1.msra.mxu0 %v3021
  %3297 = vmatprep.subr.mxu0 0.0
  %3298 = vmatpush1.msra.mxu0 %v3022
  %3299 = vmatprep.subr.mxu0 0.0
  %3300 = vmatpush1.msra.mxu0 %v3023
  %3301 = vmatprep.subr.mxu0 0.0
  %3302 = vmatpush1.msra.mxu0 %v3024
  %3303 = vmatprep.subr.mxu0 0.0
  %3304 = vmatpush1.msra.mxu0 %v3025
  %3305 = vmatprep.subr.mxu0 0.0
  %3306 = vmatpush1.msra.mxu0 %v3026
  %3307 = vmatprep.subr.mxu0 0.0
  %3308 = vmatpush1.msra.mxu0 0.0
  %3309 = vmatprep.subr.mxu0 0.0
  %3310 = vmatpush1.msra.mxu0 0.0
  %3311 = vmatprep.subr.mxu0 0.0
  %3312 = vmatpush1.msra.mxu0 0.0
  %3313 = vmatprep.subr.mxu0 0.0
  %3314 = vmatpush1.msra.mxu0 0.0
  %3315 = vmatprep.subr.mxu0 0.0
  %3316 = vmatpush1.msra.mxu0 0.0
  %3317 = vmatprep.subr.mxu0 0.0
  %3318 = vmatpush1.msra.mxu0 0.0
  %3319 = vmatprep.subr.mxu0 0.0
  %3320 = vmatpush1.msra.mxu0 0.0
  %3321 = vmatprep.subr.mxu0 0.0
  %3322 = vmatpush1.msra.mxu0 0.0
  %3323 = vmatprep.subr.mxu0 0.0
  %3324 = vmatpush1.msra.mxu0 0.0
  %3325 = vmatprep.subr.mxu0 0.0
  %3326 = vmatpush1.msra.mxu0 0.0
  %3327 = vmatprep.subr.mxu0 0.0
  %3328 = vmatpush1.msra.mxu0 0.0
  %3329 = vmatprep.subr.mxu0 0.0
  %3330 = vmatpush1.msra.mxu0 0.0
  %3331 = vmatprep.subr.mxu0 0.0
  %3332 = vmatpush1.msra.mxu0 0.0
  %3333 = vmatprep.subr.mxu0 0.0
  %3334 = vmatpush1.msra.mxu0 0.0
  %3335 = vmatprep.subr.mxu0 0.0
  %3336 = vmatpush1.msra.mxu0 0.0
  %3337 = vmatprep.subr.mxu0 0.0
  %3338 = vmatpush1.msra.mxu0 0.0
  %3339 = vmatprep.subr.mxu0 0.0
  %3340 = vmatpush1.msra.mxu0 0.0
  %3341 = vmatprep.subr.mxu0 0.0
  %3342 = vmatpush1.msra.mxu0 0.0
  %3343 = vmatprep.subr.mxu0 0.0
  %3344 = vmatpush1.msra.mxu0 0.0
  %3345 = vmatprep.subr.mxu0 0.0
  %3346 = vmatpush1.msra.mxu0 0.0
  %3347 = vmatprep.subr.mxu0 0.0
  %3348 = vmatpush1.msra.mxu0 0.0
  %3349 = vmatprep.subr.mxu0 0.0
  %3350 = vmatpush1.msra.mxu0 0.0
  %3351 = vmatprep.subr.mxu0 0.0
  %3352 = vmatpush1.msra.mxu0 0.0
  %3353 = vmatprep.subr.mxu0 0.0
  %3354 = vmatpush1.msra.mxu0 0.0
  %3355 = vmatprep.mubr.f32.mxu0 0.0
  %3356 = vmatmul.mubr.f32.gmra.mrb[0].mxu0 %v3289
  %v3357 = vpop.f32.mrb[0].mxu0
  %v3358 = vadd.f32 %v3038, %v3357
  %v3359 = vpop.f32.mrb[0].mxu0
  %3360 = vdwg.mxu0
  %v3361 = vld [vmem:[%s1215] sm:$0x3f]
  %v3362 = vld [vmem:[%s2605] sm:$0x3f]
  %3364 = vrot.lane.b32.xlu0 %v3362, 32
  %v3365 = vpop.permute.xlu0 %3364
  %v3367 = vsel %vm696, %v3361, %v3365
  %v3369 = vsel %vm3047, %v3367, 0
  %3371 = vmatprep.subr.mxu0 0.0
  %3372 = vmatpush1.msra.mxu0 %v3019
  %3373 = vmatprep.subr.mxu0 0.0
  %3374 = vmatpush1.msra.mxu0 %v3020
  %3375 = vmatprep.subr.mxu0 0.0
  %3376 = vmatpush1.msra.mxu0 %v3021
  %3377 = vmatprep.subr.mxu0 0.0
  %3378 = vmatpush1.msra.mxu0 %v3022
  %3379 = vmatprep.subr.mxu0 0.0
  %3380 = vmatpush1.msra.mxu0 %v3023
  %3381 = vmatprep.subr.mxu0 0.0
  %3382 = vmatpush1.msra.mxu0 %v3024
  %3383 = vmatprep.subr.mxu0 0.0
  %3384 = vmatpush1.msra.mxu0 %v3025
  %3385 = vmatprep.subr.mxu0 0.0
  %3386 = vmatpush1.msra.mxu0 %v3026
  %3387 = vmatprep.subr.mxu0 0.0
  %3388 = vmatpush1.msra.mxu0 0.0
  %3389 = vmatprep.subr.mxu0 0.0
  %3390 = vmatpush1.msra.mxu0 0.0
  %3391 = vmatprep.subr.mxu0 0.0
  %3392 = vmatpush1.msra.mxu0 0.0
  %3393 = vmatprep.subr.mxu0 0.0
  %3394 = vmatpush1.msra.mxu0 0.0
  %3395 = vmatprep.subr.mxu0 0.0
  %3396 = vmatpush1.msra.mxu0 0.0
  %3397 = vmatprep.subr.mxu0 0.0
  %3398 = vmatpush1.msra.mxu0 0.0
  %3399 = vmatprep.subr.mxu0 0.0
  %3400 = vmatpush1.msra.mxu0 0.0
  %3401 = vmatprep.subr.mxu0 0.0
  %3402 = vmatpush1.msra.mxu0 0.0
  %3403 = vmatprep.subr.mxu0 0.0
  %3404 = vmatpush1.msra.mxu0 0.0
  %3405 = vmatprep.subr.mxu0 0.0
  %3406 = vmatpush1.msra.mxu0 0.0
  %3407 = vmatprep.subr.mxu0 0.0
  %3408 = vmatpush1.msra.mxu0 0.0
  %3409 = vmatprep.subr.mxu0 0.0
  %3410 = vmatpush1.msra.mxu0 0.0
  %3411 = vmatprep.subr.mxu0 0.0
  %3412 = vmatpush1.msra.mxu0 0.0
  %3413 = vmatprep.subr.mxu0 0.0
  %3414 = vmatpush1.msra.mxu0 0.0
  %3415 = vmatprep.subr.mxu0 0.0
  %3416 = vmatpush1.msra.mxu0 0.0
  %3417 = vmatprep.subr.mxu0 0.0
  %3418 = vmatpush1.msra.mxu0 0.0
  %3419 = vmatprep.subr.mxu0 0.0
  %3420 = vmatpush1.msra.mxu0 0.0
  %3421 = vmatprep.subr.mxu0 0.0
  %3422 = vmatpush1.msra.mxu0 0.0
  %3423 = vmatprep.subr.mxu0 0.0
  %3424 = vmatpush1.msra.mxu0 0.0
  %3425 = vmatprep.subr.mxu0 0.0
  %3426 = vmatpush1.msra.mxu0 0.0
  %3427 = vmatprep.subr.mxu0 0.0
  %3428 = vmatpush1.msra.mxu0 0.0
  %3429 = vmatprep.subr.mxu0 0.0
  %3430 = vmatpush1.msra.mxu0 0.0
  %3431 = vmatprep.subr.mxu0 0.0
  %3432 = vmatpush1.msra.mxu0 0.0
  %3433 = vmatprep.subr.mxu0 0.0
  %3434 = vmatpush1.msra.mxu0 0.0
  %3435 = vmatprep.mubr.f32.mxu0 0.0
  %3436 = vmatmul.mubr.f32.gmra.mrb[0].mxu0 %v3369
  %v3437 = vpop.f32.mrb[0].mxu0
  %v3438 = vadd.f32 %v3038, %v3437
  %v3439 = vpop.f32.mrb[0].mxu0
  %3440 = vdwg.mxu0
  %v3441 = vld [vmem:[%s1318] sm:$0x3f]
  %v3442 = vld [vmem:[%s2502] sm:$0x3f]
  %3444 = vrot.lane.b32.xlu0 %v3442, 32
  %v3445 = vpop.permute.xlu0 %3444
  %v3447 = vsel %vm696, %v3441, %v3445
  %v3449 = vsel %vm3047, %v3447, 0
  %3451 = vmatprep.subr.mxu0 0.0
  %3452 = vmatpush1.msra.mxu0 %v3019
  %3453 = vmatprep.subr.mxu0 0.0
  %3454 = vmatpush1.msra.mxu0 %v3020
  %3455 = vmatprep.subr.mxu0 0.0
  %3456 = vmatpush1.msra.mxu0 %v3021
  %3457 = vmatprep.subr.mxu0 0.0
  %3458 = vmatpush1.msra.mxu0 %v3022
  %3459 = vmatprep.subr.mxu0 0.0
  %3460 = vmatpush1.msra.mxu0 %v3023
  %3461 = vmatprep.subr.mxu0 0.0
  %3462 = vmatpush1.msra.mxu0 %v3024
  %3463 = vmatprep.subr.mxu0 0.0
  %3464 = vmatpush1.msra.mxu0 %v3025
  %3465 = vmatprep.subr.mxu0 0.0
  %3466 = vmatpush1.msra.mxu0 %v3026
  %3467 = vmatprep.subr.mxu0 0.0
  %3468 = vmatpush1.msra.mxu0 0.0
  %3469 = vmatprep.subr.mxu0 0.0
  %3470 = vmatpush1.msra.mxu0 0.0
  %3471 = vmatprep.subr.mxu0 0.0
  %3472 = vmatpush1.msra.mxu0 0.0
  %3473 = vmatprep.subr.mxu0 0.0
  %3474 = vmatpush1.msra.mxu0 0.0
  %3475 = vmatprep.subr.mxu0 0.0
  %3476 = vmatpush1.msra.mxu0 0.0
  %3477 = vmatprep.subr.mxu0 0.0
  %3478 = vmatpush1.msra.mxu0 0.0
  %3479 = vmatprep.subr.mxu0 0.0
  %3480 = vmatpush1.msra.mxu0 0.0
  %3481 = vmatprep.subr.mxu0 0.0
  %3482 = vmatpush1.msra.mxu0 0.0
  %3483 = vmatprep.subr.mxu0 0.0
  %3484 = vmatpush1.msra.mxu0 0.0
  %3485 = vmatprep.subr.mxu0 0.0
  %3486 = vmatpush1.msra.mxu0 0.0
  %3487 = vmatprep.subr.mxu0 0.0
  %3488 = vmatpush1.msra.mxu0 0.0
  %3489 = vmatprep.subr.mxu0 0.0
  %3490 = vmatpush1.msra.mxu0 0.0
  %3491 = vmatprep.subr.mxu0 0.0
  %3492 = vmatpush1.msra.mxu0 0.0
  %3493 = vmatprep.subr.mxu0 0.0
  %3494 = vmatpush1.msra.mxu0 0.0
  %3495 = vmatprep.subr.mxu0 0.0
  %3496 = vmatpush1.msra.mxu0 0.0
  %3497 = vmatprep.subr.mxu0 0.0
  %3498 = vmatpush1.msra.mxu0 0.0
  %3499 = vmatprep.subr.mxu0 0.0
  %3500 = vmatpush1.msra.mxu0 0.0
  %3501 = vmatprep.subr.mxu0 0.0
  %3502 = vmatpush1.msra.mxu0 0.0
  %3503 = vmatprep.subr.mxu0 0.0
  %3504 = vmatpush1.msra.mxu0 0.0
  %3505 = vmatprep.subr.mxu0 0.0
  %3506 = vmatpush1.msra.mxu0 0.0
  %3507 = vmatprep.subr.mxu0 0.0
  %3508 = vmatpush1.msra.mxu0 0.0
  %3509 = vmatprep.subr.mxu0 0.0
  %3510 = vmatpush1.msra.mxu0 0.0
  %3511 = vmatprep.subr.mxu0 0.0
  %3512 = vmatpush1.msra.mxu0 0.0
  %3513 = vmatprep.subr.mxu0 0.0
  %3514 = vmatpush1.msra.mxu0 0.0
  %3515 = vmatprep.mubr.f32.mxu0 0.0
  %3516 = vmatmul.mubr.f32.gmra.mrb[0].mxu0 %v3449
  %v3517 = vpop.f32.mrb[0].mxu0
  %v3518 = vadd.f32 %v3038, %v3517
  %v3519 = vpop.f32.mrb[0].mxu0
  %3520 = vdwg.mxu0
  %v3521 = vld [vmem:[%s1421] sm:$0x3f]
  %v3522 = vld [vmem:[%s2399] sm:$0x3f]
  %3524 = vrot.lane.b32.xlu0 %v3522, 32
  %v3525 = vpop.permute.xlu0 %3524
  %v3527 = vsel %vm696, %v3521, %v3525
  %v3529 = vsel %vm3047, %v3527, 0
  %3531 = vmatprep.subr.mxu0 0.0
  %3532 = vmatpush1.msra.mxu0 %v3019
  %3533 = vmatprep.subr.mxu0 0.0
  %3534 = vmatpush1.msra.mxu0 %v3020
  %3535 = vmatprep.subr.mxu0 0.0
  %3536 = vmatpush1.msra.mxu0 %v3021
  %3537 = vmatprep.subr.mxu0 0.0
  %3538 = vmatpush1.msra.mxu0 %v3022
  %3539 = vmatprep.subr.mxu0 0.0
  %3540 = vmatpush1.msra.mxu0 %v3023
  %3541 = vmatprep.subr.mxu0 0.0
  %3542 = vmatpush1.msra.mxu0 %v3024
  %3543 = vmatprep.subr.mxu0 0.0
  %3544 = vmatpush1.msra.mxu0 %v3025
  %3545 = vmatprep.subr.mxu0 0.0
  %3546 = vmatpush1.msra.mxu0 %v3026
  %3547 = vmatprep.subr.mxu0 0.0
  %3548 = vmatpush1.msra.mxu0 0.0
  %3549 = vmatprep.subr.mxu0 0.0
  %3550 = vmatpush1.msra.mxu0 0.0
  %3551 = vmatprep.subr.mxu0 0.0
  %3552 = vmatpush1.msra.mxu0 0.0
  %3553 = vmatprep.subr.mxu0 0.0
  %3554 = vmatpush1.msra.mxu0 0.0
  %3555 = vmatprep.subr.mxu0 0.0
  %3556 = vmatpush1.msra.mxu0 0.0
  %3557 = vmatprep.subr.mxu0 0.0
  %3558 = vmatpush1.msra.mxu0 0.0
  %3559 = vmatprep.subr.mxu0 0.0
  %3560 = vmatpush1.msra.mxu0 0.0
  %3561 = vmatprep.subr.mxu0 0.0
  %3562 = vmatpush1.msra.mxu0 0.0
  %3563 = vmatprep.subr.mxu0 0.0
  %3564 = vmatpush1.msra.mxu0 0.0
  %3565 = vmatprep.subr.mxu0 0.0
  %3566 = vmatpush1.msra.mxu0 0.0
  %3567 = vmatprep.subr.mxu0 0.0
  %3568 = vmatpush1.msra.mxu0 0.0
  %3569 = vmatprep.subr.mxu0 0.0
  %3570 = vmatpush1.msra.mxu0 0.0
  %3571 = vmatprep.subr.mxu0 0.0
  %3572 = vmatpush1.msra.mxu0 0.0
  %3573 = vmatprep.subr.mxu0 0.0
  %3574 = vmatpush1.msra.mxu0 0.0
  %3575 = vmatprep.subr.mxu0 0.0
  %3576 = vmatpush1.msra.mxu0 0.0
  %3577 = vmatprep.subr.mxu0 0.0
  %3578 = vmatpush1.msra.mxu0 0.0
  %3579 = vmatprep.subr.mxu0 0.0
  %3580 = vmatpush1.msra.mxu0 0.0
  %3581 = vmatprep.subr.mxu0 0.0
  %3582 = vmatpush1.msra.mxu0 0.0
  %3583 = vmatprep.subr.mxu0 0.0
  %3584 = vmatpush1.msra.mxu0 0.0
  %3585 = vmatprep.subr.mxu0 0.0
  %3586 = vmatpush1.msra.mxu0 0.0
  %3587 = vmatprep.subr.mxu0 0.0
  %3588 = vmatpush1.msra.mxu0 0.0
  %3589 = vmatprep.subr.mxu0 0.0
  %3590 = vmatpush1.msra.mxu0 0.0
  %3591 = vmatprep.subr.mxu0 0.0
  %3592 = vmatpush1.msra.mxu0 0.0
  %3593 = vmatprep.subr.mxu0 0.0
  %3594 = vmatpush1.msra.mxu0 0.0
  %3595 = vmatprep.mubr.f32.mxu0 0.0
  %3596 = vmatmul.mubr.f32.gmra.mrb[0].mxu0 %v3529
  %v3597 = vpop.f32.mrb[0].mxu0
  %v3598 = vadd.f32 %v3038, %v3597
  %v3599 = vpop.f32.mrb[0].mxu0
  %3600 = vdwg.mxu0
  %v3601 = vld [vmem:[%s1524] sm:$0x3f]
  %v3602 = vld [vmem:[%s2296] sm:$0x3f]
  %3604 = vrot.lane.b32.xlu0 %v3602, 32
  %v3605 = vpop.permute.xlu0 %3604
  %v3607 = vsel %vm696, %v3601, %v3605
  %v3609 = vsel %vm3047, %v3607, 0
  %3611 = vmatprep.subr.mxu0 0.0
  %3612 = vmatpush1.msra.mxu0 %v3019
  %3613 = vmatprep.subr.mxu0 0.0
  %3614 = vmatpush1.msra.mxu0 %v3020
  %3615 = vmatprep.subr.mxu0 0.0
  %3616 = vmatpush1.msra.mxu0 %v3021
  %3617 = vmatprep.subr.mxu0 0.0
  %3618 = vmatpush1.msra.mxu0 %v3022
  %3619 = vmatprep.subr.mxu0 0.0
  %3620 = vmatpush1.msra.mxu0 %v3023
  %3621 = vmatprep.subr.mxu0 0.0
  %3622 = vmatpush1.msra.mxu0 %v3024
  %3623 = vmatprep.subr.mxu0 0.0
  %3624 = vmatpush1.msra.mxu0 %v3025
  %3625 = vmatprep.subr.mxu0 0.0
  %3626 = vmatpush1.msra.mxu0 %v3026
  %3627 = vmatprep.subr.mxu0 0.0
  %3628 = vmatpush1.msra.mxu0 0.0
  %3629 = vmatprep.subr.mxu0 0.0
  %3630 = vmatpush1.msra.mxu0 0.0
  %3631 = vmatprep.subr.mxu0 0.0
  %3632 = vmatpush1.msra.mxu0 0.0
  %3633 = vmatprep.subr.mxu0 0.0
  %3634 = vmatpush1.msra.mxu0 0.0
  %3635 = vmatprep.subr.mxu0 0.0
  %3636 = vmatpush1.msra.mxu0 0.0
  %3637 = vmatprep.subr.mxu0 0.0
  %3638 = vmatpush1.msra.mxu0 0.0
  %3639 = vmatprep.subr.mxu0 0.0
  %3640 = vmatpush1.msra.mxu0 0.0
  %3641 = vmatprep.subr.mxu0 0.0
  %3642 = vmatpush1.msra.mxu0 0.0
  %3643 = vmatprep.subr.mxu0 0.0
  %3644 = vmatpush1.msra.mxu0 0.0
  %3645 = vmatprep.subr.mxu0 0.0
  %3646 = vmatpush1.msra.mxu0 0.0
  %3647 = vmatprep.subr.mxu0 0.0
  %3648 = vmatpush1.msra.mxu0 0.0
  %3649 = vmatprep.subr.mxu0 0.0
  %3650 = vmatpush1.msra.mxu0 0.0
  %3651 = vmatprep.subr.mxu0 0.0
  %3652 = vmatpush1.msra.mxu0 0.0
  %3653 = vmatprep.subr.mxu0 0.0
  %3654 = vmatpush1.msra.mxu0 0.0
  %3655 = vmatprep.subr.mxu0 0.0
  %3656 = vmatpush1.msra.mxu0 0.0
  %3657 = vmatprep.subr.mxu0 0.0
  %3658 = vmatpush1.msra.mxu0 0.0
  %3659 = vmatprep.subr.mxu0 0.0
  %3660 = vmatpush1.msra.mxu0 0.0
  %3661 = vmatprep.subr.mxu0 0.0
  %3662 = vmatpush1.msra.mxu0 0.0
  %3663 = vmatprep.subr.mxu0 0.0
  %3664 = vmatpush1.msra.mxu0 0.0
  %3665 = vmatprep.subr.mxu0 0.0
  %3666 = vmatpush1.msra.mxu0 0.0
  %3667 = vmatprep.subr.mxu0 0.0
  %3668 = vmatpush1.msra.mxu0 0.0
  %3669 = vmatprep.subr.mxu0 0.0
  %3670 = vmatpush1.msra.mxu0 0.0
  %3671 = vmatprep.subr.mxu0 0.0
  %3672 = vmatpush1.msra.mxu0 0.0
  %3673 = vmatprep.subr.mxu0 0.0
  %3674 = vmatpush1.msra.mxu0 0.0
  %3675 = vmatprep.mubr.f32.mxu0 0.0
  %3676 = vmatmul.mubr.f32.gmra.mrb[0].mxu0 %v3609
  %v3677 = vpop.f32.mrb[0].mxu0
  %v3678 = vadd.f32 %v3038, %v3677
  %v3679 = vpop.f32.mrb[0].mxu0
  %3680 = vdwg.mxu0
  %s3681 = scalar_lea.vmem %s5, 16
  %v3682 = vld [vmem:[%s3681] sm:$0x3f]
  %s3683 = scalar_lea.vmem %s6, 16
  %v3684 = vld [vmem:[%s3683] sm:$0x3f]
  %v3686 = vsel %vm696, %v3682, 0
  %3688 = vmatprep.subr.mxu0 0.0
  %3689 = vmatpush1.msra.mxu0 %v3028
  %3690 = vmatprep.subr.mxu0 0.0
  %3691 = vmatpush1.msra.mxu0 %v3029
  %3692 = vmatprep.subr.mxu0 0.0
  %3693 = vmatpush1.msra.mxu0 %v3030
  %3694 = vmatprep.subr.mxu0 0.0
  %3695 = vmatpush1.msra.mxu0 %v3031
  %3696 = vmatprep.subr.mxu0 0.0
  %3697 = vmatpush1.msra.mxu0 0.0
  %3698 = vmatprep.subr.mxu0 0.0
  %3699 = vmatpush1.msra.mxu0 0.0
  %3700 = vmatprep.subr.mxu0 0.0
  %3701 = vmatpush1.msra.mxu0 0.0
  %3702 = vmatprep.subr.mxu0 0.0
  %3703 = vmatpush1.msra.mxu0 0.0
  %3704 = vmatprep.subr.mxu0 0.0
  %3705 = vmatpush1.msra.mxu0 0.0
  %3706 = vmatprep.subr.mxu0 0.0
  %3707 = vmatpush1.msra.mxu0 0.0
  %3708 = vmatprep.subr.mxu0 0.0
  %3709 = vmatpush1.msra.mxu0 0.0
  %3710 = vmatprep.subr.mxu0 0.0
  %3711 = vmatpush1.msra.mxu0 0.0
  %3712 = vmatprep.subr.mxu0 0.0
  %3713 = vmatpush1.msra.mxu0 0.0
  %3714 = vmatprep.subr.mxu0 0.0
  %3715 = vmatpush1.msra.mxu0 0.0
  %3716 = vmatprep.subr.mxu0 0.0
  %3717 = vmatpush1.msra.mxu0 0.0
  %3718 = vmatprep.subr.mxu0 0.0
  %3719 = vmatpush1.msra.mxu0 0.0
  %3720 = vmatprep.subr.mxu0 0.0
  %3721 = vmatpush1.msra.mxu0 0.0
  %3722 = vmatprep.subr.mxu0 0.0
  %3723 = vmatpush1.msra.mxu0 0.0
  %3724 = vmatprep.subr.mxu0 0.0
  %3725 = vmatpush1.msra.mxu0 0.0
  %3726 = vmatprep.subr.mxu0 0.0
  %3727 = vmatpush1.msra.mxu0 0.0
  %3728 = vmatprep.subr.mxu0 0.0
  %3729 = vmatpush1.msra.mxu0 0.0
  %3730 = vmatprep.subr.mxu0 0.0
  %3731 = vmatpush1.msra.mxu0 0.0
  %3732 = vmatprep.subr.mxu0 0.0
  %3733 = vmatpush1.msra.mxu0 0.0
  %3734 = vmatprep.subr.mxu0 0.0
  %3735 = vmatpush1.msra.mxu0 0.0
  %3736 = vmatprep.subr.mxu0 0.0
  %3737 = vmatpush1.msra.mxu0 0.0
  %3738 = vmatprep.subr.mxu0 0.0
  %3739 = vmatpush1.msra.mxu0 0.0
  %3740 = vmatprep.subr.mxu0 0.0
  %3741 = vmatpush1.msra.mxu0 0.0
  %3742 = vmatprep.subr.mxu0 0.0
  %3743 = vmatpush1.msra.mxu0 0.0
  %3744 = vmatprep.subr.mxu0 0.0
  %3745 = vmatpush1.msra.mxu0 0.0
  %3746 = vmatprep.subr.mxu0 0.0
  %3747 = vmatpush1.msra.mxu0 0.0
  %3748 = vmatprep.subr.mxu0 0.0
  %3749 = vmatpush1.msra.mxu0 0.0
  %3750 = vmatprep.subr.mxu0 0.0
  %3751 = vmatpush1.msra.mxu0 0.0
  %3752 = vmatprep.mubr.f32.mxu0 0.0
  %3753 = vmatmul.mubr.f32.gmra.mrb[0].mxu0 %v3686
  %v3754 = vpop.f32.mrb[0].mxu0
  %v3755 = vadd.f32 0.0, %v3754
  %v3756 = vpop.f32.mrb[0].mxu0
  %3757 = vdwg.mxu0
  %v3758 = vadd.f32 %v3118, %v3755
  %v3759 = vxor.u32 %v3758, 2147483648
  %v3760 = vmul.f32 %v3759, 1.442695
  %v3761 = vpow.pop %v3760
  %v3762 = vadd.f32 %v3761, 1.0
  %v3763 = vrcp.pop %v3762
  %v3764 = vmul.f32 1.0, %v3763
  %v3765 = vtanh.pop %v3758
  %3767 = vrot.lane.b32.xlu0 %v3684, 32
  %v3768 = vpop.permute.xlu0 %3767
  %v3770 = vmul.f32 %v3764, %v3768
  %3772 = vrot.lane.b32.xlu0 %v3765, 64
  %v3773 = vpop.permute.xlu0 %3772
  %v3775 = vmul.f32 %v3764, %v3773
  %3777 = vrot.lane.b32.xlu0 %v3775, 32
  %v3778 = vpop.permute.xlu0 %3777
  %v3780 = vadd.f32 %v3770, %v3778
  %v3781 = vtanh.pop %v3780
  %3783 = vrot.lane.b32.xlu0 %v3781, 64
  %v3784 = vpop.permute.xlu0 %3783
  %v3786 = vmul.f32 %v3764, %v3784
  %3788 = vrot.lane.b32.xlu0 %v3786, 32
  %v3789 = vpop.permute.xlu0 %3788
  %s3791 = scalar_lea.vmem [#allocation2], 128
  %3792 = vst.msk [vmem:[%s3791] sm:$0x3f] %vm803, %v3789
  %v3793 = vsel %vm696, %v3789, 0
  %3795 = vmatprep.subr.mxu0 0.0
  %3796 = vmatpush1.msra.mxu0 %v3028
  %3797 = vmatprep.subr.mxu0 0.0
  %3798 = vmatpush1.msra.mxu0 %v3029
  %3799 = vmatprep.subr.mxu0 0.0
  %3800 = vmatpush1.msra.mxu0 %v3030
  %3801 = vmatprep.subr.mxu0 0.0
  %3802 = vmatpush1.msra.mxu0 %v3031
  %3803 = vmatprep.subr.mxu0 0.0
  %3804 = vmatpush1.msra.mxu0 0.0
  %3805 = vmatprep.subr.mxu0 0.0
  %3806 = vmatpush1.msra.mxu0 0.0
  %3807 = vmatprep.subr.mxu0 0.0
  %3808 = vmatpush1.msra.mxu0 0.0
  %3809 = vmatprep.subr.mxu0 0.0
  %3810 = vmatpush1.msra.mxu0 0.0
  %3811 = vmatprep.subr.mxu0 0.0
  %3812 = vmatpush1.msra.mxu0 0.0
  %3813 = vmatprep.subr.mxu0 0.0
  %3814 = vmatpush1.msra.mxu0 0.0
  %3815 = vmatprep.subr.mxu0 0.0
  %3816 = vmatpush1.msra.mxu0 0.0
  %3817 = vmatprep.subr.mxu0 0.0
  %3818 = vmatpush1.msra.mxu0 0.0
  %3819 = vmatprep.subr.mxu0 0.0
  %3820 = vmatpush1.msra.mxu0 0.0
  %3821 = vmatprep.subr.mxu0 0.0
  %3822 = vmatpush1.msra.mxu0 0.0
  %3823 = vmatprep.subr.mxu0 0.0
  %3824 = vmatpush1.msra.mxu0 0.0
  %3825 = vmatprep.subr.mxu0 0.0
  %3826 = vmatpush1.msra.mxu0 0.0
  %3827 = vmatprep.subr.mxu0 0.0
  %3828 = vmatpush1.msra.mxu0 0.0
  %3829 = vmatprep.subr.mxu0 0.0
  %3830 = vmatpush1.msra.mxu0 0.0
  %3831 = vmatprep.subr.mxu0 0.0
  %3832 = vmatpush1.msra.mxu0 0.0
  %3833 = vmatprep.subr.mxu0 0.0
  %3834 = vmatpush1.msra.mxu0 0.0
  %3835 = vmatprep.subr.mxu0 0.0
  %3836 = vmatpush1.msra.mxu0 0.0
  %3837 = vmatprep.subr.mxu0 0.0
  %3838 = vmatpush1.msra.mxu0 0.0
  %3839 = vmatprep.subr.mxu0 0.0
  %3840 = vmatpush1.msra.mxu0 0.0
  %3841 = vmatprep.subr.mxu0 0.0
  %3842 = vmatpush1.msra.mxu0 0.0
  %3843 = vmatprep.subr.mxu0 0.0
  %3844 = vmatpush1.msra.mxu0 0.0
  %3845 = vmatprep.subr.mxu0 0.0
  %3846 = vmatpush1.msra.mxu0 0.0
  %3847 = vmatprep.subr.mxu0 0.0
  %3848 = vmatpush1.msra.mxu0 0.0
  %3849 = vmatprep.subr.mxu0 0.0
  %3850 = vmatpush1.msra.mxu0 0.0
  %3851 = vmatprep.subr.mxu0 0.0
  %3852 = vmatpush1.msra.mxu0 0.0
  %3853 = vmatprep.subr.mxu0 0.0
  %3854 = vmatpush1.msra.mxu0 0.0
  %3855 = vmatprep.subr.mxu0 0.0
  %3856 = vmatpush1.msra.mxu0 0.0
  %3857 = vmatprep.subr.mxu0 0.0
  %3858 = vmatpush1.msra.mxu0 0.0
  %3859 = vmatprep.mubr.f32.mxu0 0.0
  %3860 = vmatmul.mubr.f32.gmra.mrb[0].mxu0 %v3793
  %v3861 = vpop.f32.mrb[0].mxu0
  %v3862 = vadd.f32 0.0, %v3861
  %v3863 = vpop.f32.mrb[0].mxu0
  %3864 = vdwg.mxu0
  %v3865 = vadd.f32 %v3198, %v3862
  %v3866 = vxor.u32 %v3865, 2147483648
  %v3867 = vmul.f32 %v3866, 1.442695
  %v3868 = vpow.pop %v3867
  %v3869 = vadd.f32 %v3868, 1.0
  %v3870 = vrcp.pop %v3869
  %v3871 = vmul.f32 1.0, %v3870
  %v3872 = vtanh.pop %v3865
  %v3873 = vmul.f32 %v3871, %v3780
  %3875 = vrot.lane.b32.xlu0 %v3872, 64
  %v3876 = vpop.permute.xlu0 %3875
  %v3878 = vmul.f32 %v3871, %v3876
  %3880 = vrot.lane.b32.xlu0 %v3878, 32
  %v3881 = vpop.permute.xlu0 %3880
  %v3883 = vadd.f32 %v3873, %v3881
  %v3884 = vtanh.pop %v3883
  %3886 = vrot.lane.b32.xlu0 %v3884, 64
  %v3887 = vpop.permute.xlu0 %3886
  %v3889 = vmul.f32 %v3871, %v3887
  %3891 = vrot.lane.b32.xlu0 %v3889, 32
  %v3892 = vpop.permute.xlu0 %3891
  %s3894 = scalar_lea.vmem [#allocation2], 136
  %3895 = vst.msk [vmem:[%s3894] sm:$0x3f] %vm803, %v3892
  %v3896 = vsel %vm696, %v3892, 0
  %3898 = vmatprep.subr.mxu0 0.0
  %3899 = vmatpush1.msra.mxu0 %v3028
  %3900 = vmatprep.subr.mxu0 0.0
  %3901 = vmatpush1.msra.mxu0 %v3029
  %3902 = vmatprep.subr.mxu0 0.0
  %3903 = vmatpush1.msra.mxu0 %v3030
  %3904 = vmatprep.subr.mxu0 0.0
  %3905 = vmatpush1.msra.mxu0 %v3031
  %3906 = vmatprep.subr.mxu0 0.0
  %3907 = vmatpush1.msra.mxu0 0.0
  %3908 = vmatprep.subr.mxu0 0.0
  %3909 = vmatpush1.msra.mxu0 0.0
  %3910 = vmatprep.subr.mxu0 0.0
  %3911 = vmatpush1.msra.mxu0 0.0
  %3912 = vmatprep.subr.mxu0 0.0
  %3913 = vmatpush1.msra.mxu0 0.0
  %3914 = vmatprep.subr.mxu0 0.0
  %3915 = vmatpush1.msra.mxu0 0.0
  %3916 = vmatprep.subr.mxu0 0.0
  %3917 = vmatpush1.msra.mxu0 0.0
  %3918 = vmatprep.subr.mxu0 0.0
  %3919 = vmatpush1.msra.mxu0 0.0
  %3920 = vmatprep.subr.mxu0 0.0
  %3921 = vmatpush1.msra.mxu0 0.0
  %3922 = vmatprep.subr.mxu0 0.0
  %3923 = vmatpush1.msra.mxu0 0.0
  %3924 = vmatprep.subr.mxu0 0.0
  %3925 = vmatpush1.msra.mxu0 0.0
  %3926 = vmatprep.subr.mxu0 0.0
  %3927 = vmatpush1.msra.mxu0 0.0
  %3928 = vmatprep.subr.mxu0 0.0
  %3929 = vmatpush1.msra.mxu0 0.0
  %3930 = vmatprep.subr.mxu0 0.0
  %3931 = vmatpush1.msra.mxu0 0.0
  %3932 = vmatprep.subr.mxu0 0.0
  %3933 = vmatpush1.msra.mxu0 0.0
  %3934 = vmatprep.subr.mxu0 0.0
  %3935 = vmatpush1.msra.mxu0 0.0
  %3936 = vmatprep.subr.mxu0 0.0
  %3937 = vmatpush1.msra.mxu0 0.0
  %3938 = vmatprep.subr.mxu0 0.0
  %3939 = vmatpush1.msra.mxu0 0.0
  %3940 = vmatprep.subr.mxu0 0.0
  %3941 = vmatpush1.msra.mxu0 0.0
  %3942 = vmatprep.subr.mxu0 0.0
  %3943 = vmatpush1.msra.mxu0 0.0
  %3944 = vmatprep.subr.mxu0 0.0
  %3945 = vmatpush1.msra.mxu0 0.0
  %3946 = vmatprep.subr.mxu0 0.0
  %3947 = vmatpush1.msra.mxu0 0.0
  %3948 = vmatprep.subr.mxu0 0.0
  %3949 = vmatpush1.msra.mxu0 0.0
  %3950 = vmatprep.subr.mxu0 0.0
  %3951 = vmatpush1.msra.mxu0 0.0
  %3952 = vmatprep.subr.mxu0 0.0
  %3953 = vmatpush1.msra.mxu0 0.0
  %3954 = vmatprep.subr.mxu0 0.0
  %3955 = vmatpush1.msra.mxu0 0.0
  %3956 = vmatprep.subr.mxu0 0.0
  %3957 = vmatpush1.msra.mxu0 0.0
  %3958 = vmatprep.subr.mxu0 0.0
  %3959 = vmatpush1.msra.mxu0 0.0
  %3960 = vmatprep.subr.mxu0 0.0
  %3961 = vmatpush1.msra.mxu0 0.0
  %3962 = vmatprep.mubr.f32.mxu0 0.0
  %3963 = vmatmul.mubr.f32.gmra.mrb[0].mxu0 %v3896
  %v3964 = vpop.f32.mrb[0].mxu0
  %v3965 = vadd.f32 0.0, %v3964
  %v3966 = vpop.f32.mrb[0].mxu0
  %3967 = vdwg.mxu0
  %v3968 = vadd.f32 %v3278, %v3965
  %v3969 = vxor.u32 %v3968, 2147483648
  %v3970 = vmul.f32 %v3969, 1.442695
  %v3971 = vpow.pop %v3970
  %v3972 = vadd.f32 %v3971, 1.0
  %v3973 = vrcp.pop %v3972
  %v3974 = vmul.f32 1.0, %v3973
  %v3975 = vtanh.pop %v3968
  %v3976 = vmul.f32 %v3974, %v3883
  %3978 = vrot.lane.b32.xlu0 %v3975, 64
  %v3979 = vpop.permute.xlu0 %3978
  %v3981 = vmul.f32 %v3974, %v3979
  %3983 = vrot.lane.b32.xlu0 %v3981, 32
  %v3984 = vpop.permute.xlu0 %3983
  %v3986 = vadd.f32 %v3976, %v3984
  %v3987 = vtanh.pop %v3986
  %3989 = vrot.lane.b32.xlu0 %v3987, 64
  %v3990 = vpop.permute.xlu0 %3989
  %v3992 = vmul.f32 %v3974, %v3990
  %3994 = vrot.lane.b32.xlu0 %v3992, 32
  %v3995 = vpop.permute.xlu0 %3994
  %s3997 = scalar_lea.vmem [#allocation2], 144
  %3998 = vst.msk [vmem:[%s3997] sm:$0x3f] %vm803, %v3995
  %v3999 = vsel %vm696, %v3995, 0
  %4001 = vmatprep.subr.mxu0 0.0
  %4002 = vmatpush1.msra.mxu0 %v3028
  %4003 = vmatprep.subr.mxu0 0.0
  %4004 = vmatpush1.msra.mxu0 %v3029
  %4005 = vmatprep.subr.mxu0 0.0
  %4006 = vmatpush1.msra.mxu0 %v3030
  %4007 = vmatprep.subr.mxu0 0.0
  %4008 = vmatpush1.msra.mxu0 %v3031
  %4009 = vmatprep.subr.mxu0 0.0
  %4010 = vmatpush1.msra.mxu0 0.0
  %4011 = vmatprep.subr.mxu0 0.0
  %4012 = vmatpush1.msra.mxu0 0.0
  %4013 = vmatprep.subr.mxu0 0.0
  %4014 = vmatpush1.msra.mxu0 0.0
  %4015 = vmatprep.subr.mxu0 0.0
  %4016 = vmatpush1.msra.mxu0 0.0
  %4017 = vmatprep.subr.mxu0 0.0
  %4018 = vmatpush1.msra.mxu0 0.0
  %4019 = vmatprep.subr.mxu0 0.0
  %4020 = vmatpush1.msra.mxu0 0.0
  %4021 = vmatprep.subr.mxu0 0.0
  %4022 = vmatpush1.msra.mxu0 0.0
  %4023 = vmatprep.subr.mxu0 0.0
  %4024 = vmatpush1.msra.mxu0 0.0
  %4025 = vmatprep.subr.mxu0 0.0
  %4026 = vmatpush1.msra.mxu0 0.0
  %4027 = vmatprep.subr.mxu0 0.0
  %4028 = vmatpush1.msra.mxu0 0.0
  %4029 = vmatprep.subr.mxu0 0.0
  %4030 = vmatpush1.msra.mxu0 0.0
  %4031 = vmatprep.subr.mxu0 0.0
  %4032 = vmatpush1.msra.mxu0 0.0
  %4033 = vmatprep.subr.mxu0 0.0
  %4034 = vmatpush1.msra.mxu0 0.0
  %4035 = vmatprep.subr.mxu0 0.0
  %4036 = vmatpush1.msra.mxu0 0.0
  %4037 = vmatprep.subr.mxu0 0.0
  %4038 = vmatpush1.msra.mxu0 0.0
  %4039 = vmatprep.subr.mxu0 0.0
  %4040 = vmatpush1.msra.mxu0 0.0
  %4041 = vmatprep.subr.mxu0 0.0
  %4042 = vmatpush1.msra.mxu0 0.0
  %4043 = vmatprep.subr.mxu0 0.0
  %4044 = vmatpush1.msra.mxu0 0.0
  %4045 = vmatprep.subr.mxu0 0.0
  %4046 = vmatpush1.msra.mxu0 0.0
  %4047 = vmatprep.subr.mxu0 0.0
  %4048 = vmatpush1.msra.mxu0 0.0
  %4049 = vmatprep.subr.mxu0 0.0
  %4050 = vmatpush1.msra.mxu0 0.0
  %4051 = vmatprep.subr.mxu0 0.0
  %4052 = vmatpush1.msra.mxu0 0.0
  %4053 = vmatprep.subr.mxu0 0.0
  %4054 = vmatpush1.msra.mxu0 0.0
  %4055 = vmatprep.subr.mxu0 0.0
  %4056 = vmatpush1.msra.mxu0 0.0
  %4057 = vmatprep.subr.mxu0 0.0
  %4058 = vmatpush1.msra.mxu0 0.0
  %4059 = vmatprep.subr.mxu0 0.0
  %4060 = vmatpush1.msra.mxu0 0.0
  %4061 = vmatprep.subr.mxu0 0.0
  %4062 = vmatpush1.msra.mxu0 0.0
  %4063 = vmatprep.subr.mxu0 0.0
  %4064 = vmatpush1.msra.mxu0 0.0
  %4065 = vmatprep.mubr.f32.mxu0 0.0
  %4066 = vmatmul.mubr.f32.gmra.mrb[0].mxu0 %v3999
  %v4067 = vpop.f32.mrb[0].mxu0
  %v4068 = vadd.f32 0.0, %v4067
  %v4069 = vpop.f32.mrb[0].mxu0
  %4070 = vdwg.mxu0
  %v4071 = vadd.f32 %v3358, %v4068
  %v4072 = vxor.u32 %v4071, 2147483648
  %v4073 = vmul.f32 %v4072, 1.442695
  %v4074 = vpow.pop %v4073
  %v4075 = vadd.f32 %v4074, 1.0
  %v4076 = vrcp.pop %v4075
  %v4077 = vmul.f32 1.0, %v4076
  %v4078 = vtanh.pop %v4071
  %v4079 = vmul.f32 %v4077, %v3986
  %4081 = vrot.lane.b32.xlu0 %v4078, 64
  %v4082 = vpop.permute.xlu0 %4081
  %v4084 = vmul.f32 %v4077, %v4082
  %4086 = vrot.lane.b32.xlu0 %v4084, 32
  %v4087 = vpop.permute.xlu0 %4086
  %v4089 = vadd.f32 %v4079, %v4087
  %v4090 = vtanh.pop %v4089
  %4092 = vrot.lane.b32.xlu0 %v4090, 64
  %v4093 = vpop.permute.xlu0 %4092
  %v4095 = vmul.f32 %v4077, %v4093
  %4097 = vrot.lane.b32.xlu0 %v4095, 32
  %v4098 = vpop.permute.xlu0 %4097
  %s4100 = scalar_lea.vmem [#allocation2], 152
  %4101 = vst.msk [vmem:[%s4100] sm:$0x3f] %vm803, %v4098
  %v4102 = vsel %vm696, %v4098, 0
  %4104 = vmatprep.subr.mxu0 0.0
  %4105 = vmatpush1.msra.mxu0 %v3028
  %4106 = vmatprep.subr.mxu0 0.0
  %4107 = vmatpush1.msra.mxu0 %v3029
  %4108 = vmatprep.subr.mxu0 0.0
  %4109 = vmatpush1.msra.mxu0 %v3030
  %4110 = vmatprep.subr.mxu0 0.0
  %4111 = vmatpush1.msra.mxu0 %v3031
  %4112 = vmatprep.subr.mxu0 0.0
  %4113 = vmatpush1.msra.mxu0 0.0
  %4114 = vmatprep.subr.mxu0 0.0
  %4115 = vmatpush1.msra.mxu0 0.0
  %4116 = vmatprep.subr.mxu0 0.0
  %4117 = vmatpush1.msra.mxu0 0.0
  %4118 = vmatprep.subr.mxu0 0.0
  %4119 = vmatpush1.msra.mxu0 0.0
  %4120 = vmatprep.subr.mxu0 0.0
  %4121 = vmatpush1.msra.mxu0 0.0
  %4122 = vmatprep.subr.mxu0 0.0
  %4123 = vmatpush1.msra.mxu0 0.0
  %4124 = vmatprep.subr.mxu0 0.0
  %4125 = vmatpush1.msra.mxu0 0.0
  %4126 = vmatprep.subr.mxu0 0.0
  %4127 = vmatpush1.msra.mxu0 0.0
  %4128 = vmatprep.subr.mxu0 0.0
  %4129 = vmatpush1.msra.mxu0 0.0
  %4130 = vmatprep.subr.mxu0 0.0
  %4131 = vmatpush1.msra.mxu0 0.0
  %4132 = vmatprep.subr.mxu0 0.0
  %4133 = vmatpush1.msra.mxu0 0.0
  %4134 = vmatprep.subr.mxu0 0.0
  %4135 = vmatpush1.msra.mxu0 0.0
  %4136 = vmatprep.subr.mxu0 0.0
  %4137 = vmatpush1.msra.mxu0 0.0
  %4138 = vmatprep.subr.mxu0 0.0
  %4139 = vmatpush1.msra.mxu0 0.0
  %4140 = vmatprep.subr.mxu0 0.0
  %4141 = vmatpush1.msra.mxu0 0.0
  %4142 = vmatprep.subr.mxu0 0.0
  %4143 = vmatpush1.msra.mxu0 0.0
  %4144 = vmatprep.subr.mxu0 0.0
  %4145 = vmatpush1.msra.mxu0 0.0
  %4146 = vmatprep.subr.mxu0 0.0
  %4147 = vmatpush1.msra.mxu0 0.0
  %4148 = vmatprep.subr.mxu0 0.0
  %4149 = vmatpush1.msra.mxu0 0.0
  %4150 = vmatprep.subr.mxu0 0.0
  %4151 = vmatpush1.msra.mxu0 0.0
  %4152 = vmatprep.subr.mxu0 0.0
  %4153 = vmatpush1.msra.mxu0 0.0
  %4154 = vmatprep.subr.mxu0 0.0
  %4155 = vmatpush1.msra.mxu0 0.0
  %4156 = vmatprep.subr.mxu0 0.0
  %4157 = vmatpush1.msra.mxu0 0.0
  %4158 = vmatprep.subr.mxu0 0.0
  %4159 = vmatpush1.msra.mxu0 0.0
  %4160 = vmatprep.subr.mxu0 0.0
  %4161 = vmatpush1.msra.mxu0 0.0
  %4162 = vmatprep.subr.mxu0 0.0
  %4163 = vmatpush1.msra.mxu0 0.0
  %4164 = vmatprep.subr.mxu0 0.0
  %4165 = vmatpush1.msra.mxu0 0.0
  %4166 = vmatprep.subr.mxu0 0.0
  %4167 = vmatpush1.msra.mxu0 0.0
  %4168 = vmatprep.mubr.f32.mxu0 0.0
  %4169 = vmatmul.mubr.f32.gmra.mrb[0].mxu0 %v4102
  %v4170 = vpop.f32.mrb[0].mxu0
  %v4171 = vadd.f32 0.0, %v4170
  %v4172 = vpop.f32.mrb[0].mxu0
  %4173 = vdwg.mxu0
  %v4174 = vadd.f32 %v3438, %v4171
  %v4175 = vxor.u32 %v4174, 2147483648
  %v4176 = vmul.f32 %v4175, 1.442695
  %v4177 = vpow.pop %v4176
  %v4178 = vadd.f32 %v4177, 1.0
  %v4179 = vrcp.pop %v4178
  %v4180 = vmul.f32 1.0, %v4179
  %v4181 = vtanh.pop %v4174
  %v4182 = vmul.f32 %v4180, %v4089
  %4184 = vrot.lane.b32.xlu0 %v4181, 64
  %v4185 = vpop.permute.xlu0 %4184
  %v4187 = vmul.f32 %v4180, %v4185
  %4189 = vrot.lane.b32.xlu0 %v4187, 32
  %v4190 = vpop.permute.xlu0 %4189
  %v4192 = vadd.f32 %v4182, %v4190
  %v4193 = vtanh.pop %v4192
  %4195 = vrot.lane.b32.xlu0 %v4193, 64
  %v4196 = vpop.permute.xlu0 %4195
  %v4198 = vmul.f32 %v4180, %v4196
  %4200 = vrot.lane.b32.xlu0 %v4198, 32
  %v4201 = vpop.permute.xlu0 %4200
  %s4203 = scalar_lea.vmem [#allocation2], 160
  %4204 = vst.msk [vmem:[%s4203] sm:$0x3f] %vm803, %v4201
  %v4205 = vsel %vm696, %v4201, 0
  %4207 = vmatprep.subr.mxu0 0.0
  %4208 = vmatpush1.msra.mxu0 %v3028
  %4209 = vmatprep.subr.mxu0 0.0
  %4210 = vmatpush1.msra.mxu0 %v3029
  %4211 = vmatprep.subr.mxu0 0.0
  %4212 = vmatpush1.msra.mxu0 %v3030
  %4213 = vmatprep.subr.mxu0 0.0
  %4214 = vmatpush1.msra.mxu0 %v3031
  %4215 = vmatprep.subr.mxu0 0.0
  %4216 = vmatpush1.msra.mxu0 0.0
  %4217 = vmatprep.subr.mxu0 0.0
  %4218 = vmatpush1.msra.mxu0 0.0
  %4219 = vmatprep.subr.mxu0 0.0
  %4220 = vmatpush1.msra.mxu0 0.0
  %4221 = vmatprep.subr.mxu0 0.0
  %4222 = vmatpush1.msra.mxu0 0.0
  %4223 = vmatprep.subr.mxu0 0.0
  %4224 = vmatpush1.msra.mxu0 0.0
  %4225 = vmatprep.subr.mxu0 0.0
  %4226 = vmatpush1.msra.mxu0 0.0
  %4227 = vmatprep.subr.mxu0 0.0
  %4228 = vmatpush1.msra.mxu0 0.0
  %4229 = vmatprep.subr.mxu0 0.0
  %4230 = vmatpush1.msra.mxu0 0.0
  %4231 = vmatprep.subr.mxu0 0.0
  %4232 = vmatpush1.msra.mxu0 0.0
  %4233 = vmatprep.subr.mxu0 0.0
  %4234 = vmatpush1.msra.mxu0 0.0
  %4235 = vmatprep.subr.mxu0 0.0
  %4236 = vmatpush1.msra.mxu0 0.0
  %4237 = vmatprep.subr.mxu0 0.0
  %4238 = vmatpush1.msra.mxu0 0.0
  %4239 = vmatprep.subr.mxu0 0.0
  %4240 = vmatpush1.msra.mxu0 0.0
  %4241 = vmatprep.subr.mxu0 0.0
  %4242 = vmatpush1.msra.mxu0 0.0
  %4243 = vmatprep.subr.mxu0 0.0
  %4244 = vmatpush1.msra.mxu0 0.0
  %4245 = vmatprep.subr.mxu0 0.0
  %4246 = vmatpush1.msra.mxu0 0.0
  %4247 = vmatprep.subr.mxu0 0.0
  %4248 = vmatpush1.msra.mxu0 0.0
  %4249 = vmatprep.subr.mxu0 0.0
  %4250 = vmatpush1.msra.mxu0 0.0
  %4251 = vmatprep.subr.mxu0 0.0
  %4252 = vmatpush1.msra.mxu0 0.0
  %4253 = vmatprep.subr.mxu0 0.0
  %4254 = vmatpush1.msra.mxu0 0.0
  %4255 = vmatprep.subr.mxu0 0.0
  %4256 = vmatpush1.msra.mxu0 0.0
  %4257 = vmatprep.subr.mxu0 0.0
  %4258 = vmatpush1.msra.mxu0 0.0
  %4259 = vmatprep.subr.mxu0 0.0
  %4260 = vmatpush1.msra.mxu0 0.0
  %4261 = vmatprep.subr.mxu0 0.0
  %4262 = vmatpush1.msra.mxu0 0.0
  %4263 = vmatprep.subr.mxu0 0.0
  %4264 = vmatpush1.msra.mxu0 0.0
  %4265 = vmatprep.subr.mxu0 0.0
  %4266 = vmatpush1.msra.mxu0 0.0
  %4267 = vmatprep.subr.mxu0 0.0
  %4268 = vmatpush1.msra.mxu0 0.0
  %4269 = vmatprep.subr.mxu0 0.0
  %4270 = vmatpush1.msra.mxu0 0.0
  %4271 = vmatprep.mubr.f32.mxu0 0.0
  %4272 = vmatmul.mubr.f32.gmra.mrb[0].mxu0 %v4205
  %v4273 = vpop.f32.mrb[0].mxu0
  %v4274 = vadd.f32 0.0, %v4273
  %v4275 = vpop.f32.mrb[0].mxu0
  %4276 = vdwg.mxu0
  %v4277 = vadd.f32 %v3518, %v4274
  %v4278 = vxor.u32 %v4277, 2147483648
  %v4279 = vmul.f32 %v4278, 1.442695
  %v4280 = vpow.pop %v4279
  %v4281 = vadd.f32 %v4280, 1.0
  %v4282 = vrcp.pop %v4281
  %v4283 = vmul.f32 1.0, %v4282
  %v4284 = vtanh.pop %v4277
  %v4285 = vmul.f32 %v4283, %v4192
  %4287 = vrot.lane.b32.xlu0 %v4284, 64
  %v4288 = vpop.permute.xlu0 %4287
  %v4290 = vmul.f32 %v4283, %v4288
  %4292 = vrot.lane.b32.xlu0 %v4290, 32
  %v4293 = vpop.permute.xlu0 %4292
  %v4295 = vadd.f32 %v4285, %v4293
  %v4296 = vtanh.pop %v4295
  %4298 = vrot.lane.b32.xlu0 %v4296, 64
  %v4299 = vpop.permute.xlu0 %4298
  %v4301 = vmul.f32 %v4283, %v4299
  %4303 = vrot.lane.b32.xlu0 %v4301, 32
  %v4304 = vpop.permute.xlu0 %4303
  %s4306 = scalar_lea.vmem [#allocation2], 168
  %4307 = vst.msk [vmem:[%s4306] sm:$0x3f] %vm803, %v4304
  %v4308 = vsel %vm696, %v4304, 0
  %4310 = vmatprep.subr.mxu0 0.0
  %4311 = vmatpush1.msra.mxu0 %v3028
  %4312 = vmatprep.subr.mxu0 0.0
  %4313 = vmatpush1.msra.mxu0 %v3029
  %4314 = vmatprep.subr.mxu0 0.0
  %4315 = vmatpush1.msra.mxu0 %v3030
  %4316 = vmatprep.subr.mxu0 0.0
  %4317 = vmatpush1.msra.mxu0 %v3031
  %4318 = vmatprep.subr.mxu0 0.0
  %4319 = vmatpush1.msra.mxu0 0.0
  %4320 = vmatprep.subr.mxu0 0.0
  %4321 = vmatpush1.msra.mxu0 0.0
  %4322 = vmatprep.subr.mxu0 0.0
  %4323 = vmatpush1.msra.mxu0 0.0
  %4324 = vmatprep.subr.mxu0 0.0
  %4325 = vmatpush1.msra.mxu0 0.0
  %4326 = vmatprep.subr.mxu0 0.0
  %4327 = vmatpush1.msra.mxu0 0.0
  %4328 = vmatprep.subr.mxu0 0.0
  %4329 = vmatpush1.msra.mxu0 0.0
  %4330 = vmatprep.subr.mxu0 0.0
  %4331 = vmatpush1.msra.mxu0 0.0
  %4332 = vmatprep.subr.mxu0 0.0
  %4333 = vmatpush1.msra.mxu0 0.0
  %4334 = vmatprep.subr.mxu0 0.0
  %4335 = vmatpush1.msra.mxu0 0.0
  %4336 = vmatprep.subr.mxu0 0.0
  %4337 = vmatpush1.msra.mxu0 0.0
  %4338 = vmatprep.subr.mxu0 0.0
  %4339 = vmatpush1.msra.mxu0 0.0
  %4340 = vmatprep.subr.mxu0 0.0
  %4341 = vmatpush1.msra.mxu0 0.0
  %4342 = vmatprep.subr.mxu0 0.0
  %4343 = vmatpush1.msra.mxu0 0.0
  %4344 = vmatprep.subr.mxu0 0.0
  %4345 = vmatpush1.msra.mxu0 0.0
  %4346 = vmatprep.subr.mxu0 0.0
  %4347 = vmatpush1.msra.mxu0 0.0
  %4348 = vmatprep.subr.mxu0 0.0
  %4349 = vmatpush1.msra.mxu0 0.0
  %4350 = vmatprep.subr.mxu0 0.0
  %4351 = vmatpush1.msra.mxu0 0.0
  %4352 = vmatprep.subr.mxu0 0.0
  %4353 = vmatpush1.msra.mxu0 0.0
  %4354 = vmatprep.subr.mxu0 0.0
  %4355 = vmatpush1.msra.mxu0 0.0
  %4356 = vmatprep.subr.mxu0 0.0
  %4357 = vmatpush1.msra.mxu0 0.0
  %4358 = vmatprep.subr.mxu0 0.0
  %4359 = vmatpush1.msra.mxu0 0.0
  %4360 = vmatprep.subr.mxu0 0.0
  %4361 = vmatpush1.msra.mxu0 0.0
  %4362 = vmatprep.subr.mxu0 0.0
  %4363 = vmatpush1.msra.mxu0 0.0
  %4364 = vmatprep.subr.mxu0 0.0
  %4365 = vmatpush1.msra.mxu0 0.0
  %4366 = vmatprep.subr.mxu0 0.0
  %4367 = vmatpush1.msra.mxu0 0.0
  %4368 = vmatprep.subr.mxu0 0.0
  %4369 = vmatpush1.msra.mxu0 0.0
  %4370 = vmatprep.subr.mxu0 0.0
  %4371 = vmatpush1.msra.mxu0 0.0
  %4372 = vmatprep.subr.mxu0 0.0
  %4373 = vmatpush1.msra.mxu0 0.0
  %4374 = vmatprep.mubr.f32.mxu0 0.0
  %4375 = vmatmul.mubr.f32.gmra.mrb[0].mxu0 %v4308
  %v4376 = vpop.f32.mrb[0].mxu0
  %v4377 = vadd.f32 0.0, %v4376
  %v4378 = vpop.f32.mrb[0].mxu0
  %4379 = vdwg.mxu0
  %v4380 = vadd.f32 %v3598, %v4377
  %v4381 = vxor.u32 %v4380, 2147483648
  %v4382 = vmul.f32 %v4381, 1.442695
  %v4383 = vpow.pop %v4382
  %v4384 = vadd.f32 %v4383, 1.0
  %v4385 = vrcp.pop %v4384
  %v4386 = vmul.f32 1.0, %v4385
  %v4387 = vtanh.pop %v4380
  %v4388 = vmul.f32 %v4386, %v4295
  %4390 = vrot.lane.b32.xlu0 %v4387, 64
  %v4391 = vpop.permute.xlu0 %4390
  %v4393 = vmul.f32 %v4386, %v4391
  %4395 = vrot.lane.b32.xlu0 %v4393, 32
  %v4396 = vpop.permute.xlu0 %4395
  %v4398 = vadd.f32 %v4388, %v4396
  %v4399 = vtanh.pop %v4398
  %4401 = vrot.lane.b32.xlu0 %v4399, 64
  %v4402 = vpop.permute.xlu0 %4401
  %v4404 = vmul.f32 %v4386, %v4402
  %4406 = vrot.lane.b32.xlu0 %v4404, 32
  %v4407 = vpop.permute.xlu0 %4406
  %s4409 = scalar_lea.vmem [#allocation2], 176
  %4410 = vst.msk [vmem:[%s4409] sm:$0x3f] %vm803, %v4407
  %v4411 = vsel %vm696, %v4407, 0
  %4413 = vmatprep.subr.mxu0 0.0
  %4414 = vmatpush1.msra.mxu0 %v3028
  %4415 = vmatprep.subr.mxu0 0.0
  %4416 = vmatpush1.msra.mxu0 %v3029
  %4417 = vmatprep.subr.mxu0 0.0
  %4418 = vmatpush1.msra.mxu0 %v3030
  %4419 = vmatprep.subr.mxu0 0.0
  %4420 = vmatpush1.msra.mxu0 %v3031
  %4421 = vmatprep.subr.mxu0 0.0
  %4422 = vmatpush1.msra.mxu0 0.0
  %4423 = vmatprep.subr.mxu0 0.0
  %4424 = vmatpush1.msra.mxu0 0.0
  %4425 = vmatprep.subr.mxu0 0.0
  %4426 = vmatpush1.msra.mxu0 0.0
  %4427 = vmatprep.subr.mxu0 0.0
  %4428 = vmatpush1.msra.mxu0 0.0
  %4429 = vmatprep.subr.mxu0 0.0
  %4430 = vmatpush1.msra.mxu0 0.0
  %4431 = vmatprep.subr.mxu0 0.0
  %4432 = vmatpush1.msra.mxu0 0.0
  %4433 = vmatprep.subr.mxu0 0.0
  %4434 = vmatpush1.msra.mxu0 0.0
  %4435 = vmatprep.subr.mxu0 0.0
  %4436 = vmatpush1.msra.mxu0 0.0
  %4437 = vmatprep.subr.mxu0 0.0
  %4438 = vmatpush1.msra.mxu0 0.0
  %4439 = vmatprep.subr.mxu0 0.0
  %4440 = vmatpush1.msra.mxu0 0.0
  %4441 = vmatprep.subr.mxu0 0.0
  %4442 = vmatpush1.msra.mxu0 0.0
  %4443 = vmatprep.subr.mxu0 0.0
  %4444 = vmatpush1.msra.mxu0 0.0
  %4445 = vmatprep.subr.mxu0 0.0
  %4446 = vmatpush1.msra.mxu0 0.0
  %4447 = vmatprep.subr.mxu0 0.0
  %4448 = vmatpush1.msra.mxu0 0.0
  %4449 = vmatprep.subr.mxu0 0.0
  %4450 = vmatpush1.msra.mxu0 0.0
  %4451 = vmatprep.subr.mxu0 0.0
  %4452 = vmatpush1.msra.mxu0 0.0
  %4453 = vmatprep.subr.mxu0 0.0
  %4454 = vmatpush1.msra.mxu0 0.0
  %4455 = vmatprep.subr.mxu0 0.0
  %4456 = vmatpush1.msra.mxu0 0.0
  %4457 = vmatprep.subr.mxu0 0.0
  %4458 = vmatpush1.msra.mxu0 0.0
  %4459 = vmatprep.subr.mxu0 0.0
  %4460 = vmatpush1.msra.mxu0 0.0
  %4461 = vmatprep.subr.mxu0 0.0
  %4462 = vmatpush1.msra.mxu0 0.0
  %4463 = vmatprep.subr.mxu0 0.0
  %4464 = vmatpush1.msra.mxu0 0.0
  %4465 = vmatprep.subr.mxu0 0.0
  %4466 = vmatpush1.msra.mxu0 0.0
  %4467 = vmatprep.subr.mxu0 0.0
  %4468 = vmatpush1.msra.mxu0 0.0
  %4469 = vmatprep.subr.mxu0 0.0
  %4470 = vmatpush1.msra.mxu0 0.0
  %4471 = vmatprep.subr.mxu0 0.0
  %4472 = vmatpush1.msra.mxu0 0.0
  %4473 = vmatprep.subr.mxu0 0.0
  %4474 = vmatpush1.msra.mxu0 0.0
  %4475 = vmatprep.subr.mxu0 0.0
  %4476 = vmatpush1.msra.mxu0 0.0
  %4477 = vmatprep.mubr.f32.mxu0 0.0
  %4478 = vmatmul.mubr.f32.gmra.mrb[0].mxu0 %v4411
  %v4479 = vpop.f32.mrb[0].mxu0
  %v4480 = vadd.f32 0.0, %v4479
  %v4481 = vpop.f32.mrb[0].mxu0
  %4482 = vdwg.mxu0
  %v4483 = vadd.f32 %v3678, %v4480
  %v4484 = vxor.u32 %v4483, 2147483648
  %v4485 = vmul.f32 %v4484, 1.442695
  %v4486 = vpow.pop %v4485
  %v4487 = vadd.f32 %v4486, 1.0
  %v4488 = vrcp.pop %v4487
  %v4489 = vmul.f32 1.0, %v4488
  %v4490 = vtanh.pop %v4483
  %v4491 = vmul.f32 %v4489, %v4398
  %4493 = vrot.lane.b32.xlu0 %v4490, 64
  %v4494 = vpop.permute.xlu0 %4493
  %v4496 = vmul.f32 %v4489, %v4494
  %4498 = vrot.lane.b32.xlu0 %v4496, 32
  %v4499 = vpop.permute.xlu0 %4498
  %v4501 = vadd.f32 %v4491, %v4499
  %v4502 = vtanh.pop %v4501
  %4504 = vrot.lane.b32.xlu0 %v4502, 64
  %v4505 = vpop.permute.xlu0 %4504
  %v4507 = vmul.f32 %v4489, %v4505
  %4509 = vrot.lane.b32.xlu0 %v4507, 32
  %v4510 = vpop.permute.xlu0 %4509
  %s4512 = scalar_lea.vmem [#allocation2], 184
  %4513 = vst.msk [vmem:[%s4512] sm:$0x3f] %vm803, %v4510
  %s4514 = scalar_lea.vmem %s2, 64
  %v4515 = vld [vmem:[%s4514] sm:$0xff]
  %v4516 = vld [vmem:[%s4514 + $0x8] sm:$0xff]
  %v4517 = vld [vmem:[%s4514 + $0x10] sm:$0xff]
  %v4518 = vld [vmem:[%s4514 + $0x18] sm:$0xff]
  %v4519 = vld [vmem:[%s4514 + $0x20] sm:$0xff]
  %v4520 = vld [vmem:[%s4514 + $0x28] sm:$0xff]
  %v4521 = vld [vmem:[%s4514 + $0x30] sm:$0xff]
  %v4522 = vld [vmem:[%s4514 + $0x38] sm:$0xff]
  %s4523 = scalar_lea.vmem %s3, 96
  %v4524 = vld [vmem:[%s4523] sm:$0xff]
  %v4525 = vld [vmem:[%s4523 + $0x8] sm:$0xff]
  %v4526 = vld [vmem:[%s4523 + $0x10] sm:$0xff]
  %v4527 = vld [vmem:[%s4523 + $0x18] sm:$0xff]
  %s4528 = scalar_lea.vmem %s4, 3
  %v4529 = vld [vmem:[%s4528] sm:$0x1]
  %v4531 = vlaneseq
  %v4532 = vshrl.u32 %v4531, 7
  %v4533 = vsub.s32 0, %v4532
  %v4534 = vrot.slane %v4529, %v4533
  %v4536 = vld [vmem:[#allocation2] sm:$0x3f]
  %v4537 = vld [vmem:[%s3017] sm:$0x3f]
  %4539 = vrot.lane.b32.xlu0 %v4537, 32
  %v4540 = vpop.permute.xlu0 %4539
  %v4542 = vsel %vm696, %v4536, %v4540
  %v4544 = vsel %vm3047, %v4542, 0
  %4546 = vmatprep.subr.mxu0 0.0
  %4547 = vmatpush1.msra.mxu0 %v4515
  %4548 = vmatprep.subr.mxu0 0.0
  %4549 = vmatpush1.msra.mxu0 %v4516
  %4550 = vmatprep.subr.mxu0 0.0
  %4551 = vmatpush1.msra.mxu0 %v4517
  %4552 = vmatprep.subr.mxu0 0.0
  %4553 = vmatpush1.msra.mxu0 %v4518
  %4554 = vmatprep.subr.mxu0 0.0
  %4555 = vmatpush1.msra.mxu0 %v4519
  %4556 = vmatprep.subr.mxu0 0.0
  %4557 = vmatpush1.msra.mxu0 %v4520
  %4558 = vmatprep.subr.mxu0 0.0
  %4559 = vmatpush1.msra.mxu0 %v4521
  %4560 = vmatprep.subr.mxu0 0.0
  %4561 = vmatpush1.msra.mxu0 %v4522
  %4562 = vmatprep.subr.mxu0 0.0
  %4563 = vmatpush1.msra.mxu0 0.0
  %4564 = vmatprep.subr.mxu0 0.0
  %4565 = vmatpush1.msra.mxu0 0.0
  %4566 = vmatprep.subr.mxu0 0.0
  %4567 = vmatpush1.msra.mxu0 0.0
  %4568 = vmatprep.subr.mxu0 0.0
  %4569 = vmatpush1.msra.mxu0 0.0
  %4570 = vmatprep.subr.mxu0 0.0
  %4571 = vmatpush1.msra.mxu0 0.0
  %4572 = vmatprep.subr.mxu0 0.0
  %4573 = vmatpush1.msra.mxu0 0.0
  %4574 = vmatprep.subr.mxu0 0.0
  %4575 = vmatpush1.msra.mxu0 0.0
  %4576 = vmatprep.subr.mxu0 0.0
  %4577 = vmatpush1.msra.mxu0 0.0
  %4578 = vmatprep.subr.mxu0 0.0
  %4579 = vmatpush1.msra.mxu0 0.0
  %4580 = vmatprep.subr.mxu0 0.0
  %4581 = vmatpush1.msra.mxu0 0.0
  %4582 = vmatprep.subr.mxu0 0.0
  %4583 = vmatpush1.msra.mxu0 0.0
  %4584 = vmatprep.subr.mxu0 0.0
  %4585 = vmatpush1.msra.mxu0 0.0
  %4586 = vmatprep.subr.mxu0 0.0
  %4587 = vmatpush1.msra.mxu0 0.0
  %4588 = vmatprep.subr.mxu0 0.0
  %4589 = vmatpush1.msra.mxu0 0.0
  %4590 = vmatprep.subr.mxu0 0.0
  %4591 = vmatpush1.msra.mxu0 0.0
  %4592 = vmatprep.subr.mxu0 0.0
  %4593 = vmatpush1.msra.mxu0 0.0
  %4594 = vmatprep.subr.mxu0 0.0
  %4595 = vmatpush1.msra.mxu0 0.0
  %4596 = vmatprep.subr.mxu0 0.0
  %4597 = vmatpush1.msra.mxu0 0.0
  %4598 = vmatprep.subr.mxu0 0.0
  %4599 = vmatpush1.msra.mxu0 0.0
  %4600 = vmatprep.subr.mxu0 0.0
  %4601 = vmatpush1.msra.mxu0 0.0
  %4602 = vmatprep.subr.mxu0 0.0
  %4603 = vmatpush1.msra.mxu0 0.0
  %4604 = vmatprep.subr.mxu0 0.0
  %4605 = vmatpush1.msra.mxu0 0.0
  %4606 = vmatprep.subr.mxu0 0.0
  %4607 = vmatpush1.msra.mxu0 0.0
  %4608 = vmatprep.subr.mxu0 0.0
  %4609 = vmatpush1.msra.mxu0 0.0
  %4610 = vmatprep.mubr.f32.mxu0 0.0
  %4611 = vmatmul.mubr.f32.gmra.mrb[0].mxu0 %v4544
  %v4612 = vpop.f32.mrb[0].mxu0
  %v4613 = vadd.f32 %v4534, %v4612
  %v4614 = vpop.f32.mrb[0].mxu0
  %4615 = vdwg.mxu0
  %v4616 = vld [vmem:[%s906] sm:$0x3f]
  %v4617 = vld [vmem:[%s2914] sm:$0x3f]
  %4619 = vrot.lane.b32.xlu0 %v4617, 32
  %v4620 = vpop.permute.xlu0 %4619
  %v4622 = vsel %vm696, %v4616, %v4620
  %v4624 = vsel %vm3047, %v4622, 0
  %4626 = vmatprep.subr.mxu0 0.0
  %4627 = vmatpush1.msra.mxu0 %v4515
  %4628 = vmatprep.subr.mxu0 0.0
  %4629 = vmatpush1.msra.mxu0 %v4516
  %4630 = vmatprep.subr.mxu0 0.0
  %4631 = vmatpush1.msra.mxu0 %v4517
  %4632 = vmatprep.subr.mxu0 0.0
  %4633 = vmatpush1.msra.mxu0 %v4518
  %4634 = vmatprep.subr.mxu0 0.0
  %4635 = vmatpush1.msra.mxu0 %v4519
  %4636 = vmatprep.subr.mxu0 0.0
  %4637 = vmatpush1.msra.mxu0 %v4520
  %4638 = vmatprep.subr.mxu0 0.0
  %4639 = vmatpush1.msra.mxu0 %v4521
  %4640 = vmatprep.subr.mxu0 0.0
  %4641 = vmatpush1.msra.mxu0 %v4522
  %4642 = vmatprep.subr.mxu0 0.0
  %4643 = vmatpush1.msra.mxu0 0.0
  %4644 = vmatprep.subr.mxu0 0.0
  %4645 = vmatpush1.msra.mxu0 0.0
  %4646 = vmatprep.subr.mxu0 0.0
  %4647 = vmatpush1.msra.mxu0 0.0
  %4648 = vmatprep.subr.mxu0 0.0
  %4649 = vmatpush1.msra.mxu0 0.0
  %4650 = vmatprep.subr.mxu0 0.0
  %4651 = vmatpush1.msra.mxu0 0.0
  %4652 = vmatprep.subr.mxu0 0.0
  %4653 = vmatpush1.msra.mxu0 0.0
  %4654 = vmatprep.subr.mxu0 0.0
  %4655 = vmatpush1.msra.mxu0 0.0
  %4656 = vmatprep.subr.mxu0 0.0
  %4657 = vmatpush1.msra.mxu0 0.0
  %4658 = vmatprep.subr.mxu0 0.0
  %4659 = vmatpush1.msra.mxu0 0.0
  %4660 = vmatprep.subr.mxu0 0.0
  %4661 = vmatpush1.msra.mxu0 0.0
  %4662 = vmatprep.subr.mxu0 0.0
  %4663 = vmatpush1.msra.mxu0 0.0
  %4664 = vmatprep.subr.mxu0 0.0
  %4665 = vmatpush1.msra.mxu0 0.0
  %4666 = vmatprep.subr.mxu0 0.0
  %4667 = vmatpush1.msra.mxu0 0.0
  %4668 = vmatprep.subr.mxu0 0.0
  %4669 = vmatpush1.msra.mxu0 0.0
  %4670 = vmatprep.subr.mxu0 0.0
  %4671 = vmatpush1.msra.mxu0 0.0
  %4672 = vmatprep.subr.mxu0 0.0
  %4673 = vmatpush1.msra.mxu0 0.0
  %4674 = vmatprep.subr.mxu0 0.0
  %4675 = vmatpush1.msra.mxu0 0.0
  %4676 = vmatprep.subr.mxu0 0.0
  %4677 = vmatpush1.msra.mxu0 0.0
  %4678 = vmatprep.subr.mxu0 0.0
  %4679 = vmatpush1.msra.mxu0 0.0
  %4680 = vmatprep.subr.mxu0 0.0
  %4681 = vmatpush1.msra.mxu0 0.0
  %4682 = vmatprep.subr.mxu0 0.0
  %4683 = vmatpush1.msra.mxu0 0.0
  %4684 = vmatprep.subr.mxu0 0.0
  %4685 = vmatpush1.msra.mxu0 0.0
  %4686 = vmatprep.subr.mxu0 0.0
  %4687 = vmatpush1.msra.mxu0 0.0
  %4688 = vmatprep.subr.mxu0 0.0
  %4689 = vmatpush1.msra.mxu0 0.0
  %4690 = vmatprep.mubr.f32.mxu0 0.0
  %4691 = vmatmul.mubr.f32.gmra.mrb[0].mxu0 %v4624
  %v4692 = vpop.f32.mrb[0].mxu0
  %v4693 = vadd.f32 %v4534, %v4692
  %v4694 = vpop.f32.mrb[0].mxu0
  %4695 = vdwg.mxu0
  %v4696 = vld [vmem:[%s1009] sm:$0x3f]
  %v4697 = vld [vmem:[%s2811] sm:$0x3f]
  %4699 = vrot.lane.b32.xlu0 %v4697, 32
  %v4700 = vpop.permute.xlu0 %4699
  %v4702 = vsel %vm696, %v4696, %v4700
  %v4704 = vsel %vm3047, %v4702, 0
  %4706 = vmatprep.subr.mxu0 0.0
  %4707 = vmatpush1.msra.mxu0 %v4515
  %4708 = vmatprep.subr.mxu0 0.0
  %4709 = vmatpush1.msra.mxu0 %v4516
  %4710 = vmatprep.subr.mxu0 0.0
  %4711 = vmatpush1.msra.mxu0 %v4517
  %4712 = vmatprep.subr.mxu0 0.0
  %4713 = vmatpush1.msra.mxu0 %v4518
  %4714 = vmatprep.subr.mxu0 0.0
  %4715 = vmatpush1.msra.mxu0 %v4519
  %4716 = vmatprep.subr.mxu0 0.0
  %4717 = vmatpush1.msra.mxu0 %v4520
  %4718 = vmatprep.subr.mxu0 0.0
  %4719 = vmatpush1.msra.mxu0 %v4521
  %4720 = vmatprep.subr.mxu0 0.0
  %4721 = vmatpush1.msra.mxu0 %v4522
  %4722 = vmatprep.subr.mxu0 0.0
  %4723 = vmatpush1.msra.mxu0 0.0
  %4724 = vmatprep.subr.mxu0 0.0
  %4725 = vmatpush1.msra.mxu0 0.0
  %4726 = vmatprep.subr.mxu0 0.0
  %4727 = vmatpush1.msra.mxu0 0.0
  %4728 = vmatprep.subr.mxu0 0.0
  %4729 = vmatpush1.msra.mxu0 0.0
  %4730 = vmatprep.subr.mxu0 0.0
  %4731 = vmatpush1.msra.mxu0 0.0
  %4732 = vmatprep.subr.mxu0 0.0
  %4733 = vmatpush1.msra.mxu0 0.0
  %4734 = vmatprep.subr.mxu0 0.0
  %4735 = vmatpush1.msra.mxu0 0.0
  %4736 = vmatprep.subr.mxu0 0.0
  %4737 = vmatpush1.msra.mxu0 0.0
  %4738 = vmatprep.subr.mxu0 0.0
  %4739 = vmatpush1.msra.mxu0 0.0
  %4740 = vmatprep.subr.mxu0 0.0
  %4741 = vmatpush1.msra.mxu0 0.0
  %4742 = vmatprep.subr.mxu0 0.0
  %4743 = vmatpush1.msra.mxu0 0.0
  %4744 = vmatprep.subr.mxu0 0.0
  %4745 = vmatpush1.msra.mxu0 0.0
  %4746 = vmatprep.subr.mxu0 0.0
  %4747 = vmatpush1.msra.mxu0 0.0
  %4748 = vmatprep.subr.mxu0 0.0
  %4749 = vmatpush1.msra.mxu0 0.0
  %4750 = vmatprep.subr.mxu0 0.0
  %4751 = vmatpush1.msra.mxu0 0.0
  %4752 = vmatprep.subr.mxu0 0.0
  %4753 = vmatpush1.msra.mxu0 0.0
  %4754 = vmatprep.subr.mxu0 0.0
  %4755 = vmatpush1.msra.mxu0 0.0
  %4756 = vmatprep.subr.mxu0 0.0
  %4757 = vmatpush1.msra.mxu0 0.0
  %4758 = vmatprep.subr.mxu0 0.0
  %4759 = vmatpush1.msra.mxu0 0.0
  %4760 = vmatprep.subr.mxu0 0.0
  %4761 = vmatpush1.msra.mxu0 0.0
  %4762 = vmatprep.subr.mxu0 0.0
  %4763 = vmatpush1.msra.mxu0 0.0
  %4764 = vmatprep.subr.mxu0 0.0
  %4765 = vmatpush1.msra.mxu0 0.0
  %4766 = vmatprep.subr.mxu0 0.0
  %4767 = vmatpush1.msra.mxu0 0.0
  %4768 = vmatprep.subr.mxu0 0.0
  %4769 = vmatpush1.msra.mxu0 0.0
  %4770 = vmatprep.mubr.f32.mxu0 0.0
  %4771 = vmatmul.mubr.f32.gmra.mrb[0].mxu0 %v4704
  %v4772 = vpop.f32.mrb[0].mxu0
  %v4773 = vadd.f32 %v4534, %v4772
  %v4774 = vpop.f32.mrb[0].mxu0
  %4775 = vdwg.mxu0
  %v4776 = vld [vmem:[%s1112] sm:$0x3f]
  %v4777 = vld [vmem:[%s2708] sm:$0x3f]
  %4779 = vrot.lane.b32.xlu0 %v4777, 32
  %v4780 = vpop.permute.xlu0 %4779
  %v4782 = vsel %vm696, %v4776, %v4780
  %v4784 = vsel %vm3047, %v4782, 0
  %4786 = vmatprep.subr.mxu0 0.0
  %4787 = vmatpush1.msra.mxu0 %v4515
  %4788 = vmatprep.subr.mxu0 0.0
  %4789 = vmatpush1.msra.mxu0 %v4516
  %4790 = vmatprep.subr.mxu0 0.0
  %4791 = vmatpush1.msra.mxu0 %v4517
  %4792 = vmatprep.subr.mxu0 0.0
  %4793 = vmatpush1.msra.mxu0 %v4518
  %4794 = vmatprep.subr.mxu0 0.0
  %4795 = vmatpush1.msra.mxu0 %v4519
  %4796 = vmatprep.subr.mxu0 0.0
  %4797 = vmatpush1.msra.mxu0 %v4520
  %4798 = vmatprep.subr.mxu0 0.0
  %4799 = vmatpush1.msra.mxu0 %v4521
  %4800 = vmatprep.subr.mxu0 0.0
  %4801 = vmatpush1.msra.mxu0 %v4522
  %4802 = vmatprep.subr.mxu0 0.0
  %4803 = vmatpush1.msra.mxu0 0.0
  %4804 = vmatprep.subr.mxu0 0.0
  %4805 = vmatpush1.msra.mxu0 0.0
  %4806 = vmatprep.subr.mxu0 0.0
  %4807 = vmatpush1.msra.mxu0 0.0
  %4808 = vmatprep.subr.mxu0 0.0
  %4809 = vmatpush1.msra.mxu0 0.0
  %4810 = vmatprep.subr.mxu0 0.0
  %4811 = vmatpush1.msra.mxu0 0.0
  %4812 = vmatprep.subr.mxu0 0.0
  %4813 = vmatpush1.msra.mxu0 0.0
  %4814 = vmatprep.subr.mxu0 0.0
  %4815 = vmatpush1.msra.mxu0 0.0
  %4816 = vmatprep.subr.mxu0 0.0
  %4817 = vmatpush1.msra.mxu0 0.0
  %4818 = vmatprep.subr.mxu0 0.0
  %4819 = vmatpush1.msra.mxu0 0.0
  %4820 = vmatprep.subr.mxu0 0.0
  %4821 = vmatpush1.msra.mxu0 0.0
  %4822 = vmatprep.subr.mxu0 0.0
  %4823 = vmatpush1.msra.mxu0 0.0
  %4824 = vmatprep.subr.mxu0 0.0
  %4825 = vmatpush1.msra.mxu0 0.0
  %4826 = vmatprep.subr.mxu0 0.0
  %4827 = vmatpush1.msra.mxu0 0.0
  %4828 = vmatprep.subr.mxu0 0.0
  %4829 = vmatpush1.msra.mxu0 0.0
  %4830 = vmatprep.subr.mxu0 0.0
  %4831 = vmatpush1.msra.mxu0 0.0
  %4832 = vmatprep.subr.mxu0 0.0
  %4833 = vmatpush1.msra.mxu0 0.0
  %4834 = vmatprep.subr.mxu0 0.0
  %4835 = vmatpush1.msra.mxu0 0.0
  %4836 = vmatprep.subr.mxu0 0.0
  %4837 = vmatpush1.msra.mxu0 0.0
  %4838 = vmatprep.subr.mxu0 0.0
  %4839 = vmatpush1.msra.mxu0 0.0
  %4840 = vmatprep.subr.mxu0 0.0
  %4841 = vmatpush1.msra.mxu0 0.0
  %4842 = vmatprep.subr.mxu0 0.0
  %4843 = vmatpush1.msra.mxu0 0.0
  %4844 = vmatprep.subr.mxu0 0.0
  %4845 = vmatpush1.msra.mxu0 0.0
  %4846 = vmatprep.subr.mxu0 0.0
  %4847 = vmatpush1.msra.mxu0 0.0
  %4848 = vmatprep.subr.mxu0 0.0
  %4849 = vmatpush1.msra.mxu0 0.0
  %4850 = vmatprep.mubr.f32.mxu0 0.0
  %4851 = vmatmul.mubr.f32.gmra.mrb[0].mxu0 %v4784
  %v4852 = vpop.f32.mrb[0].mxu0
  %v4853 = vadd.f32 %v4534, %v4852
  %v4854 = vpop.f32.mrb[0].mxu0
  %4855 = vdwg.mxu0
  %v4856 = vld [vmem:[%s1215] sm:$0x3f]
  %v4857 = vld [vmem:[%s2605] sm:$0x3f]
  %4859 = vrot.lane.b32.xlu0 %v4857, 32
  %v4860 = vpop.permute.xlu0 %4859
  %v4862 = vsel %vm696, %v4856, %v4860
  %v4864 = vsel %vm3047, %v4862, 0
  %4866 = vmatprep.subr.mxu0 0.0
  %4867 = vmatpush1.msra.mxu0 %v4515
  %4868 = vmatprep.subr.mxu0 0.0
  %4869 = vmatpush1.msra.mxu0 %v4516
  %4870 = vmatprep.subr.mxu0 0.0
  %4871 = vmatpush1.msra.mxu0 %v4517
  %4872 = vmatprep.subr.mxu0 0.0
  %4873 = vmatpush1.msra.mxu0 %v4518
  %4874 = vmatprep.subr.mxu0 0.0
  %4875 = vmatpush1.msra.mxu0 %v4519
  %4876 = vmatprep.subr.mxu0 0.0
  %4877 = vmatpush1.msra.mxu0 %v4520
  %4878 = vmatprep.subr.mxu0 0.0
  %4879 = vmatpush1.msra.mxu0 %v4521
  %4880 = vmatprep.subr.mxu0 0.0
  %4881 = vmatpush1.msra.mxu0 %v4522
  %4882 = vmatprep.subr.mxu0 0.0
  %4883 = vmatpush1.msra.mxu0 0.0
  %4884 = vmatprep.subr.mxu0 0.0
  %4885 = vmatpush1.msra.mxu0 0.0
  %4886 = vmatprep.subr.mxu0 0.0
  %4887 = vmatpush1.msra.mxu0 0.0
  %4888 = vmatprep.subr.mxu0 0.0
  %4889 = vmatpush1.msra.mxu0 0.0
  %4890 = vmatprep.subr.mxu0 0.0
  %4891 = vmatpush1.msra.mxu0 0.0
  %4892 = vmatprep.subr.mxu0 0.0
  %4893 = vmatpush1.msra.mxu0 0.0
  %4894 = vmatprep.subr.mxu0 0.0
  %4895 = vmatpush1.msra.mxu0 0.0
  %4896 = vmatprep.subr.mxu0 0.0
  %4897 = vmatpush1.msra.mxu0 0.0
  %4898 = vmatprep.subr.mxu0 0.0
  %4899 = vmatpush1.msra.mxu0 0.0
  %4900 = vmatprep.subr.mxu0 0.0
  %4901 = vmatpush1.msra.mxu0 0.0
  %4902 = vmatprep.subr.mxu0 0.0
  %4903 = vmatpush1.msra.mxu0 0.0
  %4904 = vmatprep.subr.mxu0 0.0
  %4905 = vmatpush1.msra.mxu0 0.0
  %4906 = vmatprep.subr.mxu0 0.0
  %4907 = vmatpush1.msra.mxu0 0.0
  %4908 = vmatprep.subr.mxu0 0.0
  %4909 = vmatpush1.msra.mxu0 0.0
  %4910 = vmatprep.subr.mxu0 0.0
  %4911 = vmatpush1.msra.mxu0 0.0
  %4912 = vmatprep.subr.mxu0 0.0
  %4913 = vmatpush1.msra.mxu0 0.0
  %4914 = vmatprep.subr.mxu0 0.0
  %4915 = vmatpush1.msra.mxu0 0.0
  %4916 = vmatprep.subr.mxu0 0.0
  %4917 = vmatpush1.msra.mxu0 0.0
  %4918 = vmatprep.subr.mxu0 0.0
  %4919 = vmatpush1.msra.mxu0 0.0
  %4920 = vmatprep.subr.mxu0 0.0
  %4921 = vmatpush1.msra.mxu0 0.0
  %4922 = vmatprep.subr.mxu0 0.0
  %4923 = vmatpush1.msra.mxu0 0.0
  %4924 = vmatprep.subr.mxu0 0.0
  %4925 = vmatpush1.msra.mxu0 0.0
  %4926 = vmatprep.subr.mxu0 0.0
  %4927 = vmatpush1.msra.mxu0 0.0
  %4928 = vmatprep.subr.mxu0 0.0
  %4929 = vmatpush1.msra.mxu0 0.0
  %4930 = vmatprep.mubr.f32.mxu0 0.0
  %4931 = vmatmul.mubr.f32.gmra.mrb[0].mxu0 %v4864
  %v4932 = vpop.f32.mrb[0].mxu0
  %v4933 = vadd.f32 %v4534, %v4932
  %v4934 = vpop.f32.mrb[0].mxu0
  %4935 = vdwg.mxu0
  %v4936 = vld [vmem:[%s1318] sm:$0x3f]
  %v4937 = vld [vmem:[%s2502] sm:$0x3f]
  %4939 = vrot.lane.b32.xlu0 %v4937, 32
  %v4940 = vpop.permute.xlu0 %4939
  %v4942 = vsel %vm696, %v4936, %v4940
  %v4944 = vsel %vm3047, %v4942, 0
  %4946 = vmatprep.subr.mxu0 0.0
  %4947 = vmatpush1.msra.mxu0 %v4515
  %4948 = vmatprep.subr.mxu0 0.0
  %4949 = vmatpush1.msra.mxu0 %v4516
  %4950 = vmatprep.subr.mxu0 0.0
  %4951 = vmatpush1.msra.mxu0 %v4517
  %4952 = vmatprep.subr.mxu0 0.0
  %4953 = vmatpush1.msra.mxu0 %v4518
  %4954 = vmatprep.subr.mxu0 0.0
  %4955 = vmatpush1.msra.mxu0 %v4519
  %4956 = vmatprep.subr.mxu0 0.0
  %4957 = vmatpush1.msra.mxu0 %v4520
  %4958 = vmatprep.subr.mxu0 0.0
  %4959 = vmatpush1.msra.mxu0 %v4521
  %4960 = vmatprep.subr.mxu0 0.0
  %4961 = vmatpush1.msra.mxu0 %v4522
  %4962 = vmatprep.subr.mxu0 0.0
  %4963 = vmatpush1.msra.mxu0 0.0
  %4964 = vmatprep.subr.mxu0 0.0
  %4965 = vmatpush1.msra.mxu0 0.0
  %4966 = vmatprep.subr.mxu0 0.0
  %4967 = vmatpush1.msra.mxu0 0.0
  %4968 = vmatprep.subr.mxu0 0.0
  %4969 = vmatpush1.msra.mxu0 0.0
  %4970 = vmatprep.subr.mxu0 0.0
  %4971 = vmatpush1.msra.mxu0 0.0
  %4972 = vmatprep.subr.mxu0 0.0
  %4973 = vmatpush1.msra.mxu0 0.0
  %4974 = vmatprep.subr.mxu0 0.0
  %4975 = vmatpush1.msra.mxu0 0.0
  %4976 = vmatprep.subr.mxu0 0.0
  %4977 = vmatpush1.msra.mxu0 0.0
  %4978 = vmatprep.subr.mxu0 0.0
  %4979 = vmatpush1.msra.mxu0 0.0
  %4980 = vmatprep.subr.mxu0 0.0
  %4981 = vmatpush1.msra.mxu0 0.0
  %4982 = vmatprep.subr.mxu0 0.0
  %4983 = vmatpush1.msra.mxu0 0.0
  %4984 = vmatprep.subr.mxu0 0.0
  %4985 = vmatpush1.msra.mxu0 0.0
  %4986 = vmatprep.subr.mxu0 0.0
  %4987 = vmatpush1.msra.mxu0 0.0
  %4988 = vmatprep.subr.mxu0 0.0
  %4989 = vmatpush1.msra.mxu0 0.0
  %4990 = vmatprep.subr.mxu0 0.0
  %4991 = vmatpush1.msra.mxu0 0.0
  %4992 = vmatprep.subr.mxu0 0.0
  %4993 = vmatpush1.msra.mxu0 0.0
  %4994 = vmatprep.subr.mxu0 0.0
  %4995 = vmatpush1.msra.mxu0 0.0
  %4996 = vmatprep.subr.mxu0 0.0
  %4997 = vmatpush1.msra.mxu0 0.0
  %4998 = vmatprep.subr.mxu0 0.0
  %4999 = vmatpush1.msra.mxu0 0.0
  %5000 = vmatprep.subr.mxu0 0.0
  %5001 = vmatpush1.msra.mxu0 0.0
  %5002 = vmatprep.subr.mxu0 0.0
  %5003 = vmatpush1.msra.mxu0 0.0
  %5004 = vmatprep.subr.mxu0 0.0
  %5005 = vmatpush1.msra.mxu0 0.0
  %5006 = vmatprep.subr.mxu0 0.0
  %5007 = vmatpush1.msra.mxu0 0.0
  %5008 = vmatprep.subr.mxu0 0.0
  %5009 = vmatpush1.msra.mxu0 0.0
  %5010 = vmatprep.mubr.f32.mxu0 0.0
  %5011 = vmatmul.mubr.f32.gmra.mrb[0].mxu0 %v4944
  %v5012 = vpop.f32.mrb[0].mxu0
  %v5013 = vadd.f32 %v4534, %v5012
  %v5014 = vpop.f32.mrb[0].mxu0
  %5015 = vdwg.mxu0
  %v5016 = vld [vmem:[%s1421] sm:$0x3f]
  %v5017 = vld [vmem:[%s2399] sm:$0x3f]
  %5019 = vrot.lane.b32.xlu0 %v5017, 32
  %v5020 = vpop.permute.xlu0 %5019
  %v5022 = vsel %vm696, %v5016, %v5020
  %v5024 = vsel %vm3047, %v5022, 0
  %5026 = vmatprep.subr.mxu0 0.0
  %5027 = vmatpush1.msra.mxu0 %v4515
  %5028 = vmatprep.subr.mxu0 0.0
  %5029 = vmatpush1.msra.mxu0 %v4516
  %5030 = vmatprep.subr.mxu0 0.0
  %5031 = vmatpush1.msra.mxu0 %v4517
  %5032 = vmatprep.subr.mxu0 0.0
  %5033 = vmatpush1.msra.mxu0 %v4518
  %5034 = vmatprep.subr.mxu0 0.0
  %5035 = vmatpush1.msra.mxu0 %v4519
  %5036 = vmatprep.subr.mxu0 0.0
  %5037 = vmatpush1.msra.mxu0 %v4520
  %5038 = vmatprep.subr.mxu0 0.0
  %5039 = vmatpush1.msra.mxu0 %v4521
  %5040 = vmatprep.subr.mxu0 0.0
  %5041 = vmatpush1.msra.mxu0 %v4522
  %5042 = vmatprep.subr.mxu0 0.0
  %5043 = vmatpush1.msra.mxu0 0.0
  %5044 = vmatprep.subr.mxu0 0.0
  %5045 = vmatpush1.msra.mxu0 0.0
  %5046 = vmatprep.subr.mxu0 0.0
  %5047 = vmatpush1.msra.mxu0 0.0
  %5048 = vmatprep.subr.mxu0 0.0
  %5049 = vmatpush1.msra.mxu0 0.0
  %5050 = vmatprep.subr.mxu0 0.0
  %5051 = vmatpush1.msra.mxu0 0.0
  %5052 = vmatprep.subr.mxu0 0.0
  %5053 = vmatpush1.msra.mxu0 0.0
  %5054 = vmatprep.subr.mxu0 0.0
  %5055 = vmatpush1.msra.mxu0 0.0
  %5056 = vmatprep.subr.mxu0 0.0
  %5057 = vmatpush1.msra.mxu0 0.0
  %5058 = vmatprep.subr.mxu0 0.0
  %5059 = vmatpush1.msra.mxu0 0.0
  %5060 = vmatprep.subr.mxu0 0.0
  %5061 = vmatpush1.msra.mxu0 0.0
  %5062 = vmatprep.subr.mxu0 0.0
  %5063 = vmatpush1.msra.mxu0 0.0
  %5064 = vmatprep.subr.mxu0 0.0
  %5065 = vmatpush1.msra.mxu0 0.0
  %5066 = vmatprep.subr.mxu0 0.0
  %5067 = vmatpush1.msra.mxu0 0.0
  %5068 = vmatprep.subr.mxu0 0.0
  %5069 = vmatpush1.msra.mxu0 0.0
  %5070 = vmatprep.subr.mxu0 0.0
  %5071 = vmatpush1.msra.mxu0 0.0
  %5072 = vmatprep.subr.mxu0 0.0
  %5073 = vmatpush1.msra.mxu0 0.0
  %5074 = vmatprep.subr.mxu0 0.0
  %5075 = vmatpush1.msra.mxu0 0.0
  %5076 = vmatprep.subr.mxu0 0.0
  %5077 = vmatpush1.msra.mxu0 0.0
  %5078 = vmatprep.subr.mxu0 0.0
  %5079 = vmatpush1.msra.mxu0 0.0
  %5080 = vmatprep.subr.mxu0 0.0
  %5081 = vmatpush1.msra.mxu0 0.0
  %5082 = vmatprep.subr.mxu0 0.0
  %5083 = vmatpush1.msra.mxu0 0.0
  %5084 = vmatprep.subr.mxu0 0.0
  %5085 = vmatpush1.msra.mxu0 0.0
  %5086 = vmatprep.subr.mxu0 0.0
  %5087 = vmatpush1.msra.mxu0 0.0
  %5088 = vmatprep.subr.mxu0 0.0
  %5089 = vmatpush1.msra.mxu0 0.0
  %5090 = vmatprep.mubr.f32.mxu0 0.0
  %5091 = vmatmul.mubr.f32.gmra.mrb[0].mxu0 %v5024
  %v5092 = vpop.f32.mrb[0].mxu0
  %v5093 = vadd.f32 %v4534, %v5092
  %v5094 = vpop.f32.mrb[0].mxu0
  %5095 = vdwg.mxu0
  %v5096 = vld [vmem:[%s1524] sm:$0x3f]
  %v5097 = vld [vmem:[%s2296] sm:$0x3f]
  %5099 = vrot.lane.b32.xlu0 %v5097, 32
  %v5100 = vpop.permute.xlu0 %5099
  %v5102 = vsel %vm696, %v5096, %v5100
  %v5104 = vsel %vm3047, %v5102, 0
  %5106 = vmatprep.subr.mxu0 0.0
  %5107 = vmatpush1.msra.mxu0 %v4515
  %5108 = vmatprep.subr.mxu0 0.0
  %5109 = vmatpush1.msra.mxu0 %v4516
  %5110 = vmatprep.subr.mxu0 0.0
  %5111 = vmatpush1.msra.mxu0 %v4517
  %5112 = vmatprep.subr.mxu0 0.0
  %5113 = vmatpush1.msra.mxu0 %v4518
  %5114 = vmatprep.subr.mxu0 0.0
  %5115 = vmatpush1.msra.mxu0 %v4519
  %5116 = vmatprep.subr.mxu0 0.0
  %5117 = vmatpush1.msra.mxu0 %v4520
  %5118 = vmatprep.subr.mxu0 0.0
  %5119 = vmatpush1.msra.mxu0 %v4521
  %5120 = vmatprep.subr.mxu0 0.0
  %5121 = vmatpush1.msra.mxu0 %v4522
  %5122 = vmatprep.subr.mxu0 0.0
  %5123 = vmatpush1.msra.mxu0 0.0
  %5124 = vmatprep.subr.mxu0 0.0
  %5125 = vmatpush1.msra.mxu0 0.0
  %5126 = vmatprep.subr.mxu0 0.0
  %5127 = vmatpush1.msra.mxu0 0.0
  %5128 = vmatprep.subr.mxu0 0.0
  %5129 = vmatpush1.msra.mxu0 0.0
  %5130 = vmatprep.subr.mxu0 0.0
  %5131 = vmatpush1.msra.mxu0 0.0
  %5132 = vmatprep.subr.mxu0 0.0
  %5133 = vmatpush1.msra.mxu0 0.0
  %5134 = vmatprep.subr.mxu0 0.0
  %5135 = vmatpush1.msra.mxu0 0.0
  %5136 = vmatprep.subr.mxu0 0.0
  %5137 = vmatpush1.msra.mxu0 0.0
  %5138 = vmatprep.subr.mxu0 0.0
  %5139 = vmatpush1.msra.mxu0 0.0
  %5140 = vmatprep.subr.mxu0 0.0
  %5141 = vmatpush1.msra.mxu0 0.0
  %5142 = vmatprep.subr.mxu0 0.0
  %5143 = vmatpush1.msra.mxu0 0.0
  %5144 = vmatprep.subr.mxu0 0.0
  %5145 = vmatpush1.msra.mxu0 0.0
  %5146 = vmatprep.subr.mxu0 0.0
  %5147 = vmatpush1.msra.mxu0 0.0
  %5148 = vmatprep.subr.mxu0 0.0
  %5149 = vmatpush1.msra.mxu0 0.0
  %5150 = vmatprep.subr.mxu0 0.0
  %5151 = vmatpush1.msra.mxu0 0.0
  %5152 = vmatprep.subr.mxu0 0.0
  %5153 = vmatpush1.msra.mxu0 0.0
  %5154 = vmatprep.subr.mxu0 0.0
  %5155 = vmatpush1.msra.mxu0 0.0
  %5156 = vmatprep.subr.mxu0 0.0
  %5157 = vmatpush1.msra.mxu0 0.0
  %5158 = vmatprep.subr.mxu0 0.0
  %5159 = vmatpush1.msra.mxu0 0.0
  %5160 = vmatprep.subr.mxu0 0.0
  %5161 = vmatpush1.msra.mxu0 0.0
  %5162 = vmatprep.subr.mxu0 0.0
  %5163 = vmatpush1.msra.mxu0 0.0
  %5164 = vmatprep.subr.mxu0 0.0
  %5165 = vmatpush1.msra.mxu0 0.0
  %5166 = vmatprep.subr.mxu0 0.0
  %5167 = vmatpush1.msra.mxu0 0.0
  %5168 = vmatprep.subr.mxu0 0.0
  %5169 = vmatpush1.msra.mxu0 0.0
  %5170 = vmatprep.mubr.f32.mxu0 0.0
  %5171 = vmatmul.mubr.f32.gmra.mrb[0].mxu0 %v5104
  %v5172 = vpop.f32.mrb[0].mxu0
  %v5173 = vadd.f32 %v4534, %v5172
  %v5174 = vpop.f32.mrb[0].mxu0
  %5175 = vdwg.mxu0
  %s5176 = scalar_lea.vmem %s5, 24
  %v5177 = vld [vmem:[%s5176] sm:$0x3f]
  %s5178 = scalar_lea.vmem %s6, 24
  %v5179 = vld [vmem:[%s5178] sm:$0x3f]
  %v5181 = vsel %vm696, %v5177, 0
  %5183 = vmatprep.subr.mxu0 0.0
  %5184 = vmatpush1.msra.mxu0 %v4524
  %5185 = vmatprep.subr.mxu0 0.0
  %5186 = vmatpush1.msra.mxu0 %v4525
  %5187 = vmatprep.subr.mxu0 0.0
  %5188 = vmatpush1.msra.mxu0 %v4526
  %5189 = vmatprep.subr.mxu0 0.0
  %5190 = vmatpush1.msra.mxu0 %v4527
  %5191 = vmatprep.subr.mxu0 0.0
  %5192 = vmatpush1.msra.mxu0 0.0
  %5193 = vmatprep.subr.mxu0 0.0
  %5194 = vmatpush1.msra.mxu0 0.0
  %5195 = vmatprep.subr.mxu0 0.0
  %5196 = vmatpush1.msra.mxu0 0.0
  %5197 = vmatprep.subr.mxu0 0.0
  %5198 = vmatpush1.msra.mxu0 0.0
  %5199 = vmatprep.subr.mxu0 0.0
  %5200 = vmatpush1.msra.mxu0 0.0
  %5201 = vmatprep.subr.mxu0 0.0
  %5202 = vmatpush1.msra.mxu0 0.0
  %5203 = vmatprep.subr.mxu0 0.0
  %5204 = vmatpush1.msra.mxu0 0.0
  %5205 = vmatprep.subr.mxu0 0.0
  %5206 = vmatpush1.msra.mxu0 0.0
  %5207 = vmatprep.subr.mxu0 0.0
  %5208 = vmatpush1.msra.mxu0 0.0
  %5209 = vmatprep.subr.mxu0 0.0
  %5210 = vmatpush1.msra.mxu0 0.0
  %5211 = vmatprep.subr.mxu0 0.0
  %5212 = vmatpush1.msra.mxu0 0.0
  %5213 = vmatprep.subr.mxu0 0.0
  %5214 = vmatpush1.msra.mxu0 0.0
  %5215 = vmatprep.subr.mxu0 0.0
  %5216 = vmatpush1.msra.mxu0 0.0
  %5217 = vmatprep.subr.mxu0 0.0
  %5218 = vmatpush1.msra.mxu0 0.0
  %5219 = vmatprep.subr.mxu0 0.0
  %5220 = vmatpush1.msra.mxu0 0.0
  %5221 = vmatprep.subr.mxu0 0.0
  %5222 = vmatpush1.msra.mxu0 0.0
  %5223 = vmatprep.subr.mxu0 0.0
  %5224 = vmatpush1.msra.mxu0 0.0
  %5225 = vmatprep.subr.mxu0 0.0
  %5226 = vmatpush1.msra.mxu0 0.0
  %5227 = vmatprep.subr.mxu0 0.0
  %5228 = vmatpush1.msra.mxu0 0.0
  %5229 = vmatprep.subr.mxu0 0.0
  %5230 = vmatpush1.msra.mxu0 0.0
  %5231 = vmatprep.subr.mxu0 0.0
  %5232 = vmatpush1.msra.mxu0 0.0
  %5233 = vmatprep.subr.mxu0 0.0
  %5234 = vmatpush1.msra.mxu0 0.0
  %5235 = vmatprep.subr.mxu0 0.0
  %5236 = vmatpush1.msra.mxu0 0.0
  %5237 = vmatprep.subr.mxu0 0.0
  %5238 = vmatpush1.msra.mxu0 0.0
  %5239 = vmatprep.subr.mxu0 0.0
  %5240 = vmatpush1.msra.mxu0 0.0
  %5241 = vmatprep.subr.mxu0 0.0
  %5242 = vmatpush1.msra.mxu0 0.0
  %5243 = vmatprep.subr.mxu0 0.0
  %5244 = vmatpush1.msra.mxu0 0.0
  %5245 = vmatprep.subr.mxu0 0.0
  %5246 = vmatpush1.msra.mxu0 0.0
  %5247 = vmatprep.mubr.f32.mxu0 0.0
  %5248 = vmatmul.mubr.f32.gmra.mrb[0].mxu0 %v5181
  %v5249 = vpop.f32.mrb[0].mxu0
  %v5250 = vadd.f32 0.0, %v5249
  %v5251 = vpop.f32.mrb[0].mxu0
  %5252 = vdwg.mxu0
  %v5253 = vadd.f32 %v5173, %v5250
  %v5254 = vxor.u32 %v5253, 2147483648
  %v5255 = vmul.f32 %v5254, 1.442695
  %v5256 = vpow.pop %v5255
  %v5257 = vadd.f32 %v5256, 1.0
  %v5258 = vrcp.pop %v5257
  %v5259 = vmul.f32 1.0, %v5258
  %v5260 = vtanh.pop %v5253
  %5262 = vrot.lane.b32.xlu0 %v5179, 32
  %v5263 = vpop.permute.xlu0 %5262
  %v5265 = vmul.f32 %v5259, %v5263
  %5267 = vrot.lane.b32.xlu0 %v5260, 64
  %v5268 = vpop.permute.xlu0 %5267
  %v5270 = vmul.f32 %v5259, %v5268
  %5272 = vrot.lane.b32.xlu0 %v5270, 32
  %v5273 = vpop.permute.xlu0 %5272
  %v5275 = vadd.f32 %v5265, %v5273
  %v5276 = vtanh.pop %v5275
  %5278 = vrot.lane.b32.xlu0 %v5276, 64
  %v5279 = vpop.permute.xlu0 %5278
  %v5281 = vmul.f32 %v5259, %v5279
  %5283 = vrot.lane.b32.xlu0 %v5281, 32
  %v5284 = vpop.permute.xlu0 %5283
  %s5286 = scalar_lea.vmem [#allocation2], 248
  %5287 = vst.msk [vmem:[%s5286] sm:$0x3f] %vm803, %v5284
  %v5288 = vsel %vm696, %v5284, 0
  %5290 = vmatprep.subr.mxu0 0.0
  %5291 = vmatpush1.msra.mxu0 %v4524
  %5292 = vmatprep.subr.mxu0 0.0
  %5293 = vmatpush1.msra.mxu0 %v4525
  %5294 = vmatprep.subr.mxu0 0.0
  %5295 = vmatpush1.msra.mxu0 %v4526
  %5296 = vmatprep.subr.mxu0 0.0
  %5297 = vmatpush1.msra.mxu0 %v4527
  %5298 = vmatprep.subr.mxu0 0.0
  %5299 = vmatpush1.msra.mxu0 0.0
  %5300 = vmatprep.subr.mxu0 0.0
  %5301 = vmatpush1.msra.mxu0 0.0
  %5302 = vmatprep.subr.mxu0 0.0
  %5303 = vmatpush1.msra.mxu0 0.0
  %5304 = vmatprep.subr.mxu0 0.0
  %5305 = vmatpush1.msra.mxu0 0.0
  %5306 = vmatprep.subr.mxu0 0.0
  %5307 = vmatpush1.msra.mxu0 0.0
  %5308 = vmatprep.subr.mxu0 0.0
  %5309 = vmatpush1.msra.mxu0 0.0
  %5310 = vmatprep.subr.mxu0 0.0
  %5311 = vmatpush1.msra.mxu0 0.0
  %5312 = vmatprep.subr.mxu0 0.0
  %5313 = vmatpush1.msra.mxu0 0.0
  %5314 = vmatprep.subr.mxu0 0.0
  %5315 = vmatpush1.msra.mxu0 0.0
  %5316 = vmatprep.subr.mxu0 0.0
  %5317 = vmatpush1.msra.mxu0 0.0
  %5318 = vmatprep.subr.mxu0 0.0
  %5319 = vmatpush1.msra.mxu0 0.0
  %5320 = vmatprep.subr.mxu0 0.0
  %5321 = vmatpush1.msra.mxu0 0.0
  %5322 = vmatprep.subr.mxu0 0.0
  %5323 = vmatpush1.msra.mxu0 0.0
  %5324 = vmatprep.subr.mxu0 0.0
  %5325 = vmatpush1.msra.mxu0 0.0
  %5326 = vmatprep.subr.mxu0 0.0
  %5327 = vmatpush1.msra.mxu0 0.0
  %5328 = vmatprep.subr.mxu0 0.0
  %5329 = vmatpush1.msra.mxu0 0.0
  %5330 = vmatprep.subr.mxu0 0.0
  %5331 = vmatpush1.msra.mxu0 0.0
  %5332 = vmatprep.subr.mxu0 0.0
  %5333 = vmatpush1.msra.mxu0 0.0
  %5334 = vmatprep.subr.mxu0 0.0
  %5335 = vmatpush1.msra.mxu0 0.0
  %5336 = vmatprep.subr.mxu0 0.0
  %5337 = vmatpush1.msra.mxu0 0.0
  %5338 = vmatprep.subr.mxu0 0.0
  %5339 = vmatpush1.msra.mxu0 0.0
  %5340 = vmatprep.subr.mxu0 0.0
  %5341 = vmatpush1.msra.mxu0 0.0
  %5342 = vmatprep.subr.mxu0 0.0
  %5343 = vmatpush1.msra.mxu0 0.0
  %5344 = vmatprep.subr.mxu0 0.0
  %5345 = vmatpush1.msra.mxu0 0.0
  %5346 = vmatprep.subr.mxu0 0.0
  %5347 = vmatpush1.msra.mxu0 0.0
  %5348 = vmatprep.subr.mxu0 0.0
  %5349 = vmatpush1.msra.mxu0 0.0
  %5350 = vmatprep.subr.mxu0 0.0
  %5351 = vmatpush1.msra.mxu0 0.0
  %5352 = vmatprep.subr.mxu0 0.0
  %5353 = vmatpush1.msra.mxu0 0.0
  %5354 = vmatprep.mubr.f32.mxu0 0.0
  %5355 = vmatmul.mubr.f32.gmra.mrb[0].mxu0 %v5288
  %v5356 = vpop.f32.mrb[0].mxu0
  %v5357 = vadd.f32 0.0, %v5356
  %v5358 = vpop.f32.mrb[0].mxu0
  %5359 = vdwg.mxu0
  %v5360 = vadd.f32 %v5093, %v5357
  %v5361 = vxor.u32 %v5360, 2147483648
  %v5362 = vmul.f32 %v5361, 1.442695
  %v5363 = vpow.pop %v5362
  %v5364 = vadd.f32 %v5363, 1.0
  %v5365 = vrcp.pop %v5364
  %v5366 = vmul.f32 1.0, %v5365
  %v5367 = vtanh.pop %v5360
  %v5368 = vmul.f32 %v5366, %v5275
  %5370 = vrot.lane.b32.xlu0 %v5367, 64
  %v5371 = vpop.permute.xlu0 %5370
  %v5373 = vmul.f32 %v5366, %v5371
  %5375 = vrot.lane.b32.xlu0 %v5373, 32
  %v5376 = vpop.permute.xlu0 %5375
  %v5378 = vadd.f32 %v5368, %v5376
  %v5379 = vtanh.pop %v5378
  %5381 = vrot.lane.b32.xlu0 %v5379, 64
  %v5382 = vpop.permute.xlu0 %5381
  %v5384 = vmul.f32 %v5366, %v5382
  %5386 = vrot.lane.b32.xlu0 %v5384, 32
  %v5387 = vpop.permute.xlu0 %5386
  %s5389 = scalar_lea.vmem [#allocation2], 240
  %5390 = vst.msk [vmem:[%s5389] sm:$0x3f] %vm803, %v5387
  %v5391 = vsel %vm696, %v5387, 0
  %5393 = vmatprep.subr.mxu0 0.0
  %5394 = vmatpush1.msra.mxu0 %v4524
  %5395 = vmatprep.subr.mxu0 0.0
  %5396 = vmatpush1.msra.mxu0 %v4525
  %5397 = vmatprep.subr.mxu0 0.0
  %5398 = vmatpush1.msra.mxu0 %v4526
  %5399 = vmatprep.subr.mxu0 0.0
  %5400 = vmatpush1.msra.mxu0 %v4527
  %5401 = vmatprep.subr.mxu0 0.0
  %5402 = vmatpush1.msra.mxu0 0.0
  %5403 = vmatprep.subr.mxu0 0.0
  %5404 = vmatpush1.msra.mxu0 0.0
  %5405 = vmatprep.subr.mxu0 0.0
  %5406 = vmatpush1.msra.mxu0 0.0
  %5407 = vmatprep.subr.mxu0 0.0
  %5408 = vmatpush1.msra.mxu0 0.0
  %5409 = vmatprep.subr.mxu0 0.0
  %5410 = vmatpush1.msra.mxu0 0.0
  %5411 = vmatprep.subr.mxu0 0.0
  %5412 = vmatpush1.msra.mxu0 0.0
  %5413 = vmatprep.subr.mxu0 0.0
  %5414 = vmatpush1.msra.mxu0 0.0
  %5415 = vmatprep.subr.mxu0 0.0
  %5416 = vmatpush1.msra.mxu0 0.0
  %5417 = vmatprep.subr.mxu0 0.0
  %5418 = vmatpush1.msra.mxu0 0.0
  %5419 = vmatprep.subr.mxu0 0.0
  %5420 = vmatpush1.msra.mxu0 0.0
  %5421 = vmatprep.subr.mxu0 0.0
  %5422 = vmatpush1.msra.mxu0 0.0
  %5423 = vmatprep.subr.mxu0 0.0
  %5424 = vmatpush1.msra.mxu0 0.0
  %5425 = vmatprep.subr.mxu0 0.0
  %5426 = vmatpush1.msra.mxu0 0.0
  %5427 = vmatprep.subr.mxu0 0.0
  %5428 = vmatpush1.msra.mxu0 0.0
  %5429 = vmatprep.subr.mxu0 0.0
  %5430 = vmatpush1.msra.mxu0 0.0
  %5431 = vmatprep.subr.mxu0 0.0
  %5432 = vmatpush1.msra.mxu0 0.0
  %5433 = vmatprep.subr.mxu0 0.0
  %5434 = vmatpush1.msra.mxu0 0.0
  %5435 = vmatprep.subr.mxu0 0.0
  %5436 = vmatpush1.msra.mxu0 0.0
  %5437 = vmatprep.subr.mxu0 0.0
  %5438 = vmatpush1.msra.mxu0 0.0
  %5439 = vmatprep.subr.mxu0 0.0
  %5440 = vmatpush1.msra.mxu0 0.0
  %5441 = vmatprep.subr.mxu0 0.0
  %5442 = vmatpush1.msra.mxu0 0.0
  %5443 = vmatprep.subr.mxu0 0.0
  %5444 = vmatpush1.msra.mxu0 0.0
  %5445 = vmatprep.subr.mxu0 0.0
  %5446 = vmatpush1.msra.mxu0 0.0
  %5447 = vmatprep.subr.mxu0 0.0
  %5448 = vmatpush1.msra.mxu0 0.0
  %5449 = vmatprep.subr.mxu0 0.0
  %5450 = vmatpush1.msra.mxu0 0.0
  %5451 = vmatprep.subr.mxu0 0.0
  %5452 = vmatpush1.msra.mxu0 0.0
  %5453 = vmatprep.subr.mxu0 0.0
  %5454 = vmatpush1.msra.mxu0 0.0
  %5455 = vmatprep.subr.mxu0 0.0
  %5456 = vmatpush1.msra.mxu0 0.0
  %5457 = vmatprep.mubr.f32.mxu0 0.0
  %5458 = vmatmul.mubr.f32.gmra.mrb[0].mxu0 %v5391
  %v5459 = vpop.f32.mrb[0].mxu0
  %v5460 = vadd.f32 0.0, %v5459
  %v5461 = vpop.f32.mrb[0].mxu0
  %5462 = vdwg.mxu0
  %v5463 = vadd.f32 %v5013, %v5460
  %v5464 = vxor.u32 %v5463, 2147483648
  %v5465 = vmul.f32 %v5464, 1.442695
  %v5466 = vpow.pop %v5465
  %v5467 = vadd.f32 %v5466, 1.0
  %v5468 = vrcp.pop %v5467
  %v5469 = vmul.f32 1.0, %v5468
  %v5470 = vtanh.pop %v5463
  %v5471 = vmul.f32 %v5469, %v5378
  %5473 = vrot.lane.b32.xlu0 %v5470, 64
  %v5474 = vpop.permute.xlu0 %5473
  %v5476 = vmul.f32 %v5469, %v5474
  %5478 = vrot.lane.b32.xlu0 %v5476, 32
  %v5479 = vpop.permute.xlu0 %5478
  %v5481 = vadd.f32 %v5471, %v5479
  %v5482 = vtanh.pop %v5481
  %5484 = vrot.lane.b32.xlu0 %v5482, 64
  %v5485 = vpop.permute.xlu0 %5484
  %v5487 = vmul.f32 %v5469, %v5485
  %5489 = vrot.lane.b32.xlu0 %v5487, 32
  %v5490 = vpop.permute.xlu0 %5489
  %s5492 = scalar_lea.vmem [#allocation2], 232
  %5493 = vst.msk [vmem:[%s5492] sm:$0x3f] %vm803, %v5490
  %v5494 = vsel %vm696, %v5490, 0
  %5496 = vmatprep.subr.mxu0 0.0
  %5497 = vmatpush1.msra.mxu0 %v4524
  %5498 = vmatprep.subr.mxu0 0.0
  %5499 = vmatpush1.msra.mxu0 %v4525
  %5500 = vmatprep.subr.mxu0 0.0
  %5501 = vmatpush1.msra.mxu0 %v4526
  %5502 = vmatprep.subr.mxu0 0.0
  %5503 = vmatpush1.msra.mxu0 %v4527
  %5504 = vmatprep.subr.mxu0 0.0
  %5505 = vmatpush1.msra.mxu0 0.0
  %5506 = vmatprep.subr.mxu0 0.0
  %5507 = vmatpush1.msra.mxu0 0.0
  %5508 = vmatprep.subr.mxu0 0.0
  %5509 = vmatpush1.msra.mxu0 0.0
  %5510 = vmatprep.subr.mxu0 0.0
  %5511 = vmatpush1.msra.mxu0 0.0
  %5512 = vmatprep.subr.mxu0 0.0
  %5513 = vmatpush1.msra.mxu0 0.0
  %5514 = vmatprep.subr.mxu0 0.0
  %5515 = vmatpush1.msra.mxu0 0.0
  %5516 = vmatprep.subr.mxu0 0.0
  %5517 = vmatpush1.msra.mxu0 0.0
  %5518 = vmatprep.subr.mxu0 0.0
  %5519 = vmatpush1.msra.mxu0 0.0
  %5520 = vmatprep.subr.mxu0 0.0
  %5521 = vmatpush1.msra.mxu0 0.0
  %5522 = vmatprep.subr.mxu0 0.0
  %5523 = vmatpush1.msra.mxu0 0.0
  %5524 = vmatprep.subr.mxu0 0.0
  %5525 = vmatpush1.msra.mxu0 0.0
  %5526 = vmatprep.subr.mxu0 0.0
  %5527 = vmatpush1.msra.mxu0 0.0
  %5528 = vmatprep.subr.mxu0 0.0
  %5529 = vmatpush1.msra.mxu0 0.0
  %5530 = vmatprep.subr.mxu0 0.0
  %5531 = vmatpush1.msra.mxu0 0.0
  %5532 = vmatprep.subr.mxu0 0.0
  %5533 = vmatpush1.msra.mxu0 0.0
  %5534 = vmatprep.subr.mxu0 0.0
  %5535 = vmatpush1.msra.mxu0 0.0
  %5536 = vmatprep.subr.mxu0 0.0
  %5537 = vmatpush1.msra.mxu0 0.0
  %5538 = vmatprep.subr.mxu0 0.0
  %5539 = vmatpush1.msra.mxu0 0.0
  %5540 = vmatprep.subr.mxu0 0.0
  %5541 = vmatpush1.msra.mxu0 0.0
  %5542 = vmatprep.subr.mxu0 0.0
  %5543 = vmatpush1.msra.mxu0 0.0
  %5544 = vmatprep.subr.mxu0 0.0
  %5545 = vmatpush1.msra.mxu0 0.0
  %5546 = vmatprep.subr.mxu0 0.0
  %5547 = vmatpush1.msra.mxu0 0.0
  %5548 = vmatprep.subr.mxu0 0.0
  %5549 = vmatpush1.msra.mxu0 0.0
  %5550 = vmatprep.subr.mxu0 0.0
  %5551 = vmatpush1.msra.mxu0 0.0
  %5552 = vmatprep.subr.mxu0 0.0
  %5553 = vmatpush1.msra.mxu0 0.0
  %5554 = vmatprep.subr.mxu0 0.0
  %5555 = vmatpush1.msra.mxu0 0.0
  %5556 = vmatprep.subr.mxu0 0.0
  %5557 = vmatpush1.msra.mxu0 0.0
  %5558 = vmatprep.subr.mxu0 0.0
  %5559 = vmatpush1.msra.mxu0 0.0
  %5560 = vmatprep.mubr.f32.mxu0 0.0
  %5561 = vmatmul.mubr.f32.gmra.mrb[0].mxu0 %v5494
  %v5562 = vpop.f32.mrb[0].mxu0
  %v5563 = vadd.f32 0.0, %v5562
  %v5564 = vpop.f32.mrb[0].mxu0
  %5565 = vdwg.mxu0
  %v5566 = vadd.f32 %v4933, %v5563
  %v5567 = vxor.u32 %v5566, 2147483648
  %v5568 = vmul.f32 %v5567, 1.442695
  %v5569 = vpow.pop %v5568
  %v5570 = vadd.f32 %v5569, 1.0
  %v5571 = vrcp.pop %v5570
  %v5572 = vmul.f32 1.0, %v5571
  %v5573 = vtanh.pop %v5566
  %v5574 = vmul.f32 %v5572, %v5481
  %5576 = vrot.lane.b32.xlu0 %v5573, 64
  %v5577 = vpop.permute.xlu0 %5576
  %v5579 = vmul.f32 %v5572, %v5577
  %5581 = vrot.lane.b32.xlu0 %v5579, 32
  %v5582 = vpop.permute.xlu0 %5581
  %v5584 = vadd.f32 %v5574, %v5582
  %v5585 = vtanh.pop %v5584
  %5587 = vrot.lane.b32.xlu0 %v5585, 64
  %v5588 = vpop.permute.xlu0 %5587
  %v5590 = vmul.f32 %v5572, %v5588
  %5592 = vrot.lane.b32.xlu0 %v5590, 32
  %v5593 = vpop.permute.xlu0 %5592
  %s5595 = scalar_lea.vmem [#allocation2], 224
  %5596 = vst.msk [vmem:[%s5595] sm:$0x3f] %vm803, %v5593
  %v5597 = vsel %vm696, %v5593, 0
  %5599 = vmatprep.subr.mxu0 0.0
  %5600 = vmatpush1.msra.mxu0 %v4524
  %5601 = vmatprep.subr.mxu0 0.0
  %5602 = vmatpush1.msra.mxu0 %v4525
  %5603 = vmatprep.subr.mxu0 0.0
  %5604 = vmatpush1.msra.mxu0 %v4526
  %5605 = vmatprep.subr.mxu0 0.0
  %5606 = vmatpush1.msra.mxu0 %v4527
  %5607 = vmatprep.subr.mxu0 0.0
  %5608 = vmatpush1.msra.mxu0 0.0
  %5609 = vmatprep.subr.mxu0 0.0
  %5610 = vmatpush1.msra.mxu0 0.0
  %5611 = vmatprep.subr.mxu0 0.0
  %5612 = vmatpush1.msra.mxu0 0.0
  %5613 = vmatprep.subr.mxu0 0.0
  %5614 = vmatpush1.msra.mxu0 0.0
  %5615 = vmatprep.subr.mxu0 0.0
  %5616 = vmatpush1.msra.mxu0 0.0
  %5617 = vmatprep.subr.mxu0 0.0
  %5618 = vmatpush1.msra.mxu0 0.0
  %5619 = vmatprep.subr.mxu0 0.0
  %5620 = vmatpush1.msra.mxu0 0.0
  %5621 = vmatprep.subr.mxu0 0.0
  %5622 = vmatpush1.msra.mxu0 0.0
  %5623 = vmatprep.subr.mxu0 0.0
  %5624 = vmatpush1.msra.mxu0 0.0
  %5625 = vmatprep.subr.mxu0 0.0
  %5626 = vmatpush1.msra.mxu0 0.0
  %5627 = vmatprep.subr.mxu0 0.0
  %5628 = vmatpush1.msra.mxu0 0.0
  %5629 = vmatprep.subr.mxu0 0.0
  %5630 = vmatpush1.msra.mxu0 0.0
  %5631 = vmatprep.subr.mxu0 0.0
  %5632 = vmatpush1.msra.mxu0 0.0
  %5633 = vmatprep.subr.mxu0 0.0
  %5634 = vmatpush1.msra.mxu0 0.0
  %5635 = vmatprep.subr.mxu0 0.0
  %5636 = vmatpush1.msra.mxu0 0.0
  %5637 = vmatprep.subr.mxu0 0.0
  %5638 = vmatpush1.msra.mxu0 0.0
  %5639 = vmatprep.subr.mxu0 0.0
  %5640 = vmatpush1.msra.mxu0 0.0
  %5641 = vmatprep.subr.mxu0 0.0
  %5642 = vmatpush1.msra.mxu0 0.0
  %5643 = vmatprep.subr.mxu0 0.0
  %5644 = vmatpush1.msra.mxu0 0.0
  %5645 = vmatprep.subr.mxu0 0.0
  %5646 = vmatpush1.msra.mxu0 0.0
  %5647 = vmatprep.subr.mxu0 0.0
  %5648 = vmatpush1.msra.mxu0 0.0
  %5649 = vmatprep.subr.mxu0 0.0
  %5650 = vmatpush1.msra.mxu0 0.0
  %5651 = vmatprep.subr.mxu0 0.0
  %5652 = vmatpush1.msra.mxu0 0.0
  %5653 = vmatprep.subr.mxu0 0.0
  %5654 = vmatpush1.msra.mxu0 0.0
  %5655 = vmatprep.subr.mxu0 0.0
  %5656 = vmatpush1.msra.mxu0 0.0
  %5657 = vmatprep.subr.mxu0 0.0
  %5658 = vmatpush1.msra.mxu0 0.0
  %5659 = vmatprep.subr.mxu0 0.0
  %5660 = vmatpush1.msra.mxu0 0.0
  %5661 = vmatprep.subr.mxu0 0.0
  %5662 = vmatpush1.msra.mxu0 0.0
  %5663 = vmatprep.mubr.f32.mxu0 0.0
  %5664 = vmatmul.mubr.f32.gmra.mrb[0].mxu0 %v5597
  %v5665 = vpop.f32.mrb[0].mxu0
  %v5666 = vadd.f32 0.0, %v5665
  %v5667 = vpop.f32.mrb[0].mxu0
  %5668 = vdwg.mxu0
  %v5669 = vadd.f32 %v4853, %v5666
  %v5670 = vxor.u32 %v5669, 2147483648
  %v5671 = vmul.f32 %v5670, 1.442695
  %v5672 = vpow.pop %v5671
  %v5673 = vadd.f32 %v5672, 1.0
  %v5674 = vrcp.pop %v5673
  %v5675 = vmul.f32 1.0, %v5674
  %v5676 = vtanh.pop %v5669
  %v5677 = vmul.f32 %v5675, %v5584
  %5679 = vrot.lane.b32.xlu0 %v5676, 64
  %v5680 = vpop.permute.xlu0 %5679
  %v5682 = vmul.f32 %v5675, %v5680
  %5684 = vrot.lane.b32.xlu0 %v5682, 32
  %v5685 = vpop.permute.xlu0 %5684
  %v5687 = vadd.f32 %v5677, %v5685
  %v5688 = vtanh.pop %v5687
  %5690 = vrot.lane.b32.xlu0 %v5688, 64
  %v5691 = vpop.permute.xlu0 %5690
  %v5693 = vmul.f32 %v5675, %v5691
  %5695 = vrot.lane.b32.xlu0 %v5693, 32
  %v5696 = vpop.permute.xlu0 %5695
  %s5698 = scalar_lea.vmem [#allocation2], 216
  %5699 = vst.msk [vmem:[%s5698] sm:$0x3f] %vm803, %v5696
  %v5700 = vsel %vm696, %v5696, 0
  %5702 = vmatprep.subr.mxu0 0.0
  %5703 = vmatpush1.msra.mxu0 %v4524
  %5704 = vmatprep.subr.mxu0 0.0
  %5705 = vmatpush1.msra.mxu0 %v4525
  %5706 = vmatprep.subr.mxu0 0.0
  %5707 = vmatpush1.msra.mxu0 %v4526
  %5708 = vmatprep.subr.mxu0 0.0
  %5709 = vmatpush1.msra.mxu0 %v4527
  %5710 = vmatprep.subr.mxu0 0.0
  %5711 = vmatpush1.msra.mxu0 0.0
  %5712 = vmatprep.subr.mxu0 0.0
  %5713 = vmatpush1.msra.mxu0 0.0
  %5714 = vmatprep.subr.mxu0 0.0
  %5715 = vmatpush1.msra.mxu0 0.0
  %5716 = vmatprep.subr.mxu0 0.0
  %5717 = vmatpush1.msra.mxu0 0.0
  %5718 = vmatprep.subr.mxu0 0.0
  %5719 = vmatpush1.msra.mxu0 0.0
  %5720 = vmatprep.subr.mxu0 0.0
  %5721 = vmatpush1.msra.mxu0 0.0
  %5722 = vmatprep.subr.mxu0 0.0
  %5723 = vmatpush1.msra.mxu0 0.0
  %5724 = vmatprep.subr.mxu0 0.0
  %5725 = vmatpush1.msra.mxu0 0.0
  %5726 = vmatprep.subr.mxu0 0.0
  %5727 = vmatpush1.msra.mxu0 0.0
  %5728 = vmatprep.subr.mxu0 0.0
  %5729 = vmatpush1.msra.mxu0 0.0
  %5730 = vmatprep.subr.mxu0 0.0
  %5731 = vmatpush1.msra.mxu0 0.0
  %5732 = vmatprep.subr.mxu0 0.0
  %5733 = vmatpush1.msra.mxu0 0.0
  %5734 = vmatprep.subr.mxu0 0.0
  %5735 = vmatpush1.msra.mxu0 0.0
  %5736 = vmatprep.subr.mxu0 0.0
  %5737 = vmatpush1.msra.mxu0 0.0
  %5738 = vmatprep.subr.mxu0 0.0
  %5739 = vmatpush1.msra.mxu0 0.0
  %5740 = vmatprep.subr.mxu0 0.0
  %5741 = vmatpush1.msra.mxu0 0.0
  %5742 = vmatprep.subr.mxu0 0.0
  %5743 = vmatpush1.msra.mxu0 0.0
  %5744 = vmatprep.subr.mxu0 0.0
  %5745 = vmatpush1.msra.mxu0 0.0
  %5746 = vmatprep.subr.mxu0 0.0
  %5747 = vmatpush1.msra.mxu0 0.0
  %5748 = vmatprep.subr.mxu0 0.0
  %5749 = vmatpush1.msra.mxu0 0.0
  %5750 = vmatprep.subr.mxu0 0.0
  %5751 = vmatpush1.msra.mxu0 0.0
  %5752 = vmatprep.subr.mxu0 0.0
  %5753 = vmatpush1.msra.mxu0 0.0
  %5754 = vmatprep.subr.mxu0 0.0
  %5755 = vmatpush1.msra.mxu0 0.0
  %5756 = vmatprep.subr.mxu0 0.0
  %5757 = vmatpush1.msra.mxu0 0.0
  %5758 = vmatprep.subr.mxu0 0.0
  %5759 = vmatpush1.msra.mxu0 0.0
  %5760 = vmatprep.subr.mxu0 0.0
  %5761 = vmatpush1.msra.mxu0 0.0
  %5762 = vmatprep.subr.mxu0 0.0
  %5763 = vmatpush1.msra.mxu0 0.0
  %5764 = vmatprep.subr.mxu0 0.0
  %5765 = vmatpush1.msra.mxu0 0.0
  %5766 = vmatprep.mubr.f32.mxu0 0.0
  %5767 = vmatmul.mubr.f32.gmra.mrb[0].mxu0 %v5700
  %v5768 = vpop.f32.mrb[0].mxu0
  %v5769 = vadd.f32 0.0, %v5768
  %v5770 = vpop.f32.mrb[0].mxu0
  %5771 = vdwg.mxu0
  %v5772 = vadd.f32 %v4773, %v5769
  %v5773 = vxor.u32 %v5772, 2147483648
  %v5774 = vmul.f32 %v5773, 1.442695
  %v5775 = vpow.pop %v5774
  %v5776 = vadd.f32 %v5775, 1.0
  %v5777 = vrcp.pop %v5776
  %v5778 = vmul.f32 1.0, %v5777
  %v5779 = vtanh.pop %v5772
  %v5780 = vmul.f32 %v5778, %v5687
  %5782 = vrot.lane.b32.xlu0 %v5779, 64
  %v5783 = vpop.permute.xlu0 %5782
  %v5785 = vmul.f32 %v5778, %v5783
  %5787 = vrot.lane.b32.xlu0 %v5785, 32
  %v5788 = vpop.permute.xlu0 %5787
  %v5790 = vadd.f32 %v5780, %v5788
  %v5791 = vtanh.pop %v5790
  %5793 = vrot.lane.b32.xlu0 %v5791, 64
  %v5794 = vpop.permute.xlu0 %5793
  %v5796 = vmul.f32 %v5778, %v5794
  %5798 = vrot.lane.b32.xlu0 %v5796, 32
  %v5799 = vpop.permute.xlu0 %5798
  %s5801 = scalar_lea.vmem [#allocation2], 208
  %5802 = vst.msk [vmem:[%s5801] sm:$0x3f] %vm803, %v5799
  %v5803 = vsel %vm696, %v5799, 0
  %5805 = vmatprep.subr.mxu0 0.0
  %5806 = vmatpush1.msra.mxu0 %v4524
  %5807 = vmatprep.subr.mxu0 0.0
  %5808 = vmatpush1.msra.mxu0 %v4525
  %5809 = vmatprep.subr.mxu0 0.0
  %5810 = vmatpush1.msra.mxu0 %v4526
  %5811 = vmatprep.subr.mxu0 0.0
  %5812 = vmatpush1.msra.mxu0 %v4527
  %5813 = vmatprep.subr.mxu0 0.0
  %5814 = vmatpush1.msra.mxu0 0.0
  %5815 = vmatprep.subr.mxu0 0.0
  %5816 = vmatpush1.msra.mxu0 0.0
  %5817 = vmatprep.subr.mxu0 0.0
  %5818 = vmatpush1.msra.mxu0 0.0
  %5819 = vmatprep.subr.mxu0 0.0
  %5820 = vmatpush1.msra.mxu0 0.0
  %5821 = vmatprep.subr.mxu0 0.0
  %5822 = vmatpush1.msra.mxu0 0.0
  %5823 = vmatprep.subr.mxu0 0.0
  %5824 = vmatpush1.msra.mxu0 0.0
  %5825 = vmatprep.subr.mxu0 0.0
  %5826 = vmatpush1.msra.mxu0 0.0
  %5827 = vmatprep.subr.mxu0 0.0
  %5828 = vmatpush1.msra.mxu0 0.0
  %5829 = vmatprep.subr.mxu0 0.0
  %5830 = vmatpush1.msra.mxu0 0.0
  %5831 = vmatprep.subr.mxu0 0.0
  %5832 = vmatpush1.msra.mxu0 0.0
  %5833 = vmatprep.subr.mxu0 0.0
  %5834 = vmatpush1.msra.mxu0 0.0
  %5835 = vmatprep.subr.mxu0 0.0
  %5836 = vmatpush1.msra.mxu0 0.0
  %5837 = vmatprep.subr.mxu0 0.0
  %5838 = vmatpush1.msra.mxu0 0.0
  %5839 = vmatprep.subr.mxu0 0.0
  %5840 = vmatpush1.msra.mxu0 0.0
  %5841 = vmatprep.subr.mxu0 0.0
  %5842 = vmatpush1.msra.mxu0 0.0
  %5843 = vmatprep.subr.mxu0 0.0
  %5844 = vmatpush1.msra.mxu0 0.0
  %5845 = vmatprep.subr.mxu0 0.0
  %5846 = vmatpush1.msra.mxu0 0.0
  %5847 = vmatprep.subr.mxu0 0.0
  %5848 = vmatpush1.msra.mxu0 0.0
  %5849 = vmatprep.subr.mxu0 0.0
  %5850 = vmatpush1.msra.mxu0 0.0
  %5851 = vmatprep.subr.mxu0 0.0
  %5852 = vmatpush1.msra.mxu0 0.0
  %5853 = vmatprep.subr.mxu0 0.0
  %5854 = vmatpush1.msra.mxu0 0.0
  %5855 = vmatprep.subr.mxu0 0.0
  %5856 = vmatpush1.msra.mxu0 0.0
  %5857 = vmatprep.subr.mxu0 0.0
  %5858 = vmatpush1.msra.mxu0 0.0
  %5859 = vmatprep.subr.mxu0 0.0
  %5860 = vmatpush1.msra.mxu0 0.0
  %5861 = vmatprep.subr.mxu0 0.0
  %5862 = vmatpush1.msra.mxu0 0.0
  %5863 = vmatprep.subr.mxu0 0.0
  %5864 = vmatpush1.msra.mxu0 0.0
  %5865 = vmatprep.subr.mxu0 0.0
  %5866 = vmatpush1.msra.mxu0 0.0
  %5867 = vmatprep.subr.mxu0 0.0
  %5868 = vmatpush1.msra.mxu0 0.0
  %5869 = vmatprep.mubr.f32.mxu0 0.0
  %5870 = vmatmul.mubr.f32.gmra.mrb[0].mxu0 %v5803
  %v5871 = vpop.f32.mrb[0].mxu0
  %v5872 = vadd.f32 0.0, %v5871
  %v5873 = vpop.f32.mrb[0].mxu0
  %5874 = vdwg.mxu0
  %v5875 = vadd.f32 %v4693, %v5872
  %v5876 = vxor.u32 %v5875, 2147483648
  %v5877 = vmul.f32 %v5876, 1.442695
  %v5878 = vpow.pop %v5877
  %v5879 = vadd.f32 %v5878, 1.0
  %v5880 = vrcp.pop %v5879
  %v5881 = vmul.f32 1.0, %v5880
  %v5882 = vtanh.pop %v5875
  %v5883 = vmul.f32 %v5881, %v5790
  %5885 = vrot.lane.b32.xlu0 %v5882, 64
  %v5886 = vpop.permute.xlu0 %5885
  %v5888 = vmul.f32 %v5881, %v5886
  %5890 = vrot.lane.b32.xlu0 %v5888, 32
  %v5891 = vpop.permute.xlu0 %5890
  %v5893 = vadd.f32 %v5883, %v5891
  %v5894 = vtanh.pop %v5893
  %5896 = vrot.lane.b32.xlu0 %v5894, 64
  %v5897 = vpop.permute.xlu0 %5896
  %v5899 = vmul.f32 %v5881, %v5897
  %5901 = vrot.lane.b32.xlu0 %v5899, 32
  %v5902 = vpop.permute.xlu0 %5901
  %s5904 = scalar_lea.vmem [#allocation2], 200
  %5905 = vst.msk [vmem:[%s5904] sm:$0x3f] %vm803, %v5902
  %v5906 = vsel %vm696, %v5902, 0
  %5908 = vmatprep.subr.mxu0 0.0
  %5909 = vmatpush1.msra.mxu0 %v4524
  %5910 = vmatprep.subr.mxu0 0.0
  %5911 = vmatpush1.msra.mxu0 %v4525
  %5912 = vmatprep.subr.mxu0 0.0
  %5913 = vmatpush1.msra.mxu0 %v4526
  %5914 = vmatprep.subr.mxu0 0.0
  %5915 = vmatpush1.msra.mxu0 %v4527
  %5916 = vmatprep.subr.mxu0 0.0
  %5917 = vmatpush1.msra.mxu0 0.0
  %5918 = vmatprep.subr.mxu0 0.0
  %5919 = vmatpush1.msra.mxu0 0.0
  %5920 = vmatprep.subr.mxu0 0.0
  %5921 = vmatpush1.msra.mxu0 0.0
  %5922 = vmatprep.subr.mxu0 0.0
  %5923 = vmatpush1.msra.mxu0 0.0
  %5924 = vmatprep.subr.mxu0 0.0
  %5925 = vmatpush1.msra.mxu0 0.0
  %5926 = vmatprep.subr.mxu0 0.0
  %5927 = vmatpush1.msra.mxu0 0.0
  %5928 = vmatprep.subr.mxu0 0.0
  %5929 = vmatpush1.msra.mxu0 0.0
  %5930 = vmatprep.subr.mxu0 0.0
  %5931 = vmatpush1.msra.mxu0 0.0
  %5932 = vmatprep.subr.mxu0 0.0
  %5933 = vmatpush1.msra.mxu0 0.0
  %5934 = vmatprep.subr.mxu0 0.0
  %5935 = vmatpush1.msra.mxu0 0.0
  %5936 = vmatprep.subr.mxu0 0.0
  %5937 = vmatpush1.msra.mxu0 0.0
  %5938 = vmatprep.subr.mxu0 0.0
  %5939 = vmatpush1.msra.mxu0 0.0
  %5940 = vmatprep.subr.mxu0 0.0
  %5941 = vmatpush1.msra.mxu0 0.0
  %5942 = vmatprep.subr.mxu0 0.0
  %5943 = vmatpush1.msra.mxu0 0.0
  %5944 = vmatprep.subr.mxu0 0.0
  %5945 = vmatpush1.msra.mxu0 0.0
  %5946 = vmatprep.subr.mxu0 0.0
  %5947 = vmatpush1.msra.mxu0 0.0
  %5948 = vmatprep.subr.mxu0 0.0
  %5949 = vmatpush1.msra.mxu0 0.0
  %5950 = vmatprep.subr.mxu0 0.0
  %5951 = vmatpush1.msra.mxu0 0.0
  %5952 = vmatprep.subr.mxu0 0.0
  %5953 = vmatpush1.msra.mxu0 0.0
  %5954 = vmatprep.subr.mxu0 0.0
  %5955 = vmatpush1.msra.mxu0 0.0
  %5956 = vmatprep.subr.mxu0 0.0
  %5957 = vmatpush1.msra.mxu0 0.0
  %5958 = vmatprep.subr.mxu0 0.0
  %5959 = vmatpush1.msra.mxu0 0.0
  %5960 = vmatprep.subr.mxu0 0.0
  %5961 = vmatpush1.msra.mxu0 0.0
  %5962 = vmatprep.subr.mxu0 0.0
  %5963 = vmatpush1.msra.mxu0 0.0
  %5964 = vmatprep.subr.mxu0 0.0
  %5965 = vmatpush1.msra.mxu0 0.0
  %5966 = vmatprep.subr.mxu0 0.0
  %5967 = vmatpush1.msra.mxu0 0.0
  %5968 = vmatprep.subr.mxu0 0.0
  %5969 = vmatpush1.msra.mxu0 0.0
  %5970 = vmatprep.subr.mxu0 0.0
  %5971 = vmatpush1.msra.mxu0 0.0
  %5972 = vmatprep.mubr.f32.mxu0 0.0
  %5973 = vmatmul.mubr.f32.gmra.mrb[0].mxu0 %v5906
  %v5974 = vpop.f32.mrb[0].mxu0
  %v5975 = vadd.f32 0.0, %v5974
  %v5976 = vpop.f32.mrb[0].mxu0
  %5977 = vdwg.mxu0
  %v5978 = vadd.f32 %v4613, %v5975
  %v5979 = vxor.u32 %v5978, 2147483648
  %v5980 = vmul.f32 %v5979, 1.442695
  %v5981 = vpow.pop %v5980
  %v5982 = vadd.f32 %v5981, 1.0
  %v5983 = vrcp.pop %v5982
  %v5984 = vmul.f32 1.0, %v5983
  %v5985 = vtanh.pop %v5978
  %v5986 = vmul.f32 %v5984, %v5893
  %5988 = vrot.lane.b32.xlu0 %v5985, 64
  %v5989 = vpop.permute.xlu0 %5988
  %v5991 = vmul.f32 %v5984, %v5989
  %5993 = vrot.lane.b32.xlu0 %v5991, 32
  %v5994 = vpop.permute.xlu0 %5993
  %v5996 = vadd.f32 %v5986, %v5994
  %v5997 = vtanh.pop %v5996
  %5999 = vrot.lane.b32.xlu0 %v5997, 64
  %v6000 = vpop.permute.xlu0 %5999
  %v6002 = vmul.f32 %v5984, %v6000
  %6004 = vrot.lane.b32.xlu0 %v6002, 32
  %v6005 = vpop.permute.xlu0 %6004
  %s6007 = scalar_lea.vmem [#allocation2], 192
  %6008 = vst.msk [vmem:[%s6007] sm:$0x3f] %vm803, %v6005
  %v6009 = vld [vmem:[%s3791] sm:$0x3f]
  %v6010 = vld [vmem:[%s3791 + $0x8] sm:$0x3f]
  %v6011 = vld [vmem:[%s3791 + $0x10] sm:$0x3f]
  %v6012 = vld [vmem:[%s3791 + $0x18] sm:$0x3f]
  %v6013 = vld [vmem:[%s3791 + $0x20] sm:$0x3f]
  %v6014 = vld [vmem:[%s3791 + $0x28] sm:$0x3f]
  %v6015 = vld [vmem:[%s3791 + $0x30] sm:$0x3f]
  %v6016 = vld [vmem:[%s3791 + $0x38] sm:$0x3f]
  %v6017 = vld [vmem:[%s6007] sm:$0x3f]
  %v6018 = vld [vmem:[%s6007 + $0x8] sm:$0x3f]
  %v6019 = vld [vmem:[%s6007 + $0x10] sm:$0x3f]
  %v6020 = vld [vmem:[%s6007 + $0x18] sm:$0x3f]
  %v6021 = vld [vmem:[%s6007 + $0x20] sm:$0x3f]
  %v6022 = vld [vmem:[%s6007 + $0x28] sm:$0x3f]
  %v6023 = vld [vmem:[%s6007 + $0x30] sm:$0x3f]
  %v6024 = vld [vmem:[%s6007 + $0x38] sm:$0x3f]
  %6033 = vrot.lane.b32.xlu0 %v6017, 32
  %v6034 = vpop.permute.xlu0 %6033
  %6035 = vrot.lane.b32.xlu0 %v6018, 32
  %v6036 = vpop.permute.xlu0 %6035
  %6037 = vrot.lane.b32.xlu0 %v6019, 32
  %v6038 = vpop.permute.xlu0 %6037
  %6039 = vrot.lane.b32.xlu0 %v6020, 32
  %v6040 = vpop.permute.xlu0 %6039
  %6041 = vrot.lane.b32.xlu0 %v6021, 32
  %v6042 = vpop.permute.xlu0 %6041
  %6043 = vrot.lane.b32.xlu0 %v6022, 32
  %v6044 = vpop.permute.xlu0 %6043
  %6045 = vrot.lane.b32.xlu0 %v6023, 32
  %v6046 = vpop.permute.xlu0 %6045
  %6047 = vrot.lane.b32.xlu0 %v6024, 32
  %v6048 = vpop.permute.xlu0 %6047
  %v6057 = vsel %vm696, %v6009, %v6034
  %v6058 = vsel %vm696, %v6010, %v6036
  %v6059 = vsel %vm696, %v6011, %v6038
  %v6060 = vsel %vm696, %v6012, %v6040
  %v6061 = vsel %vm696, %v6013, %v6042
  %v6062 = vsel %vm696, %v6014, %v6044
  %v6063 = vsel %vm696, %v6015, %v6046
  %v6064 = vsel %vm696, %v6016, %v6048
  %vm6065 = vcmask 521216
  %6066 = vst.msk [vmem:[%s7] sm:$0x3f] %vm6065, %v6057
  %6067 = vst.msk [vmem:[%s7 + $0x8] sm:$0x3f] %vm6065, %v6058
  %6068 = vst.msk [vmem:[%s7 + $0x10] sm:$0x3f] %vm6065, %v6059
  %6069 = vst.msk [vmem:[%s7 + $0x18] sm:$0x3f] %vm6065, %v6060
  %6070 = vst.msk [vmem:[%s7 + $0x20] sm:$0x3f] %vm6065, %v6061
  %6071 = vst.msk [vmem:[%s7 + $0x28] sm:$0x3f] %vm6065, %v6062
  %6072 = vst.msk [vmem:[%s7 + $0x30] sm:$0x3f] %vm6065, %v6063
  %6073 = vst.msk [vmem:[%s7 + $0x38] sm:$0x3f] %vm6065, %v6064
  // Predicated region
  $region30: #{embed_char_forward.1} parent=0 // pred_check
    _
  $region31: #{embed_char_forward.1} parent=0 // pred_check_branch
    %6075 = sbr.rel (0) target = $region33
  $region32: #{embed_char_forward.1} parent=0 // pred_region
    _
  $region33: #{embed_char_forward.1} parent=0 // pred_fallthru
    _
  // Predicated region
  $region34: #{embed_char_forward.1} parent=0 // pred_check
    _
  $region35: #{embed_char_forward.1} parent=0 // pred_check_branch
    %6077 = sbr.rel (0) target = $region37
  $region36: #{embed_char_forward.1} parent=0 // pred_region
    _
  $region37: #{embed_char_forward.1} parent=0 // pred_fallthru
    _

</llo_original>
